<compile_context>
chip_gen: v7x
topology: tpu7x:2x2x1
jax: 0.10.0
libtpu: 0.0.40
codegen_flags: <defaults>
</compile_context>

<pallas_src>
import numpy as np
import jax
import jax.numpy as jnp
from jax.experimental import pallas as pl
from jax.experimental.pallas import tpu as pltpu

EPS = 1e-5
NEG_SLOPE = 0.01
FOLDED_SLOPE = NEG_SLOPE * NEG_SLOPE     # leaky(leaky(x)) == leaky(x, 1e-4)
CH = 256                                 # hidden width fixed by the module


def _round_up(v, m):
    return (v + m - 1) // m * m


def _leaky2(x):
    return jnp.where(x >= 0.0, x, FOLDED_SLOPE * x)


def _bilinear_matrix(in_size, out_size):
    """Interpolation matrix matching F.interpolate(mode='bilinear', align_corners=False)."""
    m = np.zeros((out_size, in_size), np.float32)
    for o in range(out_size):
        src = (o + 0.5) * in_size / out_size - 0.5
        src = max(src, 0.0)
        i0 = min(int(np.floor(src)), in_size - 1)
        i1 = min(i0 + 1, in_size - 1)
        frac = src - i0
        m[o, i0] += 1.0 - frac
        m[o, i1] += frac
    return m


# ----------------------------------------------------------------------------
# Fused kernel: [3x3 conv + folded-BN + leaky^2] x3 -> [1x1 conv + BN + leaky^2]
#               -> bilinear resize.  One grid step == one image.
# Activations live in "strided flat" layout: row index = r * stride + c, so a
# conv tap is a contiguous row-slice; slack columns never feed valid outputs
# and are zeroed by the resize matrix coefficients.
# ----------------------------------------------------------------------------
def _make_fused_kernel(stride, m1, m2, m3, rows1, rows2):
    offsets = [dy * stride + dx for dy in range(3) for dx in range(3)]

    def kernel(x_ref, w1_ref, w2_ref, w3_ref, w4t_ref,
               st1_ref, st2_ref, st3_ref, st4_ref, k_ref,
               o_ref, buf1, buf2):

        # ---- layer 1: (num_classes+1) -> 256, single GEMM on wrapper im2col ----
        y1 = jnp.dot(x_ref[0], w1_ref[...], preferred_element_type=jnp.float32)
        y1 = _leaky2(y1 * st1_ref[0:1] + st1_ref[1:2])
        buf1[0:m1, :] = y1.astype(jnp.bfloat16)
        if rows1 > m1:                       # zero slack rows read by layer-2 taps
            buf1[m1:rows1, :] = jnp.zeros((rows1 - m1, CH), jnp.bfloat16)

        # ---- layer 2: 256 -> 256, in-kernel im2col (K = 9*256) + one GEMM ----
        t2 = jnp.concatenate([buf1[off:off + m2, :] for off in offsets], axis=1)
        y2 = jnp.dot(t2, w2_ref[...], preferred_element_type=jnp.float32)
        y2 = _leaky2(y2 * st2_ref[0:1] + st2_ref[1:2])
        buf2[0:m2, :] = y2.astype(jnp.bfloat16)
        if rows2 > m2:
            buf2[m2:rows2, :] = jnp.zeros((rows2 - m2, CH), jnp.bfloat16)

        # ---- layer 3: 256 -> 256 ----
        t3 = jnp.concatenate([buf2[off:off + m3, :] for off in offsets], axis=1)
        y3 = jnp.dot(t3, w3_ref[...], preferred_element_type=jnp.float32)
        y3 = _leaky2(y3 * st3_ref[0:1] + st3_ref[1:2])          # (m3, 256) f32

        # ---- layer 4: 1x1 conv, computed transposed (NT matmul) so that the
        #      final result is lane-dense (num_classes on sublanes, pixels on lanes)
        z_t = jax.lax.dot_general(                                # (nclass, m3)
            w4t_ref[...], y3.astype(jnp.bfloat16),
            dimension_numbers=(((1,), (1,)), ((), ())),
            preferred_element_type=jnp.float32)
        z_t = _leaky2(z_t * st4_ref[:, 0:1] + st4_ref[:, 1:2])

        # ---- bilinear resize (align_corners=False): one NN matmul with the
        #      precomputed strided Kronecker matrix (slack columns hit zeros)
        res_t = jnp.dot(z_t, k_ref[...], preferred_element_type=jnp.float32)
        o_ref[0] = res_t.astype(o_ref.dtype)                     # (nclass, Ho*Wo)

    return kernel


# ----------------------------------------------------------------------------
# Wrapper: NCHW in -> NCHW out, matching RefineHead.forward(x, depth, size)
# ----------------------------------------------------------------------------
def refine_head_forward(x_nchw, depth_nchw, output_size, params):
    n, _, h0, w0 = x_nchw.shape
    x = jnp.concatenate([x_nchw, depth_nchw], axis=1)         # (N, C0, H, W)
    c0 = x.shape[1]
    nclass = params[3]["w"].shape[-1]
    ho, wo = output_size

    # geometry: three VALID 3x3 convs, then 1x1
    s = w0                                   # row stride of every flat buffer
    h1, w1v = h0 - 2, w0 - 2
    h2, w2v = h1 - 2, w1v - 2
    h3, w3v = h2 - 2, w2v - 2
    m1, m2, m3 = h1 * s, h2 * s, h3 * s      # strided (implicit-GEMM) row counts
    pad = 2 * s + 2                          # max tap row offset
    rows1 = _round_up(max(m1, pad + m2), 8)
    rows2 = _round_up(max(m2, pad + m3), 8)

    offsets = [dy * s + dx for dy in range(3) for dx in range(3)]
    k1 = 9 * c0
    k1p = _round_up(k1, 128)                 # layer-1 GEMM K padded to 128 lanes

    # layer-1 im2col in the wrapper (tiny: ~114 KiB/image in bf16)
    xflat = jnp.transpose(x, (0, 2, 3, 1)).reshape(n, h0 * w0, c0)
    xflat = jnp.pad(xflat, ((0, 0), (0, pad), (0, 0)))       # finite zero slack rows
    xcol = jnp.concatenate([xflat[:, off:off + m1, :] for off in offsets], axis=2)
    xcol = jnp.pad(xcol, ((0, 0), (0, 0), (0, k1p - k1))).astype(jnp.bfloat16)

    # conv bias folded into the BN affine
    def fold(p):
        scale = p["scale"]
        bias = p["bias"] + scale * p["b"]
        return jnp.stack([scale, bias], axis=0).astype(jnp.float32)   # (2, Cout)

    # weights in bf16 for the MXU, flattened so every layer is a single GEMM
    w1 = jnp.pad(params[0]["w"].reshape(k1, CH),
                 ((0, k1p - k1), (0, 0))).astype(jnp.bfloat16)         # (128, 256)
    w2 = params[1]["w"].reshape(9 * CH, CH).astype(jnp.bfloat16)        # (2304, 256)
    w3 = params[2]["w"].reshape(9 * CH, CH).astype(jnp.bfloat16)        # (2304, 256)
    w4t = params[3]["w"].reshape(CH, nclass).T.astype(jnp.bfloat16)     # (nclass, 256)
    st1, st2, st3 = (fold(p) for p in params[:3])
    st4 = fold(params[3]).T                                             # (nclass, 2)

    # resize matrix (transposed): kT[h*s+w, o*Wo+p] = A[o,h]*B[p,w], zeros over
    # the slack columns (w >= w3v) of the strided feature map.
    a = _bilinear_matrix(h3, ho)                        # (Ho, H3)
    b = _bilinear_matrix(w3v, wo)                       # (Wo, W3)
    b_pad = np.zeros((wo, s), np.float32)
    b_pad[:, :w3v] = b
    k_t = jnp.asarray(np.kron(a, b_pad).T)              # (m3, Ho*Wo)

    # NOTE: constant operands (w*, st*, k_t) could use pipeline_mode=pl.Buffered(1)
    # to save VMEM at production sizes; left at defaults here (plenty of headroom).
    kernel = _make_fused_kernel(s, m1, m2, m3, rows1, rows2)
    out = pl.pallas_call(
        kernel,
        out_shape=jax.ShapeDtypeStruct((n, nclass, ho * wo), jnp.float32),
        grid=(n,),
        in_specs=[
            pl.BlockSpec((1, m1, k1p), lambda i: (i, 0, 0)),      # layer-1 im2col
            pl.BlockSpec((k1p, CH), lambda i: (0, 0)),            # w1 (flat)
            pl.BlockSpec((9 * CH, CH), lambda i: (0, 0)),         # w2 (flat)
            pl.BlockSpec((9 * CH, CH), lambda i: (0, 0)),         # w3 (flat)
            pl.BlockSpec((nclass, CH), lambda i: (0, 0)),         # w4 transposed
            pl.BlockSpec((2, CH), lambda i: (0, 0)),              # st1
            pl.BlockSpec((2, CH), lambda i: (0, 0)),              # st2
            pl.BlockSpec((2, CH), lambda i: (0, 0)),              # st3
            pl.BlockSpec((nclass, 2), lambda i: (0, 0)),          # st4 transposed
            pl.BlockSpec((m3, ho * wo), lambda i: (0, 0)),        # resize matrix^T
        ],
        out_specs=pl.BlockSpec((1, nclass, ho * wo), lambda i: (i, 0, 0)),
        scratch_shapes=[pltpu.VMEM((rows1, CH), jnp.bfloat16),
                        pltpu.VMEM((rows2, CH), jnp.bfloat16)],
        compiler_params=pltpu.CompilerParams(
            dimension_semantics=("parallel",),
            vmem_limit_bytes=32 * 1024 * 1024),
    )(xcol, w1, w2, w3, w4t, st1, st2, st3, st4, k_t)

    return out.reshape(n, nclass, ho, wo), {}                    # already NCHW


# ----------------------------------------------------------------------------
# Deterministic synthetic parameters (inference-mode BN folded into scale/bias)
# ----------------------------------------------------------------------------
def init_params(key, num_classes):
    dims = [(3, num_classes + 1, CH), (3, CH, CH), (3, CH, CH), (1, CH, num_classes)]
    params = []
    for (k, cin, cout) in dims:
        key, kw, kb, kg, kbe, km, kv = jax.random.split(key, 7)
        w = jax.random.normal(kw, (k, k, cin, cout), jnp.float32) / np.sqrt(k * k * cin)
        b = 0.1 * jax.random.normal(kb, (cout,), jnp.float32)
        gamma = jax.random.uniform(kg, (cout,), jnp.float32, 0.8, 1.2)
        beta = 0.1 * jax.random.normal(kbe, (cout,), jnp.float32)
        rmean = 0.1 * jax.random.normal(km, (cout,), jnp.float32)
        rvar = jax.random.uniform(kv, (cout,), jnp.float32, 0.5, 1.5)
        scale = gamma / jnp.sqrt(rvar + EPS)
        bias = beta - rmean * scale
        params.append(dict(w=w, b=b, scale=scale, bias=bias, ksize=k))
    return params


# ----------------------------------------------------------------------------
# Pure-JAX references for the numerical check.
#   matmul_dtype=float32  -> exact module math (loose tol covers bf16 MXU ops)
#   matmul_dtype=bfloat16 -> mirrors the kernel's operand precision (tight tol)
# ----------------------------------------------------------------------------
def reference_forward(x_nchw, depth_nchw, output_size, params, matmul_dtype):
    prec = jax.lax.Precision.HIGHEST
    x = jnp.concatenate([x_nchw, depth_nchw], axis=1)
    x = jnp.transpose(x, (0, 2, 3, 1))                        # NHWC
    for p in params:
        k = p["ksize"]
        hin, win = x.shape[1], x.shape[2]
        hout, wout = hin - k + 1, win - k + 1
        acc = jnp.zeros((x.shape[0], hout, wout, p["w"].shape[-1]), jnp.float32)
        for dy in range(k):
            for dx in range(k):
                tap = x[:, dy:dy + hout, dx:dx + wout, :].astype(matmul_dtype)
                wt = p["w"][dy, dx].astype(matmul_dtype)
                acc = acc + jnp.einsum("nhwc,cd->nhwd", tap, wt, precision=prec,
                                       preferred_element_type=jnp.float32)
        y = acc * p["scale"] + (p["bias"] + p["scale"] * p["b"])
        x = jnp.where(y >= 0.0, y, FOLDED_SLOPE * y)
    a = jnp.asarray(_bilinear_matrix(x.shape[1], output_size[0]))
    b = jnp.asarray(_bilinear_matrix(x.shape[2], output_size[1]))
    x = jnp.einsum("oh,nhwc->nowc", a, x, precision=prec)
    x = jnp.einsum("pw,nowc->nopc", b, x, precision=prec)
    return jnp.transpose(x, (0, 3, 1, 2))


if __name__ == "__main__":
    num_classes = 4
    n, hsz, wsz = 2, 16, 16
    output_size = (16, 16)

    key = jax.random.PRNGKey(0)
    kx, kd, kp = jax.random.split(key, 3)
    x = jax.random.normal(kx, (n, num_classes, hsz, wsz), jnp.float32)
    depth_map = jax.random.normal(kd, (n, 1, hsz, wsz), jnp.float32)
    params = init_params(kp, num_classes)

    out, losses = refine_head_forward(x, depth_map, output_size, params)
    out = jax.block_until_ready(out)

    assert out.shape == (n, num_classes, output_size[0], output_size[1]), out.shape
    assert losses == {}
    assert bool(jnp.all(jnp.isfinite(out)))

    ref_f32 = jax.block_until_ready(
        reference_forward(x, depth_map, output_size, params, jnp.float32))
    err_f32 = float(jnp.max(jnp.abs(out - ref_f32)))

    ref_bf16 = jax.block_until_ready(
        reference_forward(x, depth_map, output_size, params, jnp.bfloat16))
    err_bf16 = float(jnp.max(jnp.abs(out - ref_bf16)))

    assert err_bf16 < 1e-2, f"max abs error vs bf16-matched reference: {err_bf16}"
    assert err_f32 < 1e-1, f"max abs error vs f32 reference: {err_f32}"

    print("KERNEL_OK")
</pallas_src>

<mosaic_0001>
module attributes {stable_mosaic.version = 11 : i64} {
  func.func @kernel(%arg0: i32, %arg1: memref<1x224x128xbf16, #tpu.memory_space<vmem>>, %arg2: memref<128x256xbf16, #tpu.memory_space<vmem>>, %arg3: memref<2304x256xbf16, #tpu.memory_space<vmem>>, %arg4: memref<2304x256xbf16, #tpu.memory_space<vmem>>, %arg5: memref<4x256xbf16, #tpu.memory_space<vmem>>, %arg6: memref<2x256xf32, #tpu.memory_space<vmem>>, %arg7: memref<2x256xf32, #tpu.memory_space<vmem>>, %arg8: memref<2x256xf32, #tpu.memory_space<vmem>>, %arg9: memref<4x2xf32, #tpu.memory_space<vmem>>, %arg10: memref<160x256xf32, #tpu.memory_space<vmem>>, %arg11: memref<1x4x256xf32, #tpu.memory_space<vmem>>, %arg12: memref<232x256xbf16, #tpu.memory_space<vmem>>, %arg13: memref<200x256xbf16, #tpu.memory_space<vmem>>) attributes {dimension_semantics = [#tpu.dimension_semantics<parallel>], iteration_bounds = array<i64: 2>, scalar_prefetch = 0 : i64, scratch_operands = 2 : i64, tpu.core_type = #tpu.core_type<tc>, window_params = [{transform_indices = @transform_0, window_bounds = array<i64: 1, 224, 128>}, {pipeline_mode = #tpu.pipeline_mode<synchronous>, transform_indices = @transform_1, window_bounds = array<i64: 128, 256>}, {pipeline_mode = #tpu.pipeline_mode<synchronous>, transform_indices = @transform_2, window_bounds = array<i64: 2304, 256>}, {pipeline_mode = #tpu.pipeline_mode<synchronous>, transform_indices = @transform_3, window_bounds = array<i64: 2304, 256>}, {pipeline_mode = #tpu.pipeline_mode<synchronous>, transform_indices = @transform_4, window_bounds = array<i64: 4, 256>}, {pipeline_mode = #tpu.pipeline_mode<synchronous>, transform_indices = @transform_5, window_bounds = array<i64: 2, 256>}, {pipeline_mode = #tpu.pipeline_mode<synchronous>, transform_indices = @transform_6, window_bounds = array<i64: 2, 256>}, {pipeline_mode = #tpu.pipeline_mode<synchronous>, transform_indices = @transform_7, window_bounds = array<i64: 2, 256>}, {pipeline_mode = #tpu.pipeline_mode<synchronous>, transform_indices = @transform_8, window_bounds = array<i64: 4, 2>}, {pipeline_mode = #tpu.pipeline_mode<synchronous>, transform_indices = @transform_9, window_bounds = array<i64: 160, 256>}, {transform_indices = @transform_10, window_bounds = array<i64: 1, 4, 256>}]} {
    %c0 = arith.constant 0 : index
    %c0_0 = arith.constant 0 : index
    %c0_1 = arith.constant 0 : index
    %0 = vector.load %arg1[%c0, %c0_0, %c0_1] : memref<1x224x128xbf16, #tpu.memory_space<vmem>>, vector<1x224x128xbf16>
    %1 = vector.shape_cast %0 : vector<1x224x128xbf16> to vector<224x128xbf16>
    %c0_2 = arith.constant 0 : index
    %c0_3 = arith.constant 0 : index
    %2 = vector.load %arg2[%c0_2, %c0_3] : memref<128x256xbf16, #tpu.memory_space<vmem>>, vector<128x256xbf16>
    %cst = arith.constant dense<0.000000e+00> : vector<224x256xf32>
    %3 = tpu.matmul %1, %2, %cst {dimension_numbers = #tpu.dot_dimension_numbers<[1], [0], [0], [1], [0, 0, 1, 1], [], []>} : vector<224x128xbf16>, vector<128x256xbf16>, vector<224x256xf32> -> vector<224x256xf32>
    %c0_4 = arith.constant 0 : index
    %c0_5 = arith.constant 0 : index
    %4 = vector.load %arg6[%c0_4, %c0_5] : memref<2x256xf32, #tpu.memory_space<vmem>>, vector<1x256xf32>
    %5 = vector.broadcast %4 : vector<1x256xf32> to vector<224x256xf32>
    %6 = arith.mulf %3, %5 : vector<224x256xf32>
    %c1 = arith.constant 1 : index
    %c0_6 = arith.constant 0 : index
    %7 = vector.load %arg6[%c1, %c0_6] : memref<2x256xf32, #tpu.memory_space<vmem>>, vector<1x256xf32>
    %8 = vector.broadcast %7 : vector<1x256xf32> to vector<224x256xf32>
    %9 = arith.addf %6, %8 : vector<224x256xf32>
    %cst_7 = arith.constant 0.000000e+00 : f32
    %10 = vector.broadcast %cst_7 : f32 to vector<224x256xf32>
    %11 = arith.cmpf oge, %9, %10 : vector<224x256xf32>
    %cst_8 = arith.constant 9.99999974E-5 : f32
    %12 = vector.broadcast %cst_8 : f32 to vector<224x256xf32>
    %13 = arith.mulf %12, %9 : vector<224x256xf32>
    %14 = arith.select %11, %9, %13 : vector<224x256xi1>, vector<224x256xf32>
    %15 = arith.truncf %14 : vector<224x256xf32> to vector<224x256xbf16>
    %c0_9 = arith.constant 0 : index
    %c0_10 = arith.constant 0 : index
    %16 = vector.load %arg12[%c0_9, %c0_10] : memref<232x256xbf16, #tpu.memory_space<vmem>>, vector<224x256xbf16>
    tpu.vector_store %arg12[%c0_9, %c0_10], %15 {strides = array<i32>} : memref<232x256xbf16, #tpu.memory_space<vmem>>, vector<224x256xbf16>,
    %cst_11 = arith.constant 0.000000e+00 : bf16
    %17 = vector.broadcast %cst_11 : bf16 to vector<8x256xbf16>
    %c224 = arith.constant 224 : index
    %c0_12 = arith.constant 0 : index
    %18 = vector.load %arg12[%c224, %c0_12] : memref<232x256xbf16, #tpu.memory_space<vmem>>, vector<8x256xbf16>
    tpu.vector_store %arg12[%c224, %c0_12], %17 {strides = array<i32>} : memref<232x256xbf16, #tpu.memory_space<vmem>>, vector<8x256xbf16>,
    %c0_13 = arith.constant 0 : index
    %c0_14 = arith.constant 0 : index
    %19 = vector.load %arg12[%c0_13, %c0_14] : memref<232x256xbf16, #tpu.memory_space<vmem>>, vector<192x256xbf16>
    %c1_15 = arith.constant 1 : index
    %c0_16 = arith.constant 0 : index
    %20 = vector.load %arg12[%c1_15, %c0_16] : memref<232x256xbf16, #tpu.memory_space<vmem>>, vector<192x256xbf16>
    %c2 = arith.constant 2 : index
    %c0_17 = arith.constant 0 : index
    %21 = vector.load %arg12[%c2, %c0_17] : memref<232x256xbf16, #tpu.memory_space<vmem>>, vector<192x256xbf16>
    %c16 = arith.constant 16 : index
    %c0_18 = arith.constant 0 : index
    %22 = vector.load %arg12[%c16, %c0_18] : memref<232x256xbf16, #tpu.memory_space<vmem>>, vector<192x256xbf16>
    %c17 = arith.constant 17 : index
    %c0_19 = arith.constant 0 : index
    %23 = vector.load %arg12[%c17, %c0_19] : memref<232x256xbf16, #tpu.memory_space<vmem>>, vector<192x256xbf16>
    %c18 = arith.constant 18 : index
    %c0_20 = arith.constant 0 : index
    %24 = vector.load %arg12[%c18, %c0_20] : memref<232x256xbf16, #tpu.memory_space<vmem>>, vector<192x256xbf16>
    %c32 = arith.constant 32 : index
    %c0_21 = arith.constant 0 : index
    %25 = vector.load %arg12[%c32, %c0_21] : memref<232x256xbf16, #tpu.memory_space<vmem>>, vector<192x256xbf16>
    %c33 = arith.constant 33 : index
    %c0_22 = arith.constant 0 : index
    %26 = vector.load %arg12[%c33, %c0_22] : memref<232x256xbf16, #tpu.memory_space<vmem>>, vector<192x256xbf16>
    %c34 = arith.constant 34 : index
    %c0_23 = arith.constant 0 : index
    %27 = vector.load %arg12[%c34, %c0_23] : memref<232x256xbf16, #tpu.memory_space<vmem>>, vector<192x256xbf16>
    %28 = tpu.concatenate %19, %20, %21, %22, %23, %24, %25, %26, %27 in 1 : vector<192x256xbf16>, vector<192x256xbf16>, vector<192x256xbf16>, vector<192x256xbf16>, vector<192x256xbf16>, vector<192x256xbf16>, vector<192x256xbf16>, vector<192x256xbf16>, vector<192x256xbf16> -> vector<192x2304xbf16>
    %c0_24 = arith.constant 0 : index
    %c0_25 = arith.constant 0 : index
    %29 = vector.load %arg3[%c0_24, %c0_25] : memref<2304x256xbf16, #tpu.memory_space<vmem>>, vector<2304x256xbf16>
    %cst_26 = arith.constant dense<0.000000e+00> : vector<192x256xf32>
    %30 = tpu.matmul %28, %29, %cst_26 {dimension_numbers = #tpu.dot_dimension_numbers<[1], [0], [0], [1], [0, 0, 1, 1], [], []>} : vector<192x2304xbf16>, vector<2304x256xbf16>, vector<192x256xf32> -> vector<192x256xf32>
    %c0_27 = arith.constant 0 : index
    %c0_28 = arith.constant 0 : index
    %31 = vector.load %arg7[%c0_27, %c0_28] : memref<2x256xf32, #tpu.memory_space<vmem>>, vector<1x256xf32>
    %32 = vector.broadcast %31 : vector<1x256xf32> to vector<192x256xf32>
    %33 = arith.mulf %30, %32 : vector<192x256xf32>
    %c1_29 = arith.constant 1 : index
    %c0_30 = arith.constant 0 : index
    %34 = vector.load %arg7[%c1_29, %c0_30] : memref<2x256xf32, #tpu.memory_space<vmem>>, vector<1x256xf32>
    %35 = vector.broadcast %34 : vector<1x256xf32> to vector<192x256xf32>
    %36 = arith.addf %33, %35 : vector<192x256xf32>
    %cst_31 = arith.constant 0.000000e+00 : f32
    %37 = vector.broadcast %cst_31 : f32 to vector<192x256xf32>
    %38 = arith.cmpf oge, %36, %37 : vector<192x256xf32>
    %cst_32 = arith.constant 9.99999974E-5 : f32
    %39 = vector.broadcast %cst_32 : f32 to vector<192x256xf32>
    %40 = arith.mulf %39, %36 : vector<192x256xf32>
    %41 = arith.select %38, %36, %40 : vector<192x256xi1>, vector<192x256xf32>
    %42 = arith.truncf %41 : vector<192x256xf32> to vector<192x256xbf16>
    %c0_33 = arith.constant 0 : index
    %c0_34 = arith.constant 0 : index
    %43 = vector.load %arg13[%c0_33, %c0_34] : memref<200x256xbf16, #tpu.memory_space<vmem>>, vector<192x256xbf16>
    tpu.vector_store %arg13[%c0_33, %c0_34], %42 {strides = array<i32>} : memref<200x256xbf16, #tpu.memory_space<vmem>>, vector<192x256xbf16>,
    %cst_35 = arith.constant 0.000000e+00 : bf16
    %44 = vector.broadcast %cst_35 : bf16 to vector<8x256xbf16>
    %c192 = arith.constant 192 : index
    %c0_36 = arith.constant 0 : index
    %45 = vector.load %arg13[%c192, %c0_36] : memref<200x256xbf16, #tpu.memory_space<vmem>>, vector<8x256xbf16>
    tpu.vector_store %arg13[%c192, %c0_36], %44 {strides = array<i32>} : memref<200x256xbf16, #tpu.memory_space<vmem>>, vector<8x256xbf16>,
    %c0_37 = arith.constant 0 : index
    %c0_38 = arith.constant 0 : index
    %46 = vector.load %arg13[%c0_37, %c0_38] : memref<200x256xbf16, #tpu.memory_space<vmem>>, vector<160x256xbf16>
    %c1_39 = arith.constant 1 : index
    %c0_40 = arith.constant 0 : index
    %47 = vector.load %arg13[%c1_39, %c0_40] : memref<200x256xbf16, #tpu.memory_space<vmem>>, vector<160x256xbf16>
    %c2_41 = arith.constant 2 : index
    %c0_42 = arith.constant 0 : index
    %48 = vector.load %arg13[%c2_41, %c0_42] : memref<200x256xbf16, #tpu.memory_space<vmem>>, vector<160x256xbf16>
    %c16_43 = arith.constant 16 : index
    %c0_44 = arith.constant 0 : index
    %49 = vector.load %arg13[%c16_43, %c0_44] : memref<200x256xbf16, #tpu.memory_space<vmem>>, vector<160x256xbf16>
    %c17_45 = arith.constant 17 : index
    %c0_46 = arith.constant 0 : index
    %50 = vector.load %arg13[%c17_45, %c0_46] : memref<200x256xbf16, #tpu.memory_space<vmem>>, vector<160x256xbf16>
    %c18_47 = arith.constant 18 : index
    %c0_48 = arith.constant 0 : index
    %51 = vector.load %arg13[%c18_47, %c0_48] : memref<200x256xbf16, #tpu.memory_space<vmem>>, vector<160x256xbf16>
    %c32_49 = arith.constant 32 : index
    %c0_50 = arith.constant 0 : index
    %52 = vector.load %arg13[%c32_49, %c0_50] : memref<200x256xbf16, #tpu.memory_space<vmem>>, vector<160x256xbf16>
    %c33_51 = arith.constant 33 : index
    %c0_52 = arith.constant 0 : index
    %53 = vector.load %arg13[%c33_51, %c0_52] : memref<200x256xbf16, #tpu.memory_space<vmem>>, vector<160x256xbf16>
    %c34_53 = arith.constant 34 : index
    %c0_54 = arith.constant 0 : index
    %54 = vector.load %arg13[%c34_53, %c0_54] : memref<200x256xbf16, #tpu.memory_space<vmem>>, vector<160x256xbf16>
    %55 = tpu.concatenate %46, %47, %48, %49, %50, %51, %52, %53, %54 in 1 : vector<160x256xbf16>, vector<160x256xbf16>, vector<160x256xbf16>, vector<160x256xbf16>, vector<160x256xbf16>, vector<160x256xbf16>, vector<160x256xbf16>, vector<160x256xbf16>, vector<160x256xbf16> -> vector<160x2304xbf16>
    %c0_55 = arith.constant 0 : index
    %c0_56 = arith.constant 0 : index
    %56 = vector.load %arg4[%c0_55, %c0_56] : memref<2304x256xbf16, #tpu.memory_space<vmem>>, vector<2304x256xbf16>
    %cst_57 = arith.constant dense<0.000000e+00> : vector<160x256xf32>
    %57 = tpu.matmul %55, %56, %cst_57 {dimension_numbers = #tpu.dot_dimension_numbers<[1], [0], [0], [1], [0, 0, 1, 1], [], []>} : vector<160x2304xbf16>, vector<2304x256xbf16>, vector<160x256xf32> -> vector<160x256xf32>
    %c0_58 = arith.constant 0 : index
    %c0_59 = arith.constant 0 : index
    %58 = vector.load %arg8[%c0_58, %c0_59] : memref<2x256xf32, #tpu.memory_space<vmem>>, vector<1x256xf32>
    %59 = vector.broadcast %58 : vector<1x256xf32> to vector<160x256xf32>
    %60 = arith.mulf %57, %59 : vector<160x256xf32>
    %c1_60 = arith.constant 1 : index
    %c0_61 = arith.constant 0 : index
    %61 = vector.load %arg8[%c1_60, %c0_61] : memref<2x256xf32, #tpu.memory_space<vmem>>, vector<1x256xf32>
    %62 = vector.broadcast %61 : vector<1x256xf32> to vector<160x256xf32>
    %63 = arith.addf %60, %62 : vector<160x256xf32>
    %cst_62 = arith.constant 0.000000e+00 : f32
    %64 = vector.broadcast %cst_62 : f32 to vector<160x256xf32>
    %65 = arith.cmpf oge, %63, %64 : vector<160x256xf32>
    %cst_63 = arith.constant 9.99999974E-5 : f32
    %66 = vector.broadcast %cst_63 : f32 to vector<160x256xf32>
    %67 = arith.mulf %66, %63 : vector<160x256xf32>
    %68 = arith.select %65, %63, %67 : vector<160x256xi1>, vector<160x256xf32>
    %c0_64 = arith.constant 0 : index
    %c0_65 = arith.constant 0 : index
    %69 = vector.load %arg5[%c0_64, %c0_65] : memref<4x256xbf16, #tpu.memory_space<vmem>>, vector<4x256xbf16>
    %70 = arith.truncf %68 : vector<160x256xf32> to vector<160x256xbf16>
    %cst_66 = arith.constant dense<0.000000e+00> : vector<4x160xf32>
    %71 = tpu.matmul %69, %70, %cst_66 {dimension_numbers = #tpu.dot_dimension_numbers<[1], [1], [0], [0], [0, 0, 1, 0], [], []>} : vector<4x256xbf16>, vector<160x256xbf16>, vector<4x160xf32> -> vector<4x160xf32>
    %c0_67 = arith.constant 0 : index
    %c0_68 = arith.constant 0 : index
    %72 = vector.load %arg9[%c0_67, %c0_68] : memref<4x2xf32, #tpu.memory_space<vmem>>, vector<4x1xf32>
    %73 = vector.broadcast %72 : vector<4x1xf32> to vector<4x160xf32>
    %74 = arith.mulf %71, %73 : vector<4x160xf32>
    %c0_69 = arith.constant 0 : index
    %c1_70 = arith.constant 1 : index
    %75 = vector.load %arg9[%c0_69, %c1_70] : memref<4x2xf32, #tpu.memory_space<vmem>>, vector<4x1xf32>
    %76 = vector.broadcast %75 : vector<4x1xf32> to vector<4x160xf32>
    %77 = arith.addf %74, %76 : vector<4x160xf32>
    %cst_71 = arith.constant 0.000000e+00 : f32
    %78 = vector.broadcast %cst_71 : f32 to vector<4x160xf32>
    %79 = arith.cmpf oge, %77, %78 : vector<4x160xf32>
    %cst_72 = arith.constant 9.99999974E-5 : f32
    %80 = vector.broadcast %cst_72 : f32 to vector<4x160xf32>
    %81 = arith.mulf %80, %77 : vector<4x160xf32>
    %82 = arith.select %79, %77, %81 : vector<4x160xi1>, vector<4x160xf32>
    %c0_73 = arith.constant 0 : index
    %c0_74 = arith.constant 0 : index
    %83 = vector.load %arg10[%c0_73, %c0_74] : memref<160x256xf32, #tpu.memory_space<vmem>>, vector<160x256xf32>
    %cst_75 = arith.constant dense<0.000000e+00> : vector<4x256xf32>
    %84 = tpu.matmul %82, %83, %cst_75 {dimension_numbers = #tpu.dot_dimension_numbers<[1], [0], [0], [1], [0, 0, 1, 1], [], []>} : vector<4x160xf32>, vector<160x256xf32>, vector<4x256xf32> -> vector<4x256xf32>
    %c0_76 = arith.constant 0 : index
    %c0_77 = arith.constant 0 : index
    %c0_78 = arith.constant 0 : index
    %85 = vector.load %arg11[%c0_76, %c0_77, %c0_78] : memref<1x4x256xf32, #tpu.memory_space<vmem>>, vector<1x4x256xf32>
    %86 = vector.shape_cast %85 : vector<1x4x256xf32> to vector<4x256xf32>
    %87 = vector.shape_cast %84 : vector<4x256xf32> to vector<1x4x256xf32>
    tpu.vector_store %arg11[%c0_76, %c0_77, %c0_78], %87 {strides = array<i32>} : memref<1x4x256xf32, #tpu.memory_space<vmem>>, vector<1x4x256xf32>,
    return
  }
  func.func @transform_0(%arg0: i32) -> (i32, i32, i32) {
    %c0_i32 = arith.constant 0 : i32
    %c0_i32_0 = arith.constant 0 : i32
    %c0_i32_1 = arith.constant 0 : i32
    return %arg0, %c0_i32, %c0_i32_0 : i32, i32, i32
  }
  func.func @transform_1(%arg0: i32) -> (i32, i32) {
    %c0_i32 = arith.constant 0 : i32
    %c0_i32_0 = arith.constant 0 : i32
    %c0_i32_1 = arith.constant 0 : i32
    return %c0_i32, %c0_i32_0 : i32, i32
  }
  func.func @transform_2(%arg0: i32) -> (i32, i32) {
    %c0_i32 = arith.constant 0 : i32
    %c0_i32_0 = arith.constant 0 : i32
    %c0_i32_1 = arith.constant 0 : i32
    return %c0_i32, %c0_i32_0 : i32, i32
  }
  func.func @transform_3(%arg0: i32) -> (i32, i32) {
    %c0_i32 = arith.constant 0 : i32
    %c0_i32_0 = arith.constant 0 : i32
    %c0_i32_1 = arith.constant 0 : i32
    return %c0_i32, %c0_i32_0 : i32, i32
  }
  func.func @transform_4(%arg0: i32) -> (i32, i32) {
    %c0_i32 = arith.constant 0 : i32
    %c0_i32_0 = arith.constant 0 : i32
    %c0_i32_1 = arith.constant 0 : i32
    return %c0_i32, %c0_i32_0 : i32, i32
  }
  func.func @transform_5(%arg0: i32) -> (i32, i32) {
    %c0_i32 = arith.constant 0 : i32
    %c0_i32_0 = arith.constant 0 : i32
    %c0_i32_1 = arith.constant 0 : i32
    return %c0_i32, %c0_i32_0 : i32, i32
  }
  func.func @transform_6(%arg0: i32) -> (i32, i32) {
    %c0_i32 = arith.constant 0 : i32
    %c0_i32_0 = arith.constant 0 : i32
    %c0_i32_1 = arith.constant 0 : i32
    return %c0_i32, %c0_i32_0 : i32, i32
  }
  func.func @transform_7(%arg0: i32) -> (i32, i32) {
    %c0_i32 = arith.constant 0 : i32
    %c0_i32_0 = arith.constant 0 : i32
    %c0_i32_1 = arith.constant 0 : i32
    return %c0_i32, %c0_i32_0 : i32, i32
  }
  func.func @transform_8(%arg0: i32) -> (i32, i32) {
    %c0_i32 = arith.constant 0 : i32
    %c0_i32_0 = arith.constant 0 : i32
    %c0_i32_1 = arith.constant 0 : i32
    return %c0_i32, %c0_i32_0 : i32, i32
  }
  func.func @transform_9(%arg0: i32) -> (i32, i32) {
    %c0_i32 = arith.constant 0 : i32
    %c0_i32_0 = arith.constant 0 : i32
    %c0_i32_1 = arith.constant 0 : i32
    return %c0_i32, %c0_i32_0 : i32, i32
  }
  func.func @transform_10(%arg0: i32) -> (i32, i32, i32) {
    %c0_i32 = arith.constant 0 : i32
    %c0_i32_0 = arith.constant 0 : i32
    %c0_i32_1 = arith.constant 0 : i32
    return %arg0, %c0_i32, %c0_i32_0 : i32, i32, i32
  }
}

</mosaic_0001>

<llo_original>
// kernel: tpu_custom_call.1
$region0: #{tpu_custom_call.1}
  #allocation0 [shape = 'u32[]', space=smem, size = 0x4, offset = 0x4, fixed_abs, tag = 'smem constant byte address 0x4 - core index']
  #allocation1 [shape = 'u32[144,128]{1,0:T(1,128)}', space=vmem, size = 0x12000, scoped, tag = 'internal scratch']
  #allocation2 [shape = 'bf16[232,256]{1,0:T(8,128)(2,1)}', space=vmem, size = 0x1d000, scoped, tag = 'scratch operand']
  #allocation3 [shape = 'bf16[200,256]{1,0:T(8,128)(2,1)}', space=vmem, size = 0x19000, scoped, tag = 'scratch operand']
  %s0 = inlined_call_operand.hbm [shape: bf16[2,224,128], index: 0, kind: input, shape index: {}]
  %s1 = inlined_call_operand.hbm [shape: bf16[128,256], index: 1, kind: input, shape index: {}]
  %s2 = inlined_call_operand.hbm [shape: bf16[2304,256], index: 2, kind: input, shape index: {}]
  %s3 = inlined_call_operand.hbm [shape: bf16[2304,256], index: 3, kind: input, shape index: {}]
  %s4 = inlined_call_operand.hbm [shape: bf16[4,256], index: 4, kind: input, shape index: {}]
  %s5 = inlined_call_operand.hbm [shape: f32[2,256], index: 5, kind: input, shape index: {}]
  %s6 = inlined_call_operand.hbm [shape: f32[2,256], index: 6, kind: input, shape index: {}]
  %s7 = inlined_call_operand.hbm [shape: f32[2,256], index: 7, kind: input, shape index: {}]
  %s8 = inlined_call_operand.vmem [shape: f32[4,2], index: 8, kind: input, shape index: {}]
  %s9 = inlined_call_operand.hbm [shape: f32[160,256], index: 9, kind: input, shape index: {}]
  %s10 = inlined_call_operand.hbm [shape: f32[2,4,256], index: 10, kind: output, shape index: {}]
  %s11 = sld [smem:[#allocation0]]
  $region109: #{tpu_custom_call.1} parent=0
    _
  %s13 = ssub.s32 1, %s11
  %s14 = scalar_select 0, %s13, %s11
  $region1: #{tpu_custom_call.1} parent=0
    #allocation4 [shape = 'u8[114688]{0}', space=vmem, size = 0x1c000, scoped, tag = 'input window, operand 0']
    #allocation5 [shape = 's32[2]{0}', space=sflag, size = 0x8, scoped, tag = 'scoped memory for tpu_custom_call.1']
    #allocation6 [shape = 's32[2]{0}', space=sflag, size = 0x8, scoped, tag = 'scoped memory for tpu_custom_call.1']
    #allocation7 [shape = 'u8[65536]{0}', space=vmem, size = 0x10000, scoped, tag = 'input window, operand 1, single buffered']
    #allocation8 [shape = 's32[1]{0}', space=sflag, size = 0x4, scoped, tag = 'scoped memory for tpu_custom_call.1']
    #allocation9 [shape = 'u8[1179648]{0}', space=vmem, size = 0x120000, scoped, tag = 'input window, operand 2, single buffered']
    #allocation10 [shape = 'u8[1179648]{0}', space=vmem, size = 0x120000, scoped, tag = 'input window, operand 3, single buffered']
    #allocation11 [shape = 's32[1]{0}', space=sflag, size = 0x4, scoped, tag = 'scoped memory for tpu_custom_call.1']
    #allocation12 [shape = 'u8[2048]{0}', space=vmem, size = 0x800, scoped, tag = 'input window, operand 4, single buffered']
    #allocation13 [shape = 'u8[2048]{0}', space=vmem, size = 0x800, scoped, tag = 'input window, operand 5, single buffered']
    #allocation14 [shape = 's32[1]{0}', space=sflag, size = 0x4, scoped, tag = 'scoped memory for tpu_custom_call.1']
    #allocation15 [shape = 'u8[2048]{0}', space=vmem, size = 0x800, scoped, tag = 'input window, operand 6, single buffered']
    #allocation16 [shape = 'u8[2048]{0}', space=vmem, size = 0x800, scoped, tag = 'input window, operand 7, single buffered']
    #allocation17 [shape = 's32[1]{0}', space=sflag, size = 0x4, scoped, tag = 'scoped memory for tpu_custom_call.1']
    #allocation18 [shape = 'u8[163840]{0}', space=vmem, size = 0x28000, scoped, tag = 'input window, operand 9, single buffered']
    #allocation19 [shape = 'u8[8192]{0}', space=vmem, size = 0x2000, scoped, tag = 'output window, operand 0']
    %15 = vsyncpa [#allocation5], 0
    %s16 = scalar_lea.sflag [#allocation5], 1
    %17 = vsyncpa %s16, 0
    %18 = vsyncpa [#allocation8], 0
    %19 = vsyncpa [#allocation11], 0
    %20 = vsyncpa [#allocation14], 0
    %21 = vsyncpa [#allocation17], 0
    %22 = vsyncpa [#allocation6], 0
    %s23 = scalar_lea.sflag [#allocation6], 1
    %24 = vsyncpa %s23, 0
    loop: start=0, step=1, limit=4
    $region2: #{tpu_custom_call.1} parent=1 // loop_pre_header
      _
    $region3: #{tpu_custom_call.1} parent=1 // loop_header
      %s26 = sphi 0, %s30
      %p27 = scmp.ge.s32.totalorder %s26, 4
      %s36 = sphi 0, %s38
      %s39 = sphi 0, %s36
      %s40 = sphi 0, %s39
      %s56 = sphi 0, %s40
      %s60 = sphi 0, %s60
      %s62 = sphi 0, %s60
      %s63 = sphi 0, %s62
      %s77 = sphi 0, %s63
      %s81 = sphi 0, %s81
      %s83 = sphi 0, %s81
      %s84 = sphi 0, %s83
      %s98 = sphi 0, %s84
      %s102 = sphi 0, %s102
      %s104 = sphi 0, %s102
      %s105 = sphi 0, %s104
      %s119 = sphi 0, %s105
      %s123 = sphi 0, %s123
      %s125 = sphi 0, %s123
      %s126 = sphi 0, %s125
      %s140 = sphi 0, %s126
      %s144 = sphi 0, %s144
      %s146 = sphi 0, %s144
      %s147 = sphi 0, %s146
      %s161 = sphi 0, %s147
      %s165 = sphi 0, %s165
      %s167 = sphi 0, %s165
      %s168 = sphi 0, %s167
      %s182 = sphi 0, %s168
      %s186 = sphi 0, %s186
      %s188 = sphi 0, %s186
      %s189 = sphi 0, %s188
      %s203 = sphi 0, %s189
      %s207 = sphi 0, %s207
      %s209 = sphi 0, %s207
      %s210 = sphi 0, %s209
      %s224 = sphi 0, %s210
      %s228 = sphi 0, %s228
      %s230 = sphi 0, %s228
      %s231 = sphi 0, %s230
      %s245 = sphi 0, %s231
      %s251 = sphi 0, %s253
      %s254 = sphi 0, %s251
      %s255 = sphi 0, %s254
      %s271 = sphi 0, %s255
    $region4: #{tpu_custom_call.1} parent=1 // loop_header_branch
      %29 = sbr.rel (%p27) target = $region8
    $region5: #{tpu_custom_call.1} parent=1 // loop_body
      %s31 = ssub.s32 %s26, 1
      %s32 = ssub.s32 %s26, 2
      %s33 = sadd.s32 %s26, 1
      %s34 = ssub.s32 %s26, %s33
      %p35 = scmp.eq.s32.totalorder %s34, 0
      %s37 = sadd.s32 %s36, 1
      %s38 = scalar_select %p35, %s36, %s37
      %p41 = pneg %p35
      %p42 = scmp.eq.s32.totalorder %s26, 1
      %p43 = por %p41, %p42
      %p44 = scmp.ne.s32.totalorder %s36, %s39
      %p45 = scmp.eq.s32.totalorder %s26, 0
      %p46 = por %p44, %p45
      %p47 = scmp.ne.s32.totalorder %s36, %s39
      %p48 = scmp.eq.s32.totalorder %s31, 1
      %p49 = por %p47, %p48
      %p50 = scmp.ne.s32.totalorder %s39, %s40
      %p51 = scmp.eq.s32.totalorder %s31, 0
      %p52 = por %p50, %p51
      %p53 = scmp.ne.s32.totalorder %s39, %s40
      %p54 = scmp.eq.s32.totalorder %s32, 1
      %p55 = por %p53, %p54
      %p57 = scmp.ne.s32.totalorder %s40, %s56
      %p58 = scmp.eq.s32.totalorder %s32, 0
      %p59 = por %p57, %p58
      %s61 = sadd.s32 %s60, 1
      %p64 = scmp.eq.s32.totalorder %s26, 1
      %p65 = scmp.ne.s32.totalorder %s60, %s62
      %p66 = scmp.eq.s32.totalorder %s26, 0
      %p67 = por %p65, %p66
      %p68 = scmp.ne.s32.totalorder %s60, %s62
      %p69 = scmp.eq.s32.totalorder %s31, 1
      %p70 = por %p68, %p69
      %p71 = scmp.ne.s32.totalorder %s62, %s63
      %p72 = scmp.eq.s32.totalorder %s31, 0
      %p73 = por %p71, %p72
      %p74 = scmp.ne.s32.totalorder %s62, %s63
      %p75 = scmp.eq.s32.totalorder %s32, 1
      %p76 = por %p74, %p75
      %p78 = scmp.ne.s32.totalorder %s63, %s77
      %p79 = scmp.eq.s32.totalorder %s32, 0
      %p80 = por %p78, %p79
      %s82 = sadd.s32 %s81, 1
      %p85 = scmp.eq.s32.totalorder %s26, 1
      %p86 = scmp.ne.s32.totalorder %s81, %s83
      %p87 = scmp.eq.s32.totalorder %s26, 0
      %p88 = por %p86, %p87
      %p89 = scmp.ne.s32.totalorder %s81, %s83
      %p90 = scmp.eq.s32.totalorder %s31, 1
      %p91 = por %p89, %p90
      %p92 = scmp.ne.s32.totalorder %s83, %s84
      %p93 = scmp.eq.s32.totalorder %s31, 0
      %p94 = por %p92, %p93
      %p95 = scmp.ne.s32.totalorder %s83, %s84
      %p96 = scmp.eq.s32.totalorder %s32, 1
      %p97 = por %p95, %p96
      %p99 = scmp.ne.s32.totalorder %s84, %s98
      %p100 = scmp.eq.s32.totalorder %s32, 0
      %p101 = por %p99, %p100
      %s103 = sadd.s32 %s102, 1
      %p106 = scmp.eq.s32.totalorder %s26, 1
      %p107 = scmp.ne.s32.totalorder %s102, %s104
      %p108 = scmp.eq.s32.totalorder %s26, 0
      %p109 = por %p107, %p108
      %p110 = scmp.ne.s32.totalorder %s102, %s104
      %p111 = scmp.eq.s32.totalorder %s31, 1
      %p112 = por %p110, %p111
      %p113 = scmp.ne.s32.totalorder %s104, %s105
      %p114 = scmp.eq.s32.totalorder %s31, 0
      %p115 = por %p113, %p114
      %p116 = scmp.ne.s32.totalorder %s104, %s105
      %p117 = scmp.eq.s32.totalorder %s32, 1
      %p118 = por %p116, %p117
      %p120 = scmp.ne.s32.totalorder %s105, %s119
      %p121 = scmp.eq.s32.totalorder %s32, 0
      %p122 = por %p120, %p121
      %s124 = sadd.s32 %s123, 1
      %p127 = scmp.eq.s32.totalorder %s26, 1
      %p128 = scmp.ne.s32.totalorder %s123, %s125
      %p129 = scmp.eq.s32.totalorder %s26, 0
      %p130 = por %p128, %p129
      %p131 = scmp.ne.s32.totalorder %s123, %s125
      %p132 = scmp.eq.s32.totalorder %s31, 1
      %p133 = por %p131, %p132
      %p134 = scmp.ne.s32.totalorder %s125, %s126
      %p135 = scmp.eq.s32.totalorder %s31, 0
      %p136 = por %p134, %p135
      %p137 = scmp.ne.s32.totalorder %s125, %s126
      %p138 = scmp.eq.s32.totalorder %s32, 1
      %p139 = por %p137, %p138
      %p141 = scmp.ne.s32.totalorder %s126, %s140
      %p142 = scmp.eq.s32.totalorder %s32, 0
      %p143 = por %p141, %p142
      %s145 = sadd.s32 %s144, 1
      %p148 = scmp.eq.s32.totalorder %s26, 1
      %p149 = scmp.ne.s32.totalorder %s144, %s146
      %p150 = scmp.eq.s32.totalorder %s26, 0
      %p151 = por %p149, %p150
      %p152 = scmp.ne.s32.totalorder %s144, %s146
      %p153 = scmp.eq.s32.totalorder %s31, 1
      %p154 = por %p152, %p153
      %p155 = scmp.ne.s32.totalorder %s146, %s147
      %p156 = scmp.eq.s32.totalorder %s31, 0
      %p157 = por %p155, %p156
      %p158 = scmp.ne.s32.totalorder %s146, %s147
      %p159 = scmp.eq.s32.totalorder %s32, 1
      %p160 = por %p158, %p159
      %p162 = scmp.ne.s32.totalorder %s147, %s161
      %p163 = scmp.eq.s32.totalorder %s32, 0
      %p164 = por %p162, %p163
      %s166 = sadd.s32 %s165, 1
      %p169 = scmp.eq.s32.totalorder %s26, 1
      %p170 = scmp.ne.s32.totalorder %s165, %s167
      %p171 = scmp.eq.s32.totalorder %s26, 0
      %p172 = por %p170, %p171
      %p173 = scmp.ne.s32.totalorder %s165, %s167
      %p174 = scmp.eq.s32.totalorder %s31, 1
      %p175 = por %p173, %p174
      %p176 = scmp.ne.s32.totalorder %s167, %s168
      %p177 = scmp.eq.s32.totalorder %s31, 0
      %p178 = por %p176, %p177
      %p179 = scmp.ne.s32.totalorder %s167, %s168
      %p180 = scmp.eq.s32.totalorder %s32, 1
      %p181 = por %p179, %p180
      %p183 = scmp.ne.s32.totalorder %s168, %s182
      %p184 = scmp.eq.s32.totalorder %s32, 0
      %p185 = por %p183, %p184
      %s187 = sadd.s32 %s186, 1
      %p190 = scmp.eq.s32.totalorder %s26, 1
      %p191 = scmp.ne.s32.totalorder %s186, %s188
      %p192 = scmp.eq.s32.totalorder %s26, 0
      %p193 = por %p191, %p192
      %p194 = scmp.ne.s32.totalorder %s186, %s188
      %p195 = scmp.eq.s32.totalorder %s31, 1
      %p196 = por %p194, %p195
      %p197 = scmp.ne.s32.totalorder %s188, %s189
      %p198 = scmp.eq.s32.totalorder %s31, 0
      %p199 = por %p197, %p198
      %p200 = scmp.ne.s32.totalorder %s188, %s189
      %p201 = scmp.eq.s32.totalorder %s32, 1
      %p202 = por %p200, %p201
      %p204 = scmp.ne.s32.totalorder %s189, %s203
      %p205 = scmp.eq.s32.totalorder %s32, 0
      %p206 = por %p204, %p205
      %s208 = sadd.s32 %s207, 1
      %p211 = scmp.eq.s32.totalorder %s26, 1
      %p212 = scmp.ne.s32.totalorder %s207, %s209
      %p213 = scmp.eq.s32.totalorder %s26, 0
      %p214 = por %p212, %p213
      %p215 = scmp.ne.s32.totalorder %s207, %s209
      %p216 = scmp.eq.s32.totalorder %s31, 1
      %p217 = por %p215, %p216
      %p218 = scmp.ne.s32.totalorder %s209, %s210
      %p219 = scmp.eq.s32.totalorder %s31, 0
      %p220 = por %p218, %p219
      %p221 = scmp.ne.s32.totalorder %s209, %s210
      %p222 = scmp.eq.s32.totalorder %s32, 1
      %p223 = por %p221, %p222
      %p225 = scmp.ne.s32.totalorder %s210, %s224
      %p226 = scmp.eq.s32.totalorder %s32, 0
      %p227 = por %p225, %p226
      %s229 = sadd.s32 %s228, 1
      %p232 = scmp.eq.s32.totalorder %s26, 1
      %p233 = scmp.ne.s32.totalorder %s228, %s230
      %p234 = scmp.eq.s32.totalorder %s26, 0
      %p235 = por %p233, %p234
      %p236 = scmp.ne.s32.totalorder %s228, %s230
      %p237 = scmp.eq.s32.totalorder %s31, 1
      %p238 = por %p236, %p237
      %p239 = scmp.ne.s32.totalorder %s230, %s231
      %p240 = scmp.eq.s32.totalorder %s31, 0
      %p241 = por %p239, %p240
      %p242 = scmp.ne.s32.totalorder %s230, %s231
      %p243 = scmp.eq.s32.totalorder %s32, 1
      %p244 = por %p242, %p243
      %p246 = scmp.ne.s32.totalorder %s231, %s245
      %p247 = scmp.eq.s32.totalorder %s32, 0
      %p248 = por %p246, %p247
      %s249 = ssub.s32 %s26, %s33
      %p250 = scmp.eq.s32.totalorder %s249, 0
      %s252 = sadd.s32 %s251, 1
      %s253 = scalar_select %p250, %s251, %s252
      %p256 = pneg %p250
      %p257 = scmp.eq.s32.totalorder %s26, 1
      %p258 = por %p256, %p257
      %p259 = scmp.ne.s32.totalorder %s251, %s254
      %p260 = scmp.eq.s32.totalorder %s26, 0
      %p261 = por %p259, %p260
      %p262 = scmp.ne.s32.totalorder %s251, %s254
      %p263 = scmp.eq.s32.totalorder %s31, 1
      %p264 = por %p262, %p263
      %p265 = scmp.ne.s32.totalorder %s254, %s255
      %p266 = scmp.eq.s32.totalorder %s31, 0
      %p267 = por %p265, %p266
      %p268 = scmp.ne.s32.totalorder %s254, %s255
      %p269 = scmp.eq.s32.totalorder %s32, 1
      %p270 = por %p268, %p269
      %p272 = scmp.ne.s32.totalorder %s255, %s271
      %p273 = scmp.eq.s32.totalorder %s32, 0
      %p274 = por %p272, %p273
      %p275 = scmp.le.s32.totalorder 1, %s26
      %p276 = scmp.lt.s32.totalorder %s26, 3
      %p277 = pnand %p275, %p276
      %p278 = pneg %p277
      // Predicated region
      $region9: #{tpu_custom_call.1} parent=5 // pred_check
        _
      $region10: #{tpu_custom_call.1} parent=5 // pred_check_branch
        %280 = sbr.rel (%p277) target = $region12
      $region11: #{tpu_custom_call.1} parent=5 // pred_region
        %s281 = ssub.s32 %s26, 1
        // Predicated region
        $region13: #{tpu_custom_call.1} parent=11 // pred_check
          %p282 = pneg %p73
        $region14: #{tpu_custom_call.1} parent=11 // pred_check_branch
          %284 = sbr.rel (%p282) target = $region16
        $region15: #{tpu_custom_call.1} parent=11 // pred_region
          %s286 = ssub.s32 2048, 2048
          %287 = vsyncadd [#allocation8], %s286
          %s288 = sshll.u32 [#allocation7], 4
          %s289 = int_to_ptr.vmem [resolvable:$true] %s288
          %294 = dma.hbm_to_vmem [thread:$0]  %s1, 2048, %s289, [#allocation8], 128, 128, 8
        $region16: #{tpu_custom_call.1} parent=11 // pred_fallthru
          _
        // Predicated region
        $region17: #{tpu_custom_call.1} parent=11 // pred_check
          %p295 = pneg %p94
        $region18: #{tpu_custom_call.1} parent=11 // pred_check_branch
          %297 = sbr.rel (%p295) target = $region20
        $region19: #{tpu_custom_call.1} parent=11 // pred_region
          %s299 = ssub.s32 36864, 36864
          %300 = vsyncadd [#allocation8], %s299
          %s301 = sshll.u32 [#allocation9], 4
          %s302 = int_to_ptr.vmem [resolvable:$true] %s301
          %307 = dma.hbm_to_vmem [thread:$0]  %s2, 36864, %s302, [#allocation8], 128, 128, 8
        $region20: #{tpu_custom_call.1} parent=11 // pred_fallthru
          _
        // Predicated region
        $region21: #{tpu_custom_call.1} parent=11 // pred_check
          %p308 = pneg %p115
        $region22: #{tpu_custom_call.1} parent=11 // pred_check_branch
          %310 = sbr.rel (%p308) target = $region24
        $region23: #{tpu_custom_call.1} parent=11 // pred_region
          %s312 = ssub.s32 36864, 36864
          %313 = vsyncadd [#allocation11], %s312
          %s314 = sshll.u32 [#allocation10], 4
          %s315 = int_to_ptr.vmem [resolvable:$true] %s314
          %320 = dma.hbm_to_vmem [thread:$0]  %s3, 36864, %s315, [#allocation11], 128, 128, 8
        $region24: #{tpu_custom_call.1} parent=11 // pred_fallthru
          _
        // Predicated region
        $region25: #{tpu_custom_call.1} parent=11 // pred_check
          %p321 = pneg %p136
        $region26: #{tpu_custom_call.1} parent=11 // pred_check_branch
          %323 = sbr.rel (%p321) target = $region28
        $region27: #{tpu_custom_call.1} parent=11 // pred_region
          %s325 = ssub.s32 64, 64
          %326 = vsyncadd [#allocation11], %s325
          %s328 = sshll.u32 [#allocation12], 4
          %s329 = int_to_ptr.vmem [resolvable:$true] %s328
          %331 = dma.hbm_to_vmem [thread:$0]  %s4, 64, %s329, [#allocation11]
        $region28: #{tpu_custom_call.1} parent=11 // pred_fallthru
          _
        // Predicated region
        $region29: #{tpu_custom_call.1} parent=11 // pred_check
          %p332 = pneg %p157
        $region30: #{tpu_custom_call.1} parent=11 // pred_check_branch
          %334 = sbr.rel (%p332) target = $region32
        $region31: #{tpu_custom_call.1} parent=11 // pred_region
          %s336 = ssub.s32 64, 64
          %337 = vsyncadd [#allocation14], %s336
          %s339 = sshll.u32 [#allocation13], 4
          %s340 = int_to_ptr.vmem [resolvable:$true] %s339
          %342 = dma.hbm_to_vmem [thread:$0]  %s5, 64, %s340, [#allocation14]
        $region32: #{tpu_custom_call.1} parent=11 // pred_fallthru
          _
        // Predicated region
        $region33: #{tpu_custom_call.1} parent=11 // pred_check
          %p343 = pneg %p178
        $region34: #{tpu_custom_call.1} parent=11 // pred_check_branch
          %345 = sbr.rel (%p343) target = $region36
        $region35: #{tpu_custom_call.1} parent=11 // pred_region
          %s347 = ssub.s32 64, 64
          %348 = vsyncadd [#allocation14], %s347
          %s350 = sshll.u32 [#allocation15], 4
          %s351 = int_to_ptr.vmem [resolvable:$true] %s350
          %353 = dma.hbm_to_vmem [thread:$0]  %s6, 64, %s351, [#allocation14]
        $region36: #{tpu_custom_call.1} parent=11 // pred_fallthru
          _
        // Predicated region
        $region37: #{tpu_custom_call.1} parent=11 // pred_check
          %p354 = pneg %p199
        $region38: #{tpu_custom_call.1} parent=11 // pred_check_branch
          %356 = sbr.rel (%p354) target = $region40
        $region39: #{tpu_custom_call.1} parent=11 // pred_region
          %s358 = ssub.s32 64, 64
          %359 = vsyncadd [#allocation17], %s358
          %s361 = sshll.u32 [#allocation16], 4
          %s362 = int_to_ptr.vmem [resolvable:$true] %s361
          %364 = dma.hbm_to_vmem [thread:$0]  %s7, 64, %s362, [#allocation17]
        $region40: #{tpu_custom_call.1} parent=11 // pred_fallthru
          _
        // Predicated region
        $region41: #{tpu_custom_call.1} parent=11 // pred_check
          %p365 = pneg %p220
        $region42: #{tpu_custom_call.1} parent=11 // pred_check_branch
          %367 = sbr.rel (%p365) target = $region44
        $region43: #{tpu_custom_call.1} parent=11 // pred_region
          _
        $region44: #{tpu_custom_call.1} parent=11 // pred_fallthru
          _
        // Predicated region
        $region45: #{tpu_custom_call.1} parent=11 // pred_check
          %p368 = pneg %p241
        $region46: #{tpu_custom_call.1} parent=11 // pred_check_branch
          %370 = sbr.rel (%p368) target = $region48
        $region47: #{tpu_custom_call.1} parent=11 // pred_region
          %s372 = ssub.s32 5120, 5120
          %373 = vsyncadd [#allocation17], %s372
          %s374 = sshll.u32 [#allocation18], 4
          %s375 = int_to_ptr.vmem [resolvable:$true] %s374
          %380 = dma.hbm_to_vmem [thread:$0]  %s9, 5120, %s375, [#allocation17], 256, 256, 16
        $region48: #{tpu_custom_call.1} parent=11 // pred_fallthru
          _
      $region12: #{tpu_custom_call.1} parent=5 // pred_fallthru
        _
      %p381 = scmp.lt.s32.totalorder %s26, 2
      // Predicated region
      $region49: #{tpu_custom_call.1} parent=5 // pred_check
        %p382 = pneg %p381
      $region50: #{tpu_custom_call.1} parent=5 // pred_check_branch
        %384 = sbr.rel (%p382) target = $region52
      $region51: #{tpu_custom_call.1} parent=5 // pred_region
        // Predicated region
        $region53: #{tpu_custom_call.1} parent=51 // pred_check
          %p385 = pneg %p46
        $region54: #{tpu_custom_call.1} parent=51 // pred_check_branch
          %387 = sbr.rel (%p385) target = $region56
        $region55: #{tpu_custom_call.1} parent=51 // pred_region
          %s388 = sand.u32 %s36, 1
          %s389 = scalar_lea.sflag [#allocation5], %s388
          %s390 = sand.u32 %s36, 1
          %s391 = smul.addr %s390, 112
          %s392 = scalar_lea.vmem [#allocation4], %s391
          %s394 = ssub.s32 1792, 1792
          %395 = vsyncadd %s389, %s394
          %s396 = smul.addr %s26, 28
          %s397 = smul.addr %s396, 64
          %s398 = scalar_lea.hbm %s0, %s397
          %s399 = sshll.u32 %s392, 4
          %s400 = int_to_ptr.vmem [resolvable:$true] %s399
          %405 = dma.hbm_to_vmem [thread:$0]  %s398, 1792, %s400, %s389, 64, 64, 4
        $region56: #{tpu_custom_call.1} parent=51 // pred_fallthru
          _
      $region52: #{tpu_custom_call.1} parent=5 // pred_fallthru
        _
      %p406 = scmp.le.s32.totalorder 1, %s26
      %p407 = scmp.lt.s32.totalorder %s26, 3
      %p408 = pnand %p406, %p407
      %p409 = pneg %p408
      // Predicated region
      $region57: #{tpu_custom_call.1} parent=5 // pred_check
        _
      $region58: #{tpu_custom_call.1} parent=5 // pred_check_branch
        %411 = sbr.rel (%p408) target = $region60
      $region59: #{tpu_custom_call.1} parent=5 // pred_region
        %s412 = ssub.s32 %s26, 1
        %s413 = sand.u32 %s39, 1
        %s414 = scalar_lea.sflag [#allocation5], %s413
        %s415 = sand.u32 %s39, 1
        %s416 = smul.addr %s415, 112
        %s417 = scalar_lea.vmem [#allocation4], %s416
        // Predicated region
        $region61: #{tpu_custom_call.1} parent=59 // pred_check
          %p418 = pneg %p52
        $region62: #{tpu_custom_call.1} parent=59 // pred_check_branch
          %420 = sbr.rel (%p418) target = $region64
        $region63: #{tpu_custom_call.1} parent=59 // pred_region
          %421 = dma.done %s414, 1792
        $region64: #{tpu_custom_call.1} parent=59 // pred_fallthru
          _
        // Predicated region
        $region65: #{tpu_custom_call.1} parent=59 // pred_check
          %p422 = pneg %p73
        $region66: #{tpu_custom_call.1} parent=59 // pred_check_branch
          %424 = sbr.rel (%p422) target = $region68
        $region67: #{tpu_custom_call.1} parent=59 // pred_region
          %425 = dma.done [#allocation8], 2048
        $region68: #{tpu_custom_call.1} parent=59 // pred_fallthru
          _
        // Predicated region
        $region69: #{tpu_custom_call.1} parent=59 // pred_check
          %p426 = pneg %p94
        $region70: #{tpu_custom_call.1} parent=59 // pred_check_branch
          %428 = sbr.rel (%p426) target = $region72
        $region71: #{tpu_custom_call.1} parent=59 // pred_region
          %429 = dma.done [#allocation8], 36864
        $region72: #{tpu_custom_call.1} parent=59 // pred_fallthru
          _
        // Predicated region
        $region73: #{tpu_custom_call.1} parent=59 // pred_check
          %p430 = pneg %p115
        $region74: #{tpu_custom_call.1} parent=59 // pred_check_branch
          %432 = sbr.rel (%p430) target = $region76
        $region75: #{tpu_custom_call.1} parent=59 // pred_region
          %433 = dma.done [#allocation11], 36864
        $region76: #{tpu_custom_call.1} parent=59 // pred_fallthru
          _
        // Predicated region
        $region77: #{tpu_custom_call.1} parent=59 // pred_check
          %p434 = pneg %p136
        $region78: #{tpu_custom_call.1} parent=59 // pred_check_branch
          %436 = sbr.rel (%p434) target = $region80
        $region79: #{tpu_custom_call.1} parent=59 // pred_region
          %437 = dma.done [#allocation11], 64
        $region80: #{tpu_custom_call.1} parent=59 // pred_fallthru
          _
        // Predicated region
        $region81: #{tpu_custom_call.1} parent=59 // pred_check
          %p438 = pneg %p157
        $region82: #{tpu_custom_call.1} parent=59 // pred_check_branch
          %440 = sbr.rel (%p438) target = $region84
        $region83: #{tpu_custom_call.1} parent=59 // pred_region
          %441 = dma.done [#allocation14], 64
        $region84: #{tpu_custom_call.1} parent=59 // pred_fallthru
          _
        // Predicated region
        $region85: #{tpu_custom_call.1} parent=59 // pred_check
          %p442 = pneg %p178
        $region86: #{tpu_custom_call.1} parent=59 // pred_check_branch
          %444 = sbr.rel (%p442) target = $region88
        $region87: #{tpu_custom_call.1} parent=59 // pred_region
          %445 = dma.done [#allocation14], 64
        $region88: #{tpu_custom_call.1} parent=59 // pred_fallthru
          _
        // Predicated region
        $region89: #{tpu_custom_call.1} parent=59 // pred_check
          %p446 = pneg %p199
        $region90: #{tpu_custom_call.1} parent=59 // pred_check_branch
          %448 = sbr.rel (%p446) target = $region92
        $region91: #{tpu_custom_call.1} parent=59 // pred_region
          %449 = dma.done [#allocation17], 64
        $region92: #{tpu_custom_call.1} parent=59 // pred_fallthru
          _
        // Predicated region
        $region93: #{tpu_custom_call.1} parent=59 // pred_check
          %p450 = pneg %p241
        $region94: #{tpu_custom_call.1} parent=59 // pred_check_branch
          %452 = sbr.rel (%p450) target = $region96
        $region95: #{tpu_custom_call.1} parent=59 // pred_region
          %453 = dma.done [#allocation17], 5120
        $region96: #{tpu_custom_call.1} parent=59 // pred_fallthru
          _
        %s454 = sand.u32 %s39, 1
        %s455 = scalar_lea.sflag [#allocation5], %s454
        %s456 = sand.u32 %s39, 1
        %s457 = smul.addr %s456, 112
        %s458 = scalar_lea.vmem [#allocation4], %s457
        %p459 = pneg %p52
        %p460 = pneg %p49
        %p461 = pneg %p73
        %p462 = pneg %p70
        %p463 = pneg %p94
        %p464 = pneg %p91
        %p465 = pneg %p115
        %p466 = pneg %p112
        %p467 = pneg %p136
        %p468 = pneg %p133
        %p469 = pneg %p157
        %p470 = pneg %p154
        %p471 = pneg %p178
        %p472 = pneg %p175
        %p473 = pneg %p199
        %p474 = pneg %p196
        %p475 = pneg %p220
        %p476 = pneg %p217
        %p477 = pneg %p241
        %p478 = pneg %p238
        %p479 = pneg %p267
        %p480 = pneg %p264
        %s481 = sand.u32 %s254, 1
        %s482 = scalar_lea.sflag [#allocation6], %s481
        %s483 = sand.u32 %s254, 1
        %s484 = smul.addr %s483, 8
        %s485 = scalar_lea.vmem [#allocation19], %s484
        %v487 = vld [vmem:[%s417] sm:$0xf]
        %v488 = vld [vmem:[%s417 + $0x4] sm:$0xf]
        %v489 = vld [vmem:[%s417 + $0x8] sm:$0xf]
        %v490 = vld [vmem:[%s417 + $0xc] sm:$0xf]
        %v491 = vld [vmem:[%s417 + $0x10] sm:$0xf]
        %v492 = vld [vmem:[%s417 + $0x14] sm:$0xf]
        %v493 = vld [vmem:[%s417 + $0x18] sm:$0xf]
        %v494 = vld [vmem:[%s417 + $0x1c] sm:$0xf]
        %v495 = vld [vmem:[%s417 + $0x20] sm:$0xf]
        %v496 = vld [vmem:[%s417 + $0x24] sm:$0xf]
        %v497 = vld [vmem:[%s417 + $0x28] sm:$0xf]
        %v498 = vld [vmem:[%s417 + $0x2c] sm:$0xf]
        %v499 = vld [vmem:[%s417 + $0x30] sm:$0xf]
        %v500 = vld [vmem:[%s417 + $0x34] sm:$0xf]
        %v501 = vld [vmem:[%s417 + $0x38] sm:$0xf]
        %v502 = vld [vmem:[%s417 + $0x3c] sm:$0xf]
        %v503 = vld [vmem:[%s417 + $0x40] sm:$0xf]
        %v504 = vld [vmem:[%s417 + $0x44] sm:$0xf]
        %v505 = vld [vmem:[%s417 + $0x48] sm:$0xf]
        %v506 = vld [vmem:[%s417 + $0x4c] sm:$0xf]
        %v507 = vld [vmem:[%s417 + $0x50] sm:$0xf]
        %v508 = vld [vmem:[%s417 + $0x54] sm:$0xf]
        %v509 = vld [vmem:[%s417 + $0x58] sm:$0xf]
        %v510 = vld [vmem:[%s417 + $0x5c] sm:$0xf]
        %v511 = vld [vmem:[%s417 + $0x60] sm:$0xf]
        %v512 = vld [vmem:[%s417 + $0x64] sm:$0xf]
        %v513 = vld [vmem:[%s417 + $0x68] sm:$0xf]
        %v514 = vld [vmem:[%s417 + $0x6c] sm:$0xf]
        %v515 = vld [vmem:[#allocation7] sm:$0xff]
        %v516 = vld [vmem:[#allocation7 + $0x8] sm:$0xff]
        %v517 = vld [vmem:[#allocation7 + $0x10] sm:$0xff]
        %v518 = vld [vmem:[#allocation7 + $0x18] sm:$0xff]
        %v519 = vld [vmem:[#allocation7 + $0x20] sm:$0xff]
        %v520 = vld [vmem:[#allocation7 + $0x28] sm:$0xff]
        %v521 = vld [vmem:[#allocation7 + $0x30] sm:$0xff]
        %v522 = vld [vmem:[#allocation7 + $0x38] sm:$0xff]
        %v523 = vld [vmem:[#allocation7 + $0x40] sm:$0xff]
        %v524 = vld [vmem:[#allocation7 + $0x48] sm:$0xff]
        %v525 = vld [vmem:[#allocation7 + $0x50] sm:$0xff]
        %v526 = vld [vmem:[#allocation7 + $0x58] sm:$0xff]
        %v527 = vld [vmem:[#allocation7 + $0x60] sm:$0xff]
        %v528 = vld [vmem:[#allocation7 + $0x68] sm:$0xff]
        %v529 = vld [vmem:[#allocation7 + $0x70] sm:$0xff]
        %v530 = vld [vmem:[#allocation7 + $0x78] sm:$0xff]
        %v559 = vunpack.c.l.b16 %v487
        %v560 = vunpack.c.l.b16 %v488
        %v561 = vunpack.c.l.b16 %v489
        %v562 = vunpack.c.l.b16 %v490
        %v563 = vunpack.c.l.b16 %v491
        %v564 = vunpack.c.l.b16 %v492
        %v565 = vunpack.c.l.b16 %v493
        %v566 = vunpack.c.l.b16 %v494
        %v567 = vunpack.c.l.b16 %v495
        %v568 = vunpack.c.l.b16 %v496
        %v569 = vunpack.c.l.b16 %v497
        %v570 = vunpack.c.l.b16 %v498
        %v571 = vunpack.c.l.b16 %v499
        %v572 = vunpack.c.l.b16 %v500
        %v573 = vunpack.c.l.b16 %v501
        %v574 = vunpack.c.l.b16 %v502
        %v575 = vunpack.c.l.b16 %v503
        %v576 = vunpack.c.l.b16 %v504
        %v577 = vunpack.c.l.b16 %v505
        %v578 = vunpack.c.l.b16 %v506
        %v579 = vunpack.c.l.b16 %v507
        %v580 = vunpack.c.l.b16 %v508
        %v581 = vunpack.c.l.b16 %v509
        %v582 = vunpack.c.l.b16 %v510
        %v583 = vunpack.c.l.b16 %v511
        %v584 = vunpack.c.l.b16 %v512
        %v585 = vunpack.c.l.b16 %v513
        %v586 = vunpack.c.l.b16 %v514
        %v587 = vpack.c.b16 %v560, %v559
        %v588 = vpack.c.b16 %v562, %v561
        %v589 = vpack.c.b16 %v564, %v563
        %v590 = vpack.c.b16 %v566, %v565
        %v591 = vpack.c.b16 %v568, %v567
        %v592 = vpack.c.b16 %v570, %v569
        %v593 = vpack.c.b16 %v572, %v571
        %v594 = vpack.c.b16 %v574, %v573
        %v595 = vpack.c.b16 %v576, %v575
        %v596 = vpack.c.b16 %v578, %v577
        %v597 = vpack.c.b16 %v580, %v579
        %v598 = vpack.c.b16 %v582, %v581
        %v599 = vpack.c.b16 %v584, %v583
        %v600 = vpack.c.b16 %v586, %v585
        %v631 = vunpack.c.l.b16 %v515
        %v632 = vunpack.c.h.b16 %v515
        %v633 = vunpack.c.l.b16 %v516
        %v634 = vunpack.c.h.b16 %v516
        %v635 = vunpack.c.l.b16 %v517
        %v636 = vunpack.c.h.b16 %v517
        %v637 = vunpack.c.l.b16 %v518
        %v638 = vunpack.c.h.b16 %v518
        %v639 = vunpack.c.l.b16 %v519
        %v640 = vunpack.c.h.b16 %v519
        %v641 = vunpack.c.l.b16 %v520
        %v642 = vunpack.c.h.b16 %v520
        %v643 = vunpack.c.l.b16 %v521
        %v644 = vunpack.c.h.b16 %v521
        %v645 = vunpack.c.l.b16 %v522
        %v646 = vunpack.c.h.b16 %v522
        %v647 = vunpack.c.l.b16 %v523
        %v648 = vunpack.c.h.b16 %v523
        %v649 = vunpack.c.l.b16 %v524
        %v650 = vunpack.c.h.b16 %v524
        %v651 = vunpack.c.l.b16 %v525
        %v652 = vunpack.c.h.b16 %v525
        %v653 = vunpack.c.l.b16 %v526
        %v654 = vunpack.c.h.b16 %v526
        %v655 = vunpack.c.l.b16 %v527
        %v656 = vunpack.c.h.b16 %v527
        %v657 = vunpack.c.l.b16 %v528
        %v658 = vunpack.c.h.b16 %v528
        %v659 = vunpack.c.l.b16 %v529
        %v660 = vunpack.c.h.b16 %v529
        %v661 = vunpack.c.l.b16 %v530
        %v662 = vunpack.c.h.b16 %v530
        %v663 = vpack.c.b16 %v633, %v631
        %v664 = vpack.c.b16 %v634, %v632
        %v665 = vpack.c.b16 %v637, %v635
        %v666 = vpack.c.b16 %v638, %v636
        %v667 = vpack.c.b16 %v641, %v639
        %v668 = vpack.c.b16 %v642, %v640
        %v669 = vpack.c.b16 %v645, %v643
        %v670 = vpack.c.b16 %v646, %v644
        %v671 = vpack.c.b16 %v649, %v647
        %v672 = vpack.c.b16 %v650, %v648
        %v673 = vpack.c.b16 %v653, %v651
        %v674 = vpack.c.b16 %v654, %v652
        %v675 = vpack.c.b16 %v657, %v655
        %v676 = vpack.c.b16 %v658, %v656
        %v677 = vpack.c.b16 %v661, %v659
        %v678 = vpack.c.b16 %v662, %v660
        %695 = vmatprep.subr.bf16.mxu0 %v664
        %696 = vmatpush1.bf16.msra.mxu0 %v663
        %697 = vmatprep.subr.bf16.mxu0 %v666
        %698 = vmatpush1.bf16.msra.mxu0 %v665
        %699 = vmatprep.subr.bf16.mxu0 %v668
        %700 = vmatpush1.bf16.msra.mxu0 %v667
        %701 = vmatprep.subr.bf16.mxu0 %v670
        %702 = vmatpush1.bf16.msra.mxu0 %v669
        %703 = vmatprep.subr.bf16.mxu0 %v672
        %704 = vmatpush1.bf16.msra.mxu0 %v671
        %705 = vmatprep.subr.bf16.mxu0 %v674
        %706 = vmatpush1.bf16.msra.mxu0 %v673
        %707 = vmatprep.subr.bf16.mxu0 %v676
        %708 = vmatpush1.bf16.msra.mxu0 %v675
        %709 = vmatprep.subr.bf16.mxu0 %v678
        %710 = vmatpush1.bf16.msra.mxu0 %v677
        %711 = vmatprep.subr.bf16.mxu0 0
        %712 = vmatpush1.bf16.msra.mxu0 0
        %713 = vmatprep.subr.bf16.mxu0 0
        %714 = vmatpush1.bf16.msra.mxu0 0
        %715 = vmatprep.subr.bf16.mxu0 0
        %716 = vmatpush1.bf16.msra.mxu0 0
        %717 = vmatprep.subr.bf16.mxu0 0
        %718 = vmatpush1.bf16.msra.mxu0 0
        %719 = vmatprep.subr.bf16.mxu0 0
        %720 = vmatpush1.bf16.msra.mxu0 0
        %721 = vmatprep.subr.bf16.mxu0 0
        %722 = vmatpush1.bf16.msra.mxu0 0
        %723 = vmatprep.subr.bf16.mxu0 0
        %724 = vmatpush1.bf16.msra.mxu0 0
        %725 = vmatprep.subr.bf16.mxu0 0
        %726 = vmatpush1.bf16.msra.mxu0 0
        %727 = vmatprep.mubr.bf16.mxu0 0
        %728 = vmatmul.mubr.bf16.gmra.mrb[0].mxu0 %v587
        %v729 = vpop.f32.mrb[0].mxu0
        %v730 = vadd.f32 0.0, %v729
        %v731 = vpop.f32.mrb[0].mxu0
        %v732 = vadd.f32 0.0, %v731
        %v733 = vpop.f32.mrb[0].mxu0
        %v734 = vadd.f32 0.0, %v733
        %v735 = vpop.f32.mrb[0].mxu0
        %v736 = vadd.f32 0.0, %v735
        %737 = vmatprep.mubr.bf16.mxu0 0
        %738 = vmatmul.mubr.bf16.gmra.mrb[0].mxu0 %v588
        %v739 = vpop.f32.mrb[0].mxu0
        %v740 = vadd.f32 0.0, %v739
        %v741 = vpop.f32.mrb[0].mxu0
        %v742 = vadd.f32 0.0, %v741
        %v743 = vpop.f32.mrb[0].mxu0
        %v744 = vadd.f32 0.0, %v743
        %v745 = vpop.f32.mrb[0].mxu0
        %v746 = vadd.f32 0.0, %v745
        %747 = vmatprep.mubr.bf16.mxu0 0
        %748 = vmatmul.mubr.bf16.gmra.mrb[0].mxu0 %v589
        %v749 = vpop.f32.mrb[0].mxu0
        %v750 = vadd.f32 0.0, %v749
        %v751 = vpop.f32.mrb[0].mxu0
        %v752 = vadd.f32 0.0, %v751
        %v753 = vpop.f32.mrb[0].mxu0
        %v754 = vadd.f32 0.0, %v753
        %v755 = vpop.f32.mrb[0].mxu0
        %v756 = vadd.f32 0.0, %v755
        %757 = vmatprep.mubr.bf16.mxu0 0
        %758 = vmatmul.mubr.bf16.gmra.mrb[0].mxu0 %v590
        %v759 = vpop.f32.mrb[0].mxu0
        %v760 = vadd.f32 0.0, %v759
        %v761 = vpop.f32.mrb[0].mxu0
        %v762 = vadd.f32 0.0, %v761
        %v763 = vpop.f32.mrb[0].mxu0
        %v764 = vadd.f32 0.0, %v763
        %v765 = vpop.f32.mrb[0].mxu0
        %v766 = vadd.f32 0.0, %v765
        %767 = vmatprep.mubr.bf16.mxu0 0
        %768 = vmatmul.mubr.bf16.gmra.mrb[0].mxu0 %v591
        %v769 = vpop.f32.mrb[0].mxu0
        %v770 = vadd.f32 0.0, %v769
        %v771 = vpop.f32.mrb[0].mxu0
        %v772 = vadd.f32 0.0, %v771
        %v773 = vpop.f32.mrb[0].mxu0
        %v774 = vadd.f32 0.0, %v773
        %v775 = vpop.f32.mrb[0].mxu0
        %v776 = vadd.f32 0.0, %v775
        %777 = vmatprep.mubr.bf16.mxu0 0
        %778 = vmatmul.mubr.bf16.gmra.mrb[0].mxu0 %v592
        %v779 = vpop.f32.mrb[0].mxu0
        %v780 = vadd.f32 0.0, %v779
        %v781 = vpop.f32.mrb[0].mxu0
        %v782 = vadd.f32 0.0, %v781
        %v783 = vpop.f32.mrb[0].mxu0
        %v784 = vadd.f32 0.0, %v783
        %v785 = vpop.f32.mrb[0].mxu0
        %v786 = vadd.f32 0.0, %v785
        %787 = vmatprep.mubr.bf16.mxu0 0
        %788 = vmatmul.mubr.bf16.gmra.mrb[0].mxu0 %v593
        %v789 = vpop.f32.mrb[0].mxu0
        %v790 = vadd.f32 0.0, %v789
        %v791 = vpop.f32.mrb[0].mxu0
        %v792 = vadd.f32 0.0, %v791
        %v793 = vpop.f32.mrb[0].mxu0
        %v794 = vadd.f32 0.0, %v793
        %v795 = vpop.f32.mrb[0].mxu0
        %v796 = vadd.f32 0.0, %v795
        %797 = vmatprep.mubr.bf16.mxu0 0
        %798 = vmatmul.mubr.bf16.gmra.mrb[0].mxu0 %v594
        %v799 = vpop.f32.mrb[0].mxu0
        %v800 = vadd.f32 0.0, %v799
        %v801 = vpop.f32.mrb[0].mxu0
        %v802 = vadd.f32 0.0, %v801
        %v803 = vpop.f32.mrb[0].mxu0
        %v804 = vadd.f32 0.0, %v803
        %v805 = vpop.f32.mrb[0].mxu0
        %v806 = vadd.f32 0.0, %v805
        %807 = vmatprep.mubr.bf16.mxu0 0
        %808 = vmatmul.mubr.bf16.gmra.mrb[0].mxu0 %v595
        %v809 = vpop.f32.mrb[0].mxu0
        %v810 = vadd.f32 0.0, %v809
        %v811 = vpop.f32.mrb[0].mxu0
        %v812 = vadd.f32 0.0, %v811
        %v813 = vpop.f32.mrb[0].mxu0
        %v814 = vadd.f32 0.0, %v813
        %v815 = vpop.f32.mrb[0].mxu0
        %v816 = vadd.f32 0.0, %v815
        %817 = vmatprep.mubr.bf16.mxu0 0
        %818 = vmatmul.mubr.bf16.gmra.mrb[0].mxu0 %v596
        %v819 = vpop.f32.mrb[0].mxu0
        %v820 = vadd.f32 0.0, %v819
        %v821 = vpop.f32.mrb[0].mxu0
        %v822 = vadd.f32 0.0, %v821
        %v823 = vpop.f32.mrb[0].mxu0
        %v824 = vadd.f32 0.0, %v823
        %v825 = vpop.f32.mrb[0].mxu0
        %v826 = vadd.f32 0.0, %v825
        %827 = vmatprep.mubr.bf16.mxu0 0
        %828 = vmatmul.mubr.bf16.gmra.mrb[0].mxu0 %v597
        %v829 = vpop.f32.mrb[0].mxu0
        %v830 = vadd.f32 0.0, %v829
        %v831 = vpop.f32.mrb[0].mxu0
        %v832 = vadd.f32 0.0, %v831
        %v833 = vpop.f32.mrb[0].mxu0
        %v834 = vadd.f32 0.0, %v833
        %v835 = vpop.f32.mrb[0].mxu0
        %v836 = vadd.f32 0.0, %v835
        %837 = vmatprep.mubr.bf16.mxu0 0
        %838 = vmatmul.mubr.bf16.gmra.mrb[0].mxu0 %v598
        %v839 = vpop.f32.mrb[0].mxu0
        %v840 = vadd.f32 0.0, %v839
        %v841 = vpop.f32.mrb[0].mxu0
        %v842 = vadd.f32 0.0, %v841
        %v843 = vpop.f32.mrb[0].mxu0
        %v844 = vadd.f32 0.0, %v843
        %v845 = vpop.f32.mrb[0].mxu0
        %v846 = vadd.f32 0.0, %v845
        %847 = vmatprep.mubr.bf16.mxu0 0
        %848 = vmatmul.mubr.bf16.gmra.mrb[0].mxu0 %v599
        %v849 = vpop.f32.mrb[0].mxu0
        %v850 = vadd.f32 0.0, %v849
        %v851 = vpop.f32.mrb[0].mxu0
        %v852 = vadd.f32 0.0, %v851
        %v853 = vpop.f32.mrb[0].mxu0
        %v854 = vadd.f32 0.0, %v853
        %v855 = vpop.f32.mrb[0].mxu0
        %v856 = vadd.f32 0.0, %v855
        %857 = vmatprep.mubr.bf16.mxu0 0
        %858 = vmatmul.mubr.bf16.gmra.mrb[0].mxu0 %v600
        %v859 = vpop.f32.mrb[0].mxu0
        %v860 = vadd.f32 0.0, %v859
        %v861 = vpop.f32.mrb[0].mxu0
        %v862 = vadd.f32 0.0, %v861
        %v863 = vpop.f32.mrb[0].mxu0
        %v864 = vadd.f32 0.0, %v863
        %v865 = vpop.f32.mrb[0].mxu0
        %v866 = vadd.f32 0.0, %v865
        %867 = vdwg.mxu0
        %v868 = vld [vmem:[#allocation13] ss:$2 sm:$0x3]
        %v870 = vlaneseq
        %v871 = vshrl.u32 %v870, 7
        %v872 = vsub.s32 0, %v871
        %v873 = vrot.slane %v868, %v872
        %v874 = vlaneseq
        %v875 = vshrl.u32 %v874, 7
        %v876 = vsub.s32 1, %v875
        %v877 = vrot.slane %v868, %v876
        %v880 = vmul.f32 %v730, %v873
        %v881 = vmul.f32 %v732, %v877
        %v882 = vmul.f32 %v734, %v873
        %v883 = vmul.f32 %v736, %v877
        %v884 = vmul.f32 %v740, %v873
        %v885 = vmul.f32 %v742, %v877
        %v886 = vmul.f32 %v744, %v873
        %v887 = vmul.f32 %v746, %v877
        %v888 = vmul.f32 %v750, %v873
        %v889 = vmul.f32 %v752, %v877
        %v890 = vmul.f32 %v754, %v873
        %v891 = vmul.f32 %v756, %v877
        %v892 = vmul.f32 %v760, %v873
        %v893 = vmul.f32 %v762, %v877
        %v894 = vmul.f32 %v764, %v873
        %v895 = vmul.f32 %v766, %v877
        %v896 = vmul.f32 %v770, %v873
        %v897 = vmul.f32 %v772, %v877
        %v898 = vmul.f32 %v774, %v873
        %v899 = vmul.f32 %v776, %v877
        %v900 = vmul.f32 %v780, %v873
        %v901 = vmul.f32 %v782, %v877
        %v902 = vmul.f32 %v784, %v873
        %v903 = vmul.f32 %v786, %v877
        %v904 = vmul.f32 %v790, %v873
        %v905 = vmul.f32 %v792, %v877
        %v906 = vmul.f32 %v794, %v873
        %v907 = vmul.f32 %v796, %v877
        %v908 = vmul.f32 %v800, %v873
        %v909 = vmul.f32 %v802, %v877
        %v910 = vmul.f32 %v804, %v873
        %v911 = vmul.f32 %v806, %v877
        %v912 = vmul.f32 %v810, %v873
        %v913 = vmul.f32 %v812, %v877
        %v914 = vmul.f32 %v814, %v873
        %v915 = vmul.f32 %v816, %v877
        %v916 = vmul.f32 %v820, %v873
        %v917 = vmul.f32 %v822, %v877
        %v918 = vmul.f32 %v824, %v873
        %v919 = vmul.f32 %v826, %v877
        %v920 = vmul.f32 %v830, %v873
        %v921 = vmul.f32 %v832, %v877
        %v922 = vmul.f32 %v834, %v873
        %v923 = vmul.f32 %v836, %v877
        %v924 = vmul.f32 %v840, %v873
        %v925 = vmul.f32 %v842, %v877
        %v926 = vmul.f32 %v844, %v873
        %v927 = vmul.f32 %v846, %v877
        %v928 = vmul.f32 %v850, %v873
        %v929 = vmul.f32 %v852, %v877
        %v930 = vmul.f32 %v854, %v873
        %v931 = vmul.f32 %v856, %v877
        %v932 = vmul.f32 %v860, %v873
        %v933 = vmul.f32 %v862, %v877
        %v934 = vmul.f32 %v864, %v873
        %v935 = vmul.f32 %v866, %v877
        %s936 = scalar_lea.vmem [#allocation13], 1
        %v937 = vld [vmem:[%s936] ss:$2 sm:$0x3]
        %v939 = vlaneseq
        %v940 = vshrl.u32 %v939, 7
        %v941 = vsub.s32 0, %v940
        %v942 = vrot.slane %v937, %v941
        %v943 = vlaneseq
        %v944 = vshrl.u32 %v943, 7
        %v945 = vsub.s32 1, %v944
        %v946 = vrot.slane %v937, %v945
        %v949 = vadd.f32 %v880, %v942
        %v950 = vadd.f32 %v881, %v946
        %v951 = vadd.f32 %v882, %v942
        %v952 = vadd.f32 %v883, %v946
        %v953 = vadd.f32 %v884, %v942
        %v954 = vadd.f32 %v885, %v946
        %v955 = vadd.f32 %v886, %v942
        %v956 = vadd.f32 %v887, %v946
        %v957 = vadd.f32 %v888, %v942
        %v958 = vadd.f32 %v889, %v946
        %v959 = vadd.f32 %v890, %v942
        %v960 = vadd.f32 %v891, %v946
        %v961 = vadd.f32 %v892, %v942
        %v962 = vadd.f32 %v893, %v946
        %v963 = vadd.f32 %v894, %v942
        %v964 = vadd.f32 %v895, %v946
        %v965 = vadd.f32 %v896, %v942
        %v966 = vadd.f32 %v897, %v946
        %v967 = vadd.f32 %v898, %v942
        %v968 = vadd.f32 %v899, %v946
        %v969 = vadd.f32 %v900, %v942
        %v970 = vadd.f32 %v901, %v946
        %v971 = vadd.f32 %v902, %v942
        %v972 = vadd.f32 %v903, %v946
        %v973 = vadd.f32 %v904, %v942
        %v974 = vadd.f32 %v905, %v946
        %v975 = vadd.f32 %v906, %v942
        %v976 = vadd.f32 %v907, %v946
        %v977 = vadd.f32 %v908, %v942
        %v978 = vadd.f32 %v909, %v946
        %v979 = vadd.f32 %v910, %v942
        %v980 = vadd.f32 %v911, %v946
        %v981 = vadd.f32 %v912, %v942
        %v982 = vadd.f32 %v913, %v946
        %v983 = vadd.f32 %v914, %v942
        %v984 = vadd.f32 %v915, %v946
        %v985 = vadd.f32 %v916, %v942
        %v986 = vadd.f32 %v917, %v946
        %v987 = vadd.f32 %v918, %v942
        %v988 = vadd.f32 %v919, %v946
        %v989 = vadd.f32 %v920, %v942
        %v990 = vadd.f32 %v921, %v946
        %v991 = vadd.f32 %v922, %v942
        %v992 = vadd.f32 %v923, %v946
        %v993 = vadd.f32 %v924, %v942
        %v994 = vadd.f32 %v925, %v946
        %v995 = vadd.f32 %v926, %v942
        %v996 = vadd.f32 %v927, %v946
        %v997 = vadd.f32 %v928, %v942
        %v998 = vadd.f32 %v929, %v946
        %v999 = vadd.f32 %v930, %v942
        %v1000 = vadd.f32 %v931, %v946
        %v1001 = vadd.f32 %v932, %v942
        %v1002 = vadd.f32 %v933, %v946
        %v1003 = vadd.f32 %v934, %v942
        %v1004 = vadd.f32 %v935, %v946
        %vm1005 = vcmp.ge.f32.partialorder %v949, 0.0
        %vm1006 = vcmp.ge.f32.partialorder %v950, 0.0
        %vm1007 = vcmp.ge.f32.partialorder %v951, 0.0
        %vm1008 = vcmp.ge.f32.partialorder %v952, 0.0
        %vm1009 = vcmp.ge.f32.partialorder %v953, 0.0
        %vm1010 = vcmp.ge.f32.partialorder %v954, 0.0
        %vm1011 = vcmp.ge.f32.partialorder %v955, 0.0
        %vm1012 = vcmp.ge.f32.partialorder %v956, 0.0
        %vm1013 = vcmp.ge.f32.partialorder %v957, 0.0
        %vm1014 = vcmp.ge.f32.partialorder %v958, 0.0
        %vm1015 = vcmp.ge.f32.partialorder %v959, 0.0
        %vm1016 = vcmp.ge.f32.partialorder %v960, 0.0
        %vm1017 = vcmp.ge.f32.partialorder %v961, 0.0
        %vm1018 = vcmp.ge.f32.partialorder %v962, 0.0
        %vm1019 = vcmp.ge.f32.partialorder %v963, 0.0
        %vm1020 = vcmp.ge.f32.partialorder %v964, 0.0
        %vm1021 = vcmp.ge.f32.partialorder %v965, 0.0
        %vm1022 = vcmp.ge.f32.partialorder %v966, 0.0
        %vm1023 = vcmp.ge.f32.partialorder %v967, 0.0
        %vm1024 = vcmp.ge.f32.partialorder %v968, 0.0
        %vm1025 = vcmp.ge.f32.partialorder %v969, 0.0
        %vm1026 = vcmp.ge.f32.partialorder %v970, 0.0
        %vm1027 = vcmp.ge.f32.partialorder %v971, 0.0
        %vm1028 = vcmp.ge.f32.partialorder %v972, 0.0
        %vm1029 = vcmp.ge.f32.partialorder %v973, 0.0
        %vm1030 = vcmp.ge.f32.partialorder %v974, 0.0
        %vm1031 = vcmp.ge.f32.partialorder %v975, 0.0
        %vm1032 = vcmp.ge.f32.partialorder %v976, 0.0
        %vm1033 = vcmp.ge.f32.partialorder %v977, 0.0
        %vm1034 = vcmp.ge.f32.partialorder %v978, 0.0
        %vm1035 = vcmp.ge.f32.partialorder %v979, 0.0
        %vm1036 = vcmp.ge.f32.partialorder %v980, 0.0
        %vm1037 = vcmp.ge.f32.partialorder %v981, 0.0
        %vm1038 = vcmp.ge.f32.partialorder %v982, 0.0
        %vm1039 = vcmp.ge.f32.partialorder %v983, 0.0
        %vm1040 = vcmp.ge.f32.partialorder %v984, 0.0
        %vm1041 = vcmp.ge.f32.partialorder %v985, 0.0
        %vm1042 = vcmp.ge.f32.partialorder %v986, 0.0
        %vm1043 = vcmp.ge.f32.partialorder %v987, 0.0
        %vm1044 = vcmp.ge.f32.partialorder %v988, 0.0
        %vm1045 = vcmp.ge.f32.partialorder %v989, 0.0
        %vm1046 = vcmp.ge.f32.partialorder %v990, 0.0
        %vm1047 = vcmp.ge.f32.partialorder %v991, 0.0
        %vm1048 = vcmp.ge.f32.partialorder %v992, 0.0
        %vm1049 = vcmp.ge.f32.partialorder %v993, 0.0
        %vm1050 = vcmp.ge.f32.partialorder %v994, 0.0
        %vm1051 = vcmp.ge.f32.partialorder %v995, 0.0
        %vm1052 = vcmp.ge.f32.partialorder %v996, 0.0
        %vm1053 = vcmp.ge.f32.partialorder %v997, 0.0
        %vm1054 = vcmp.ge.f32.partialorder %v998, 0.0
        %vm1055 = vcmp.ge.f32.partialorder %v999, 0.0
        %vm1056 = vcmp.ge.f32.partialorder %v1000, 0.0
        %vm1057 = vcmp.ge.f32.partialorder %v1001, 0.0
        %vm1058 = vcmp.ge.f32.partialorder %v1002, 0.0
        %vm1059 = vcmp.ge.f32.partialorder %v1003, 0.0
        %vm1060 = vcmp.ge.f32.partialorder %v1004, 0.0
        %v1061 = vmul.f32 %v949, 0.0001
        %v1062 = vmul.f32 %v950, 0.0001
        %v1063 = vmul.f32 %v951, 0.0001
        %v1064 = vmul.f32 %v952, 0.0001
        %v1065 = vmul.f32 %v953, 0.0001
        %v1066 = vmul.f32 %v954, 0.0001
        %v1067 = vmul.f32 %v955, 0.0001
        %v1068 = vmul.f32 %v956, 0.0001
        %v1069 = vmul.f32 %v957, 0.0001
        %v1070 = vmul.f32 %v958, 0.0001
        %v1071 = vmul.f32 %v959, 0.0001
        %v1072 = vmul.f32 %v960, 0.0001
        %v1073 = vmul.f32 %v961, 0.0001
        %v1074 = vmul.f32 %v962, 0.0001
        %v1075 = vmul.f32 %v963, 0.0001
        %v1076 = vmul.f32 %v964, 0.0001
        %v1077 = vmul.f32 %v965, 0.0001
        %v1078 = vmul.f32 %v966, 0.0001
        %v1079 = vmul.f32 %v967, 0.0001
        %v1080 = vmul.f32 %v968, 0.0001
        %v1081 = vmul.f32 %v969, 0.0001
        %v1082 = vmul.f32 %v970, 0.0001
        %v1083 = vmul.f32 %v971, 0.0001
        %v1084 = vmul.f32 %v972, 0.0001
        %v1085 = vmul.f32 %v973, 0.0001
        %v1086 = vmul.f32 %v974, 0.0001
        %v1087 = vmul.f32 %v975, 0.0001
        %v1088 = vmul.f32 %v976, 0.0001
        %v1089 = vmul.f32 %v977, 0.0001
        %v1090 = vmul.f32 %v978, 0.0001
        %v1091 = vmul.f32 %v979, 0.0001
        %v1092 = vmul.f32 %v980, 0.0001
        %v1093 = vmul.f32 %v981, 0.0001
        %v1094 = vmul.f32 %v982, 0.0001
        %v1095 = vmul.f32 %v983, 0.0001
        %v1096 = vmul.f32 %v984, 0.0001
        %v1097 = vmul.f32 %v985, 0.0001
        %v1098 = vmul.f32 %v986, 0.0001
        %v1099 = vmul.f32 %v987, 0.0001
        %v1100 = vmul.f32 %v988, 0.0001
        %v1101 = vmul.f32 %v989, 0.0001
        %v1102 = vmul.f32 %v990, 0.0001
        %v1103 = vmul.f32 %v991, 0.0001
        %v1104 = vmul.f32 %v992, 0.0001
        %v1105 = vmul.f32 %v993, 0.0001
        %v1106 = vmul.f32 %v994, 0.0001
        %v1107 = vmul.f32 %v995, 0.0001
        %v1108 = vmul.f32 %v996, 0.0001
        %v1109 = vmul.f32 %v997, 0.0001
        %v1110 = vmul.f32 %v998, 0.0001
        %v1111 = vmul.f32 %v999, 0.0001
        %v1112 = vmul.f32 %v1000, 0.0001
        %v1113 = vmul.f32 %v1001, 0.0001
        %v1114 = vmul.f32 %v1002, 0.0001
        %v1115 = vmul.f32 %v1003, 0.0001
        %v1116 = vmul.f32 %v1004, 0.0001
        %v1117 = vsel %vm1005, %v949, %v1061
        %v1118 = vsel %vm1006, %v950, %v1062
        %v1119 = vsel %vm1007, %v951, %v1063
        %v1120 = vsel %vm1008, %v952, %v1064
        %v1121 = vsel %vm1009, %v953, %v1065
        %v1122 = vsel %vm1010, %v954, %v1066
        %v1123 = vsel %vm1011, %v955, %v1067
        %v1124 = vsel %vm1012, %v956, %v1068
        %v1125 = vsel %vm1013, %v957, %v1069
        %v1126 = vsel %vm1014, %v958, %v1070
        %v1127 = vsel %vm1015, %v959, %v1071
        %v1128 = vsel %vm1016, %v960, %v1072
        %v1129 = vsel %vm1017, %v961, %v1073
        %v1130 = vsel %vm1018, %v962, %v1074
        %v1131 = vsel %vm1019, %v963, %v1075
        %v1132 = vsel %vm1020, %v964, %v1076
        %v1133 = vsel %vm1021, %v965, %v1077
        %v1134 = vsel %vm1022, %v966, %v1078
        %v1135 = vsel %vm1023, %v967, %v1079
        %v1136 = vsel %vm1024, %v968, %v1080
        %v1137 = vsel %vm1025, %v969, %v1081
        %v1138 = vsel %vm1026, %v970, %v1082
        %v1139 = vsel %vm1027, %v971, %v1083
        %v1140 = vsel %vm1028, %v972, %v1084
        %v1141 = vsel %vm1029, %v973, %v1085
        %v1142 = vsel %vm1030, %v974, %v1086
        %v1143 = vsel %vm1031, %v975, %v1087
        %v1144 = vsel %vm1032, %v976, %v1088
        %v1145 = vsel %vm1033, %v977, %v1089
        %v1146 = vsel %vm1034, %v978, %v1090
        %v1147 = vsel %vm1035, %v979, %v1091
        %v1148 = vsel %vm1036, %v980, %v1092
        %v1149 = vsel %vm1037, %v981, %v1093
        %v1150 = vsel %vm1038, %v982, %v1094
        %v1151 = vsel %vm1039, %v983, %v1095
        %v1152 = vsel %vm1040, %v984, %v1096
        %v1153 = vsel %vm1041, %v985, %v1097
        %v1154 = vsel %vm1042, %v986, %v1098
        %v1155 = vsel %vm1043, %v987, %v1099
        %v1156 = vsel %vm1044, %v988, %v1100
        %v1157 = vsel %vm1045, %v989, %v1101
        %v1158 = vsel %vm1046, %v990, %v1102
        %v1159 = vsel %vm1047, %v991, %v1103
        %v1160 = vsel %vm1048, %v992, %v1104
        %v1161 = vsel %vm1049, %v993, %v1105
        %v1162 = vsel %vm1050, %v994, %v1106
        %v1163 = vsel %vm1051, %v995, %v1107
        %v1164 = vsel %vm1052, %v996, %v1108
        %v1165 = vsel %vm1053, %v997, %v1109
        %v1166 = vsel %vm1054, %v998, %v1110
        %v1167 = vsel %vm1055, %v999, %v1111
        %v1168 = vsel %vm1056, %v1000, %v1112
        %v1169 = vsel %vm1057, %v1001, %v1113
        %v1170 = vsel %vm1058, %v1002, %v1114
        %v1171 = vsel %vm1059, %v1003, %v1115
        %v1172 = vsel %vm1060, %v1004, %v1116
        %v1173 = vpack.c.bf16 %v1119, %v1117
        %v1174 = vpack.c.bf16 %v1120, %v1118
        %v1175 = vpack.c.bf16 %v1123, %v1121
        %v1176 = vpack.c.bf16 %v1124, %v1122
        %v1177 = vpack.c.bf16 %v1127, %v1125
        %v1178 = vpack.c.bf16 %v1128, %v1126
        %v1179 = vpack.c.bf16 %v1131, %v1129
        %v1180 = vpack.c.bf16 %v1132, %v1130
        %v1181 = vpack.c.bf16 %v1135, %v1133
        %v1182 = vpack.c.bf16 %v1136, %v1134
        %v1183 = vpack.c.bf16 %v1139, %v1137
        %v1184 = vpack.c.bf16 %v1140, %v1138
        %v1185 = vpack.c.bf16 %v1143, %v1141
        %v1186 = vpack.c.bf16 %v1144, %v1142
        %v1187 = vpack.c.bf16 %v1147, %v1145
        %v1188 = vpack.c.bf16 %v1148, %v1146
        %v1189 = vpack.c.bf16 %v1151, %v1149
        %v1190 = vpack.c.bf16 %v1152, %v1150
        %v1191 = vpack.c.bf16 %v1155, %v1153
        %v1192 = vpack.c.bf16 %v1156, %v1154
        %v1193 = vpack.c.bf16 %v1159, %v1157
        %v1194 = vpack.c.bf16 %v1160, %v1158
        %v1195 = vpack.c.bf16 %v1163, %v1161
        %v1196 = vpack.c.bf16 %v1164, %v1162
        %v1197 = vpack.c.bf16 %v1167, %v1165
        %v1198 = vpack.c.bf16 %v1168, %v1166
        %v1199 = vpack.c.bf16 %v1171, %v1169
        %v1200 = vpack.c.bf16 %v1172, %v1170
        %v1229 = vunpack.c.l.b16 %v1173
        %v1230 = vunpack.c.l.b16 %v1174
        %v1231 = vunpack.c.h.b16 %v1173
        %v1232 = vunpack.c.h.b16 %v1174
        %v1233 = vunpack.c.l.b16 %v1175
        %v1234 = vunpack.c.l.b16 %v1176
        %v1235 = vunpack.c.h.b16 %v1175
        %v1236 = vunpack.c.h.b16 %v1176
        %v1237 = vunpack.c.l.b16 %v1177
        %v1238 = vunpack.c.l.b16 %v1178
        %v1239 = vunpack.c.h.b16 %v1177
        %v1240 = vunpack.c.h.b16 %v1178
        %v1241 = vunpack.c.l.b16 %v1179
        %v1242 = vunpack.c.l.b16 %v1180
        %v1243 = vunpack.c.h.b16 %v1179
        %v1244 = vunpack.c.h.b16 %v1180
        %v1245 = vunpack.c.l.b16 %v1181
        %v1246 = vunpack.c.l.b16 %v1182
        %v1247 = vunpack.c.h.b16 %v1181
        %v1248 = vunpack.c.h.b16 %v1182
        %v1249 = vunpack.c.l.b16 %v1183
        %v1250 = vunpack.c.l.b16 %v1184
        %v1251 = vunpack.c.h.b16 %v1183
        %v1252 = vunpack.c.h.b16 %v1184
        %v1253 = vunpack.c.l.b16 %v1185
        %v1254 = vunpack.c.l.b16 %v1186
        %v1255 = vunpack.c.h.b16 %v1185
        %v1256 = vunpack.c.h.b16 %v1186
        %v1257 = vunpack.c.l.b16 %v1187
        %v1258 = vunpack.c.l.b16 %v1188
        %v1259 = vunpack.c.h.b16 %v1187
        %v1260 = vunpack.c.h.b16 %v1188
        %v1261 = vunpack.c.l.b16 %v1189
        %v1262 = vunpack.c.l.b16 %v1190
        %v1263 = vunpack.c.h.b16 %v1189
        %v1264 = vunpack.c.h.b16 %v1190
        %v1265 = vunpack.c.l.b16 %v1191
        %v1266 = vunpack.c.l.b16 %v1192
        %v1267 = vunpack.c.h.b16 %v1191
        %v1268 = vunpack.c.h.b16 %v1192
        %v1269 = vunpack.c.l.b16 %v1193
        %v1270 = vunpack.c.l.b16 %v1194
        %v1271 = vunpack.c.h.b16 %v1193
        %v1272 = vunpack.c.h.b16 %v1194
        %v1273 = vunpack.c.l.b16 %v1195
        %v1274 = vunpack.c.l.b16 %v1196
        %v1275 = vunpack.c.h.b16 %v1195
        %v1276 = vunpack.c.h.b16 %v1196
        %v1277 = vunpack.c.l.b16 %v1197
        %v1278 = vunpack.c.l.b16 %v1198
        %v1279 = vunpack.c.h.b16 %v1197
        %v1280 = vunpack.c.h.b16 %v1198
        %v1281 = vunpack.c.l.b16 %v1199
        %v1282 = vunpack.c.l.b16 %v1200
        %v1283 = vunpack.c.h.b16 %v1199
        %v1284 = vunpack.c.h.b16 %v1200
        %v1285 = vpack.c.b16 %v1230, %v1229
        %v1286 = vpack.c.b16 %v1232, %v1231
        %v1287 = vpack.c.b16 %v1234, %v1233
        %v1288 = vpack.c.b16 %v1236, %v1235
        %v1289 = vpack.c.b16 %v1238, %v1237
        %v1290 = vpack.c.b16 %v1240, %v1239
        %v1291 = vpack.c.b16 %v1242, %v1241
        %v1292 = vpack.c.b16 %v1244, %v1243
        %v1293 = vpack.c.b16 %v1246, %v1245
        %v1294 = vpack.c.b16 %v1248, %v1247
        %v1295 = vpack.c.b16 %v1250, %v1249
        %v1296 = vpack.c.b16 %v1252, %v1251
        %v1297 = vpack.c.b16 %v1254, %v1253
        %v1298 = vpack.c.b16 %v1256, %v1255
        %v1299 = vpack.c.b16 %v1258, %v1257
        %v1300 = vpack.c.b16 %v1260, %v1259
        %v1301 = vpack.c.b16 %v1262, %v1261
        %v1302 = vpack.c.b16 %v1264, %v1263
        %v1303 = vpack.c.b16 %v1266, %v1265
        %v1304 = vpack.c.b16 %v1268, %v1267
        %v1305 = vpack.c.b16 %v1270, %v1269
        %v1306 = vpack.c.b16 %v1272, %v1271
        %v1307 = vpack.c.b16 %v1274, %v1273
        %v1308 = vpack.c.b16 %v1276, %v1275
        %v1309 = vpack.c.b16 %v1278, %v1277
        %v1310 = vpack.c.b16 %v1280, %v1279
        %v1311 = vpack.c.b16 %v1282, %v1281
        %v1312 = vpack.c.b16 %v1284, %v1283
        %1341 = vst [vmem:[#allocation2] sm:$0xff] %v1285
        %1342 = vst [vmem:[#allocation2 + $0x8] sm:$0xff] %v1286
        %1343 = vst [vmem:[#allocation2 + $0x10] sm:$0xff] %v1287
        %1344 = vst [vmem:[#allocation2 + $0x18] sm:$0xff] %v1288
        %1345 = vst [vmem:[#allocation2 + $0x20] sm:$0xff] %v1289
        %1346 = vst [vmem:[#allocation2 + $0x28] sm:$0xff] %v1290
        %1347 = vst [vmem:[#allocation2 + $0x30] sm:$0xff] %v1291
        %1348 = vst [vmem:[#allocation2 + $0x38] sm:$0xff] %v1292
        %1349 = vst [vmem:[#allocation2 + $0x40] sm:$0xff] %v1293
        %1350 = vst [vmem:[#allocation2 + $0x48] sm:$0xff] %v1294
        %1351 = vst [vmem:[#allocation2 + $0x50] sm:$0xff] %v1295
        %1352 = vst [vmem:[#allocation2 + $0x58] sm:$0xff] %v1296
        %1353 = vst [vmem:[#allocation2 + $0x60] sm:$0xff] %v1297
        %1354 = vst [vmem:[#allocation2 + $0x68] sm:$0xff] %v1298
        %1355 = vst [vmem:[#allocation2 + $0x70] sm:$0xff] %v1299
        %1356 = vst [vmem:[#allocation2 + $0x78] sm:$0xff] %v1300
        %1357 = vst [vmem:[#allocation2 + $0x80] sm:$0xff] %v1301
        %1358 = vst [vmem:[#allocation2 + $0x88] sm:$0xff] %v1302
        %1359 = vst [vmem:[#allocation2 + $0x90] sm:$0xff] %v1303
        %1360 = vst [vmem:[#allocation2 + $0x98] sm:$0xff] %v1304
        %1361 = vst [vmem:[#allocation2 + $0xa0] sm:$0xff] %v1305
        %1362 = vst [vmem:[#allocation2 + $0xa8] sm:$0xff] %v1306
        %1363 = vst [vmem:[#allocation2 + $0xb0] sm:$0xff] %v1307
        %1364 = vst [vmem:[#allocation2 + $0xb8] sm:$0xff] %v1308
        %1365 = vst [vmem:[#allocation2 + $0xc0] sm:$0xff] %v1309
        %1366 = vst [vmem:[#allocation2 + $0xc8] sm:$0xff] %v1310
        %1367 = vst [vmem:[#allocation2 + $0xd0] sm:$0xff] %v1311
        %1368 = vst [vmem:[#allocation2 + $0xd8] sm:$0xff] %v1312
        %1369 = vst [vmem:[#allocation2 + $0xe0] sm:$0xff] 0
        %v1370 = vld [vmem:[#allocation2] sm:$0xff]
        %v1371 = vld [vmem:[#allocation2 + $0x8] sm:$0xff]
        %v1372 = vld [vmem:[#allocation2 + $0x10] sm:$0xff]
        %v1373 = vld [vmem:[#allocation2 + $0x18] sm:$0xff]
        %v1374 = vld [vmem:[#allocation2 + $0x20] sm:$0xff]
        %v1375 = vld [vmem:[#allocation2 + $0x28] sm:$0xff]
        %v1376 = vld [vmem:[#allocation2 + $0x30] sm:$0xff]
        %v1377 = vld [vmem:[#allocation2 + $0x38] sm:$0xff]
        %v1378 = vld [vmem:[#allocation2 + $0x40] sm:$0xff]
        %v1379 = vld [vmem:[#allocation2 + $0x48] sm:$0xff]
        %v1380 = vld [vmem:[#allocation2 + $0x50] sm:$0xff]
        %v1381 = vld [vmem:[#allocation2 + $0x58] sm:$0xff]
        %v1382 = vld [vmem:[#allocation2 + $0x60] sm:$0xff]
        %v1383 = vld [vmem:[#allocation2 + $0x68] sm:$0xff]
        %v1384 = vld [vmem:[#allocation2 + $0x70] sm:$0xff]
        %v1385 = vld [vmem:[#allocation2 + $0x78] sm:$0xff]
        %v1386 = vld [vmem:[#allocation2 + $0x80] sm:$0xff]
        %v1387 = vld [vmem:[#allocation2 + $0x88] sm:$0xff]
        %v1388 = vld [vmem:[#allocation2 + $0x90] sm:$0xff]
        %v1389 = vld [vmem:[#allocation2 + $0x98] sm:$0xff]
        %v1390 = vld [vmem:[#allocation2 + $0xa0] sm:$0xff]
        %v1391 = vld [vmem:[#allocation2 + $0xa8] sm:$0xff]
        %v1392 = vld [vmem:[#allocation2 + $0xb0] sm:$0xff]
        %v1393 = vld [vmem:[#allocation2 + $0xb8] sm:$0xff]
        %v1394 = vld [vmem:[#allocation2 + $0xc0] sm:$0x11]
        %v1395 = vld [vmem:[#allocation2] sm:$0xee]
        %v1396 = vld [vmem:[#allocation2 + $0xc0] sm:$0xff]
        %v1397 = vld [vmem:[#allocation2 + $0xc8] sm:$0xff]
        %v1398 = vld [vmem:[#allocation2 + $0xd0] sm:$0x11]
        %v1399 = vld [vmem:[#allocation2 + $0x10] sm:$0xee]
        %v1400 = vld [vmem:[#allocation2 + $0xd0] sm:$0xff]
        %v1401 = vld [vmem:[#allocation2 + $0xd8] sm:$0xff]
        %v1402 = vld [vmem:[#allocation2 + $0x20] sm:$0xff]
        %v1403 = vld [vmem:[#allocation2 + $0x28] sm:$0xff]
        %v1404 = vld [vmem:[#allocation2 + $0x30] sm:$0xff]
        %v1405 = vld [vmem:[#allocation2 + $0x38] sm:$0xff]
        %v1406 = vld [vmem:[#allocation2 + $0x40] sm:$0xff]
        %v1407 = vld [vmem:[#allocation2 + $0x48] sm:$0xff]
        %v1408 = vld [vmem:[#allocation2 + $0x50] sm:$0xff]
        %v1409 = vld [vmem:[#allocation2 + $0x58] sm:$0xff]
        %v1410 = vld [vmem:[#allocation2 + $0x60] sm:$0xff]
        %v1411 = vld [vmem:[#allocation2 + $0x68] sm:$0xff]
        %v1412 = vld [vmem:[#allocation2 + $0x70] sm:$0xff]
        %v1413 = vld [vmem:[#allocation2 + $0x78] sm:$0xff]
        %v1414 = vld [vmem:[#allocation2 + $0x80] sm:$0xff]
        %v1415 = vld [vmem:[#allocation2 + $0x88] sm:$0xff]
        %v1416 = vld [vmem:[#allocation2 + $0x90] sm:$0xff]
        %v1417 = vld [vmem:[#allocation2 + $0x98] sm:$0xff]
        %v1418 = vld [vmem:[#allocation2 + $0xa0] sm:$0xff]
        %v1419 = vld [vmem:[#allocation2 + $0xa8] sm:$0xff]
        %v1420 = vld [vmem:[#allocation2 + $0xb0] sm:$0xff]
        %v1421 = vld [vmem:[#allocation2 + $0xb8] sm:$0xff]
        %v1422 = vld [vmem:[#allocation2 + $0xc0] sm:$0xff]
        %v1423 = vld [vmem:[#allocation2 + $0xc8] sm:$0xff]
        %v1424 = vld [vmem:[#allocation2 + $0xd0] sm:$0xff]
        %v1425 = vld [vmem:[#allocation2 + $0xd8] sm:$0xff]
        %v1426 = vld [vmem:[#allocation2 + $0xe0] sm:$0x11]
        %v1427 = vld [vmem:[#allocation2 + $0x20] sm:$0xee]
        %v1452 = vunpack.c.l.b16 %v1370
        %v1453 = vunpack.c.h.b16 %v1370
        %v1454 = vunpack.c.l.b16 %v1371
        %v1455 = vunpack.c.h.b16 %v1371
        %v1456 = vunpack.c.l.b16 %v1372
        %v1457 = vunpack.c.h.b16 %v1372
        %v1458 = vunpack.c.l.b16 %v1373
        %v1459 = vunpack.c.h.b16 %v1373
        %v1460 = vunpack.c.l.b16 %v1374
        %v1461 = vunpack.c.h.b16 %v1374
        %v1462 = vunpack.c.l.b16 %v1375
        %v1463 = vunpack.c.h.b16 %v1375
        %v1464 = vunpack.c.l.b16 %v1376
        %v1465 = vunpack.c.h.b16 %v1376
        %v1466 = vunpack.c.l.b16 %v1377
        %v1467 = vunpack.c.h.b16 %v1377
        %v1468 = vunpack.c.l.b16 %v1378
        %v1469 = vunpack.c.h.b16 %v1378
        %v1470 = vunpack.c.l.b16 %v1379
        %v1471 = vunpack.c.h.b16 %v1379
        %v1472 = vunpack.c.l.b16 %v1380
        %v1473 = vunpack.c.h.b16 %v1380
        %v1474 = vunpack.c.l.b16 %v1381
        %v1475 = vunpack.c.h.b16 %v1381
        %v1476 = vunpack.c.l.b16 %v1382
        %v1477 = vunpack.c.h.b16 %v1382
        %v1478 = vunpack.c.l.b16 %v1383
        %v1479 = vunpack.c.h.b16 %v1383
        %v1480 = vunpack.c.l.b16 %v1384
        %v1481 = vunpack.c.h.b16 %v1384
        %v1482 = vunpack.c.l.b16 %v1385
        %v1483 = vunpack.c.h.b16 %v1385
        %v1484 = vunpack.c.l.b16 %v1386
        %v1485 = vunpack.c.h.b16 %v1386
        %v1486 = vunpack.c.l.b16 %v1387
        %v1487 = vunpack.c.h.b16 %v1387
        %v1488 = vunpack.c.l.b16 %v1388
        %v1489 = vunpack.c.h.b16 %v1388
        %v1490 = vunpack.c.l.b16 %v1389
        %v1491 = vunpack.c.h.b16 %v1389
        %v1492 = vunpack.c.l.b16 %v1390
        %v1493 = vunpack.c.h.b16 %v1390
        %v1494 = vunpack.c.l.b16 %v1391
        %v1495 = vunpack.c.h.b16 %v1391
        %v1496 = vunpack.c.l.b16 %v1392
        %v1497 = vunpack.c.h.b16 %v1392
        %v1498 = vunpack.c.l.b16 %v1393
        %v1499 = vunpack.c.h.b16 %v1393
        %v1500 = vpack.c.b16 %v1454, %v1452
        %v1501 = vpack.c.b16 %v1455, %v1453
        %v1502 = vpack.c.b16 %v1458, %v1456
        %v1503 = vpack.c.b16 %v1459, %v1457
        %v1504 = vpack.c.b16 %v1462, %v1460
        %v1505 = vpack.c.b16 %v1463, %v1461
        %v1506 = vpack.c.b16 %v1466, %v1464
        %v1507 = vpack.c.b16 %v1467, %v1465
        %v1508 = vpack.c.b16 %v1470, %v1468
        %v1509 = vpack.c.b16 %v1471, %v1469
        %v1510 = vpack.c.b16 %v1474, %v1472
        %v1511 = vpack.c.b16 %v1475, %v1473
        %v1512 = vpack.c.b16 %v1478, %v1476
        %v1513 = vpack.c.b16 %v1479, %v1477
        %v1514 = vpack.c.b16 %v1482, %v1480
        %v1515 = vpack.c.b16 %v1483, %v1481
        %v1516 = vpack.c.b16 %v1486, %v1484
        %v1517 = vpack.c.b16 %v1487, %v1485
        %v1518 = vpack.c.b16 %v1490, %v1488
        %v1519 = vpack.c.b16 %v1491, %v1489
        %v1520 = vpack.c.b16 %v1494, %v1492
        %v1521 = vpack.c.b16 %v1495, %v1493
        %v1522 = vpack.c.b16 %v1498, %v1496
        %v1523 = vpack.c.b16 %v1499, %v1497
        %v1549 = vunpack.c.l.b16 %v1394
        %v1550 = vunpack.c.h.b16 %v1394
        %v1551 = vpack.c.b16 %v1549, %v1549
        %v1552 = vpack.c.b16 %v1550, %v1550
        %vm1553 = vsmask.f32 7424
        %v1555 = vshrl.u32 %v1500, 16
        %v1557 = vshll.u32 %v1500, 16
        %v1559 = vrot.slane %v1557, 1
        %v1560 = vor.u32 %v1555, %v1559
        %v1562 = vshll.u32 %v1502, 16
        %v1564 = vrot.slane %v1562, 1
        %v1565 = vsel %vm1553, %v1560, %v1564
        %v1567 = vshrl.u32 %v1501, 16
        %v1569 = vshll.u32 %v1501, 16
        %v1571 = vrot.slane %v1569, 1
        %v1572 = vor.u32 %v1567, %v1571
        %v1574 = vshll.u32 %v1503, 16
        %v1576 = vrot.slane %v1574, 1
        %v1577 = vsel %vm1553, %v1572, %v1576
        %v1578 = vshrl.u32 %v1502, 16
        %v1580 = vor.u32 %v1578, %v1564
        %v1582 = vshll.u32 %v1504, 16
        %v1584 = vrot.slane %v1582, 1
        %v1585 = vsel %vm1553, %v1580, %v1584
        %v1586 = vshrl.u32 %v1503, 16
        %v1588 = vor.u32 %v1586, %v1576
        %v1590 = vshll.u32 %v1505, 16
        %v1592 = vrot.slane %v1590, 1
        %v1593 = vsel %vm1553, %v1588, %v1592
        %v1594 = vshrl.u32 %v1504, 16
        %v1596 = vor.u32 %v1594, %v1584
        %v1598 = vshll.u32 %v1506, 16
        %v1600 = vrot.slane %v1598, 1
        %v1601 = vsel %vm1553, %v1596, %v1600
        %v1602 = vshrl.u32 %v1505, 16
        %v1604 = vor.u32 %v1602, %v1592
        %v1606 = vshll.u32 %v1507, 16
        %v1608 = vrot.slane %v1606, 1
        %v1609 = vsel %vm1553, %v1604, %v1608
        %v1610 = vshrl.u32 %v1506, 16
        %v1612 = vor.u32 %v1610, %v1600
        %v1614 = vshll.u32 %v1508, 16
        %v1616 = vrot.slane %v1614, 1
        %v1617 = vsel %vm1553, %v1612, %v1616
        %v1618 = vshrl.u32 %v1507, 16
        %v1620 = vor.u32 %v1618, %v1608
        %v1622 = vshll.u32 %v1509, 16
        %v1624 = vrot.slane %v1622, 1
        %v1625 = vsel %vm1553, %v1620, %v1624
        %v1626 = vshrl.u32 %v1508, 16
        %v1628 = vor.u32 %v1626, %v1616
        %v1630 = vshll.u32 %v1510, 16
        %v1632 = vrot.slane %v1630, 1
        %v1633 = vsel %vm1553, %v1628, %v1632
        %v1634 = vshrl.u32 %v1509, 16
        %v1636 = vor.u32 %v1634, %v1624
        %v1638 = vshll.u32 %v1511, 16
        %v1640 = vrot.slane %v1638, 1
        %v1641 = vsel %vm1553, %v1636, %v1640
        %v1642 = vshrl.u32 %v1510, 16
        %v1644 = vor.u32 %v1642, %v1632
        %v1646 = vshll.u32 %v1512, 16
        %v1648 = vrot.slane %v1646, 1
        %v1649 = vsel %vm1553, %v1644, %v1648
        %v1650 = vshrl.u32 %v1511, 16
        %v1652 = vor.u32 %v1650, %v1640
        %v1654 = vshll.u32 %v1513, 16
        %v1656 = vrot.slane %v1654, 1
        %v1657 = vsel %vm1553, %v1652, %v1656
        %v1658 = vshrl.u32 %v1512, 16
        %v1660 = vor.u32 %v1658, %v1648
        %v1662 = vshll.u32 %v1514, 16
        %v1664 = vrot.slane %v1662, 1
        %v1665 = vsel %vm1553, %v1660, %v1664
        %v1666 = vshrl.u32 %v1513, 16
        %v1668 = vor.u32 %v1666, %v1656
        %v1670 = vshll.u32 %v1515, 16
        %v1672 = vrot.slane %v1670, 1
        %v1673 = vsel %vm1553, %v1668, %v1672
        %v1674 = vshrl.u32 %v1514, 16
        %v1676 = vor.u32 %v1674, %v1664
        %v1678 = vshll.u32 %v1516, 16
        %v1680 = vrot.slane %v1678, 1
        %v1681 = vsel %vm1553, %v1676, %v1680
        %v1682 = vshrl.u32 %v1515, 16
        %v1684 = vor.u32 %v1682, %v1672
        %v1686 = vshll.u32 %v1517, 16
        %v1688 = vrot.slane %v1686, 1
        %v1689 = vsel %vm1553, %v1684, %v1688
        %v1690 = vshrl.u32 %v1516, 16
        %v1692 = vor.u32 %v1690, %v1680
        %v1694 = vshll.u32 %v1518, 16
        %v1696 = vrot.slane %v1694, 1
        %v1697 = vsel %vm1553, %v1692, %v1696
        %v1698 = vshrl.u32 %v1517, 16
        %v1700 = vor.u32 %v1698, %v1688
        %v1702 = vshll.u32 %v1519, 16
        %v1704 = vrot.slane %v1702, 1
        %v1705 = vsel %vm1553, %v1700, %v1704
        %v1706 = vshrl.u32 %v1518, 16
        %v1708 = vor.u32 %v1706, %v1696
        %v1710 = vshll.u32 %v1520, 16
        %v1712 = vrot.slane %v1710, 1
        %v1713 = vsel %vm1553, %v1708, %v1712
        %v1714 = vshrl.u32 %v1519, 16
        %v1716 = vor.u32 %v1714, %v1704
        %v1718 = vshll.u32 %v1521, 16
        %v1720 = vrot.slane %v1718, 1
        %v1721 = vsel %vm1553, %v1716, %v1720
        %v1722 = vshrl.u32 %v1520, 16
        %v1724 = vor.u32 %v1722, %v1712
        %v1726 = vshll.u32 %v1522, 16
        %v1728 = vrot.slane %v1726, 1
        %v1729 = vsel %vm1553, %v1724, %v1728
        %v1730 = vshrl.u32 %v1521, 16
        %v1732 = vor.u32 %v1730, %v1720
        %v1734 = vshll.u32 %v1523, 16
        %v1736 = vrot.slane %v1734, 1
        %v1737 = vsel %vm1553, %v1732, %v1736
        %v1738 = vshrl.u32 %v1522, 16
        %v1740 = vor.u32 %v1738, %v1728
        %v1742 = vshll.u32 %v1551, 16
        %v1744 = vrot.slane %v1742, 1
        %v1745 = vsel %vm1553, %v1740, %v1744
        %v1746 = vshrl.u32 %v1523, 16
        %v1748 = vor.u32 %v1746, %v1736
        %v1750 = vshll.u32 %v1552, 16
        %v1752 = vrot.slane %v1750, 1
        %v1753 = vsel %vm1553, %v1748, %v1752
        %v1779 = vunpack.c.l.b16 %v1395
        %v1780 = vunpack.c.h.b16 %v1395
        %v1781 = vpack.c.b16 %v1454, %v1779
        %v1782 = vpack.c.b16 %v1455, %v1780
        %vm1783 = vcmask 1046528
        %v1784 = vrot.slane %v1781, 1
        %v1785 = vrot.slane %v1502, 1
        %v1786 = vsel %vm1783, %v1784, %v1785
        %v1787 = vrot.slane %v1782, 1
        %v1788 = vrot.slane %v1503, 1
        %v1789 = vsel %vm1783, %v1787, %v1788
        %v1790 = vrot.slane %v1504, 1
        %v1791 = vsel %vm1783, %v1785, %v1790
        %v1792 = vrot.slane %v1505, 1
        %v1793 = vsel %vm1783, %v1788, %v1792
        %v1794 = vrot.slane %v1506, 1
        %v1795 = vsel %vm1783, %v1790, %v1794
        %v1796 = vrot.slane %v1507, 1
        %v1797 = vsel %vm1783, %v1792, %v1796
        %v1798 = vrot.slane %v1508, 1
        %v1799 = vsel %vm1783, %v1794, %v1798
        %v1800 = vrot.slane %v1509, 1
        %v1801 = vsel %vm1783, %v1796, %v1800
        %v1802 = vrot.slane %v1510, 1
        %v1803 = vsel %vm1783, %v1798, %v1802
        %v1804 = vrot.slane %v1511, 1
        %v1805 = vsel %vm1783, %v1800, %v1804
        %v1806 = vrot.slane %v1512, 1
        %v1807 = vsel %vm1783, %v1802, %v1806
        %v1808 = vrot.slane %v1513, 1
        %v1809 = vsel %vm1783, %v1804, %v1808
        %v1810 = vrot.slane %v1514, 1
        %v1811 = vsel %vm1783, %v1806, %v1810
        %v1812 = vrot.slane %v1515, 1
        %v1813 = vsel %vm1783, %v1808, %v1812
        %v1814 = vrot.slane %v1516, 1
        %v1815 = vsel %vm1783, %v1810, %v1814
        %v1816 = vrot.slane %v1517, 1
        %v1817 = vsel %vm1783, %v1812, %v1816
        %v1818 = vrot.slane %v1518, 1
        %v1819 = vsel %vm1783, %v1814, %v1818
        %v1820 = vrot.slane %v1519, 1
        %v1821 = vsel %vm1783, %v1816, %v1820
        %v1822 = vrot.slane %v1520, 1
        %v1823 = vsel %vm1783, %v1818, %v1822
        %v1824 = vrot.slane %v1521, 1
        %v1825 = vsel %vm1783, %v1820, %v1824
        %v1826 = vrot.slane %v1522, 1
        %v1827 = vsel %vm1783, %v1822, %v1826
        %v1828 = vrot.slane %v1523, 1
        %v1829 = vsel %vm1783, %v1824, %v1828
        %v1830 = vrot.slane %v1551, 1
        %v1831 = vsel %vm1783, %v1826, %v1830
        %v1832 = vrot.slane %v1552, 1
        %v1833 = vsel %vm1783, %v1828, %v1832
        %v1860 = vunpack.c.l.b16 %v1396
        %v1861 = vunpack.c.h.b16 %v1396
        %v1862 = vunpack.c.l.b16 %v1397
        %v1863 = vunpack.c.h.b16 %v1397
        %v1864 = vpack.c.b16 %v1862, %v1860
        %v1865 = vpack.c.b16 %v1863, %v1861
        %v1869 = vunpack.c.l.b16 %v1398
        %v1870 = vunpack.c.h.b16 %v1398
        %v1871 = vpack.c.b16 %v1869, %v1869
        %v1872 = vpack.c.b16 %v1870, %v1870
        %v1874 = vshll.u32 %v1864, 16
        %v1876 = vrot.slane %v1874, 1
        %v1877 = vsel %vm1553, %v1740, %v1876
        %v1879 = vshll.u32 %v1865, 16
        %v1881 = vrot.slane %v1879, 1
        %v1882 = vsel %vm1553, %v1748, %v1881
        %v1883 = vshrl.u32 %v1864, 16
        %v1885 = vor.u32 %v1883, %v1876
        %v1887 = vshll.u32 %v1871, 16
        %v1889 = vrot.slane %v1887, 1
        %v1890 = vsel %vm1553, %v1885, %v1889
        %v1891 = vshrl.u32 %v1865, 16
        %v1893 = vor.u32 %v1891, %v1881
        %v1895 = vshll.u32 %v1872, 16
        %v1897 = vrot.slane %v1895, 1
        %v1898 = vsel %vm1553, %v1893, %v1897
        %v1904 = vunpack.c.l.b16 %v1399
        %v1905 = vunpack.c.h.b16 %v1399
        %v1906 = vpack.c.b16 %v1458, %v1904
        %v1907 = vpack.c.b16 %v1459, %v1905
        %v1908 = vrot.slane %v1906, 1
        %v1909 = vsel %vm1783, %v1908, %v1790
        %v1910 = vrot.slane %v1907, 1
        %v1911 = vsel %vm1783, %v1910, %v1792
        %v1912 = vrot.slane %v1864, 1
        %v1913 = vsel %vm1783, %v1826, %v1912
        %v1914 = vrot.slane %v1865, 1
        %v1915 = vsel %vm1783, %v1828, %v1914
        %v1916 = vrot.slane %v1871, 1
        %v1917 = vsel %vm1783, %v1912, %v1916
        %v1918 = vrot.slane %v1872, 1
        %v1919 = vsel %vm1783, %v1914, %v1918
        %v1928 = vunpack.c.l.b16 %v1400
        %v1929 = vunpack.c.h.b16 %v1400
        %v1930 = vunpack.c.l.b16 %v1401
        %v1931 = vunpack.c.h.b16 %v1401
        %v1932 = vpack.c.b16 %v1930, %v1928
        %v1933 = vpack.c.b16 %v1931, %v1929
        %v1961 = vunpack.c.l.b16 %v1402
        %v1962 = vunpack.c.h.b16 %v1402
        %v1963 = vunpack.c.l.b16 %v1403
        %v1964 = vunpack.c.h.b16 %v1403
        %v1965 = vunpack.c.l.b16 %v1404
        %v1966 = vunpack.c.h.b16 %v1404
        %v1967 = vunpack.c.l.b16 %v1405
        %v1968 = vunpack.c.h.b16 %v1405
        %v1969 = vunpack.c.l.b16 %v1406
        %v1970 = vunpack.c.h.b16 %v1406
        %v1971 = vunpack.c.l.b16 %v1407
        %v1972 = vunpack.c.h.b16 %v1407
        %v1973 = vunpack.c.l.b16 %v1408
        %v1974 = vunpack.c.h.b16 %v1408
        %v1975 = vunpack.c.l.b16 %v1409
        %v1976 = vunpack.c.h.b16 %v1409
        %v1977 = vunpack.c.l.b16 %v1410
        %v1978 = vunpack.c.h.b16 %v1410
        %v1979 = vunpack.c.l.b16 %v1411
        %v1980 = vunpack.c.h.b16 %v1411
        %v1981 = vunpack.c.l.b16 %v1412
        %v1982 = vunpack.c.h.b16 %v1412
        %v1983 = vunpack.c.l.b16 %v1413
        %v1984 = vunpack.c.h.b16 %v1413
        %v1985 = vunpack.c.l.b16 %v1414
        %v1986 = vunpack.c.h.b16 %v1414
        %v1987 = vunpack.c.l.b16 %v1415
        %v1988 = vunpack.c.h.b16 %v1415
        %v1989 = vunpack.c.l.b16 %v1416
        %v1990 = vunpack.c.h.b16 %v1416
        %v1991 = vunpack.c.l.b16 %v1417
        %v1992 = vunpack.c.h.b16 %v1417
        %v1993 = vunpack.c.l.b16 %v1418
        %v1994 = vunpack.c.h.b16 %v1418
        %v1995 = vunpack.c.l.b16 %v1419
        %v1996 = vunpack.c.h.b16 %v1419
        %v1997 = vunpack.c.l.b16 %v1420
        %v1998 = vunpack.c.h.b16 %v1420
        %v1999 = vunpack.c.l.b16 %v1421
        %v2000 = vunpack.c.h.b16 %v1421
        %v2001 = vunpack.c.l.b16 %v1422
        %v2002 = vunpack.c.h.b16 %v1422
        %v2003 = vunpack.c.l.b16 %v1423
        %v2004 = vunpack.c.h.b16 %v1423
        %v2005 = vunpack.c.l.b16 %v1424
        %v2006 = vunpack.c.h.b16 %v1424
        %v2007 = vunpack.c.l.b16 %v1425
        %v2008 = vunpack.c.h.b16 %v1425
        %v2009 = vunpack.c.l.b16 %v1426
        %v2010 = vunpack.c.h.b16 %v1426
        %v2011 = vpack.c.b16 %v1963, %v1961
        %v2012 = vpack.c.b16 %v1964, %v1962
        %v2013 = vpack.c.b16 %v1967, %v1965
        %v2014 = vpack.c.b16 %v1968, %v1966
        %v2015 = vpack.c.b16 %v1971, %v1969
        %v2016 = vpack.c.b16 %v1972, %v1970
        %v2017 = vpack.c.b16 %v1975, %v1973
        %v2018 = vpack.c.b16 %v1976, %v1974
        %v2019 = vpack.c.b16 %v1979, %v1977
        %v2020 = vpack.c.b16 %v1980, %v1978
        %v2021 = vpack.c.b16 %v1983, %v1981
        %v2022 = vpack.c.b16 %v1984, %v1982
        %v2023 = vpack.c.b16 %v1987, %v1985
        %v2024 = vpack.c.b16 %v1988, %v1986
        %v2025 = vpack.c.b16 %v1991, %v1989
        %v2026 = vpack.c.b16 %v1992, %v1990
        %v2027 = vpack.c.b16 %v1995, %v1993
        %v2028 = vpack.c.b16 %v1996, %v1994
        %v2029 = vpack.c.b16 %v1999, %v1997
        %v2030 = vpack.c.b16 %v2000, %v1998
        %v2031 = vpack.c.b16 %v2003, %v2001
        %v2032 = vpack.c.b16 %v2004, %v2002
        %v2033 = vpack.c.b16 %v2007, %v2005
        %v2034 = vpack.c.b16 %v2008, %v2006
        %v2035 = vpack.c.b16 %v2009, %v2009
        %v2036 = vpack.c.b16 %v2010, %v2010
        %v2038 = vshrl.u32 %v2011, 16
        %v2040 = vshll.u32 %v2011, 16
        %v2042 = vrot.slane %v2040, 1
        %v2043 = vor.u32 %v2038, %v2042
        %v2045 = vshll.u32 %v2013, 16
        %v2047 = vrot.slane %v2045, 1
        %v2048 = vsel %vm1553, %v2043, %v2047
        %v2050 = vshrl.u32 %v2012, 16
        %v2052 = vshll.u32 %v2012, 16
        %v2054 = vrot.slane %v2052, 1
        %v2055 = vor.u32 %v2050, %v2054
        %v2057 = vshll.u32 %v2014, 16
        %v2059 = vrot.slane %v2057, 1
        %v2060 = vsel %vm1553, %v2055, %v2059
        %v2061 = vshrl.u32 %v2013, 16
        %v2063 = vor.u32 %v2061, %v2047
        %v2065 = vshll.u32 %v2015, 16
        %v2067 = vrot.slane %v2065, 1
        %v2068 = vsel %vm1553, %v2063, %v2067
        %v2069 = vshrl.u32 %v2014, 16
        %v2071 = vor.u32 %v2069, %v2059
        %v2073 = vshll.u32 %v2016, 16
        %v2075 = vrot.slane %v2073, 1
        %v2076 = vsel %vm1553, %v2071, %v2075
        %v2077 = vshrl.u32 %v2015, 16
        %v2079 = vor.u32 %v2077, %v2067
        %v2081 = vshll.u32 %v2017, 16
        %v2083 = vrot.slane %v2081, 1
        %v2084 = vsel %vm1553, %v2079, %v2083
        %v2085 = vshrl.u32 %v2016, 16
        %v2087 = vor.u32 %v2085, %v2075
        %v2089 = vshll.u32 %v2018, 16
        %v2091 = vrot.slane %v2089, 1
        %v2092 = vsel %vm1553, %v2087, %v2091
        %v2093 = vshrl.u32 %v2017, 16
        %v2095 = vor.u32 %v2093, %v2083
        %v2097 = vshll.u32 %v2019, 16
        %v2099 = vrot.slane %v2097, 1
        %v2100 = vsel %vm1553, %v2095, %v2099
        %v2101 = vshrl.u32 %v2018, 16
        %v2103 = vor.u32 %v2101, %v2091
        %v2105 = vshll.u32 %v2020, 16
        %v2107 = vrot.slane %v2105, 1
        %v2108 = vsel %vm1553, %v2103, %v2107
        %v2109 = vshrl.u32 %v2019, 16
        %v2111 = vor.u32 %v2109, %v2099
        %v2113 = vshll.u32 %v2021, 16
        %v2115 = vrot.slane %v2113, 1
        %v2116 = vsel %vm1553, %v2111, %v2115
        %v2117 = vshrl.u32 %v2020, 16
        %v2119 = vor.u32 %v2117, %v2107
        %v2121 = vshll.u32 %v2022, 16
        %v2123 = vrot.slane %v2121, 1
        %v2124 = vsel %vm1553, %v2119, %v2123
        %v2125 = vshrl.u32 %v2021, 16
        %v2127 = vor.u32 %v2125, %v2115
        %v2129 = vshll.u32 %v2023, 16
        %v2131 = vrot.slane %v2129, 1
        %v2132 = vsel %vm1553, %v2127, %v2131
        %v2133 = vshrl.u32 %v2022, 16
        %v2135 = vor.u32 %v2133, %v2123
        %v2137 = vshll.u32 %v2024, 16
        %v2139 = vrot.slane %v2137, 1
        %v2140 = vsel %vm1553, %v2135, %v2139
        %v2141 = vshrl.u32 %v2023, 16
        %v2143 = vor.u32 %v2141, %v2131
        %v2145 = vshll.u32 %v2025, 16
        %v2147 = vrot.slane %v2145, 1
        %v2148 = vsel %vm1553, %v2143, %v2147
        %v2149 = vshrl.u32 %v2024, 16
        %v2151 = vor.u32 %v2149, %v2139
        %v2153 = vshll.u32 %v2026, 16
        %v2155 = vrot.slane %v2153, 1
        %v2156 = vsel %vm1553, %v2151, %v2155
        %v2157 = vshrl.u32 %v2025, 16
        %v2159 = vor.u32 %v2157, %v2147
        %v2161 = vshll.u32 %v2027, 16
        %v2163 = vrot.slane %v2161, 1
        %v2164 = vsel %vm1553, %v2159, %v2163
        %v2165 = vshrl.u32 %v2026, 16
        %v2167 = vor.u32 %v2165, %v2155
        %v2169 = vshll.u32 %v2028, 16
        %v2171 = vrot.slane %v2169, 1
        %v2172 = vsel %vm1553, %v2167, %v2171
        %v2173 = vshrl.u32 %v2027, 16
        %v2175 = vor.u32 %v2173, %v2163
        %v2177 = vshll.u32 %v2029, 16
        %v2179 = vrot.slane %v2177, 1
        %v2180 = vsel %vm1553, %v2175, %v2179
        %v2181 = vshrl.u32 %v2028, 16
        %v2183 = vor.u32 %v2181, %v2171
        %v2185 = vshll.u32 %v2030, 16
        %v2187 = vrot.slane %v2185, 1
        %v2188 = vsel %vm1553, %v2183, %v2187
        %v2189 = vshrl.u32 %v2029, 16
        %v2191 = vor.u32 %v2189, %v2179
        %v2193 = vshll.u32 %v2031, 16
        %v2195 = vrot.slane %v2193, 1
        %v2196 = vsel %vm1553, %v2191, %v2195
        %v2197 = vshrl.u32 %v2030, 16
        %v2199 = vor.u32 %v2197, %v2187
        %v2201 = vshll.u32 %v2032, 16
        %v2203 = vrot.slane %v2201, 1
        %v2204 = vsel %vm1553, %v2199, %v2203
        %v2205 = vshrl.u32 %v2031, 16
        %v2207 = vor.u32 %v2205, %v2195
        %v2209 = vshll.u32 %v2033, 16
        %v2211 = vrot.slane %v2209, 1
        %v2212 = vsel %vm1553, %v2207, %v2211
        %v2213 = vshrl.u32 %v2032, 16
        %v2215 = vor.u32 %v2213, %v2203
        %v2217 = vshll.u32 %v2034, 16
        %v2219 = vrot.slane %v2217, 1
        %v2220 = vsel %vm1553, %v2215, %v2219
        %v2221 = vshrl.u32 %v2033, 16
        %v2223 = vor.u32 %v2221, %v2211
        %v2225 = vshll.u32 %v2035, 16
        %v2227 = vrot.slane %v2225, 1
        %v2228 = vsel %vm1553, %v2223, %v2227
        %v2229 = vshrl.u32 %v2034, 16
        %v2231 = vor.u32 %v2229, %v2219
        %v2233 = vshll.u32 %v2036, 16
        %v2235 = vrot.slane %v2233, 1
        %v2236 = vsel %vm1553, %v2231, %v2235
        %v2262 = vunpack.c.l.b16 %v1427
        %v2263 = vunpack.c.h.b16 %v1427
        %v2264 = vpack.c.b16 %v1963, %v2262
        %v2265 = vpack.c.b16 %v1964, %v2263
        %v2266 = vrot.slane %v2264, 1
        %v2267 = vrot.slane %v2013, 1
        %v2268 = vsel %vm1783, %v2266, %v2267
        %v2269 = vrot.slane %v2265, 1
        %v2270 = vrot.slane %v2014, 1
        %v2271 = vsel %vm1783, %v2269, %v2270
        %v2272 = vrot.slane %v2015, 1
        %v2273 = vsel %vm1783, %v2267, %v2272
        %v2274 = vrot.slane %v2016, 1
        %v2275 = vsel %vm1783, %v2270, %v2274
        %v2276 = vrot.slane %v2017, 1
        %v2277 = vsel %vm1783, %v2272, %v2276
        %v2278 = vrot.slane %v2018, 1
        %v2279 = vsel %vm1783, %v2274, %v2278
        %v2280 = vrot.slane %v2019, 1
        %v2281 = vsel %vm1783, %v2276, %v2280
        %v2282 = vrot.slane %v2020, 1
        %v2283 = vsel %vm1783, %v2278, %v2282
        %v2284 = vrot.slane %v2021, 1
        %v2285 = vsel %vm1783, %v2280, %v2284
        %v2286 = vrot.slane %v2022, 1
        %v2287 = vsel %vm1783, %v2282, %v2286
        %v2288 = vrot.slane %v2023, 1
        %v2289 = vsel %vm1783, %v2284, %v2288
        %v2290 = vrot.slane %v2024, 1
        %v2291 = vsel %vm1783, %v2286, %v2290
        %v2292 = vrot.slane %v2025, 1
        %v2293 = vsel %vm1783, %v2288, %v2292
        %v2294 = vrot.slane %v2026, 1
        %v2295 = vsel %vm1783, %v2290, %v2294
        %v2296 = vrot.slane %v2027, 1
        %v2297 = vsel %vm1783, %v2292, %v2296
        %v2298 = vrot.slane %v2028, 1
        %v2299 = vsel %vm1783, %v2294, %v2298
        %v2300 = vrot.slane %v2029, 1
        %v2301 = vsel %vm1783, %v2296, %v2300
        %v2302 = vrot.slane %v2030, 1
        %v2303 = vsel %vm1783, %v2298, %v2302
        %v2304 = vrot.slane %v2031, 1
        %v2305 = vsel %vm1783, %v2300, %v2304
        %v2306 = vrot.slane %v2032, 1
        %v2307 = vsel %vm1783, %v2302, %v2306
        %v2308 = vrot.slane %v2033, 1
        %v2309 = vsel %vm1783, %v2304, %v2308
        %v2310 = vrot.slane %v2034, 1
        %v2311 = vsel %vm1783, %v2306, %v2310
        %v2312 = vrot.slane %v2035, 1
        %v2313 = vsel %vm1783, %v2308, %v2312
        %v2314 = vrot.slane %v2036, 1
        %v2315 = vsel %vm1783, %v2310, %v2314
        %v2340 = vld [vmem:[#allocation9] sm:$0xff]
        %v2341 = vld [vmem:[#allocation9 + $0x8] sm:$0xff]
        %v2342 = vld [vmem:[#allocation9 + $0x10] sm:$0xff]
        %v2343 = vld [vmem:[#allocation9 + $0x18] sm:$0xff]
        %v2344 = vld [vmem:[#allocation9 + $0x20] sm:$0xff]
        %v2345 = vld [vmem:[#allocation9 + $0x28] sm:$0xff]
        %v2346 = vld [vmem:[#allocation9 + $0x30] sm:$0xff]
        %v2347 = vld [vmem:[#allocation9 + $0x38] sm:$0xff]
        %v2348 = vld [vmem:[#allocation9 + $0x40] sm:$0xff]
        %v2349 = vld [vmem:[#allocation9 + $0x48] sm:$0xff]
        %v2350 = vld [vmem:[#allocation9 + $0x50] sm:$0xff]
        %v2351 = vld [vmem:[#allocation9 + $0x58] sm:$0xff]
        %v2352 = vld [vmem:[#allocation9 + $0x60] sm:$0xff]
        %v2353 = vld [vmem:[#allocation9 + $0x68] sm:$0xff]
        %v2354 = vld [vmem:[#allocation9 + $0x70] sm:$0xff]
        %v2355 = vld [vmem:[#allocation9 + $0x78] sm:$0xff]
        %v2356 = vld [vmem:[#allocation9 + $0x80] sm:$0xff]
        %v2357 = vld [vmem:[#allocation9 + $0x88] sm:$0xff]
        %v2358 = vld [vmem:[#allocation9 + $0x90] sm:$0xff]
        %v2359 = vld [vmem:[#allocation9 + $0x98] sm:$0xff]
        %v2360 = vld [vmem:[#allocation9 + $0xa0] sm:$0xff]
        %v2361 = vld [vmem:[#allocation9 + $0xa8] sm:$0xff]
        %v2362 = vld [vmem:[#allocation9 + $0xb0] sm:$0xff]
        %v2363 = vld [vmem:[#allocation9 + $0xb8] sm:$0xff]
        %v2364 = vld [vmem:[#allocation9 + $0xc0] sm:$0xff]
        %v2365 = vld [vmem:[#allocation9 + $0xc8] sm:$0xff]
        %v2366 = vld [vmem:[#allocation9 + $0xd0] sm:$0xff]
        %v2367 = vld [vmem:[#allocation9 + $0xd8] sm:$0xff]
        %v2368 = vld [vmem:[#allocation9 + $0xe0] sm:$0xff]
        %v2369 = vld [vmem:[#allocation9 + $0xe8] sm:$0xff]
        %v2370 = vld [vmem:[#allocation9 + $0xf0] sm:$0xff]
        %v2371 = vld [vmem:[#allocation9 + $0xf8] sm:$0xff]
        %v2372 = vld [vmem:[#allocation9 + $0x100] sm:$0xff]
        %v2373 = vld [vmem:[#allocation9 + $0x108] sm:$0xff]
        %v2374 = vld [vmem:[#allocation9 + $0x110] sm:$0xff]
        %v2375 = vld [vmem:[#allocation9 + $0x118] sm:$0xff]
        %v2376 = vld [vmem:[#allocation9 + $0x120] sm:$0xff]
        %v2377 = vld [vmem:[#allocation9 + $0x128] sm:$0xff]
        %v2378 = vld [vmem:[#allocation9 + $0x130] sm:$0xff]
        %v2379 = vld [vmem:[#allocation9 + $0x138] sm:$0xff]
        %v2380 = vld [vmem:[#allocation9 + $0x140] sm:$0xff]
        %v2381 = vld [vmem:[#allocation9 + $0x148] sm:$0xff]
        %v2382 = vld [vmem:[#allocation9 + $0x150] sm:$0xff]
        %v2383 = vld [vmem:[#allocation9 + $0x158] sm:$0xff]
        %v2384 = vld [vmem:[#allocation9 + $0x160] sm:$0xff]
        %v2385 = vld [vmem:[#allocation9 + $0x168] sm:$0xff]
        %v2386 = vld [vmem:[#allocation9 + $0x170] sm:$0xff]
        %v2387 = vld [vmem:[#allocation9 + $0x178] sm:$0xff]
        %v2388 = vld [vmem:[#allocation9 + $0x180] sm:$0xff]
        %v2389 = vld [vmem:[#allocation9 + $0x188] sm:$0xff]
        %v2390 = vld [vmem:[#allocation9 + $0x190] sm:$0xff]
        %v2391 = vld [vmem:[#allocation9 + $0x198] sm:$0xff]
        %v2392 = vld [vmem:[#allocation9 + $0x1a0] sm:$0xff]
        %v2393 = vld [vmem:[#allocation9 + $0x1a8] sm:$0xff]
        %v2394 = vld [vmem:[#allocation9 + $0x1b0] sm:$0xff]
        %v2395 = vld [vmem:[#allocation9 + $0x1b8] sm:$0xff]
        %v2396 = vld [vmem:[#allocation9 + $0x1c0] sm:$0xff]
        %v2397 = vld [vmem:[#allocation9 + $0x1c8] sm:$0xff]
        %v2398 = vld [vmem:[#allocation9 + $0x1d0] sm:$0xff]
        %v2399 = vld [vmem:[#allocation9 + $0x1d8] sm:$0xff]
        %v2400 = vld [vmem:[#allocation9 + $0x1e0] sm:$0xff]
        %v2401 = vld [vmem:[#allocation9 + $0x1e8] sm:$0xff]
        %v2402 = vld [vmem:[#allocation9 + $0x1f0] sm:$0xff]
        %v2403 = vld [vmem:[#allocation9 + $0x1f8] sm:$0xff]
        %v2404 = vld [vmem:[#allocation9 + $0x200] sm:$0xff]
        %v2405 = vld [vmem:[#allocation9 + $0x208] sm:$0xff]
        %v2406 = vld [vmem:[#allocation9 + $0x210] sm:$0xff]
        %v2407 = vld [vmem:[#allocation9 + $0x218] sm:$0xff]
        %v2408 = vld [vmem:[#allocation9 + $0x220] sm:$0xff]
        %v2409 = vld [vmem:[#allocation9 + $0x228] sm:$0xff]
        %v2410 = vld [vmem:[#allocation9 + $0x230] sm:$0xff]
        %v2411 = vld [vmem:[#allocation9 + $0x238] sm:$0xff]
        %v2412 = vld [vmem:[#allocation9 + $0x240] sm:$0xff]
        %v2413 = vld [vmem:[#allocation9 + $0x248] sm:$0xff]
        %v2414 = vld [vmem:[#allocation9 + $0x250] sm:$0xff]
        %v2415 = vld [vmem:[#allocation9 + $0x258] sm:$0xff]
        %v2416 = vld [vmem:[#allocation9 + $0x260] sm:$0xff]
        %v2417 = vld [vmem:[#allocation9 + $0x268] sm:$0xff]
        %v2418 = vld [vmem:[#allocation9 + $0x270] sm:$0xff]
        %v2419 = vld [vmem:[#allocation9 + $0x278] sm:$0xff]
        %v2420 = vld [vmem:[#allocation9 + $0x280] sm:$0xff]
        %v2421 = vld [vmem:[#allocation9 + $0x288] sm:$0xff]
        %v2422 = vld [vmem:[#allocation9 + $0x290] sm:$0xff]
        %v2423 = vld [vmem:[#allocation9 + $0x298] sm:$0xff]
        %v2424 = vld [vmem:[#allocation9 + $0x2a0] sm:$0xff]
        %v2425 = vld [vmem:[#allocation9 + $0x2a8] sm:$0xff]
        %v2426 = vld [vmem:[#allocation9 + $0x2b0] sm:$0xff]
        %v2427 = vld [vmem:[#allocation9 + $0x2b8] sm:$0xff]
        %v2428 = vld [vmem:[#allocation9 + $0x2c0] sm:$0xff]
        %v2429 = vld [vmem:[#allocation9 + $0x2c8] sm:$0xff]
        %v2430 = vld [vmem:[#allocation9 + $0x2d0] sm:$0xff]
        %v2431 = vld [vmem:[#allocation9 + $0x2d8] sm:$0xff]
        %v2432 = vld [vmem:[#allocation9 + $0x2e0] sm:$0xff]
        %v2433 = vld [vmem:[#allocation9 + $0x2e8] sm:$0xff]
        %v2434 = vld [vmem:[#allocation9 + $0x2f0] sm:$0xff]
        %v2435 = vld [vmem:[#allocation9 + $0x2f8] sm:$0xff]
        %v2436 = vld [vmem:[#allocation9 + $0x300] sm:$0xff]
        %v2437 = vld [vmem:[#allocation9 + $0x308] sm:$0xff]
        %v2438 = vld [vmem:[#allocation9 + $0x310] sm:$0xff]
        %v2439 = vld [vmem:[#allocation9 + $0x318] sm:$0xff]
        %v2440 = vld [vmem:[#allocation9 + $0x320] sm:$0xff]
        %v2441 = vld [vmem:[#allocation9 + $0x328] sm:$0xff]
        %v2442 = vld [vmem:[#allocation9 + $0x330] sm:$0xff]
        %v2443 = vld [vmem:[#allocation9 + $0x338] sm:$0xff]
        %v2444 = vld [vmem:[#allocation9 + $0x340] sm:$0xff]
        %v2445 = vld [vmem:[#allocation9 + $0x348] sm:$0xff]
        %v2446 = vld [vmem:[#allocation9 + $0x350] sm:$0xff]
        %v2447 = vld [vmem:[#allocation9 + $0x358] sm:$0xff]
        %v2448 = vld [vmem:[#allocation9 + $0x360] sm:$0xff]
        %v2449 = vld [vmem:[#allocation9 + $0x368] sm:$0xff]
        %v2450 = vld [vmem:[#allocation9 + $0x370] sm:$0xff]
        %v2451 = vld [vmem:[#allocation9 + $0x378] sm:$0xff]
        %v2452 = vld [vmem:[#allocation9 + $0x380] sm:$0xff]
        %v2453 = vld [vmem:[#allocation9 + $0x388] sm:$0xff]
        %v2454 = vld [vmem:[#allocation9 + $0x390] sm:$0xff]
        %v2455 = vld [vmem:[#allocation9 + $0x398] sm:$0xff]
        %v2456 = vld [vmem:[#allocation9 + $0x3a0] sm:$0xff]
        %v2457 = vld [vmem:[#allocation9 + $0x3a8] sm:$0xff]
        %v2458 = vld [vmem:[#allocation9 + $0x3b0] sm:$0xff]
        %v2459 = vld [vmem:[#allocation9 + $0x3b8] sm:$0xff]
        %v2460 = vld [vmem:[#allocation9 + $0x3c0] sm:$0xff]
        %v2461 = vld [vmem:[#allocation9 + $0x3c8] sm:$0xff]
        %v2462 = vld [vmem:[#allocation9 + $0x3d0] sm:$0xff]
        %v2463 = vld [vmem:[#allocation9 + $0x3d8] sm:$0xff]
        %v2464 = vld [vmem:[#allocation9 + $0x3e0] sm:$0xff]
        %v2465 = vld [vmem:[#allocation9 + $0x3e8] sm:$0xff]
        %v2466 = vld [vmem:[#allocation9 + $0x3f0] sm:$0xff]
        %v2467 = vld [vmem:[#allocation9 + $0x3f8] sm:$0xff]
        %v2468 = vld [vmem:[#allocation9 + $0x400] sm:$0xff]
        %v2469 = vld [vmem:[#allocation9 + $0x408] sm:$0xff]
        %v2470 = vld [vmem:[#allocation9 + $0x410] sm:$0xff]
        %v2471 = vld [vmem:[#allocation9 + $0x418] sm:$0xff]
        %v2472 = vld [vmem:[#allocation9 + $0x420] sm:$0xff]
        %v2473 = vld [vmem:[#allocation9 + $0x428] sm:$0xff]
        %v2474 = vld [vmem:[#allocation9 + $0x430] sm:$0xff]
        %v2475 = vld [vmem:[#allocation9 + $0x438] sm:$0xff]
        %v2476 = vld [vmem:[#allocation9 + $0x440] sm:$0xff]
        %v2477 = vld [vmem:[#allocation9 + $0x448] sm:$0xff]
        %v2478 = vld [vmem:[#allocation9 + $0x450] sm:$0xff]
        %v2479 = vld [vmem:[#allocation9 + $0x458] sm:$0xff]
        %v2480 = vld [vmem:[#allocation9 + $0x460] sm:$0xff]
        %v2481 = vld [vmem:[#allocation9 + $0x468] sm:$0xff]
        %v2482 = vld [vmem:[#allocation9 + $0x470] sm:$0xff]
        %v2483 = vld [vmem:[#allocation9 + $0x478] sm:$0xff]
        %v2484 = vld [vmem:[#allocation9 + $0x480] sm:$0xff]
        %v2485 = vld [vmem:[#allocation9 + $0x488] sm:$0xff]
        %v2486 = vld [vmem:[#allocation9 + $0x490] sm:$0xff]
        %v2487 = vld [vmem:[#allocation9 + $0x498] sm:$0xff]
        %v2488 = vld [vmem:[#allocation9 + $0x4a0] sm:$0xff]
        %v2489 = vld [vmem:[#allocation9 + $0x4a8] sm:$0xff]
        %v2490 = vld [vmem:[#allocation9 + $0x4b0] sm:$0xff]
        %v2491 = vld [vmem:[#allocation9 + $0x4b8] sm:$0xff]
        %v2492 = vld [vmem:[#allocation9 + $0x4c0] sm:$0xff]
        %v2493 = vld [vmem:[#allocation9 + $0x4c8] sm:$0xff]
        %v2494 = vld [vmem:[#allocation9 + $0x4d0] sm:$0xff]
        %v2495 = vld [vmem:[#allocation9 + $0x4d8] sm:$0xff]
        %v2496 = vld [vmem:[#allocation9 + $0x4e0] sm:$0xff]
        %v2497 = vld [vmem:[#allocation9 + $0x4e8] sm:$0xff]
        %v2498 = vld [vmem:[#allocation9 + $0x4f0] sm:$0xff]
        %v2499 = vld [vmem:[#allocation9 + $0x4f8] sm:$0xff]
        %v2500 = vld [vmem:[#allocation9 + $0x500] sm:$0xff]
        %v2501 = vld [vmem:[#allocation9 + $0x508] sm:$0xff]
        %v2502 = vld [vmem:[#allocation9 + $0x510] sm:$0xff]
        %v2503 = vld [vmem:[#allocation9 + $0x518] sm:$0xff]
        %v2504 = vld [vmem:[#allocation9 + $0x520] sm:$0xff]
        %v2505 = vld [vmem:[#allocation9 + $0x528] sm:$0xff]
        %v2506 = vld [vmem:[#allocation9 + $0x530] sm:$0xff]
        %v2507 = vld [vmem:[#allocation9 + $0x538] sm:$0xff]
        %v2508 = vld [vmem:[#allocation9 + $0x540] sm:$0xff]
        %v2509 = vld [vmem:[#allocation9 + $0x548] sm:$0xff]
        %v2510 = vld [vmem:[#allocation9 + $0x550] sm:$0xff]
        %v2511 = vld [vmem:[#allocation9 + $0x558] sm:$0xff]
        %v2512 = vld [vmem:[#allocation9 + $0x560] sm:$0xff]
        %v2513 = vld [vmem:[#allocation9 + $0x568] sm:$0xff]
        %v2514 = vld [vmem:[#allocation9 + $0x570] sm:$0xff]
        %v2515 = vld [vmem:[#allocation9 + $0x578] sm:$0xff]
        %v2516 = vld [vmem:[#allocation9 + $0x580] sm:$0xff]
        %v2517 = vld [vmem:[#allocation9 + $0x588] sm:$0xff]
        %v2518 = vld [vmem:[#allocation9 + $0x590] sm:$0xff]
        %v2519 = vld [vmem:[#allocation9 + $0x598] sm:$0xff]
        %v2520 = vld [vmem:[#allocation9 + $0x5a0] sm:$0xff]
        %v2521 = vld [vmem:[#allocation9 + $0x5a8] sm:$0xff]
        %v2522 = vld [vmem:[#allocation9 + $0x5b0] sm:$0xff]
        %v2523 = vld [vmem:[#allocation9 + $0x5b8] sm:$0xff]
        %v2524 = vld [vmem:[#allocation9 + $0x5c0] sm:$0xff]
        %v2525 = vld [vmem:[#allocation9 + $0x5c8] sm:$0xff]
        %v2526 = vld [vmem:[#allocation9 + $0x5d0] sm:$0xff]
        %v2527 = vld [vmem:[#allocation9 + $0x5d8] sm:$0xff]
        %v2528 = vld [vmem:[#allocation9 + $0x5e0] sm:$0xff]
        %v2529 = vld [vmem:[#allocation9 + $0x5e8] sm:$0xff]
        %v2530 = vld [vmem:[#allocation9 + $0x5f0] sm:$0xff]
        %v2531 = vld [vmem:[#allocation9 + $0x5f8] sm:$0xff]
        %v2532 = vld [vmem:[#allocation9 + $0x600] sm:$0xff]
        %v2533 = vld [vmem:[#allocation9 + $0x608] sm:$0xff]
        %v2534 = vld [vmem:[#allocation9 + $0x610] sm:$0xff]
        %v2535 = vld [vmem:[#allocation9 + $0x618] sm:$0xff]
        %v2536 = vld [vmem:[#allocation9 + $0x620] sm:$0xff]
        %v2537 = vld [vmem:[#allocation9 + $0x628] sm:$0xff]
        %v2538 = vld [vmem:[#allocation9 + $0x630] sm:$0xff]
        %v2539 = vld [vmem:[#allocation9 + $0x638] sm:$0xff]
        %v2540 = vld [vmem:[#allocation9 + $0x640] sm:$0xff]
        %v2541 = vld [vmem:[#allocation9 + $0x648] sm:$0xff]
        %v2542 = vld [vmem:[#allocation9 + $0x650] sm:$0xff]
        %v2543 = vld [vmem:[#allocation9 + $0x658] sm:$0xff]
        %v2544 = vld [vmem:[#allocation9 + $0x660] sm:$0xff]
        %v2545 = vld [vmem:[#allocation9 + $0x668] sm:$0xff]
        %v2546 = vld [vmem:[#allocation9 + $0x670] sm:$0xff]
        %v2547 = vld [vmem:[#allocation9 + $0x678] sm:$0xff]
        %v2548 = vld [vmem:[#allocation9 + $0x680] sm:$0xff]
        %v2549 = vld [vmem:[#allocation9 + $0x688] sm:$0xff]
        %v2550 = vld [vmem:[#allocation9 + $0x690] sm:$0xff]
        %v2551 = vld [vmem:[#allocation9 + $0x698] sm:$0xff]
        %v2552 = vld [vmem:[#allocation9 + $0x6a0] sm:$0xff]
        %v2553 = vld [vmem:[#allocation9 + $0x6a8] sm:$0xff]
        %v2554 = vld [vmem:[#allocation9 + $0x6b0] sm:$0xff]
        %v2555 = vld [vmem:[#allocation9 + $0x6b8] sm:$0xff]
        %v2556 = vld [vmem:[#allocation9 + $0x6c0] sm:$0xff]
        %v2557 = vld [vmem:[#allocation9 + $0x6c8] sm:$0xff]
        %v2558 = vld [vmem:[#allocation9 + $0x6d0] sm:$0xff]
        %v2559 = vld [vmem:[#allocation9 + $0x6d8] sm:$0xff]
        %v2560 = vld [vmem:[#allocation9 + $0x6e0] sm:$0xff]
        %v2561 = vld [vmem:[#allocation9 + $0x6e8] sm:$0xff]
        %v2562 = vld [vmem:[#allocation9 + $0x6f0] sm:$0xff]
        %v2563 = vld [vmem:[#allocation9 + $0x6f8] sm:$0xff]
        %v2564 = vld [vmem:[#allocation9 + $0x700] sm:$0xff]
        %v2565 = vld [vmem:[#allocation9 + $0x708] sm:$0xff]
        %v2566 = vld [vmem:[#allocation9 + $0x710] sm:$0xff]
        %v2567 = vld [vmem:[#allocation9 + $0x718] sm:$0xff]
        %v2568 = vld [vmem:[#allocation9 + $0x720] sm:$0xff]
        %v2569 = vld [vmem:[#allocation9 + $0x728] sm:$0xff]
        %v2570 = vld [vmem:[#allocation9 + $0x730] sm:$0xff]
        %v2571 = vld [vmem:[#allocation9 + $0x738] sm:$0xff]
        %v2572 = vld [vmem:[#allocation9 + $0x740] sm:$0xff]
        %v2573 = vld [vmem:[#allocation9 + $0x748] sm:$0xff]
        %v2574 = vld [vmem:[#allocation9 + $0x750] sm:$0xff]
        %v2575 = vld [vmem:[#allocation9 + $0x758] sm:$0xff]
        %v2576 = vld [vmem:[#allocation9 + $0x760] sm:$0xff]
        %v2577 = vld [vmem:[#allocation9 + $0x768] sm:$0xff]
        %v2578 = vld [vmem:[#allocation9 + $0x770] sm:$0xff]
        %v2579 = vld [vmem:[#allocation9 + $0x778] sm:$0xff]
        %v2580 = vld [vmem:[#allocation9 + $0x780] sm:$0xff]
        %v2581 = vld [vmem:[#allocation9 + $0x788] sm:$0xff]
        %v2582 = vld [vmem:[#allocation9 + $0x790] sm:$0xff]
        %v2583 = vld [vmem:[#allocation9 + $0x798] sm:$0xff]
        %v2584 = vld [vmem:[#allocation9 + $0x7a0] sm:$0xff]
        %v2585 = vld [vmem:[#allocation9 + $0x7a8] sm:$0xff]
        %v2586 = vld [vmem:[#allocation9 + $0x7b0] sm:$0xff]
        %v2587 = vld [vmem:[#allocation9 + $0x7b8] sm:$0xff]
        %v2588 = vld [vmem:[#allocation9 + $0x7c0] sm:$0xff]
        %v2589 = vld [vmem:[#allocation9 + $0x7c8] sm:$0xff]
        %v2590 = vld [vmem:[#allocation9 + $0x7d0] sm:$0xff]
        %v2591 = vld [vmem:[#allocation9 + $0x7d8] sm:$0xff]
        %v2592 = vld [vmem:[#allocation9 + $0x7e0] sm:$0xff]
        %v2593 = vld [vmem:[#allocation9 + $0x7e8] sm:$0xff]
        %v2594 = vld [vmem:[#allocation9 + $0x7f0] sm:$0xff]
        %v2595 = vld [vmem:[#allocation9 + $0x7f8] sm:$0xff]
        %v2596 = vld [vmem:[#allocation9 + $0x800] sm:$0xff]
        %v2597 = vld [vmem:[#allocation9 + $0x808] sm:$0xff]
        %v2598 = vld [vmem:[#allocation9 + $0x810] sm:$0xff]
        %v2599 = vld [vmem:[#allocation9 + $0x818] sm:$0xff]
        %v2600 = vld [vmem:[#allocation9 + $0x820] sm:$0xff]
        %v2601 = vld [vmem:[#allocation9 + $0x828] sm:$0xff]
        %v2602 = vld [vmem:[#allocation9 + $0x830] sm:$0xff]
        %v2603 = vld [vmem:[#allocation9 + $0x838] sm:$0xff]
        %v2604 = vld [vmem:[#allocation9 + $0x840] sm:$0xff]
        %v2605 = vld [vmem:[#allocation9 + $0x848] sm:$0xff]
        %v2606 = vld [vmem:[#allocation9 + $0x850] sm:$0xff]
        %v2607 = vld [vmem:[#allocation9 + $0x858] sm:$0xff]
        %v2608 = vld [vmem:[#allocation9 + $0x860] sm:$0xff]
        %v2609 = vld [vmem:[#allocation9 + $0x868] sm:$0xff]
        %v2610 = vld [vmem:[#allocation9 + $0x870] sm:$0xff]
        %v2611 = vld [vmem:[#allocation9 + $0x878] sm:$0xff]
        %v2612 = vld [vmem:[#allocation9 + $0x880] sm:$0xff]
        %v2613 = vld [vmem:[#allocation9 + $0x888] sm:$0xff]
        %v2614 = vld [vmem:[#allocation9 + $0x890] sm:$0xff]
        %v2615 = vld [vmem:[#allocation9 + $0x898] sm:$0xff]
        %v2616 = vld [vmem:[#allocation9 + $0x8a0] sm:$0xff]
        %v2617 = vld [vmem:[#allocation9 + $0x8a8] sm:$0xff]
        %v2618 = vld [vmem:[#allocation9 + $0x8b0] sm:$0xff]
        %v2619 = vld [vmem:[#allocation9 + $0x8b8] sm:$0xff]
        %v2620 = vld [vmem:[#allocation9 + $0x8c0] sm:$0xff]
        %v2621 = vld [vmem:[#allocation9 + $0x8c8] sm:$0xff]
        %v2622 = vld [vmem:[#allocation9 + $0x8d0] sm:$0xff]
        %v2623 = vld [vmem:[#allocation9 + $0x8d8] sm:$0xff]
        %v2624 = vld [vmem:[#allocation9 + $0x8e0] sm:$0xff]
        %v2625 = vld [vmem:[#allocation9 + $0x8e8] sm:$0xff]
        %v2626 = vld [vmem:[#allocation9 + $0x8f0] sm:$0xff]
        %v2627 = vld [vmem:[#allocation9 + $0x8f8] sm:$0xff]
        %v2916 = vunpack.c.l.b16 %v2340
        %v2917 = vunpack.c.h.b16 %v2340
        %v2918 = vunpack.c.l.b16 %v2341
        %v2919 = vunpack.c.h.b16 %v2341
        %v2920 = vunpack.c.l.b16 %v2342
        %v2921 = vunpack.c.h.b16 %v2342
        %v2922 = vunpack.c.l.b16 %v2343
        %v2923 = vunpack.c.h.b16 %v2343
        %v2924 = vunpack.c.l.b16 %v2344
        %v2925 = vunpack.c.h.b16 %v2344
        %v2926 = vunpack.c.l.b16 %v2345
        %v2927 = vunpack.c.h.b16 %v2345
        %v2928 = vunpack.c.l.b16 %v2346
        %v2929 = vunpack.c.h.b16 %v2346
        %v2930 = vunpack.c.l.b16 %v2347
        %v2931 = vunpack.c.h.b16 %v2347
        %v2932 = vunpack.c.l.b16 %v2348
        %v2933 = vunpack.c.h.b16 %v2348
        %v2934 = vunpack.c.l.b16 %v2349
        %v2935 = vunpack.c.h.b16 %v2349
        %v2936 = vunpack.c.l.b16 %v2350
        %v2937 = vunpack.c.h.b16 %v2350
        %v2938 = vunpack.c.l.b16 %v2351
        %v2939 = vunpack.c.h.b16 %v2351
        %v2940 = vunpack.c.l.b16 %v2352
        %v2941 = vunpack.c.h.b16 %v2352
        %v2942 = vunpack.c.l.b16 %v2353
        %v2943 = vunpack.c.h.b16 %v2353
        %v2944 = vunpack.c.l.b16 %v2354
        %v2945 = vunpack.c.h.b16 %v2354
        %v2946 = vunpack.c.l.b16 %v2355
        %v2947 = vunpack.c.h.b16 %v2355
        %v2948 = vunpack.c.l.b16 %v2356
        %v2949 = vunpack.c.h.b16 %v2356
        %v2950 = vunpack.c.l.b16 %v2357
        %v2951 = vunpack.c.h.b16 %v2357
        %v2952 = vunpack.c.l.b16 %v2358
        %v2953 = vunpack.c.h.b16 %v2358
        %v2954 = vunpack.c.l.b16 %v2359
        %v2955 = vunpack.c.h.b16 %v2359
        %v2956 = vunpack.c.l.b16 %v2360
        %v2957 = vunpack.c.h.b16 %v2360
        %v2958 = vunpack.c.l.b16 %v2361
        %v2959 = vunpack.c.h.b16 %v2361
        %v2960 = vunpack.c.l.b16 %v2362
        %v2961 = vunpack.c.h.b16 %v2362
        %v2962 = vunpack.c.l.b16 %v2363
        %v2963 = vunpack.c.h.b16 %v2363
        %v2964 = vunpack.c.l.b16 %v2364
        %v2965 = vunpack.c.h.b16 %v2364
        %v2966 = vunpack.c.l.b16 %v2365
        %v2967 = vunpack.c.h.b16 %v2365
        %v2968 = vunpack.c.l.b16 %v2366
        %v2969 = vunpack.c.h.b16 %v2366
        %v2970 = vunpack.c.l.b16 %v2367
        %v2971 = vunpack.c.h.b16 %v2367
        %v2972 = vunpack.c.l.b16 %v2368
        %v2973 = vunpack.c.h.b16 %v2368
        %v2974 = vunpack.c.l.b16 %v2369
        %v2975 = vunpack.c.h.b16 %v2369
        %v2976 = vunpack.c.l.b16 %v2370
        %v2977 = vunpack.c.h.b16 %v2370
        %v2978 = vunpack.c.l.b16 %v2371
        %v2979 = vunpack.c.h.b16 %v2371
        %v2980 = vunpack.c.l.b16 %v2372
        %v2981 = vunpack.c.h.b16 %v2372
        %v2982 = vunpack.c.l.b16 %v2373
        %v2983 = vunpack.c.h.b16 %v2373
        %v2984 = vunpack.c.l.b16 %v2374
        %v2985 = vunpack.c.h.b16 %v2374
        %v2986 = vunpack.c.l.b16 %v2375
        %v2987 = vunpack.c.h.b16 %v2375
        %v2988 = vunpack.c.l.b16 %v2376
        %v2989 = vunpack.c.h.b16 %v2376
        %v2990 = vunpack.c.l.b16 %v2377
        %v2991 = vunpack.c.h.b16 %v2377
        %v2992 = vunpack.c.l.b16 %v2378
        %v2993 = vunpack.c.h.b16 %v2378
        %v2994 = vunpack.c.l.b16 %v2379
        %v2995 = vunpack.c.h.b16 %v2379
        %v2996 = vunpack.c.l.b16 %v2380
        %v2997 = vunpack.c.h.b16 %v2380
        %v2998 = vunpack.c.l.b16 %v2381
        %v2999 = vunpack.c.h.b16 %v2381
        %v3000 = vunpack.c.l.b16 %v2382
        %v3001 = vunpack.c.h.b16 %v2382
        %v3002 = vunpack.c.l.b16 %v2383
        %v3003 = vunpack.c.h.b16 %v2383
        %v3004 = vunpack.c.l.b16 %v2384
        %v3005 = vunpack.c.h.b16 %v2384
        %v3006 = vunpack.c.l.b16 %v2385
        %v3007 = vunpack.c.h.b16 %v2385
        %v3008 = vunpack.c.l.b16 %v2386
        %v3009 = vunpack.c.h.b16 %v2386
        %v3010 = vunpack.c.l.b16 %v2387
        %v3011 = vunpack.c.h.b16 %v2387
        %v3012 = vunpack.c.l.b16 %v2388
        %v3013 = vunpack.c.h.b16 %v2388
        %v3014 = vunpack.c.l.b16 %v2389
        %v3015 = vunpack.c.h.b16 %v2389
        %v3016 = vunpack.c.l.b16 %v2390
        %v3017 = vunpack.c.h.b16 %v2390
        %v3018 = vunpack.c.l.b16 %v2391
        %v3019 = vunpack.c.h.b16 %v2391
        %v3020 = vunpack.c.l.b16 %v2392
        %v3021 = vunpack.c.h.b16 %v2392
        %v3022 = vunpack.c.l.b16 %v2393
        %v3023 = vunpack.c.h.b16 %v2393
        %v3024 = vunpack.c.l.b16 %v2394
        %v3025 = vunpack.c.h.b16 %v2394
        %v3026 = vunpack.c.l.b16 %v2395
        %v3027 = vunpack.c.h.b16 %v2395
        %v3028 = vunpack.c.l.b16 %v2396
        %v3029 = vunpack.c.h.b16 %v2396
        %v3030 = vunpack.c.l.b16 %v2397
        %v3031 = vunpack.c.h.b16 %v2397
        %v3032 = vunpack.c.l.b16 %v2398
        %v3033 = vunpack.c.h.b16 %v2398
        %v3034 = vunpack.c.l.b16 %v2399
        %v3035 = vunpack.c.h.b16 %v2399
        %v3036 = vunpack.c.l.b16 %v2400
        %v3037 = vunpack.c.h.b16 %v2400
        %v3038 = vunpack.c.l.b16 %v2401
        %v3039 = vunpack.c.h.b16 %v2401
        %v3040 = vunpack.c.l.b16 %v2402
        %v3041 = vunpack.c.h.b16 %v2402
        %v3042 = vunpack.c.l.b16 %v2403
        %v3043 = vunpack.c.h.b16 %v2403
        %v3044 = vunpack.c.l.b16 %v2404
        %v3045 = vunpack.c.h.b16 %v2404
        %v3046 = vunpack.c.l.b16 %v2405
        %v3047 = vunpack.c.h.b16 %v2405
        %v3048 = vunpack.c.l.b16 %v2406
        %v3049 = vunpack.c.h.b16 %v2406
        %v3050 = vunpack.c.l.b16 %v2407
        %v3051 = vunpack.c.h.b16 %v2407
        %v3052 = vunpack.c.l.b16 %v2408
        %v3053 = vunpack.c.h.b16 %v2408
        %v3054 = vunpack.c.l.b16 %v2409
        %v3055 = vunpack.c.h.b16 %v2409
        %v3056 = vunpack.c.l.b16 %v2410
        %v3057 = vunpack.c.h.b16 %v2410
        %v3058 = vunpack.c.l.b16 %v2411
        %v3059 = vunpack.c.h.b16 %v2411
        %v3060 = vunpack.c.l.b16 %v2412
        %v3061 = vunpack.c.h.b16 %v2412
        %v3062 = vunpack.c.l.b16 %v2413
        %v3063 = vunpack.c.h.b16 %v2413
        %v3064 = vunpack.c.l.b16 %v2414
        %v3065 = vunpack.c.h.b16 %v2414
        %v3066 = vunpack.c.l.b16 %v2415
        %v3067 = vunpack.c.h.b16 %v2415
        %v3068 = vunpack.c.l.b16 %v2416
        %v3069 = vunpack.c.h.b16 %v2416
        %v3070 = vunpack.c.l.b16 %v2417
        %v3071 = vunpack.c.h.b16 %v2417
        %v3072 = vunpack.c.l.b16 %v2418
        %v3073 = vunpack.c.h.b16 %v2418
        %v3074 = vunpack.c.l.b16 %v2419
        %v3075 = vunpack.c.h.b16 %v2419
        %v3076 = vunpack.c.l.b16 %v2420
        %v3077 = vunpack.c.h.b16 %v2420
        %v3078 = vunpack.c.l.b16 %v2421
        %v3079 = vunpack.c.h.b16 %v2421
        %v3080 = vunpack.c.l.b16 %v2422
        %v3081 = vunpack.c.h.b16 %v2422
        %v3082 = vunpack.c.l.b16 %v2423
        %v3083 = vunpack.c.h.b16 %v2423
        %v3084 = vunpack.c.l.b16 %v2424
        %v3085 = vunpack.c.h.b16 %v2424
        %v3086 = vunpack.c.l.b16 %v2425
        %v3087 = vunpack.c.h.b16 %v2425
        %v3088 = vunpack.c.l.b16 %v2426
        %v3089 = vunpack.c.h.b16 %v2426
        %v3090 = vunpack.c.l.b16 %v2427
        %v3091 = vunpack.c.h.b16 %v2427
        %v3092 = vunpack.c.l.b16 %v2428
        %v3093 = vunpack.c.h.b16 %v2428
        %v3094 = vunpack.c.l.b16 %v2429
        %v3095 = vunpack.c.h.b16 %v2429
        %v3096 = vunpack.c.l.b16 %v2430
        %v3097 = vunpack.c.h.b16 %v2430
        %v3098 = vunpack.c.l.b16 %v2431
        %v3099 = vunpack.c.h.b16 %v2431
        %v3100 = vunpack.c.l.b16 %v2432
        %v3101 = vunpack.c.h.b16 %v2432
        %v3102 = vunpack.c.l.b16 %v2433
        %v3103 = vunpack.c.h.b16 %v2433
        %v3104 = vunpack.c.l.b16 %v2434
        %v3105 = vunpack.c.h.b16 %v2434
        %v3106 = vunpack.c.l.b16 %v2435
        %v3107 = vunpack.c.h.b16 %v2435
        %v3108 = vunpack.c.l.b16 %v2436
        %v3109 = vunpack.c.h.b16 %v2436
        %v3110 = vunpack.c.l.b16 %v2437
        %v3111 = vunpack.c.h.b16 %v2437
        %v3112 = vunpack.c.l.b16 %v2438
        %v3113 = vunpack.c.h.b16 %v2438
        %v3114 = vunpack.c.l.b16 %v2439
        %v3115 = vunpack.c.h.b16 %v2439
        %v3116 = vunpack.c.l.b16 %v2440
        %v3117 = vunpack.c.h.b16 %v2440
        %v3118 = vunpack.c.l.b16 %v2441
        %v3119 = vunpack.c.h.b16 %v2441
        %v3120 = vunpack.c.l.b16 %v2442
        %v3121 = vunpack.c.h.b16 %v2442
        %v3122 = vunpack.c.l.b16 %v2443
        %v3123 = vunpack.c.h.b16 %v2443
        %v3124 = vunpack.c.l.b16 %v2444
        %v3125 = vunpack.c.h.b16 %v2444
        %v3126 = vunpack.c.l.b16 %v2445
        %v3127 = vunpack.c.h.b16 %v2445
        %v3128 = vunpack.c.l.b16 %v2446
        %v3129 = vunpack.c.h.b16 %v2446
        %v3130 = vunpack.c.l.b16 %v2447
        %v3131 = vunpack.c.h.b16 %v2447
        %v3132 = vunpack.c.l.b16 %v2448
        %v3133 = vunpack.c.h.b16 %v2448
        %v3134 = vunpack.c.l.b16 %v2449
        %v3135 = vunpack.c.h.b16 %v2449
        %v3136 = vunpack.c.l.b16 %v2450
        %v3137 = vunpack.c.h.b16 %v2450
        %v3138 = vunpack.c.l.b16 %v2451
        %v3139 = vunpack.c.h.b16 %v2451
        %v3140 = vunpack.c.l.b16 %v2452
        %v3141 = vunpack.c.h.b16 %v2452
        %v3142 = vunpack.c.l.b16 %v2453
        %v3143 = vunpack.c.h.b16 %v2453
        %v3144 = vunpack.c.l.b16 %v2454
        %v3145 = vunpack.c.h.b16 %v2454
        %v3146 = vunpack.c.l.b16 %v2455
        %v3147 = vunpack.c.h.b16 %v2455
        %v3148 = vunpack.c.l.b16 %v2456
        %v3149 = vunpack.c.h.b16 %v2456
        %v3150 = vunpack.c.l.b16 %v2457
        %v3151 = vunpack.c.h.b16 %v2457
        %v3152 = vunpack.c.l.b16 %v2458
        %v3153 = vunpack.c.h.b16 %v2458
        %v3154 = vunpack.c.l.b16 %v2459
        %v3155 = vunpack.c.h.b16 %v2459
        %v3156 = vunpack.c.l.b16 %v2460
        %v3157 = vunpack.c.h.b16 %v2460
        %v3158 = vunpack.c.l.b16 %v2461
        %v3159 = vunpack.c.h.b16 %v2461
        %v3160 = vunpack.c.l.b16 %v2462
        %v3161 = vunpack.c.h.b16 %v2462
        %v3162 = vunpack.c.l.b16 %v2463
        %v3163 = vunpack.c.h.b16 %v2463
        %v3164 = vunpack.c.l.b16 %v2464
        %v3165 = vunpack.c.h.b16 %v2464
        %v3166 = vunpack.c.l.b16 %v2465
        %v3167 = vunpack.c.h.b16 %v2465
        %v3168 = vunpack.c.l.b16 %v2466
        %v3169 = vunpack.c.h.b16 %v2466
        %v3170 = vunpack.c.l.b16 %v2467
        %v3171 = vunpack.c.h.b16 %v2467
        %v3172 = vunpack.c.l.b16 %v2468
        %v3173 = vunpack.c.h.b16 %v2468
        %v3174 = vunpack.c.l.b16 %v2469
        %v3175 = vunpack.c.h.b16 %v2469
        %v3176 = vunpack.c.l.b16 %v2470
        %v3177 = vunpack.c.h.b16 %v2470
        %v3178 = vunpack.c.l.b16 %v2471
        %v3179 = vunpack.c.h.b16 %v2471
        %v3180 = vunpack.c.l.b16 %v2472
        %v3181 = vunpack.c.h.b16 %v2472
        %v3182 = vunpack.c.l.b16 %v2473
        %v3183 = vunpack.c.h.b16 %v2473
        %v3184 = vunpack.c.l.b16 %v2474
        %v3185 = vunpack.c.h.b16 %v2474
        %v3186 = vunpack.c.l.b16 %v2475
        %v3187 = vunpack.c.h.b16 %v2475
        %v3188 = vunpack.c.l.b16 %v2476
        %v3189 = vunpack.c.h.b16 %v2476
        %v3190 = vunpack.c.l.b16 %v2477
        %v3191 = vunpack.c.h.b16 %v2477
        %v3192 = vunpack.c.l.b16 %v2478
        %v3193 = vunpack.c.h.b16 %v2478
        %v3194 = vunpack.c.l.b16 %v2479
        %v3195 = vunpack.c.h.b16 %v2479
        %v3196 = vunpack.c.l.b16 %v2480
        %v3197 = vunpack.c.h.b16 %v2480
        %v3198 = vunpack.c.l.b16 %v2481
        %v3199 = vunpack.c.h.b16 %v2481
        %v3200 = vunpack.c.l.b16 %v2482
        %v3201 = vunpack.c.h.b16 %v2482
        %v3202 = vunpack.c.l.b16 %v2483
        %v3203 = vunpack.c.h.b16 %v2483
        %v3204 = vunpack.c.l.b16 %v2484
        %v3205 = vunpack.c.h.b16 %v2484
        %v3206 = vunpack.c.l.b16 %v2485
        %v3207 = vunpack.c.h.b16 %v2485
        %v3208 = vunpack.c.l.b16 %v2486
        %v3209 = vunpack.c.h.b16 %v2486
        %v3210 = vunpack.c.l.b16 %v2487
        %v3211 = vunpack.c.h.b16 %v2487
        %v3212 = vunpack.c.l.b16 %v2488
        %v3213 = vunpack.c.h.b16 %v2488
        %v3214 = vunpack.c.l.b16 %v2489
        %v3215 = vunpack.c.h.b16 %v2489
        %v3216 = vunpack.c.l.b16 %v2490
        %v3217 = vunpack.c.h.b16 %v2490
        %v3218 = vunpack.c.l.b16 %v2491
        %v3219 = vunpack.c.h.b16 %v2491
        %v3220 = vunpack.c.l.b16 %v2492
        %v3221 = vunpack.c.h.b16 %v2492
        %v3222 = vunpack.c.l.b16 %v2493
        %v3223 = vunpack.c.h.b16 %v2493
        %v3224 = vunpack.c.l.b16 %v2494
        %v3225 = vunpack.c.h.b16 %v2494
        %v3226 = vunpack.c.l.b16 %v2495
        %v3227 = vunpack.c.h.b16 %v2495
        %v3228 = vunpack.c.l.b16 %v2496
        %v3229 = vunpack.c.h.b16 %v2496
        %v3230 = vunpack.c.l.b16 %v2497
        %v3231 = vunpack.c.h.b16 %v2497
        %v3232 = vunpack.c.l.b16 %v2498
        %v3233 = vunpack.c.h.b16 %v2498
        %v3234 = vunpack.c.l.b16 %v2499
        %v3235 = vunpack.c.h.b16 %v2499
        %v3236 = vunpack.c.l.b16 %v2500
        %v3237 = vunpack.c.h.b16 %v2500
        %v3238 = vunpack.c.l.b16 %v2501
        %v3239 = vunpack.c.h.b16 %v2501
        %v3240 = vunpack.c.l.b16 %v2502
        %v3241 = vunpack.c.h.b16 %v2502
        %v3242 = vunpack.c.l.b16 %v2503
        %v3243 = vunpack.c.h.b16 %v2503
        %v3244 = vunpack.c.l.b16 %v2504
        %v3245 = vunpack.c.h.b16 %v2504
        %v3246 = vunpack.c.l.b16 %v2505
        %v3247 = vunpack.c.h.b16 %v2505
        %v3248 = vunpack.c.l.b16 %v2506
        %v3249 = vunpack.c.h.b16 %v2506
        %v3250 = vunpack.c.l.b16 %v2507
        %v3251 = vunpack.c.h.b16 %v2507
        %v3252 = vunpack.c.l.b16 %v2508
        %v3253 = vunpack.c.h.b16 %v2508
        %v3254 = vunpack.c.l.b16 %v2509
        %v3255 = vunpack.c.h.b16 %v2509
        %v3256 = vunpack.c.l.b16 %v2510
        %v3257 = vunpack.c.h.b16 %v2510
        %v3258 = vunpack.c.l.b16 %v2511
        %v3259 = vunpack.c.h.b16 %v2511
        %v3260 = vunpack.c.l.b16 %v2512
        %v3261 = vunpack.c.h.b16 %v2512
        %v3262 = vunpack.c.l.b16 %v2513
        %v3263 = vunpack.c.h.b16 %v2513
        %v3264 = vunpack.c.l.b16 %v2514
        %v3265 = vunpack.c.h.b16 %v2514
        %v3266 = vunpack.c.l.b16 %v2515
        %v3267 = vunpack.c.h.b16 %v2515
        %v3268 = vunpack.c.l.b16 %v2516
        %v3269 = vunpack.c.h.b16 %v2516
        %v3270 = vunpack.c.l.b16 %v2517
        %v3271 = vunpack.c.h.b16 %v2517
        %v3272 = vunpack.c.l.b16 %v2518
        %v3273 = vunpack.c.h.b16 %v2518
        %v3274 = vunpack.c.l.b16 %v2519
        %v3275 = vunpack.c.h.b16 %v2519
        %v3276 = vunpack.c.l.b16 %v2520
        %v3277 = vunpack.c.h.b16 %v2520
        %v3278 = vunpack.c.l.b16 %v2521
        %v3279 = vunpack.c.h.b16 %v2521
        %v3280 = vunpack.c.l.b16 %v2522
        %v3281 = vunpack.c.h.b16 %v2522
        %v3282 = vunpack.c.l.b16 %v2523
        %v3283 = vunpack.c.h.b16 %v2523
        %v3284 = vunpack.c.l.b16 %v2524
        %v3285 = vunpack.c.h.b16 %v2524
        %v3286 = vunpack.c.l.b16 %v2525
        %v3287 = vunpack.c.h.b16 %v2525
        %v3288 = vunpack.c.l.b16 %v2526
        %v3289 = vunpack.c.h.b16 %v2526
        %v3290 = vunpack.c.l.b16 %v2527
        %v3291 = vunpack.c.h.b16 %v2527
        %v3292 = vunpack.c.l.b16 %v2528
        %v3293 = vunpack.c.h.b16 %v2528
        %v3294 = vunpack.c.l.b16 %v2529
        %v3295 = vunpack.c.h.b16 %v2529
        %v3296 = vunpack.c.l.b16 %v2530
        %v3297 = vunpack.c.h.b16 %v2530
        %v3298 = vunpack.c.l.b16 %v2531
        %v3299 = vunpack.c.h.b16 %v2531
        %v3300 = vunpack.c.l.b16 %v2532
        %v3301 = vunpack.c.h.b16 %v2532
        %v3302 = vunpack.c.l.b16 %v2533
        %v3303 = vunpack.c.h.b16 %v2533
        %v3304 = vunpack.c.l.b16 %v2534
        %v3305 = vunpack.c.h.b16 %v2534
        %v3306 = vunpack.c.l.b16 %v2535
        %v3307 = vunpack.c.h.b16 %v2535
        %v3308 = vunpack.c.l.b16 %v2536
        %v3309 = vunpack.c.h.b16 %v2536
        %v3310 = vunpack.c.l.b16 %v2537
        %v3311 = vunpack.c.h.b16 %v2537
        %v3312 = vunpack.c.l.b16 %v2538
        %v3313 = vunpack.c.h.b16 %v2538
        %v3314 = vunpack.c.l.b16 %v2539
        %v3315 = vunpack.c.h.b16 %v2539
        %v3316 = vunpack.c.l.b16 %v2540
        %v3317 = vunpack.c.h.b16 %v2540
        %v3318 = vunpack.c.l.b16 %v2541
        %v3319 = vunpack.c.h.b16 %v2541
        %v3320 = vunpack.c.l.b16 %v2542
        %v3321 = vunpack.c.h.b16 %v2542
        %v3322 = vunpack.c.l.b16 %v2543
        %v3323 = vunpack.c.h.b16 %v2543
        %v3324 = vunpack.c.l.b16 %v2544
        %v3325 = vunpack.c.h.b16 %v2544
        %v3326 = vunpack.c.l.b16 %v2545
        %v3327 = vunpack.c.h.b16 %v2545
        %v3328 = vunpack.c.l.b16 %v2546
        %v3329 = vunpack.c.h.b16 %v2546
        %v3330 = vunpack.c.l.b16 %v2547
        %v3331 = vunpack.c.h.b16 %v2547
        %v3332 = vunpack.c.l.b16 %v2548
        %v3333 = vunpack.c.h.b16 %v2548
        %v3334 = vunpack.c.l.b16 %v2549
        %v3335 = vunpack.c.h.b16 %v2549
        %v3336 = vunpack.c.l.b16 %v2550
        %v3337 = vunpack.c.h.b16 %v2550
        %v3338 = vunpack.c.l.b16 %v2551
        %v3339 = vunpack.c.h.b16 %v2551
        %v3340 = vunpack.c.l.b16 %v2552
        %v3341 = vunpack.c.h.b16 %v2552
        %v3342 = vunpack.c.l.b16 %v2553
        %v3343 = vunpack.c.h.b16 %v2553
        %v3344 = vunpack.c.l.b16 %v2554
        %v3345 = vunpack.c.h.b16 %v2554
        %v3346 = vunpack.c.l.b16 %v2555
        %v3347 = vunpack.c.h.b16 %v2555
        %v3348 = vunpack.c.l.b16 %v2556
        %v3349 = vunpack.c.h.b16 %v2556
        %v3350 = vunpack.c.l.b16 %v2557
        %v3351 = vunpack.c.h.b16 %v2557
        %v3352 = vunpack.c.l.b16 %v2558
        %v3353 = vunpack.c.h.b16 %v2558
        %v3354 = vunpack.c.l.b16 %v2559
        %v3355 = vunpack.c.h.b16 %v2559
        %v3356 = vunpack.c.l.b16 %v2560
        %v3357 = vunpack.c.h.b16 %v2560
        %v3358 = vunpack.c.l.b16 %v2561
        %v3359 = vunpack.c.h.b16 %v2561
        %v3360 = vunpack.c.l.b16 %v2562
        %v3361 = vunpack.c.h.b16 %v2562
        %v3362 = vunpack.c.l.b16 %v2563
        %v3363 = vunpack.c.h.b16 %v2563
        %v3364 = vunpack.c.l.b16 %v2564
        %v3365 = vunpack.c.h.b16 %v2564
        %v3366 = vunpack.c.l.b16 %v2565
        %v3367 = vunpack.c.h.b16 %v2565
        %v3368 = vunpack.c.l.b16 %v2566
        %v3369 = vunpack.c.h.b16 %v2566
        %v3370 = vunpack.c.l.b16 %v2567
        %v3371 = vunpack.c.h.b16 %v2567
        %v3372 = vunpack.c.l.b16 %v2568
        %v3373 = vunpack.c.h.b16 %v2568
        %v3374 = vunpack.c.l.b16 %v2569
        %v3375 = vunpack.c.h.b16 %v2569
        %v3376 = vunpack.c.l.b16 %v2570
        %v3377 = vunpack.c.h.b16 %v2570
        %v3378 = vunpack.c.l.b16 %v2571
        %v3379 = vunpack.c.h.b16 %v2571
        %v3380 = vunpack.c.l.b16 %v2572
        %v3381 = vunpack.c.h.b16 %v2572
        %v3382 = vunpack.c.l.b16 %v2573
        %v3383 = vunpack.c.h.b16 %v2573
        %v3384 = vunpack.c.l.b16 %v2574
        %v3385 = vunpack.c.h.b16 %v2574
        %v3386 = vunpack.c.l.b16 %v2575
        %v3387 = vunpack.c.h.b16 %v2575
        %v3388 = vunpack.c.l.b16 %v2576
        %v3389 = vunpack.c.h.b16 %v2576
        %v3390 = vunpack.c.l.b16 %v2577
        %v3391 = vunpack.c.h.b16 %v2577
        %v3392 = vunpack.c.l.b16 %v2578
        %v3393 = vunpack.c.h.b16 %v2578
        %v3394 = vunpack.c.l.b16 %v2579
        %v3395 = vunpack.c.h.b16 %v2579
        %v3396 = vunpack.c.l.b16 %v2580
        %v3397 = vunpack.c.h.b16 %v2580
        %v3398 = vunpack.c.l.b16 %v2581
        %v3399 = vunpack.c.h.b16 %v2581
        %v3400 = vunpack.c.l.b16 %v2582
        %v3401 = vunpack.c.h.b16 %v2582
        %v3402 = vunpack.c.l.b16 %v2583
        %v3403 = vunpack.c.h.b16 %v2583
        %v3404 = vunpack.c.l.b16 %v2584
        %v3405 = vunpack.c.h.b16 %v2584
        %v3406 = vunpack.c.l.b16 %v2585
        %v3407 = vunpack.c.h.b16 %v2585
        %v3408 = vunpack.c.l.b16 %v2586
        %v3409 = vunpack.c.h.b16 %v2586
        %v3410 = vunpack.c.l.b16 %v2587
        %v3411 = vunpack.c.h.b16 %v2587
        %v3412 = vunpack.c.l.b16 %v2588
        %v3413 = vunpack.c.h.b16 %v2588
        %v3414 = vunpack.c.l.b16 %v2589
        %v3415 = vunpack.c.h.b16 %v2589
        %v3416 = vunpack.c.l.b16 %v2590
        %v3417 = vunpack.c.h.b16 %v2590
        %v3418 = vunpack.c.l.b16 %v2591
        %v3419 = vunpack.c.h.b16 %v2591
        %v3420 = vunpack.c.l.b16 %v2592
        %v3421 = vunpack.c.h.b16 %v2592
        %v3422 = vunpack.c.l.b16 %v2593
        %v3423 = vunpack.c.h.b16 %v2593
        %v3424 = vunpack.c.l.b16 %v2594
        %v3425 = vunpack.c.h.b16 %v2594
        %v3426 = vunpack.c.l.b16 %v2595
        %v3427 = vunpack.c.h.b16 %v2595
        %v3428 = vunpack.c.l.b16 %v2596
        %v3429 = vunpack.c.h.b16 %v2596
        %v3430 = vunpack.c.l.b16 %v2597
        %v3431 = vunpack.c.h.b16 %v2597
        %v3432 = vunpack.c.l.b16 %v2598
        %v3433 = vunpack.c.h.b16 %v2598
        %v3434 = vunpack.c.l.b16 %v2599
        %v3435 = vunpack.c.h.b16 %v2599
        %v3436 = vunpack.c.l.b16 %v2600
        %v3437 = vunpack.c.h.b16 %v2600
        %v3438 = vunpack.c.l.b16 %v2601
        %v3439 = vunpack.c.h.b16 %v2601
        %v3440 = vunpack.c.l.b16 %v2602
        %v3441 = vunpack.c.h.b16 %v2602
        %v3442 = vunpack.c.l.b16 %v2603
        %v3443 = vunpack.c.h.b16 %v2603
        %v3444 = vunpack.c.l.b16 %v2604
        %v3445 = vunpack.c.h.b16 %v2604
        %v3446 = vunpack.c.l.b16 %v2605
        %v3447 = vunpack.c.h.b16 %v2605
        %v3448 = vunpack.c.l.b16 %v2606
        %v3449 = vunpack.c.h.b16 %v2606
        %v3450 = vunpack.c.l.b16 %v2607
        %v3451 = vunpack.c.h.b16 %v2607
        %v3452 = vunpack.c.l.b16 %v2608
        %v3453 = vunpack.c.h.b16 %v2608
        %v3454 = vunpack.c.l.b16 %v2609
        %v3455 = vunpack.c.h.b16 %v2609
        %v3456 = vunpack.c.l.b16 %v2610
        %v3457 = vunpack.c.h.b16 %v2610
        %v3458 = vunpack.c.l.b16 %v2611
        %v3459 = vunpack.c.h.b16 %v2611
        %v3460 = vunpack.c.l.b16 %v2612
        %v3461 = vunpack.c.h.b16 %v2612
        %v3462 = vunpack.c.l.b16 %v2613
        %v3463 = vunpack.c.h.b16 %v2613
        %v3464 = vunpack.c.l.b16 %v2614
        %v3465 = vunpack.c.h.b16 %v2614
        %v3466 = vunpack.c.l.b16 %v2615
        %v3467 = vunpack.c.h.b16 %v2615
        %v3468 = vunpack.c.l.b16 %v2616
        %v3469 = vunpack.c.h.b16 %v2616
        %v3470 = vunpack.c.l.b16 %v2617
        %v3471 = vunpack.c.h.b16 %v2617
        %v3472 = vunpack.c.l.b16 %v2618
        %v3473 = vunpack.c.h.b16 %v2618
        %v3474 = vunpack.c.l.b16 %v2619
        %v3475 = vunpack.c.h.b16 %v2619
        %v3476 = vunpack.c.l.b16 %v2620
        %v3477 = vunpack.c.h.b16 %v2620
        %v3478 = vunpack.c.l.b16 %v2621
        %v3479 = vunpack.c.h.b16 %v2621
        %v3480 = vunpack.c.l.b16 %v2622
        %v3481 = vunpack.c.h.b16 %v2622
        %v3482 = vunpack.c.l.b16 %v2623
        %v3483 = vunpack.c.h.b16 %v2623
        %v3484 = vunpack.c.l.b16 %v2624
        %v3485 = vunpack.c.h.b16 %v2624
        %v3486 = vunpack.c.l.b16 %v2625
        %v3487 = vunpack.c.h.b16 %v2625
        %v3488 = vunpack.c.l.b16 %v2626
        %v3489 = vunpack.c.h.b16 %v2626
        %v3490 = vunpack.c.l.b16 %v2627
        %v3491 = vunpack.c.h.b16 %v2627
        %v3492 = vpack.c.b16 %v2918, %v2916
        %v3493 = vpack.c.b16 %v2919, %v2917
        %v3494 = vpack.c.b16 %v2922, %v2920
        %v3495 = vpack.c.b16 %v2923, %v2921
        %v3496 = vpack.c.b16 %v2926, %v2924
        %v3497 = vpack.c.b16 %v2927, %v2925
        %v3498 = vpack.c.b16 %v2930, %v2928
        %v3499 = vpack.c.b16 %v2931, %v2929
        %v3500 = vpack.c.b16 %v2934, %v2932
        %v3501 = vpack.c.b16 %v2935, %v2933
        %v3502 = vpack.c.b16 %v2938, %v2936
        %v3503 = vpack.c.b16 %v2939, %v2937
        %v3504 = vpack.c.b16 %v2942, %v2940
        %v3505 = vpack.c.b16 %v2943, %v2941
        %v3506 = vpack.c.b16 %v2946, %v2944
        %v3507 = vpack.c.b16 %v2947, %v2945
        %v3508 = vpack.c.b16 %v2950, %v2948
        %v3509 = vpack.c.b16 %v2951, %v2949
        %v3510 = vpack.c.b16 %v2954, %v2952
        %v3511 = vpack.c.b16 %v2955, %v2953
        %v3512 = vpack.c.b16 %v2958, %v2956
        %v3513 = vpack.c.b16 %v2959, %v2957
        %v3514 = vpack.c.b16 %v2962, %v2960
        %v3515 = vpack.c.b16 %v2963, %v2961
        %v3516 = vpack.c.b16 %v2966, %v2964
        %v3517 = vpack.c.b16 %v2967, %v2965
        %v3518 = vpack.c.b16 %v2970, %v2968
        %v3519 = vpack.c.b16 %v2971, %v2969
        %v3520 = vpack.c.b16 %v2974, %v2972
        %v3521 = vpack.c.b16 %v2975, %v2973
        %v3522 = vpack.c.b16 %v2978, %v2976
        %v3523 = vpack.c.b16 %v2979, %v2977
        %v3524 = vpack.c.b16 %v2982, %v2980
        %v3525 = vpack.c.b16 %v2983, %v2981
        %v3526 = vpack.c.b16 %v2986, %v2984
        %v3527 = vpack.c.b16 %v2987, %v2985
        %v3528 = vpack.c.b16 %v2990, %v2988
        %v3529 = vpack.c.b16 %v2991, %v2989
        %v3530 = vpack.c.b16 %v2994, %v2992
        %v3531 = vpack.c.b16 %v2995, %v2993
        %v3532 = vpack.c.b16 %v2998, %v2996
        %v3533 = vpack.c.b16 %v2999, %v2997
        %v3534 = vpack.c.b16 %v3002, %v3000
        %v3535 = vpack.c.b16 %v3003, %v3001
        %v3536 = vpack.c.b16 %v3006, %v3004
        %v3537 = vpack.c.b16 %v3007, %v3005
        %v3538 = vpack.c.b16 %v3010, %v3008
        %v3539 = vpack.c.b16 %v3011, %v3009
        %v3540 = vpack.c.b16 %v3014, %v3012
        %v3541 = vpack.c.b16 %v3015, %v3013
        %v3542 = vpack.c.b16 %v3018, %v3016
        %v3543 = vpack.c.b16 %v3019, %v3017
        %v3544 = vpack.c.b16 %v3022, %v3020
        %v3545 = vpack.c.b16 %v3023, %v3021
        %v3546 = vpack.c.b16 %v3026, %v3024
        %v3547 = vpack.c.b16 %v3027, %v3025
        %v3548 = vpack.c.b16 %v3030, %v3028
        %v3549 = vpack.c.b16 %v3031, %v3029
        %v3550 = vpack.c.b16 %v3034, %v3032
        %v3551 = vpack.c.b16 %v3035, %v3033
        %v3552 = vpack.c.b16 %v3038, %v3036
        %v3553 = vpack.c.b16 %v3039, %v3037
        %v3554 = vpack.c.b16 %v3042, %v3040
        %v3555 = vpack.c.b16 %v3043, %v3041
        %v3556 = vpack.c.b16 %v3046, %v3044
        %v3557 = vpack.c.b16 %v3047, %v3045
        %v3558 = vpack.c.b16 %v3050, %v3048
        %v3559 = vpack.c.b16 %v3051, %v3049
        %v3560 = vpack.c.b16 %v3054, %v3052
        %v3561 = vpack.c.b16 %v3055, %v3053
        %v3562 = vpack.c.b16 %v3058, %v3056
        %v3563 = vpack.c.b16 %v3059, %v3057
        %v3564 = vpack.c.b16 %v3062, %v3060
        %v3565 = vpack.c.b16 %v3063, %v3061
        %v3566 = vpack.c.b16 %v3066, %v3064
        %v3567 = vpack.c.b16 %v3067, %v3065
        %v3568 = vpack.c.b16 %v3070, %v3068
        %v3569 = vpack.c.b16 %v3071, %v3069
        %v3570 = vpack.c.b16 %v3074, %v3072
        %v3571 = vpack.c.b16 %v3075, %v3073
        %v3572 = vpack.c.b16 %v3078, %v3076
        %v3573 = vpack.c.b16 %v3079, %v3077
        %v3574 = vpack.c.b16 %v3082, %v3080
        %v3575 = vpack.c.b16 %v3083, %v3081
        %v3576 = vpack.c.b16 %v3086, %v3084
        %v3577 = vpack.c.b16 %v3087, %v3085
        %v3578 = vpack.c.b16 %v3090, %v3088
        %v3579 = vpack.c.b16 %v3091, %v3089
        %v3580 = vpack.c.b16 %v3094, %v3092
        %v3581 = vpack.c.b16 %v3095, %v3093
        %v3582 = vpack.c.b16 %v3098, %v3096
        %v3583 = vpack.c.b16 %v3099, %v3097
        %v3584 = vpack.c.b16 %v3102, %v3100
        %v3585 = vpack.c.b16 %v3103, %v3101
        %v3586 = vpack.c.b16 %v3106, %v3104
        %v3587 = vpack.c.b16 %v3107, %v3105
        %v3588 = vpack.c.b16 %v3110, %v3108
        %v3589 = vpack.c.b16 %v3111, %v3109
        %v3590 = vpack.c.b16 %v3114, %v3112
        %v3591 = vpack.c.b16 %v3115, %v3113
        %v3592 = vpack.c.b16 %v3118, %v3116
        %v3593 = vpack.c.b16 %v3119, %v3117
        %v3594 = vpack.c.b16 %v3122, %v3120
        %v3595 = vpack.c.b16 %v3123, %v3121
        %v3596 = vpack.c.b16 %v3126, %v3124
        %v3597 = vpack.c.b16 %v3127, %v3125
        %v3598 = vpack.c.b16 %v3130, %v3128
        %v3599 = vpack.c.b16 %v3131, %v3129
        %v3600 = vpack.c.b16 %v3134, %v3132
        %v3601 = vpack.c.b16 %v3135, %v3133
        %v3602 = vpack.c.b16 %v3138, %v3136
        %v3603 = vpack.c.b16 %v3139, %v3137
        %v3604 = vpack.c.b16 %v3142, %v3140
        %v3605 = vpack.c.b16 %v3143, %v3141
        %v3606 = vpack.c.b16 %v3146, %v3144
        %v3607 = vpack.c.b16 %v3147, %v3145
        %v3608 = vpack.c.b16 %v3150, %v3148
        %v3609 = vpack.c.b16 %v3151, %v3149
        %v3610 = vpack.c.b16 %v3154, %v3152
        %v3611 = vpack.c.b16 %v3155, %v3153
        %v3612 = vpack.c.b16 %v3158, %v3156
        %v3613 = vpack.c.b16 %v3159, %v3157
        %v3614 = vpack.c.b16 %v3162, %v3160
        %v3615 = vpack.c.b16 %v3163, %v3161
        %v3616 = vpack.c.b16 %v3166, %v3164
        %v3617 = vpack.c.b16 %v3167, %v3165
        %v3618 = vpack.c.b16 %v3170, %v3168
        %v3619 = vpack.c.b16 %v3171, %v3169
        %v3620 = vpack.c.b16 %v3174, %v3172
        %v3621 = vpack.c.b16 %v3175, %v3173
        %v3622 = vpack.c.b16 %v3178, %v3176
        %v3623 = vpack.c.b16 %v3179, %v3177
        %v3624 = vpack.c.b16 %v3182, %v3180
        %v3625 = vpack.c.b16 %v3183, %v3181
        %v3626 = vpack.c.b16 %v3186, %v3184
        %v3627 = vpack.c.b16 %v3187, %v3185
        %v3628 = vpack.c.b16 %v3190, %v3188
        %v3629 = vpack.c.b16 %v3191, %v3189
        %v3630 = vpack.c.b16 %v3194, %v3192
        %v3631 = vpack.c.b16 %v3195, %v3193
        %v3632 = vpack.c.b16 %v3198, %v3196
        %v3633 = vpack.c.b16 %v3199, %v3197
        %v3634 = vpack.c.b16 %v3202, %v3200
        %v3635 = vpack.c.b16 %v3203, %v3201
        %v3636 = vpack.c.b16 %v3206, %v3204
        %v3637 = vpack.c.b16 %v3207, %v3205
        %v3638 = vpack.c.b16 %v3210, %v3208
        %v3639 = vpack.c.b16 %v3211, %v3209
        %v3640 = vpack.c.b16 %v3214, %v3212
        %v3641 = vpack.c.b16 %v3215, %v3213
        %v3642 = vpack.c.b16 %v3218, %v3216
        %v3643 = vpack.c.b16 %v3219, %v3217
        %v3644 = vpack.c.b16 %v3222, %v3220
        %v3645 = vpack.c.b16 %v3223, %v3221
        %v3646 = vpack.c.b16 %v3226, %v3224
        %v3647 = vpack.c.b16 %v3227, %v3225
        %v3648 = vpack.c.b16 %v3230, %v3228
        %v3649 = vpack.c.b16 %v3231, %v3229
        %v3650 = vpack.c.b16 %v3234, %v3232
        %v3651 = vpack.c.b16 %v3235, %v3233
        %v3652 = vpack.c.b16 %v3238, %v3236
        %v3653 = vpack.c.b16 %v3239, %v3237
        %v3654 = vpack.c.b16 %v3242, %v3240
        %v3655 = vpack.c.b16 %v3243, %v3241
        %v3656 = vpack.c.b16 %v3246, %v3244
        %v3657 = vpack.c.b16 %v3247, %v3245
        %v3658 = vpack.c.b16 %v3250, %v3248
        %v3659 = vpack.c.b16 %v3251, %v3249
        %v3660 = vpack.c.b16 %v3254, %v3252
        %v3661 = vpack.c.b16 %v3255, %v3253
        %v3662 = vpack.c.b16 %v3258, %v3256
        %v3663 = vpack.c.b16 %v3259, %v3257
        %v3664 = vpack.c.b16 %v3262, %v3260
        %v3665 = vpack.c.b16 %v3263, %v3261
        %v3666 = vpack.c.b16 %v3266, %v3264
        %v3667 = vpack.c.b16 %v3267, %v3265
        %v3668 = vpack.c.b16 %v3270, %v3268
        %v3669 = vpack.c.b16 %v3271, %v3269
        %v3670 = vpack.c.b16 %v3274, %v3272
        %v3671 = vpack.c.b16 %v3275, %v3273
        %v3672 = vpack.c.b16 %v3278, %v3276
        %v3673 = vpack.c.b16 %v3279, %v3277
        %v3674 = vpack.c.b16 %v3282, %v3280
        %v3675 = vpack.c.b16 %v3283, %v3281
        %v3676 = vpack.c.b16 %v3286, %v3284
        %v3677 = vpack.c.b16 %v3287, %v3285
        %v3678 = vpack.c.b16 %v3290, %v3288
        %v3679 = vpack.c.b16 %v3291, %v3289
        %v3680 = vpack.c.b16 %v3294, %v3292
        %v3681 = vpack.c.b16 %v3295, %v3293
        %v3682 = vpack.c.b16 %v3298, %v3296
        %v3683 = vpack.c.b16 %v3299, %v3297
        %v3684 = vpack.c.b16 %v3302, %v3300
        %v3685 = vpack.c.b16 %v3303, %v3301
        %v3686 = vpack.c.b16 %v3306, %v3304
        %v3687 = vpack.c.b16 %v3307, %v3305
        %v3688 = vpack.c.b16 %v3310, %v3308
        %v3689 = vpack.c.b16 %v3311, %v3309
        %v3690 = vpack.c.b16 %v3314, %v3312
        %v3691 = vpack.c.b16 %v3315, %v3313
        %v3692 = vpack.c.b16 %v3318, %v3316
        %v3693 = vpack.c.b16 %v3319, %v3317
        %v3694 = vpack.c.b16 %v3322, %v3320
        %v3695 = vpack.c.b16 %v3323, %v3321
        %v3696 = vpack.c.b16 %v3326, %v3324
        %v3697 = vpack.c.b16 %v3327, %v3325
        %v3698 = vpack.c.b16 %v3330, %v3328
        %v3699 = vpack.c.b16 %v3331, %v3329
        %v3700 = vpack.c.b16 %v3334, %v3332
        %v3701 = vpack.c.b16 %v3335, %v3333
        %v3702 = vpack.c.b16 %v3338, %v3336
        %v3703 = vpack.c.b16 %v3339, %v3337
        %v3704 = vpack.c.b16 %v3342, %v3340
        %v3705 = vpack.c.b16 %v3343, %v3341
        %v3706 = vpack.c.b16 %v3346, %v3344
        %v3707 = vpack.c.b16 %v3347, %v3345
        %v3708 = vpack.c.b16 %v3350, %v3348
        %v3709 = vpack.c.b16 %v3351, %v3349
        %v3710 = vpack.c.b16 %v3354, %v3352
        %v3711 = vpack.c.b16 %v3355, %v3353
        %v3712 = vpack.c.b16 %v3358, %v3356
        %v3713 = vpack.c.b16 %v3359, %v3357
        %v3714 = vpack.c.b16 %v3362, %v3360
        %v3715 = vpack.c.b16 %v3363, %v3361
        %v3716 = vpack.c.b16 %v3366, %v3364
        %v3717 = vpack.c.b16 %v3367, %v3365
        %v3718 = vpack.c.b16 %v3370, %v3368
        %v3719 = vpack.c.b16 %v3371, %v3369
        %v3720 = vpack.c.b16 %v3374, %v3372
        %v3721 = vpack.c.b16 %v3375, %v3373
        %v3722 = vpack.c.b16 %v3378, %v3376
        %v3723 = vpack.c.b16 %v3379, %v3377
        %v3724 = vpack.c.b16 %v3382, %v3380
        %v3725 = vpack.c.b16 %v3383, %v3381
        %v3726 = vpack.c.b16 %v3386, %v3384
        %v3727 = vpack.c.b16 %v3387, %v3385
        %v3728 = vpack.c.b16 %v3390, %v3388
        %v3729 = vpack.c.b16 %v3391, %v3389
        %v3730 = vpack.c.b16 %v3394, %v3392
        %v3731 = vpack.c.b16 %v3395, %v3393
        %v3732 = vpack.c.b16 %v3398, %v3396
        %v3733 = vpack.c.b16 %v3399, %v3397
        %v3734 = vpack.c.b16 %v3402, %v3400
        %v3735 = vpack.c.b16 %v3403, %v3401
        %v3736 = vpack.c.b16 %v3406, %v3404
        %v3737 = vpack.c.b16 %v3407, %v3405
        %v3738 = vpack.c.b16 %v3410, %v3408
        %v3739 = vpack.c.b16 %v3411, %v3409
        %v3740 = vpack.c.b16 %v3414, %v3412
        %v3741 = vpack.c.b16 %v3415, %v3413
        %v3742 = vpack.c.b16 %v3418, %v3416
        %v3743 = vpack.c.b16 %v3419, %v3417
        %v3744 = vpack.c.b16 %v3422, %v3420
        %v3745 = vpack.c.b16 %v3423, %v3421
        %v3746 = vpack.c.b16 %v3426, %v3424
        %v3747 = vpack.c.b16 %v3427, %v3425
        %v3748 = vpack.c.b16 %v3430, %v3428
        %v3749 = vpack.c.b16 %v3431, %v3429
        %v3750 = vpack.c.b16 %v3434, %v3432
        %v3751 = vpack.c.b16 %v3435, %v3433
        %v3752 = vpack.c.b16 %v3438, %v3436
        %v3753 = vpack.c.b16 %v3439, %v3437
        %v3754 = vpack.c.b16 %v3442, %v3440
        %v3755 = vpack.c.b16 %v3443, %v3441
        %v3756 = vpack.c.b16 %v3446, %v3444
        %v3757 = vpack.c.b16 %v3447, %v3445
        %v3758 = vpack.c.b16 %v3450, %v3448
        %v3759 = vpack.c.b16 %v3451, %v3449
        %v3760 = vpack.c.b16 %v3454, %v3452
        %v3761 = vpack.c.b16 %v3455, %v3453
        %v3762 = vpack.c.b16 %v3458, %v3456
        %v3763 = vpack.c.b16 %v3459, %v3457
        %v3764 = vpack.c.b16 %v3462, %v3460
        %v3765 = vpack.c.b16 %v3463, %v3461
        %v3766 = vpack.c.b16 %v3466, %v3464
        %v3767 = vpack.c.b16 %v3467, %v3465
        %v3768 = vpack.c.b16 %v3470, %v3468
        %v3769 = vpack.c.b16 %v3471, %v3469
        %v3770 = vpack.c.b16 %v3474, %v3472
        %v3771 = vpack.c.b16 %v3475, %v3473
        %v3772 = vpack.c.b16 %v3478, %v3476
        %v3773 = vpack.c.b16 %v3479, %v3477
        %v3774 = vpack.c.b16 %v3482, %v3480
        %v3775 = vpack.c.b16 %v3483, %v3481
        %v3776 = vpack.c.b16 %v3486, %v3484
        %v3777 = vpack.c.b16 %v3487, %v3485
        %v3778 = vpack.c.b16 %v3490, %v3488
        %v3779 = vpack.c.b16 %v3491, %v3489
        %4068 = vmatprep.subr.bf16.mxu0 %v3493
        %4069 = vmatpush1.bf16.msra.mxu0 %v3492
        %4070 = vmatprep.subr.bf16.mxu0 %v3495
        %4071 = vmatpush1.bf16.msra.mxu0 %v3494
        %4072 = vmatprep.subr.bf16.mxu0 %v3497
        %4073 = vmatpush1.bf16.msra.mxu0 %v3496
        %4074 = vmatprep.subr.bf16.mxu0 %v3499
        %4075 = vmatpush1.bf16.msra.mxu0 %v3498
        %4076 = vmatprep.subr.bf16.mxu0 %v3501
        %4077 = vmatpush1.bf16.msra.mxu0 %v3500
        %4078 = vmatprep.subr.bf16.mxu0 %v3503
        %4079 = vmatpush1.bf16.msra.mxu0 %v3502
        %4080 = vmatprep.subr.bf16.mxu0 %v3505
        %4081 = vmatpush1.bf16.msra.mxu0 %v3504
        %4082 = vmatprep.subr.bf16.mxu0 %v3507
        %4083 = vmatpush1.bf16.msra.mxu0 %v3506
        %4084 = vmatprep.subr.bf16.mxu0 %v3509
        %4085 = vmatpush1.bf16.msra.mxu0 %v3508
        %4086 = vmatprep.subr.bf16.mxu0 %v3511
        %4087 = vmatpush1.bf16.msra.mxu0 %v3510
        %4088 = vmatprep.subr.bf16.mxu0 %v3513
        %4089 = vmatpush1.bf16.msra.mxu0 %v3512
        %4090 = vmatprep.subr.bf16.mxu0 %v3515
        %4091 = vmatpush1.bf16.msra.mxu0 %v3514
        %4092 = vmatprep.subr.bf16.mxu0 %v3517
        %4093 = vmatpush1.bf16.msra.mxu0 %v3516
        %4094 = vmatprep.subr.bf16.mxu0 %v3519
        %4095 = vmatpush1.bf16.msra.mxu0 %v3518
        %4096 = vmatprep.subr.bf16.mxu0 %v3521
        %4097 = vmatpush1.bf16.msra.mxu0 %v3520
        %4098 = vmatprep.subr.bf16.mxu0 %v3523
        %4099 = vmatpush1.bf16.msra.mxu0 %v3522
        %4100 = vmatprep.mubr.bf16.mxu0 %v1501
        %4101 = vmatmul.mubr.bf16.gmra.mrb[0].mxu0 %v1500
        %v4102 = vpop.f32.mrb[0].mxu0
        %v4103 = vadd.f32 0.0, %v4102
        %v4104 = vpop.f32.mrb[0].mxu0
        %v4105 = vadd.f32 0.0, %v4104
        %v4106 = vpop.f32.mrb[0].mxu0
        %v4107 = vadd.f32 0.0, %v4106
        %v4108 = vpop.f32.mrb[0].mxu0
        %v4109 = vadd.f32 0.0, %v4108
        %4110 = vmatprep.mubr.bf16.mxu0 %v1503
        %4111 = vmatmul.mubr.bf16.gmra.mrb[0].mxu0 %v1502
        %v4112 = vpop.f32.mrb[0].mxu0
        %v4113 = vadd.f32 0.0, %v4112
        %v4114 = vpop.f32.mrb[0].mxu0
        %v4115 = vadd.f32 0.0, %v4114
        %v4116 = vpop.f32.mrb[0].mxu0
        %v4117 = vadd.f32 0.0, %v4116
        %v4118 = vpop.f32.mrb[0].mxu0
        %v4119 = vadd.f32 0.0, %v4118
        %4120 = vmatprep.mubr.bf16.mxu0 %v1505
        %4121 = vmatmul.mubr.bf16.gmra.mrb[0].mxu0 %v1504
        %v4122 = vpop.f32.mrb[0].mxu0
        %v4123 = vadd.f32 0.0, %v4122
        %v4124 = vpop.f32.mrb[0].mxu0
        %v4125 = vadd.f32 0.0, %v4124
        %v4126 = vpop.f32.mrb[0].mxu0
        %v4127 = vadd.f32 0.0, %v4126
        %v4128 = vpop.f32.mrb[0].mxu0
        %v4129 = vadd.f32 0.0, %v4128
        %4130 = vmatprep.mubr.bf16.mxu0 %v1507
        %4131 = vmatmul.mubr.bf16.gmra.mrb[0].mxu0 %v1506
        %v4132 = vpop.f32.mrb[0].mxu0
        %v4133 = vadd.f32 0.0, %v4132
        %v4134 = vpop.f32.mrb[0].mxu0
        %v4135 = vadd.f32 0.0, %v4134
        %v4136 = vpop.f32.mrb[0].mxu0
        %v4137 = vadd.f32 0.0, %v4136
        %v4138 = vpop.f32.mrb[0].mxu0
        %v4139 = vadd.f32 0.0, %v4138
        %4140 = vmatprep.mubr.bf16.mxu0 %v1509
        %4141 = vmatmul.mubr.bf16.gmra.mrb[0].mxu0 %v1508
        %v4142 = vpop.f32.mrb[0].mxu0
        %v4143 = vadd.f32 0.0, %v4142
        %v4144 = vpop.f32.mrb[0].mxu0
        %v4145 = vadd.f32 0.0, %v4144
        %v4146 = vpop.f32.mrb[0].mxu0
        %v4147 = vadd.f32 0.0, %v4146
        %v4148 = vpop.f32.mrb[0].mxu0
        %v4149 = vadd.f32 0.0, %v4148
        %4150 = vmatprep.mubr.bf16.mxu0 %v1511
        %4151 = vmatmul.mubr.bf16.gmra.mrb[0].mxu0 %v1510
        %v4152 = vpop.f32.mrb[0].mxu0
        %v4153 = vadd.f32 0.0, %v4152
        %v4154 = vpop.f32.mrb[0].mxu0
        %v4155 = vadd.f32 0.0, %v4154
        %v4156 = vpop.f32.mrb[0].mxu0
        %v4157 = vadd.f32 0.0, %v4156
        %v4158 = vpop.f32.mrb[0].mxu0
        %v4159 = vadd.f32 0.0, %v4158
        %4160 = vmatprep.mubr.bf16.mxu0 %v1513
        %4161 = vmatmul.mubr.bf16.gmra.mrb[0].mxu0 %v1512
        %v4162 = vpop.f32.mrb[0].mxu0
        %v4163 = vadd.f32 0.0, %v4162
        %v4164 = vpop.f32.mrb[0].mxu0
        %v4165 = vadd.f32 0.0, %v4164
        %v4166 = vpop.f32.mrb[0].mxu0
        %v4167 = vadd.f32 0.0, %v4166
        %v4168 = vpop.f32.mrb[0].mxu0
        %v4169 = vadd.f32 0.0, %v4168
        %4170 = vmatprep.mubr.bf16.mxu0 %v1515
        %4171 = vmatmul.mubr.bf16.gmra.mrb[0].mxu0 %v1514
        %v4172 = vpop.f32.mrb[0].mxu0
        %v4173 = vadd.f32 0.0, %v4172
        %v4174 = vpop.f32.mrb[0].mxu0
        %v4175 = vadd.f32 0.0, %v4174
        %v4176 = vpop.f32.mrb[0].mxu0
        %v4177 = vadd.f32 0.0, %v4176
        %v4178 = vpop.f32.mrb[0].mxu0
        %v4179 = vadd.f32 0.0, %v4178
        %4180 = vmatprep.mubr.bf16.mxu0 %v1517
        %4181 = vmatmul.mubr.bf16.gmra.mrb[0].mxu0 %v1516
        %v4182 = vpop.f32.mrb[0].mxu0
        %v4183 = vadd.f32 0.0, %v4182
        %v4184 = vpop.f32.mrb[0].mxu0
        %v4185 = vadd.f32 0.0, %v4184
        %v4186 = vpop.f32.mrb[0].mxu0
        %v4187 = vadd.f32 0.0, %v4186
        %v4188 = vpop.f32.mrb[0].mxu0
        %v4189 = vadd.f32 0.0, %v4188
        %4190 = vmatprep.mubr.bf16.mxu0 %v1519
        %4191 = vmatmul.mubr.bf16.gmra.mrb[0].mxu0 %v1518
        %v4192 = vpop.f32.mrb[0].mxu0
        %v4193 = vadd.f32 0.0, %v4192
        %v4194 = vpop.f32.mrb[0].mxu0
        %v4195 = vadd.f32 0.0, %v4194
        %v4196 = vpop.f32.mrb[0].mxu0
        %v4197 = vadd.f32 0.0, %v4196
        %v4198 = vpop.f32.mrb[0].mxu0
        %v4199 = vadd.f32 0.0, %v4198
        %4200 = vmatprep.mubr.bf16.mxu0 %v1521
        %4201 = vmatmul.mubr.bf16.gmra.mrb[0].mxu0 %v1520
        %v4202 = vpop.f32.mrb[0].mxu0
        %v4203 = vadd.f32 0.0, %v4202
        %v4204 = vpop.f32.mrb[0].mxu0
        %v4205 = vadd.f32 0.0, %v4204
        %v4206 = vpop.f32.mrb[0].mxu0
        %v4207 = vadd.f32 0.0, %v4206
        %v4208 = vpop.f32.mrb[0].mxu0
        %v4209 = vadd.f32 0.0, %v4208
        %4210 = vmatprep.mubr.bf16.mxu0 %v1523
        %4211 = vmatmul.mubr.bf16.gmra.mrb[0].mxu0 %v1522
        %v4212 = vpop.f32.mrb[0].mxu0
        %v4213 = vadd.f32 0.0, %v4212
        %v4214 = vpop.f32.mrb[0].mxu0
        %v4215 = vadd.f32 0.0, %v4214
        %v4216 = vpop.f32.mrb[0].mxu0
        %v4217 = vadd.f32 0.0, %v4216
        %v4218 = vpop.f32.mrb[0].mxu0
        %v4219 = vadd.f32 0.0, %v4218
        %4220 = vdwg.mxu0
        %4221 = vmatprep.subr.bf16.mxu0 %v3525
        %4222 = vmatpush1.bf16.msra.mxu0 %v3524
        %4223 = vmatprep.subr.bf16.mxu0 %v3527
        %4224 = vmatpush1.bf16.msra.mxu0 %v3526
        %4225 = vmatprep.subr.bf16.mxu0 %v3529
        %4226 = vmatpush1.bf16.msra.mxu0 %v3528
        %4227 = vmatprep.subr.bf16.mxu0 %v3531
        %4228 = vmatpush1.bf16.msra.mxu0 %v3530
        %4229 = vmatprep.subr.bf16.mxu0 %v3533
        %4230 = vmatpush1.bf16.msra.mxu0 %v3532
        %4231 = vmatprep.subr.bf16.mxu0 %v3535
        %4232 = vmatpush1.bf16.msra.mxu0 %v3534
        %4233 = vmatprep.subr.bf16.mxu0 %v3537
        %4234 = vmatpush1.bf16.msra.mxu0 %v3536
        %4235 = vmatprep.subr.bf16.mxu0 %v3539
        %4236 = vmatpush1.bf16.msra.mxu0 %v3538
        %4237 = vmatprep.subr.bf16.mxu0 %v3541
        %4238 = vmatpush1.bf16.msra.mxu0 %v3540
        %4239 = vmatprep.subr.bf16.mxu0 %v3543
        %4240 = vmatpush1.bf16.msra.mxu0 %v3542
        %4241 = vmatprep.subr.bf16.mxu0 %v3545
        %4242 = vmatpush1.bf16.msra.mxu0 %v3544
        %4243 = vmatprep.subr.bf16.mxu0 %v3547
        %4244 = vmatpush1.bf16.msra.mxu0 %v3546
        %4245 = vmatprep.subr.bf16.mxu0 %v3549
        %4246 = vmatpush1.bf16.msra.mxu0 %v3548
        %4247 = vmatprep.subr.bf16.mxu0 %v3551
        %4248 = vmatpush1.bf16.msra.mxu0 %v3550
        %4249 = vmatprep.subr.bf16.mxu0 %v3553
        %4250 = vmatpush1.bf16.msra.mxu0 %v3552
        %4251 = vmatprep.subr.bf16.mxu0 %v3555
        %4252 = vmatpush1.bf16.msra.mxu0 %v3554
        %4253 = vmatprep.mubr.bf16.mxu0 %v1577
        %4254 = vmatmul.mubr.bf16.gmra.mrb[0].mxu0 %v1565
        %v4255 = vpop.f32.mrb[0].mxu0
        %v4256 = vadd.f32 %v4103, %v4255
        %v4257 = vpop.f32.mrb[0].mxu0
        %v4258 = vadd.f32 %v4105, %v4257
        %v4259 = vpop.f32.mrb[0].mxu0
        %v4260 = vadd.f32 %v4107, %v4259
        %v4261 = vpop.f32.mrb[0].mxu0
        %v4262 = vadd.f32 %v4109, %v4261
        %4263 = vmatprep.mubr.bf16.mxu0 %v1593
        %4264 = vmatmul.mubr.bf16.gmra.mrb[0].mxu0 %v1585
        %v4265 = vpop.f32.mrb[0].mxu0
        %v4266 = vadd.f32 %v4113, %v4265
        %v4267 = vpop.f32.mrb[0].mxu0
        %v4268 = vadd.f32 %v4115, %v4267
        %v4269 = vpop.f32.mrb[0].mxu0
        %v4270 = vadd.f32 %v4117, %v4269
        %v4271 = vpop.f32.mrb[0].mxu0
        %v4272 = vadd.f32 %v4119, %v4271
        %4273 = vmatprep.mubr.bf16.mxu0 %v1609
        %4274 = vmatmul.mubr.bf16.gmra.mrb[0].mxu0 %v1601
        %v4275 = vpop.f32.mrb[0].mxu0
        %v4276 = vadd.f32 %v4123, %v4275
        %v4277 = vpop.f32.mrb[0].mxu0
        %v4278 = vadd.f32 %v4125, %v4277
        %v4279 = vpop.f32.mrb[0].mxu0
        %v4280 = vadd.f32 %v4127, %v4279
        %v4281 = vpop.f32.mrb[0].mxu0
        %v4282 = vadd.f32 %v4129, %v4281
        %4283 = vmatprep.mubr.bf16.mxu0 %v1625
        %4284 = vmatmul.mubr.bf16.gmra.mrb[0].mxu0 %v1617
        %v4285 = vpop.f32.mrb[0].mxu0
        %v4286 = vadd.f32 %v4133, %v4285
        %v4287 = vpop.f32.mrb[0].mxu0
        %v4288 = vadd.f32 %v4135, %v4287
        %v4289 = vpop.f32.mrb[0].mxu0
        %v4290 = vadd.f32 %v4137, %v4289
        %v4291 = vpop.f32.mrb[0].mxu0
        %v4292 = vadd.f32 %v4139, %v4291
        %4293 = vmatprep.mubr.bf16.mxu0 %v1641
        %4294 = vmatmul.mubr.bf16.gmra.mrb[0].mxu0 %v1633
        %v4295 = vpop.f32.mrb[0].mxu0
        %v4296 = vadd.f32 %v4143, %v4295
        %v4297 = vpop.f32.mrb[0].mxu0
        %v4298 = vadd.f32 %v4145, %v4297
        %v4299 = vpop.f32.mrb[0].mxu0
        %v4300 = vadd.f32 %v4147, %v4299
        %v4301 = vpop.f32.mrb[0].mxu0
        %v4302 = vadd.f32 %v4149, %v4301
        %4303 = vmatprep.mubr.bf16.mxu0 %v1657
        %4304 = vmatmul.mubr.bf16.gmra.mrb[0].mxu0 %v1649
        %v4305 = vpop.f32.mrb[0].mxu0
        %v4306 = vadd.f32 %v4153, %v4305
        %v4307 = vpop.f32.mrb[0].mxu0
        %v4308 = vadd.f32 %v4155, %v4307
        %v4309 = vpop.f32.mrb[0].mxu0
        %v4310 = vadd.f32 %v4157, %v4309
        %v4311 = vpop.f32.mrb[0].mxu0
        %v4312 = vadd.f32 %v4159, %v4311
        %4313 = vmatprep.mubr.bf16.mxu0 %v1673
        %4314 = vmatmul.mubr.bf16.gmra.mrb[0].mxu0 %v1665
        %v4315 = vpop.f32.mrb[0].mxu0
        %v4316 = vadd.f32 %v4163, %v4315
        %v4317 = vpop.f32.mrb[0].mxu0
        %v4318 = vadd.f32 %v4165, %v4317
        %v4319 = vpop.f32.mrb[0].mxu0
        %v4320 = vadd.f32 %v4167, %v4319
        %v4321 = vpop.f32.mrb[0].mxu0
        %v4322 = vadd.f32 %v4169, %v4321
        %4323 = vmatprep.mubr.bf16.mxu0 %v1689
        %4324 = vmatmul.mubr.bf16.gmra.mrb[0].mxu0 %v1681
        %v4325 = vpop.f32.mrb[0].mxu0
        %v4326 = vadd.f32 %v4173, %v4325
        %v4327 = vpop.f32.mrb[0].mxu0
        %v4328 = vadd.f32 %v4175, %v4327
        %v4329 = vpop.f32.mrb[0].mxu0
        %v4330 = vadd.f32 %v4177, %v4329
        %v4331 = vpop.f32.mrb[0].mxu0
        %v4332 = vadd.f32 %v4179, %v4331
        %4333 = vmatprep.mubr.bf16.mxu0 %v1705
        %4334 = vmatmul.mubr.bf16.gmra.mrb[0].mxu0 %v1697
        %v4335 = vpop.f32.mrb[0].mxu0
        %v4336 = vadd.f32 %v4183, %v4335
        %v4337 = vpop.f32.mrb[0].mxu0
        %v4338 = vadd.f32 %v4185, %v4337
        %v4339 = vpop.f32.mrb[0].mxu0
        %v4340 = vadd.f32 %v4187, %v4339
        %v4341 = vpop.f32.mrb[0].mxu0
        %v4342 = vadd.f32 %v4189, %v4341
        %4343 = vmatprep.mubr.bf16.mxu0 %v1721
        %4344 = vmatmul.mubr.bf16.gmra.mrb[0].mxu0 %v1713
        %v4345 = vpop.f32.mrb[0].mxu0
        %v4346 = vadd.f32 %v4193, %v4345
        %v4347 = vpop.f32.mrb[0].mxu0
        %v4348 = vadd.f32 %v4195, %v4347
        %v4349 = vpop.f32.mrb[0].mxu0
        %v4350 = vadd.f32 %v4197, %v4349
        %v4351 = vpop.f32.mrb[0].mxu0
        %v4352 = vadd.f32 %v4199, %v4351
        %4353 = vmatprep.mubr.bf16.mxu0 %v1737
        %4354 = vmatmul.mubr.bf16.gmra.mrb[0].mxu0 %v1729
        %v4355 = vpop.f32.mrb[0].mxu0
        %v4356 = vadd.f32 %v4203, %v4355
        %v4357 = vpop.f32.mrb[0].mxu0
        %v4358 = vadd.f32 %v4205, %v4357
        %v4359 = vpop.f32.mrb[0].mxu0
        %v4360 = vadd.f32 %v4207, %v4359
        %v4361 = vpop.f32.mrb[0].mxu0
        %v4362 = vadd.f32 %v4209, %v4361
        %4363 = vmatprep.mubr.bf16.mxu0 %v1753
        %4364 = vmatmul.mubr.bf16.gmra.mrb[0].mxu0 %v1745
        %v4365 = vpop.f32.mrb[0].mxu0
        %v4366 = vadd.f32 %v4213, %v4365
        %v4367 = vpop.f32.mrb[0].mxu0
        %v4368 = vadd.f32 %v4215, %v4367
        %v4369 = vpop.f32.mrb[0].mxu0
        %v4370 = vadd.f32 %v4217, %v4369
        %v4371 = vpop.f32.mrb[0].mxu0
        %v4372 = vadd.f32 %v4219, %v4371
        %4373 = vdwg.mxu0
        %4374 = vmatprep.subr.bf16.mxu0 %v3557
        %4375 = vmatpush1.bf16.msra.mxu0 %v3556
        %4376 = vmatprep.subr.bf16.mxu0 %v3559
        %4377 = vmatpush1.bf16.msra.mxu0 %v3558
        %4378 = vmatprep.subr.bf16.mxu0 %v3561
        %4379 = vmatpush1.bf16.msra.mxu0 %v3560
        %4380 = vmatprep.subr.bf16.mxu0 %v3563
        %4381 = vmatpush1.bf16.msra.mxu0 %v3562
        %4382 = vmatprep.subr.bf16.mxu0 %v3565
        %4383 = vmatpush1.bf16.msra.mxu0 %v3564
        %4384 = vmatprep.subr.bf16.mxu0 %v3567
        %4385 = vmatpush1.bf16.msra.mxu0 %v3566
        %4386 = vmatprep.subr.bf16.mxu0 %v3569
        %4387 = vmatpush1.bf16.msra.mxu0 %v3568
        %4388 = vmatprep.subr.bf16.mxu0 %v3571
        %4389 = vmatpush1.bf16.msra.mxu0 %v3570
        %4390 = vmatprep.subr.bf16.mxu0 %v3573
        %4391 = vmatpush1.bf16.msra.mxu0 %v3572
        %4392 = vmatprep.subr.bf16.mxu0 %v3575
        %4393 = vmatpush1.bf16.msra.mxu0 %v3574
        %4394 = vmatprep.subr.bf16.mxu0 %v3577
        %4395 = vmatpush1.bf16.msra.mxu0 %v3576
        %4396 = vmatprep.subr.bf16.mxu0 %v3579
        %4397 = vmatpush1.bf16.msra.mxu0 %v3578
        %4398 = vmatprep.subr.bf16.mxu0 %v3581
        %4399 = vmatpush1.bf16.msra.mxu0 %v3580
        %4400 = vmatprep.subr.bf16.mxu0 %v3583
        %4401 = vmatpush1.bf16.msra.mxu0 %v3582
        %4402 = vmatprep.subr.bf16.mxu0 %v3585
        %4403 = vmatpush1.bf16.msra.mxu0 %v3584
        %4404 = vmatprep.subr.bf16.mxu0 %v3587
        %4405 = vmatpush1.bf16.msra.mxu0 %v3586
        %4406 = vmatprep.mubr.bf16.mxu0 %v1789
        %4407 = vmatmul.mubr.bf16.gmra.mrb[0].mxu0 %v1786
        %v4408 = vpop.f32.mrb[0].mxu0
        %v4409 = vadd.f32 %v4256, %v4408
        %v4410 = vpop.f32.mrb[0].mxu0
        %v4411 = vadd.f32 %v4258, %v4410
        %v4412 = vpop.f32.mrb[0].mxu0
        %v4413 = vadd.f32 %v4260, %v4412
        %v4414 = vpop.f32.mrb[0].mxu0
        %v4415 = vadd.f32 %v4262, %v4414
        %4416 = vmatprep.mubr.bf16.mxu0 %v1793
        %4417 = vmatmul.mubr.bf16.gmra.mrb[0].mxu0 %v1791
        %v4418 = vpop.f32.mrb[0].mxu0
        %v4419 = vadd.f32 %v4266, %v4418
        %v4420 = vpop.f32.mrb[0].mxu0
        %v4421 = vadd.f32 %v4268, %v4420
        %v4422 = vpop.f32.mrb[0].mxu0
        %v4423 = vadd.f32 %v4270, %v4422
        %v4424 = vpop.f32.mrb[0].mxu0
        %v4425 = vadd.f32 %v4272, %v4424
        %4426 = vmatprep.mubr.bf16.mxu0 %v1797
        %4427 = vmatmul.mubr.bf16.gmra.mrb[0].mxu0 %v1795
        %v4428 = vpop.f32.mrb[0].mxu0
        %v4429 = vadd.f32 %v4276, %v4428
        %v4430 = vpop.f32.mrb[0].mxu0
        %v4431 = vadd.f32 %v4278, %v4430
        %v4432 = vpop.f32.mrb[0].mxu0
        %v4433 = vadd.f32 %v4280, %v4432
        %v4434 = vpop.f32.mrb[0].mxu0
        %v4435 = vadd.f32 %v4282, %v4434
        %4436 = vmatprep.mubr.bf16.mxu0 %v1801
        %4437 = vmatmul.mubr.bf16.gmra.mrb[0].mxu0 %v1799
        %v4438 = vpop.f32.mrb[0].mxu0
        %v4439 = vadd.f32 %v4286, %v4438
        %v4440 = vpop.f32.mrb[0].mxu0
        %v4441 = vadd.f32 %v4288, %v4440
        %v4442 = vpop.f32.mrb[0].mxu0
        %v4443 = vadd.f32 %v4290, %v4442
        %v4444 = vpop.f32.mrb[0].mxu0
        %v4445 = vadd.f32 %v4292, %v4444
        %4446 = vmatprep.mubr.bf16.mxu0 %v1805
        %4447 = vmatmul.mubr.bf16.gmra.mrb[0].mxu0 %v1803
        %v4448 = vpop.f32.mrb[0].mxu0
        %v4449 = vadd.f32 %v4296, %v4448
        %v4450 = vpop.f32.mrb[0].mxu0
        %v4451 = vadd.f32 %v4298, %v4450
        %v4452 = vpop.f32.mrb[0].mxu0
        %v4453 = vadd.f32 %v4300, %v4452
        %v4454 = vpop.f32.mrb[0].mxu0
        %v4455 = vadd.f32 %v4302, %v4454
        %4456 = vmatprep.mubr.bf16.mxu0 %v1809
        %4457 = vmatmul.mubr.bf16.gmra.mrb[0].mxu0 %v1807
        %v4458 = vpop.f32.mrb[0].mxu0
        %v4459 = vadd.f32 %v4306, %v4458
        %v4460 = vpop.f32.mrb[0].mxu0
        %v4461 = vadd.f32 %v4308, %v4460
        %v4462 = vpop.f32.mrb[0].mxu0
        %v4463 = vadd.f32 %v4310, %v4462
        %v4464 = vpop.f32.mrb[0].mxu0
        %v4465 = vadd.f32 %v4312, %v4464
        %4466 = vmatprep.mubr.bf16.mxu0 %v1813
        %4467 = vmatmul.mubr.bf16.gmra.mrb[0].mxu0 %v1811
        %v4468 = vpop.f32.mrb[0].mxu0
        %v4469 = vadd.f32 %v4316, %v4468
        %v4470 = vpop.f32.mrb[0].mxu0
        %v4471 = vadd.f32 %v4318, %v4470
        %v4472 = vpop.f32.mrb[0].mxu0
        %v4473 = vadd.f32 %v4320, %v4472
        %v4474 = vpop.f32.mrb[0].mxu0
        %v4475 = vadd.f32 %v4322, %v4474
        %4476 = vmatprep.mubr.bf16.mxu0 %v1817
        %4477 = vmatmul.mubr.bf16.gmra.mrb[0].mxu0 %v1815
        %v4478 = vpop.f32.mrb[0].mxu0
        %v4479 = vadd.f32 %v4326, %v4478
        %v4480 = vpop.f32.mrb[0].mxu0
        %v4481 = vadd.f32 %v4328, %v4480
        %v4482 = vpop.f32.mrb[0].mxu0
        %v4483 = vadd.f32 %v4330, %v4482
        %v4484 = vpop.f32.mrb[0].mxu0
        %v4485 = vadd.f32 %v4332, %v4484
        %4486 = vmatprep.mubr.bf16.mxu0 %v1821
        %4487 = vmatmul.mubr.bf16.gmra.mrb[0].mxu0 %v1819
        %v4488 = vpop.f32.mrb[0].mxu0
        %v4489 = vadd.f32 %v4336, %v4488
        %v4490 = vpop.f32.mrb[0].mxu0
        %v4491 = vadd.f32 %v4338, %v4490
        %v4492 = vpop.f32.mrb[0].mxu0
        %v4493 = vadd.f32 %v4340, %v4492
        %v4494 = vpop.f32.mrb[0].mxu0
        %v4495 = vadd.f32 %v4342, %v4494
        %4496 = vmatprep.mubr.bf16.mxu0 %v1825
        %4497 = vmatmul.mubr.bf16.gmra.mrb[0].mxu0 %v1823
        %v4498 = vpop.f32.mrb[0].mxu0
        %v4499 = vadd.f32 %v4346, %v4498
        %v4500 = vpop.f32.mrb[0].mxu0
        %v4501 = vadd.f32 %v4348, %v4500
        %v4502 = vpop.f32.mrb[0].mxu0
        %v4503 = vadd.f32 %v4350, %v4502
        %v4504 = vpop.f32.mrb[0].mxu0
        %v4505 = vadd.f32 %v4352, %v4504
        %4506 = vmatprep.mubr.bf16.mxu0 %v1829
        %4507 = vmatmul.mubr.bf16.gmra.mrb[0].mxu0 %v1827
        %v4508 = vpop.f32.mrb[0].mxu0
        %v4509 = vadd.f32 %v4356, %v4508
        %v4510 = vpop.f32.mrb[0].mxu0
        %v4511 = vadd.f32 %v4358, %v4510
        %v4512 = vpop.f32.mrb[0].mxu0
        %v4513 = vadd.f32 %v4360, %v4512
        %v4514 = vpop.f32.mrb[0].mxu0
        %v4515 = vadd.f32 %v4362, %v4514
        %4516 = vmatprep.mubr.bf16.mxu0 %v1833
        %4517 = vmatmul.mubr.bf16.gmra.mrb[0].mxu0 %v1831
        %v4518 = vpop.f32.mrb[0].mxu0
        %v4519 = vadd.f32 %v4366, %v4518
        %v4520 = vpop.f32.mrb[0].mxu0
        %v4521 = vadd.f32 %v4368, %v4520
        %v4522 = vpop.f32.mrb[0].mxu0
        %v4523 = vadd.f32 %v4370, %v4522
        %v4524 = vpop.f32.mrb[0].mxu0
        %v4525 = vadd.f32 %v4372, %v4524
        %4526 = vdwg.mxu0
        %4527 = vmatprep.subr.bf16.mxu0 %v3589
        %4528 = vmatpush1.bf16.msra.mxu0 %v3588
        %4529 = vmatprep.subr.bf16.mxu0 %v3591
        %4530 = vmatpush1.bf16.msra.mxu0 %v3590
        %4531 = vmatprep.subr.bf16.mxu0 %v3593
        %4532 = vmatpush1.bf16.msra.mxu0 %v3592
        %4533 = vmatprep.subr.bf16.mxu0 %v3595
        %4534 = vmatpush1.bf16.msra.mxu0 %v3594
        %4535 = vmatprep.subr.bf16.mxu0 %v3597
        %4536 = vmatpush1.bf16.msra.mxu0 %v3596
        %4537 = vmatprep.subr.bf16.mxu0 %v3599
        %4538 = vmatpush1.bf16.msra.mxu0 %v3598
        %4539 = vmatprep.subr.bf16.mxu0 %v3601
        %4540 = vmatpush1.bf16.msra.mxu0 %v3600
        %4541 = vmatprep.subr.bf16.mxu0 %v3603
        %4542 = vmatpush1.bf16.msra.mxu0 %v3602
        %4543 = vmatprep.subr.bf16.mxu0 %v3605
        %4544 = vmatpush1.bf16.msra.mxu0 %v3604
        %4545 = vmatprep.subr.bf16.mxu0 %v3607
        %4546 = vmatpush1.bf16.msra.mxu0 %v3606
        %4547 = vmatprep.subr.bf16.mxu0 %v3609
        %4548 = vmatpush1.bf16.msra.mxu0 %v3608
        %4549 = vmatprep.subr.bf16.mxu0 %v3611
        %4550 = vmatpush1.bf16.msra.mxu0 %v3610
        %4551 = vmatprep.subr.bf16.mxu0 %v3613
        %4552 = vmatpush1.bf16.msra.mxu0 %v3612
        %4553 = vmatprep.subr.bf16.mxu0 %v3615
        %4554 = vmatpush1.bf16.msra.mxu0 %v3614
        %4555 = vmatprep.subr.bf16.mxu0 %v3617
        %4556 = vmatpush1.bf16.msra.mxu0 %v3616
        %4557 = vmatprep.subr.bf16.mxu0 %v3619
        %4558 = vmatpush1.bf16.msra.mxu0 %v3618
        %4559 = vmatprep.mubr.bf16.mxu0 %v1503
        %4560 = vmatmul.mubr.bf16.gmra.mrb[0].mxu0 %v1502
        %v4561 = vpop.f32.mrb[0].mxu0
        %v4562 = vadd.f32 %v4409, %v4561
        %v4563 = vpop.f32.mrb[0].mxu0
        %v4564 = vadd.f32 %v4411, %v4563
        %v4565 = vpop.f32.mrb[0].mxu0
        %v4566 = vadd.f32 %v4413, %v4565
        %v4567 = vpop.f32.mrb[0].mxu0
        %v4568 = vadd.f32 %v4415, %v4567
        %4569 = vmatprep.mubr.bf16.mxu0 %v1505
        %4570 = vmatmul.mubr.bf16.gmra.mrb[0].mxu0 %v1504
        %v4571 = vpop.f32.mrb[0].mxu0
        %v4572 = vadd.f32 %v4419, %v4571
        %v4573 = vpop.f32.mrb[0].mxu0
        %v4574 = vadd.f32 %v4421, %v4573
        %v4575 = vpop.f32.mrb[0].mxu0
        %v4576 = vadd.f32 %v4423, %v4575
        %v4577 = vpop.f32.mrb[0].mxu0
        %v4578 = vadd.f32 %v4425, %v4577
        %4579 = vmatprep.mubr.bf16.mxu0 %v1507
        %4580 = vmatmul.mubr.bf16.gmra.mrb[0].mxu0 %v1506
        %v4581 = vpop.f32.mrb[0].mxu0
        %v4582 = vadd.f32 %v4429, %v4581
        %v4583 = vpop.f32.mrb[0].mxu0
        %v4584 = vadd.f32 %v4431, %v4583
        %v4585 = vpop.f32.mrb[0].mxu0
        %v4586 = vadd.f32 %v4433, %v4585
        %v4587 = vpop.f32.mrb[0].mxu0
        %v4588 = vadd.f32 %v4435, %v4587
        %4589 = vmatprep.mubr.bf16.mxu0 %v1509
        %4590 = vmatmul.mubr.bf16.gmra.mrb[0].mxu0 %v1508
        %v4591 = vpop.f32.mrb[0].mxu0
        %v4592 = vadd.f32 %v4439, %v4591
        %v4593 = vpop.f32.mrb[0].mxu0
        %v4594 = vadd.f32 %v4441, %v4593
        %v4595 = vpop.f32.mrb[0].mxu0
        %v4596 = vadd.f32 %v4443, %v4595
        %v4597 = vpop.f32.mrb[0].mxu0
        %v4598 = vadd.f32 %v4445, %v4597
        %4599 = vmatprep.mubr.bf16.mxu0 %v1511
        %4600 = vmatmul.mubr.bf16.gmra.mrb[0].mxu0 %v1510
        %v4601 = vpop.f32.mrb[0].mxu0
        %v4602 = vadd.f32 %v4449, %v4601
        %v4603 = vpop.f32.mrb[0].mxu0
        %v4604 = vadd.f32 %v4451, %v4603
        %v4605 = vpop.f32.mrb[0].mxu0
        %v4606 = vadd.f32 %v4453, %v4605
        %v4607 = vpop.f32.mrb[0].mxu0
        %v4608 = vadd.f32 %v4455, %v4607
        %4609 = vmatprep.mubr.bf16.mxu0 %v1513
        %4610 = vmatmul.mubr.bf16.gmra.mrb[0].mxu0 %v1512
        %v4611 = vpop.f32.mrb[0].mxu0
        %v4612 = vadd.f32 %v4459, %v4611
        %v4613 = vpop.f32.mrb[0].mxu0
        %v4614 = vadd.f32 %v4461, %v4613
        %v4615 = vpop.f32.mrb[0].mxu0
        %v4616 = vadd.f32 %v4463, %v4615
        %v4617 = vpop.f32.mrb[0].mxu0
        %v4618 = vadd.f32 %v4465, %v4617
        %4619 = vmatprep.mubr.bf16.mxu0 %v1515
        %4620 = vmatmul.mubr.bf16.gmra.mrb[0].mxu0 %v1514
        %v4621 = vpop.f32.mrb[0].mxu0
        %v4622 = vadd.f32 %v4469, %v4621
        %v4623 = vpop.f32.mrb[0].mxu0
        %v4624 = vadd.f32 %v4471, %v4623
        %v4625 = vpop.f32.mrb[0].mxu0
        %v4626 = vadd.f32 %v4473, %v4625
        %v4627 = vpop.f32.mrb[0].mxu0
        %v4628 = vadd.f32 %v4475, %v4627
        %4629 = vmatprep.mubr.bf16.mxu0 %v1517
        %4630 = vmatmul.mubr.bf16.gmra.mrb[0].mxu0 %v1516
        %v4631 = vpop.f32.mrb[0].mxu0
        %v4632 = vadd.f32 %v4479, %v4631
        %v4633 = vpop.f32.mrb[0].mxu0
        %v4634 = vadd.f32 %v4481, %v4633
        %v4635 = vpop.f32.mrb[0].mxu0
        %v4636 = vadd.f32 %v4483, %v4635
        %v4637 = vpop.f32.mrb[0].mxu0
        %v4638 = vadd.f32 %v4485, %v4637
        %4639 = vmatprep.mubr.bf16.mxu0 %v1519
        %4640 = vmatmul.mubr.bf16.gmra.mrb[0].mxu0 %v1518
        %v4641 = vpop.f32.mrb[0].mxu0
        %v4642 = vadd.f32 %v4489, %v4641
        %v4643 = vpop.f32.mrb[0].mxu0
        %v4644 = vadd.f32 %v4491, %v4643
        %v4645 = vpop.f32.mrb[0].mxu0
        %v4646 = vadd.f32 %v4493, %v4645
        %v4647 = vpop.f32.mrb[0].mxu0
        %v4648 = vadd.f32 %v4495, %v4647
        %4649 = vmatprep.mubr.bf16.mxu0 %v1521
        %4650 = vmatmul.mubr.bf16.gmra.mrb[0].mxu0 %v1520
        %v4651 = vpop.f32.mrb[0].mxu0
        %v4652 = vadd.f32 %v4499, %v4651
        %v4653 = vpop.f32.mrb[0].mxu0
        %v4654 = vadd.f32 %v4501, %v4653
        %v4655 = vpop.f32.mrb[0].mxu0
        %v4656 = vadd.f32 %v4503, %v4655
        %v4657 = vpop.f32.mrb[0].mxu0
        %v4658 = vadd.f32 %v4505, %v4657
        %4659 = vmatprep.mubr.bf16.mxu0 %v1523
        %4660 = vmatmul.mubr.bf16.gmra.mrb[0].mxu0 %v1522
        %v4661 = vpop.f32.mrb[0].mxu0
        %v4662 = vadd.f32 %v4509, %v4661
        %v4663 = vpop.f32.mrb[0].mxu0
        %v4664 = vadd.f32 %v4511, %v4663
        %v4665 = vpop.f32.mrb[0].mxu0
        %v4666 = vadd.f32 %v4513, %v4665
        %v4667 = vpop.f32.mrb[0].mxu0
        %v4668 = vadd.f32 %v4515, %v4667
        %4669 = vmatprep.mubr.bf16.mxu0 %v1865
        %4670 = vmatmul.mubr.bf16.gmra.mrb[0].mxu0 %v1864
        %v4671 = vpop.f32.mrb[0].mxu0
        %v4672 = vadd.f32 %v4519, %v4671
        %v4673 = vpop.f32.mrb[0].mxu0
        %v4674 = vadd.f32 %v4521, %v4673
        %v4675 = vpop.f32.mrb[0].mxu0
        %v4676 = vadd.f32 %v4523, %v4675
        %v4677 = vpop.f32.mrb[0].mxu0
        %v4678 = vadd.f32 %v4525, %v4677
        %4679 = vdwg.mxu0
        %4680 = vmatprep.subr.bf16.mxu0 %v3621
        %4681 = vmatpush1.bf16.msra.mxu0 %v3620
        %4682 = vmatprep.subr.bf16.mxu0 %v3623
        %4683 = vmatpush1.bf16.msra.mxu0 %v3622
        %4684 = vmatprep.subr.bf16.mxu0 %v3625
        %4685 = vmatpush1.bf16.msra.mxu0 %v3624
        %4686 = vmatprep.subr.bf16.mxu0 %v3627
        %4687 = vmatpush1.bf16.msra.mxu0 %v3626
        %4688 = vmatprep.subr.bf16.mxu0 %v3629
        %4689 = vmatpush1.bf16.msra.mxu0 %v3628
        %4690 = vmatprep.subr.bf16.mxu0 %v3631
        %4691 = vmatpush1.bf16.msra.mxu0 %v3630
        %4692 = vmatprep.subr.bf16.mxu0 %v3633
        %4693 = vmatpush1.bf16.msra.mxu0 %v3632
        %4694 = vmatprep.subr.bf16.mxu0 %v3635
        %4695 = vmatpush1.bf16.msra.mxu0 %v3634
        %4696 = vmatprep.subr.bf16.mxu0 %v3637
        %4697 = vmatpush1.bf16.msra.mxu0 %v3636
        %4698 = vmatprep.subr.bf16.mxu0 %v3639
        %4699 = vmatpush1.bf16.msra.mxu0 %v3638
        %4700 = vmatprep.subr.bf16.mxu0 %v3641
        %4701 = vmatpush1.bf16.msra.mxu0 %v3640
        %4702 = vmatprep.subr.bf16.mxu0 %v3643
        %4703 = vmatpush1.bf16.msra.mxu0 %v3642
        %4704 = vmatprep.subr.bf16.mxu0 %v3645
        %4705 = vmatpush1.bf16.msra.mxu0 %v3644
        %4706 = vmatprep.subr.bf16.mxu0 %v3647
        %4707 = vmatpush1.bf16.msra.mxu0 %v3646
        %4708 = vmatprep.subr.bf16.mxu0 %v3649
        %4709 = vmatpush1.bf16.msra.mxu0 %v3648
        %4710 = vmatprep.subr.bf16.mxu0 %v3651
        %4711 = vmatpush1.bf16.msra.mxu0 %v3650
        %4712 = vmatprep.mubr.bf16.mxu0 %v1593
        %4713 = vmatmul.mubr.bf16.gmra.mrb[0].mxu0 %v1585
        %v4714 = vpop.f32.mrb[0].mxu0
        %v4715 = vadd.f32 %v4562, %v4714
        %v4716 = vpop.f32.mrb[0].mxu0
        %v4717 = vadd.f32 %v4564, %v4716
        %v4718 = vpop.f32.mrb[0].mxu0
        %v4719 = vadd.f32 %v4566, %v4718
        %v4720 = vpop.f32.mrb[0].mxu0
        %v4721 = vadd.f32 %v4568, %v4720
        %4722 = vmatprep.mubr.bf16.mxu0 %v1609
        %4723 = vmatmul.mubr.bf16.gmra.mrb[0].mxu0 %v1601
        %v4724 = vpop.f32.mrb[0].mxu0
        %v4725 = vadd.f32 %v4572, %v4724
        %v4726 = vpop.f32.mrb[0].mxu0
        %v4727 = vadd.f32 %v4574, %v4726
        %v4728 = vpop.f32.mrb[0].mxu0
        %v4729 = vadd.f32 %v4576, %v4728
        %v4730 = vpop.f32.mrb[0].mxu0
        %v4731 = vadd.f32 %v4578, %v4730
        %4732 = vmatprep.mubr.bf16.mxu0 %v1625
        %4733 = vmatmul.mubr.bf16.gmra.mrb[0].mxu0 %v1617
        %v4734 = vpop.f32.mrb[0].mxu0
        %v4735 = vadd.f32 %v4582, %v4734
        %v4736 = vpop.f32.mrb[0].mxu0
        %v4737 = vadd.f32 %v4584, %v4736
        %v4738 = vpop.f32.mrb[0].mxu0
        %v4739 = vadd.f32 %v4586, %v4738
        %v4740 = vpop.f32.mrb[0].mxu0
        %v4741 = vadd.f32 %v4588, %v4740
        %4742 = vmatprep.mubr.bf16.mxu0 %v1641
        %4743 = vmatmul.mubr.bf16.gmra.mrb[0].mxu0 %v1633
        %v4744 = vpop.f32.mrb[0].mxu0
        %v4745 = vadd.f32 %v4592, %v4744
        %v4746 = vpop.f32.mrb[0].mxu0
        %v4747 = vadd.f32 %v4594, %v4746
        %v4748 = vpop.f32.mrb[0].mxu0
        %v4749 = vadd.f32 %v4596, %v4748
        %v4750 = vpop.f32.mrb[0].mxu0
        %v4751 = vadd.f32 %v4598, %v4750
        %4752 = vmatprep.mubr.bf16.mxu0 %v1657
        %4753 = vmatmul.mubr.bf16.gmra.mrb[0].mxu0 %v1649
        %v4754 = vpop.f32.mrb[0].mxu0
        %v4755 = vadd.f32 %v4602, %v4754
        %v4756 = vpop.f32.mrb[0].mxu0
        %v4757 = vadd.f32 %v4604, %v4756
        %v4758 = vpop.f32.mrb[0].mxu0
        %v4759 = vadd.f32 %v4606, %v4758
        %v4760 = vpop.f32.mrb[0].mxu0
        %v4761 = vadd.f32 %v4608, %v4760
        %4762 = vmatprep.mubr.bf16.mxu0 %v1673
        %4763 = vmatmul.mubr.bf16.gmra.mrb[0].mxu0 %v1665
        %v4764 = vpop.f32.mrb[0].mxu0
        %v4765 = vadd.f32 %v4612, %v4764
        %v4766 = vpop.f32.mrb[0].mxu0
        %v4767 = vadd.f32 %v4614, %v4766
        %v4768 = vpop.f32.mrb[0].mxu0
        %v4769 = vadd.f32 %v4616, %v4768
        %v4770 = vpop.f32.mrb[0].mxu0
        %v4771 = vadd.f32 %v4618, %v4770
        %4772 = vmatprep.mubr.bf16.mxu0 %v1689
        %4773 = vmatmul.mubr.bf16.gmra.mrb[0].mxu0 %v1681
        %v4774 = vpop.f32.mrb[0].mxu0
        %v4775 = vadd.f32 %v4622, %v4774
        %v4776 = vpop.f32.mrb[0].mxu0
        %v4777 = vadd.f32 %v4624, %v4776
        %v4778 = vpop.f32.mrb[0].mxu0
        %v4779 = vadd.f32 %v4626, %v4778
        %v4780 = vpop.f32.mrb[0].mxu0
        %v4781 = vadd.f32 %v4628, %v4780
        %4782 = vmatprep.mubr.bf16.mxu0 %v1705
        %4783 = vmatmul.mubr.bf16.gmra.mrb[0].mxu0 %v1697
        %v4784 = vpop.f32.mrb[0].mxu0
        %v4785 = vadd.f32 %v4632, %v4784
        %v4786 = vpop.f32.mrb[0].mxu0
        %v4787 = vadd.f32 %v4634, %v4786
        %v4788 = vpop.f32.mrb[0].mxu0
        %v4789 = vadd.f32 %v4636, %v4788
        %v4790 = vpop.f32.mrb[0].mxu0
        %v4791 = vadd.f32 %v4638, %v4790
        %4792 = vmatprep.mubr.bf16.mxu0 %v1721
        %4793 = vmatmul.mubr.bf16.gmra.mrb[0].mxu0 %v1713
        %v4794 = vpop.f32.mrb[0].mxu0
        %v4795 = vadd.f32 %v4642, %v4794
        %v4796 = vpop.f32.mrb[0].mxu0
        %v4797 = vadd.f32 %v4644, %v4796
        %v4798 = vpop.f32.mrb[0].mxu0
        %v4799 = vadd.f32 %v4646, %v4798
        %v4800 = vpop.f32.mrb[0].mxu0
        %v4801 = vadd.f32 %v4648, %v4800
        %4802 = vmatprep.mubr.bf16.mxu0 %v1737
        %4803 = vmatmul.mubr.bf16.gmra.mrb[0].mxu0 %v1729
        %v4804 = vpop.f32.mrb[0].mxu0
        %v4805 = vadd.f32 %v4652, %v4804
        %v4806 = vpop.f32.mrb[0].mxu0
        %v4807 = vadd.f32 %v4654, %v4806
        %v4808 = vpop.f32.mrb[0].mxu0
        %v4809 = vadd.f32 %v4656, %v4808
        %v4810 = vpop.f32.mrb[0].mxu0
        %v4811 = vadd.f32 %v4658, %v4810
        %4812 = vmatprep.mubr.bf16.mxu0 %v1882
        %4813 = vmatmul.mubr.bf16.gmra.mrb[0].mxu0 %v1877
        %v4814 = vpop.f32.mrb[0].mxu0
        %v4815 = vadd.f32 %v4662, %v4814
        %v4816 = vpop.f32.mrb[0].mxu0
        %v4817 = vadd.f32 %v4664, %v4816
        %v4818 = vpop.f32.mrb[0].mxu0
        %v4819 = vadd.f32 %v4666, %v4818
        %v4820 = vpop.f32.mrb[0].mxu0
        %v4821 = vadd.f32 %v4668, %v4820
        %4822 = vmatprep.mubr.bf16.mxu0 %v1898
        %4823 = vmatmul.mubr.bf16.gmra.mrb[0].mxu0 %v1890
        %v4824 = vpop.f32.mrb[0].mxu0
        %v4825 = vadd.f32 %v4672, %v4824
        %v4826 = vpop.f32.mrb[0].mxu0
        %v4827 = vadd.f32 %v4674, %v4826
        %v4828 = vpop.f32.mrb[0].mxu0
        %v4829 = vadd.f32 %v4676, %v4828
        %v4830 = vpop.f32.mrb[0].mxu0
        %v4831 = vadd.f32 %v4678, %v4830
        %4832 = vdwg.mxu0
        %4833 = vmatprep.subr.bf16.mxu0 %v3653
        %4834 = vmatpush1.bf16.msra.mxu0 %v3652
        %4835 = vmatprep.subr.bf16.mxu0 %v3655
        %4836 = vmatpush1.bf16.msra.mxu0 %v3654
        %4837 = vmatprep.subr.bf16.mxu0 %v3657
        %4838 = vmatpush1.bf16.msra.mxu0 %v3656
        %4839 = vmatprep.subr.bf16.mxu0 %v3659
        %4840 = vmatpush1.bf16.msra.mxu0 %v3658
        %4841 = vmatprep.subr.bf16.mxu0 %v3661
        %4842 = vmatpush1.bf16.msra.mxu0 %v3660
        %4843 = vmatprep.subr.bf16.mxu0 %v3663
        %4844 = vmatpush1.bf16.msra.mxu0 %v3662
        %4845 = vmatprep.subr.bf16.mxu0 %v3665
        %4846 = vmatpush1.bf16.msra.mxu0 %v3664
        %4847 = vmatprep.subr.bf16.mxu0 %v3667
        %4848 = vmatpush1.bf16.msra.mxu0 %v3666
        %4849 = vmatprep.subr.bf16.mxu0 %v3669
        %4850 = vmatpush1.bf16.msra.mxu0 %v3668
        %4851 = vmatprep.subr.bf16.mxu0 %v3671
        %4852 = vmatpush1.bf16.msra.mxu0 %v3670
        %4853 = vmatprep.subr.bf16.mxu0 %v3673
        %4854 = vmatpush1.bf16.msra.mxu0 %v3672
        %4855 = vmatprep.subr.bf16.mxu0 %v3675
        %4856 = vmatpush1.bf16.msra.mxu0 %v3674
        %4857 = vmatprep.subr.bf16.mxu0 %v3677
        %4858 = vmatpush1.bf16.msra.mxu0 %v3676
        %4859 = vmatprep.subr.bf16.mxu0 %v3679
        %4860 = vmatpush1.bf16.msra.mxu0 %v3678
        %4861 = vmatprep.subr.bf16.mxu0 %v3681
        %4862 = vmatpush1.bf16.msra.mxu0 %v3680
        %4863 = vmatprep.subr.bf16.mxu0 %v3683
        %4864 = vmatpush1.bf16.msra.mxu0 %v3682
        %4865 = vmatprep.mubr.bf16.mxu0 %v1911
        %4866 = vmatmul.mubr.bf16.gmra.mrb[0].mxu0 %v1909
        %v4867 = vpop.f32.mrb[0].mxu0
        %v4868 = vadd.f32 %v4715, %v4867
        %v4869 = vpop.f32.mrb[0].mxu0
        %v4870 = vadd.f32 %v4717, %v4869
        %v4871 = vpop.f32.mrb[0].mxu0
        %v4872 = vadd.f32 %v4719, %v4871
        %v4873 = vpop.f32.mrb[0].mxu0
        %v4874 = vadd.f32 %v4721, %v4873
        %4875 = vmatprep.mubr.bf16.mxu0 %v1797
        %4876 = vmatmul.mubr.bf16.gmra.mrb[0].mxu0 %v1795
        %v4877 = vpop.f32.mrb[0].mxu0
        %v4878 = vadd.f32 %v4725, %v4877
        %v4879 = vpop.f32.mrb[0].mxu0
        %v4880 = vadd.f32 %v4727, %v4879
        %v4881 = vpop.f32.mrb[0].mxu0
        %v4882 = vadd.f32 %v4729, %v4881
        %v4883 = vpop.f32.mrb[0].mxu0
        %v4884 = vadd.f32 %v4731, %v4883
        %4885 = vmatprep.mubr.bf16.mxu0 %v1801
        %4886 = vmatmul.mubr.bf16.gmra.mrb[0].mxu0 %v1799
        %v4887 = vpop.f32.mrb[0].mxu0
        %v4888 = vadd.f32 %v4735, %v4887
        %v4889 = vpop.f32.mrb[0].mxu0
        %v4890 = vadd.f32 %v4737, %v4889
        %v4891 = vpop.f32.mrb[0].mxu0
        %v4892 = vadd.f32 %v4739, %v4891
        %v4893 = vpop.f32.mrb[0].mxu0
        %v4894 = vadd.f32 %v4741, %v4893
        %4895 = vmatprep.mubr.bf16.mxu0 %v1805
        %4896 = vmatmul.mubr.bf16.gmra.mrb[0].mxu0 %v1803
        %v4897 = vpop.f32.mrb[0].mxu0
        %v4898 = vadd.f32 %v4745, %v4897
        %v4899 = vpop.f32.mrb[0].mxu0
        %v4900 = vadd.f32 %v4747, %v4899
        %v4901 = vpop.f32.mrb[0].mxu0
        %v4902 = vadd.f32 %v4749, %v4901
        %v4903 = vpop.f32.mrb[0].mxu0
        %v4904 = vadd.f32 %v4751, %v4903
        %4905 = vmatprep.mubr.bf16.mxu0 %v1809
        %4906 = vmatmul.mubr.bf16.gmra.mrb[0].mxu0 %v1807
        %v4907 = vpop.f32.mrb[0].mxu0
        %v4908 = vadd.f32 %v4755, %v4907
        %v4909 = vpop.f32.mrb[0].mxu0
        %v4910 = vadd.f32 %v4757, %v4909
        %v4911 = vpop.f32.mrb[0].mxu0
        %v4912 = vadd.f32 %v4759, %v4911
        %v4913 = vpop.f32.mrb[0].mxu0
        %v4914 = vadd.f32 %v4761, %v4913
        %4915 = vmatprep.mubr.bf16.mxu0 %v1813
        %4916 = vmatmul.mubr.bf16.gmra.mrb[0].mxu0 %v1811
        %v4917 = vpop.f32.mrb[0].mxu0
        %v4918 = vadd.f32 %v4765, %v4917
        %v4919 = vpop.f32.mrb[0].mxu0
        %v4920 = vadd.f32 %v4767, %v4919
        %v4921 = vpop.f32.mrb[0].mxu0
        %v4922 = vadd.f32 %v4769, %v4921
        %v4923 = vpop.f32.mrb[0].mxu0
        %v4924 = vadd.f32 %v4771, %v4923
        %4925 = vmatprep.mubr.bf16.mxu0 %v1817
        %4926 = vmatmul.mubr.bf16.gmra.mrb[0].mxu0 %v1815
        %v4927 = vpop.f32.mrb[0].mxu0
        %v4928 = vadd.f32 %v4775, %v4927
        %v4929 = vpop.f32.mrb[0].mxu0
        %v4930 = vadd.f32 %v4777, %v4929
        %v4931 = vpop.f32.mrb[0].mxu0
        %v4932 = vadd.f32 %v4779, %v4931
        %v4933 = vpop.f32.mrb[0].mxu0
        %v4934 = vadd.f32 %v4781, %v4933
        %4935 = vmatprep.mubr.bf16.mxu0 %v1821
        %4936 = vmatmul.mubr.bf16.gmra.mrb[0].mxu0 %v1819
        %v4937 = vpop.f32.mrb[0].mxu0
        %v4938 = vadd.f32 %v4785, %v4937
        %v4939 = vpop.f32.mrb[0].mxu0
        %v4940 = vadd.f32 %v4787, %v4939
        %v4941 = vpop.f32.mrb[0].mxu0
        %v4942 = vadd.f32 %v4789, %v4941
        %v4943 = vpop.f32.mrb[0].mxu0
        %v4944 = vadd.f32 %v4791, %v4943
        %4945 = vmatprep.mubr.bf16.mxu0 %v1825
        %4946 = vmatmul.mubr.bf16.gmra.mrb[0].mxu0 %v1823
        %v4947 = vpop.f32.mrb[0].mxu0
        %v4948 = vadd.f32 %v4795, %v4947
        %v4949 = vpop.f32.mrb[0].mxu0
        %v4950 = vadd.f32 %v4797, %v4949
        %v4951 = vpop.f32.mrb[0].mxu0
        %v4952 = vadd.f32 %v4799, %v4951
        %v4953 = vpop.f32.mrb[0].mxu0
        %v4954 = vadd.f32 %v4801, %v4953
        %4955 = vmatprep.mubr.bf16.mxu0 %v1829
        %4956 = vmatmul.mubr.bf16.gmra.mrb[0].mxu0 %v1827
        %v4957 = vpop.f32.mrb[0].mxu0
        %v4958 = vadd.f32 %v4805, %v4957
        %v4959 = vpop.f32.mrb[0].mxu0
        %v4960 = vadd.f32 %v4807, %v4959
        %v4961 = vpop.f32.mrb[0].mxu0
        %v4962 = vadd.f32 %v4809, %v4961
        %v4963 = vpop.f32.mrb[0].mxu0
        %v4964 = vadd.f32 %v4811, %v4963
        %4965 = vmatprep.mubr.bf16.mxu0 %v1915
        %4966 = vmatmul.mubr.bf16.gmra.mrb[0].mxu0 %v1913
        %v4967 = vpop.f32.mrb[0].mxu0
        %v4968 = vadd.f32 %v4815, %v4967
        %v4969 = vpop.f32.mrb[0].mxu0
        %v4970 = vadd.f32 %v4817, %v4969
        %v4971 = vpop.f32.mrb[0].mxu0
        %v4972 = vadd.f32 %v4819, %v4971
        %v4973 = vpop.f32.mrb[0].mxu0
        %v4974 = vadd.f32 %v4821, %v4973
        %4975 = vmatprep.mubr.bf16.mxu0 %v1919
        %4976 = vmatmul.mubr.bf16.gmra.mrb[0].mxu0 %v1917
        %v4977 = vpop.f32.mrb[0].mxu0
        %v4978 = vadd.f32 %v4825, %v4977
        %v4979 = vpop.f32.mrb[0].mxu0
        %v4980 = vadd.f32 %v4827, %v4979
        %v4981 = vpop.f32.mrb[0].mxu0
        %v4982 = vadd.f32 %v4829, %v4981
        %v4983 = vpop.f32.mrb[0].mxu0
        %v4984 = vadd.f32 %v4831, %v4983
        %4985 = vdwg.mxu0
        %4986 = vmatprep.subr.bf16.mxu0 %v3685
        %4987 = vmatpush1.bf16.msra.mxu0 %v3684
        %4988 = vmatprep.subr.bf16.mxu0 %v3687
        %4989 = vmatpush1.bf16.msra.mxu0 %v3686
        %4990 = vmatprep.subr.bf16.mxu0 %v3689
        %4991 = vmatpush1.bf16.msra.mxu0 %v3688
        %4992 = vmatprep.subr.bf16.mxu0 %v3691
        %4993 = vmatpush1.bf16.msra.mxu0 %v3690
        %4994 = vmatprep.subr.bf16.mxu0 %v3693
        %4995 = vmatpush1.bf16.msra.mxu0 %v3692
        %4996 = vmatprep.subr.bf16.mxu0 %v3695
        %4997 = vmatpush1.bf16.msra.mxu0 %v3694
        %4998 = vmatprep.subr.bf16.mxu0 %v3697
        %4999 = vmatpush1.bf16.msra.mxu0 %v3696
        %5000 = vmatprep.subr.bf16.mxu0 %v3699
        %5001 = vmatpush1.bf16.msra.mxu0 %v3698
        %5002 = vmatprep.subr.bf16.mxu0 %v3701
        %5003 = vmatpush1.bf16.msra.mxu0 %v3700
        %5004 = vmatprep.subr.bf16.mxu0 %v3703
        %5005 = vmatpush1.bf16.msra.mxu0 %v3702
        %5006 = vmatprep.subr.bf16.mxu0 %v3705
        %5007 = vmatpush1.bf16.msra.mxu0 %v3704
        %5008 = vmatprep.subr.bf16.mxu0 %v3707
        %5009 = vmatpush1.bf16.msra.mxu0 %v3706
        %5010 = vmatprep.subr.bf16.mxu0 %v3709
        %5011 = vmatpush1.bf16.msra.mxu0 %v3708
        %5012 = vmatprep.subr.bf16.mxu0 %v3711
        %5013 = vmatpush1.bf16.msra.mxu0 %v3710
        %5014 = vmatprep.subr.bf16.mxu0 %v3713
        %5015 = vmatpush1.bf16.msra.mxu0 %v3712
        %5016 = vmatprep.subr.bf16.mxu0 %v3715
        %5017 = vmatpush1.bf16.msra.mxu0 %v3714
        %5018 = vmatprep.mubr.bf16.mxu0 %v1505
        %5019 = vmatmul.mubr.bf16.gmra.mrb[0].mxu0 %v1504
        %v5020 = vpop.f32.mrb[0].mxu0
        %v5021 = vadd.f32 %v4868, %v5020
        %v5022 = vpop.f32.mrb[0].mxu0
        %v5023 = vadd.f32 %v4870, %v5022
        %v5024 = vpop.f32.mrb[0].mxu0
        %v5025 = vadd.f32 %v4872, %v5024
        %v5026 = vpop.f32.mrb[0].mxu0
        %v5027 = vadd.f32 %v4874, %v5026
        %5028 = vmatprep.mubr.bf16.mxu0 %v1507
        %5029 = vmatmul.mubr.bf16.gmra.mrb[0].mxu0 %v1506
        %v5030 = vpop.f32.mrb[0].mxu0
        %v5031 = vadd.f32 %v4878, %v5030
        %v5032 = vpop.f32.mrb[0].mxu0
        %v5033 = vadd.f32 %v4880, %v5032
        %v5034 = vpop.f32.mrb[0].mxu0
        %v5035 = vadd.f32 %v4882, %v5034
        %v5036 = vpop.f32.mrb[0].mxu0
        %v5037 = vadd.f32 %v4884, %v5036
        %5038 = vmatprep.mubr.bf16.mxu0 %v1509
        %5039 = vmatmul.mubr.bf16.gmra.mrb[0].mxu0 %v1508
        %v5040 = vpop.f32.mrb[0].mxu0
        %v5041 = vadd.f32 %v4888, %v5040
        %v5042 = vpop.f32.mrb[0].mxu0
        %v5043 = vadd.f32 %v4890, %v5042
        %v5044 = vpop.f32.mrb[0].mxu0
        %v5045 = vadd.f32 %v4892, %v5044
        %v5046 = vpop.f32.mrb[0].mxu0
        %v5047 = vadd.f32 %v4894, %v5046
        %5048 = vmatprep.mubr.bf16.mxu0 %v1511
        %5049 = vmatmul.mubr.bf16.gmra.mrb[0].mxu0 %v1510
        %v5050 = vpop.f32.mrb[0].mxu0
        %v5051 = vadd.f32 %v4898, %v5050
        %v5052 = vpop.f32.mrb[0].mxu0
        %v5053 = vadd.f32 %v4900, %v5052
        %v5054 = vpop.f32.mrb[0].mxu0
        %v5055 = vadd.f32 %v4902, %v5054
        %v5056 = vpop.f32.mrb[0].mxu0
        %v5057 = vadd.f32 %v4904, %v5056
        %5058 = vmatprep.mubr.bf16.mxu0 %v1513
        %5059 = vmatmul.mubr.bf16.gmra.mrb[0].mxu0 %v1512
        %v5060 = vpop.f32.mrb[0].mxu0
        %v5061 = vadd.f32 %v4908, %v5060
        %v5062 = vpop.f32.mrb[0].mxu0
        %v5063 = vadd.f32 %v4910, %v5062
        %v5064 = vpop.f32.mrb[0].mxu0
        %v5065 = vadd.f32 %v4912, %v5064
        %v5066 = vpop.f32.mrb[0].mxu0
        %v5067 = vadd.f32 %v4914, %v5066
        %5068 = vmatprep.mubr.bf16.mxu0 %v1515
        %5069 = vmatmul.mubr.bf16.gmra.mrb[0].mxu0 %v1514
        %v5070 = vpop.f32.mrb[0].mxu0
        %v5071 = vadd.f32 %v4918, %v5070
        %v5072 = vpop.f32.mrb[0].mxu0
        %v5073 = vadd.f32 %v4920, %v5072
        %v5074 = vpop.f32.mrb[0].mxu0
        %v5075 = vadd.f32 %v4922, %v5074
        %v5076 = vpop.f32.mrb[0].mxu0
        %v5077 = vadd.f32 %v4924, %v5076
        %5078 = vmatprep.mubr.bf16.mxu0 %v1517
        %5079 = vmatmul.mubr.bf16.gmra.mrb[0].mxu0 %v1516
        %v5080 = vpop.f32.mrb[0].mxu0
        %v5081 = vadd.f32 %v4928, %v5080
        %v5082 = vpop.f32.mrb[0].mxu0
        %v5083 = vadd.f32 %v4930, %v5082
        %v5084 = vpop.f32.mrb[0].mxu0
        %v5085 = vadd.f32 %v4932, %v5084
        %v5086 = vpop.f32.mrb[0].mxu0
        %v5087 = vadd.f32 %v4934, %v5086
        %5088 = vmatprep.mubr.bf16.mxu0 %v1519
        %5089 = vmatmul.mubr.bf16.gmra.mrb[0].mxu0 %v1518
        %v5090 = vpop.f32.mrb[0].mxu0
        %v5091 = vadd.f32 %v4938, %v5090
        %v5092 = vpop.f32.mrb[0].mxu0
        %v5093 = vadd.f32 %v4940, %v5092
        %v5094 = vpop.f32.mrb[0].mxu0
        %v5095 = vadd.f32 %v4942, %v5094
        %v5096 = vpop.f32.mrb[0].mxu0
        %v5097 = vadd.f32 %v4944, %v5096
        %5098 = vmatprep.mubr.bf16.mxu0 %v1521
        %5099 = vmatmul.mubr.bf16.gmra.mrb[0].mxu0 %v1520
        %v5100 = vpop.f32.mrb[0].mxu0
        %v5101 = vadd.f32 %v4948, %v5100
        %v5102 = vpop.f32.mrb[0].mxu0
        %v5103 = vadd.f32 %v4950, %v5102
        %v5104 = vpop.f32.mrb[0].mxu0
        %v5105 = vadd.f32 %v4952, %v5104
        %v5106 = vpop.f32.mrb[0].mxu0
        %v5107 = vadd.f32 %v4954, %v5106
        %5108 = vmatprep.mubr.bf16.mxu0 %v1523
        %5109 = vmatmul.mubr.bf16.gmra.mrb[0].mxu0 %v1522
        %v5110 = vpop.f32.mrb[0].mxu0
        %v5111 = vadd.f32 %v4958, %v5110
        %v5112 = vpop.f32.mrb[0].mxu0
        %v5113 = vadd.f32 %v4960, %v5112
        %v5114 = vpop.f32.mrb[0].mxu0
        %v5115 = vadd.f32 %v4962, %v5114
        %v5116 = vpop.f32.mrb[0].mxu0
        %v5117 = vadd.f32 %v4964, %v5116
        %5118 = vmatprep.mubr.bf16.mxu0 %v1865
        %5119 = vmatmul.mubr.bf16.gmra.mrb[0].mxu0 %v1864
        %v5120 = vpop.f32.mrb[0].mxu0
        %v5121 = vadd.f32 %v4968, %v5120
        %v5122 = vpop.f32.mrb[0].mxu0
        %v5123 = vadd.f32 %v4970, %v5122
        %v5124 = vpop.f32.mrb[0].mxu0
        %v5125 = vadd.f32 %v4972, %v5124
        %v5126 = vpop.f32.mrb[0].mxu0
        %v5127 = vadd.f32 %v4974, %v5126
        %5128 = vmatprep.mubr.bf16.mxu0 %v1933
        %5129 = vmatmul.mubr.bf16.gmra.mrb[0].mxu0 %v1932
        %v5130 = vpop.f32.mrb[0].mxu0
        %v5131 = vadd.f32 %v4978, %v5130
        %v5132 = vpop.f32.mrb[0].mxu0
        %v5133 = vadd.f32 %v4980, %v5132
        %v5134 = vpop.f32.mrb[0].mxu0
        %v5135 = vadd.f32 %v4982, %v5134
        %v5136 = vpop.f32.mrb[0].mxu0
        %v5137 = vadd.f32 %v4984, %v5136
        %5138 = vdwg.mxu0
        %5139 = vmatprep.subr.bf16.mxu0 %v3717
        %5140 = vmatpush1.bf16.msra.mxu0 %v3716
        %5141 = vmatprep.subr.bf16.mxu0 %v3719
        %5142 = vmatpush1.bf16.msra.mxu0 %v3718
        %5143 = vmatprep.subr.bf16.mxu0 %v3721
        %5144 = vmatpush1.bf16.msra.mxu0 %v3720
        %5145 = vmatprep.subr.bf16.mxu0 %v3723
        %5146 = vmatpush1.bf16.msra.mxu0 %v3722
        %5147 = vmatprep.subr.bf16.mxu0 %v3725
        %5148 = vmatpush1.bf16.msra.mxu0 %v3724
        %5149 = vmatprep.subr.bf16.mxu0 %v3727
        %5150 = vmatpush1.bf16.msra.mxu0 %v3726
        %5151 = vmatprep.subr.bf16.mxu0 %v3729
        %5152 = vmatpush1.bf16.msra.mxu0 %v3728
        %5153 = vmatprep.subr.bf16.mxu0 %v3731
        %5154 = vmatpush1.bf16.msra.mxu0 %v3730
        %5155 = vmatprep.subr.bf16.mxu0 %v3733
        %5156 = vmatpush1.bf16.msra.mxu0 %v3732
        %5157 = vmatprep.subr.bf16.mxu0 %v3735
        %5158 = vmatpush1.bf16.msra.mxu0 %v3734
        %5159 = vmatprep.subr.bf16.mxu0 %v3737
        %5160 = vmatpush1.bf16.msra.mxu0 %v3736
        %5161 = vmatprep.subr.bf16.mxu0 %v3739
        %5162 = vmatpush1.bf16.msra.mxu0 %v3738
        %5163 = vmatprep.subr.bf16.mxu0 %v3741
        %5164 = vmatpush1.bf16.msra.mxu0 %v3740
        %5165 = vmatprep.subr.bf16.mxu0 %v3743
        %5166 = vmatpush1.bf16.msra.mxu0 %v3742
        %5167 = vmatprep.subr.bf16.mxu0 %v3745
        %5168 = vmatpush1.bf16.msra.mxu0 %v3744
        %5169 = vmatprep.subr.bf16.mxu0 %v3747
        %5170 = vmatpush1.bf16.msra.mxu0 %v3746
        %5171 = vmatprep.mubr.bf16.mxu0 %v2060
        %5172 = vmatmul.mubr.bf16.gmra.mrb[0].mxu0 %v2048
        %v5173 = vpop.f32.mrb[0].mxu0
        %v5174 = vadd.f32 %v5021, %v5173
        %v5175 = vpop.f32.mrb[0].mxu0
        %v5176 = vadd.f32 %v5023, %v5175
        %v5177 = vpop.f32.mrb[0].mxu0
        %v5178 = vadd.f32 %v5025, %v5177
        %v5179 = vpop.f32.mrb[0].mxu0
        %v5180 = vadd.f32 %v5027, %v5179
        %5181 = vmatprep.mubr.bf16.mxu0 %v2076
        %5182 = vmatmul.mubr.bf16.gmra.mrb[0].mxu0 %v2068
        %v5183 = vpop.f32.mrb[0].mxu0
        %v5184 = vadd.f32 %v5031, %v5183
        %v5185 = vpop.f32.mrb[0].mxu0
        %v5186 = vadd.f32 %v5033, %v5185
        %v5187 = vpop.f32.mrb[0].mxu0
        %v5188 = vadd.f32 %v5035, %v5187
        %v5189 = vpop.f32.mrb[0].mxu0
        %v5190 = vadd.f32 %v5037, %v5189
        %5191 = vmatprep.mubr.bf16.mxu0 %v2092
        %5192 = vmatmul.mubr.bf16.gmra.mrb[0].mxu0 %v2084
        %v5193 = vpop.f32.mrb[0].mxu0
        %v5194 = vadd.f32 %v5041, %v5193
        %v5195 = vpop.f32.mrb[0].mxu0
        %v5196 = vadd.f32 %v5043, %v5195
        %v5197 = vpop.f32.mrb[0].mxu0
        %v5198 = vadd.f32 %v5045, %v5197
        %v5199 = vpop.f32.mrb[0].mxu0
        %v5200 = vadd.f32 %v5047, %v5199
        %5201 = vmatprep.mubr.bf16.mxu0 %v2108
        %5202 = vmatmul.mubr.bf16.gmra.mrb[0].mxu0 %v2100
        %v5203 = vpop.f32.mrb[0].mxu0
        %v5204 = vadd.f32 %v5051, %v5203
        %v5205 = vpop.f32.mrb[0].mxu0
        %v5206 = vadd.f32 %v5053, %v5205
        %v5207 = vpop.f32.mrb[0].mxu0
        %v5208 = vadd.f32 %v5055, %v5207
        %v5209 = vpop.f32.mrb[0].mxu0
        %v5210 = vadd.f32 %v5057, %v5209
        %5211 = vmatprep.mubr.bf16.mxu0 %v2124
        %5212 = vmatmul.mubr.bf16.gmra.mrb[0].mxu0 %v2116
        %v5213 = vpop.f32.mrb[0].mxu0
        %v5214 = vadd.f32 %v5061, %v5213
        %v5215 = vpop.f32.mrb[0].mxu0
        %v5216 = vadd.f32 %v5063, %v5215
        %v5217 = vpop.f32.mrb[0].mxu0
        %v5218 = vadd.f32 %v5065, %v5217
        %v5219 = vpop.f32.mrb[0].mxu0
        %v5220 = vadd.f32 %v5067, %v5219
        %5221 = vmatprep.mubr.bf16.mxu0 %v2140
        %5222 = vmatmul.mubr.bf16.gmra.mrb[0].mxu0 %v2132
        %v5223 = vpop.f32.mrb[0].mxu0
        %v5224 = vadd.f32 %v5071, %v5223
        %v5225 = vpop.f32.mrb[0].mxu0
        %v5226 = vadd.f32 %v5073, %v5225
        %v5227 = vpop.f32.mrb[0].mxu0
        %v5228 = vadd.f32 %v5075, %v5227
        %v5229 = vpop.f32.mrb[0].mxu0
        %v5230 = vadd.f32 %v5077, %v5229
        %5231 = vmatprep.mubr.bf16.mxu0 %v2156
        %5232 = vmatmul.mubr.bf16.gmra.mrb[0].mxu0 %v2148
        %v5233 = vpop.f32.mrb[0].mxu0
        %v5234 = vadd.f32 %v5081, %v5233
        %v5235 = vpop.f32.mrb[0].mxu0
        %v5236 = vadd.f32 %v5083, %v5235
        %v5237 = vpop.f32.mrb[0].mxu0
        %v5238 = vadd.f32 %v5085, %v5237
        %v5239 = vpop.f32.mrb[0].mxu0
        %v5240 = vadd.f32 %v5087, %v5239
        %5241 = vmatprep.mubr.bf16.mxu0 %v2172
        %5242 = vmatmul.mubr.bf16.gmra.mrb[0].mxu0 %v2164
        %v5243 = vpop.f32.mrb[0].mxu0
        %v5244 = vadd.f32 %v5091, %v5243
        %v5245 = vpop.f32.mrb[0].mxu0
        %v5246 = vadd.f32 %v5093, %v5245
        %v5247 = vpop.f32.mrb[0].mxu0
        %v5248 = vadd.f32 %v5095, %v5247
        %v5249 = vpop.f32.mrb[0].mxu0
        %v5250 = vadd.f32 %v5097, %v5249
        %5251 = vmatprep.mubr.bf16.mxu0 %v2188
        %5252 = vmatmul.mubr.bf16.gmra.mrb[0].mxu0 %v2180
        %v5253 = vpop.f32.mrb[0].mxu0
        %v5254 = vadd.f32 %v5101, %v5253
        %v5255 = vpop.f32.mrb[0].mxu0
        %v5256 = vadd.f32 %v5103, %v5255
        %v5257 = vpop.f32.mrb[0].mxu0
        %v5258 = vadd.f32 %v5105, %v5257
        %v5259 = vpop.f32.mrb[0].mxu0
        %v5260 = vadd.f32 %v5107, %v5259
        %5261 = vmatprep.mubr.bf16.mxu0 %v2204
        %5262 = vmatmul.mubr.bf16.gmra.mrb[0].mxu0 %v2196
        %v5263 = vpop.f32.mrb[0].mxu0
        %v5264 = vadd.f32 %v5111, %v5263
        %v5265 = vpop.f32.mrb[0].mxu0
        %v5266 = vadd.f32 %v5113, %v5265
        %v5267 = vpop.f32.mrb[0].mxu0
        %v5268 = vadd.f32 %v5115, %v5267
        %v5269 = vpop.f32.mrb[0].mxu0
        %v5270 = vadd.f32 %v5117, %v5269
        %5271 = vmatprep.mubr.bf16.mxu0 %v2220
        %5272 = vmatmul.mubr.bf16.gmra.mrb[0].mxu0 %v2212
        %v5273 = vpop.f32.mrb[0].mxu0
        %v5274 = vadd.f32 %v5121, %v5273
        %v5275 = vpop.f32.mrb[0].mxu0
        %v5276 = vadd.f32 %v5123, %v5275
        %v5277 = vpop.f32.mrb[0].mxu0
        %v5278 = vadd.f32 %v5125, %v5277
        %v5279 = vpop.f32.mrb[0].mxu0
        %v5280 = vadd.f32 %v5127, %v5279
        %5281 = vmatprep.mubr.bf16.mxu0 %v2236
        %5282 = vmatmul.mubr.bf16.gmra.mrb[0].mxu0 %v2228
        %v5283 = vpop.f32.mrb[0].mxu0
        %v5284 = vadd.f32 %v5131, %v5283
        %v5285 = vpop.f32.mrb[0].mxu0
        %v5286 = vadd.f32 %v5133, %v5285
        %v5287 = vpop.f32.mrb[0].mxu0
        %v5288 = vadd.f32 %v5135, %v5287
        %v5289 = vpop.f32.mrb[0].mxu0
        %v5290 = vadd.f32 %v5137, %v5289
        %5291 = vdwg.mxu0
        %5292 = vmatprep.subr.bf16.mxu0 %v3749
        %5293 = vmatpush1.bf16.msra.mxu0 %v3748
        %5294 = vmatprep.subr.bf16.mxu0 %v3751
        %5295 = vmatpush1.bf16.msra.mxu0 %v3750
        %5296 = vmatprep.subr.bf16.mxu0 %v3753
        %5297 = vmatpush1.bf16.msra.mxu0 %v3752
        %5298 = vmatprep.subr.bf16.mxu0 %v3755
        %5299 = vmatpush1.bf16.msra.mxu0 %v3754
        %5300 = vmatprep.subr.bf16.mxu0 %v3757
        %5301 = vmatpush1.bf16.msra.mxu0 %v3756
        %5302 = vmatprep.subr.bf16.mxu0 %v3759
        %5303 = vmatpush1.bf16.msra.mxu0 %v3758
        %5304 = vmatprep.subr.bf16.mxu0 %v3761
        %5305 = vmatpush1.bf16.msra.mxu0 %v3760
        %5306 = vmatprep.subr.bf16.mxu0 %v3763
        %5307 = vmatpush1.bf16.msra.mxu0 %v3762
        %5308 = vmatprep.subr.bf16.mxu0 %v3765
        %5309 = vmatpush1.bf16.msra.mxu0 %v3764
        %5310 = vmatprep.subr.bf16.mxu0 %v3767
        %5311 = vmatpush1.bf16.msra.mxu0 %v3766
        %5312 = vmatprep.subr.bf16.mxu0 %v3769
        %5313 = vmatpush1.bf16.msra.mxu0 %v3768
        %5314 = vmatprep.subr.bf16.mxu0 %v3771
        %5315 = vmatpush1.bf16.msra.mxu0 %v3770
        %5316 = vmatprep.subr.bf16.mxu0 %v3773
        %5317 = vmatpush1.bf16.msra.mxu0 %v3772
        %5318 = vmatprep.subr.bf16.mxu0 %v3775
        %5319 = vmatpush1.bf16.msra.mxu0 %v3774
        %5320 = vmatprep.subr.bf16.mxu0 %v3777
        %5321 = vmatpush1.bf16.msra.mxu0 %v3776
        %5322 = vmatprep.subr.bf16.mxu0 %v3779
        %5323 = vmatpush1.bf16.msra.mxu0 %v3778
        %5324 = vmatprep.mubr.bf16.mxu0 %v2271
        %5325 = vmatmul.mubr.bf16.gmra.mrb[0].mxu0 %v2268
        %v5326 = vpop.f32.mrb[0].mxu0
        %v5327 = vadd.f32 %v5174, %v5326
        %v5328 = vpop.f32.mrb[0].mxu0
        %v5329 = vadd.f32 %v5176, %v5328
        %v5330 = vpop.f32.mrb[0].mxu0
        %v5331 = vadd.f32 %v5178, %v5330
        %v5332 = vpop.f32.mrb[0].mxu0
        %v5333 = vadd.f32 %v5180, %v5332
        %5334 = vmatprep.mubr.bf16.mxu0 %v2275
        %5335 = vmatmul.mubr.bf16.gmra.mrb[0].mxu0 %v2273
        %v5336 = vpop.f32.mrb[0].mxu0
        %v5337 = vadd.f32 %v5184, %v5336
        %v5338 = vpop.f32.mrb[0].mxu0
        %v5339 = vadd.f32 %v5186, %v5338
        %v5340 = vpop.f32.mrb[0].mxu0
        %v5341 = vadd.f32 %v5188, %v5340
        %v5342 = vpop.f32.mrb[0].mxu0
        %v5343 = vadd.f32 %v5190, %v5342
        %5344 = vmatprep.mubr.bf16.mxu0 %v2279
        %5345 = vmatmul.mubr.bf16.gmra.mrb[0].mxu0 %v2277
        %v5346 = vpop.f32.mrb[0].mxu0
        %v5347 = vadd.f32 %v5194, %v5346
        %v5348 = vpop.f32.mrb[0].mxu0
        %v5349 = vadd.f32 %v5196, %v5348
        %v5350 = vpop.f32.mrb[0].mxu0
        %v5351 = vadd.f32 %v5198, %v5350
        %v5352 = vpop.f32.mrb[0].mxu0
        %v5353 = vadd.f32 %v5200, %v5352
        %5354 = vmatprep.mubr.bf16.mxu0 %v2283
        %5355 = vmatmul.mubr.bf16.gmra.mrb[0].mxu0 %v2281
        %v5356 = vpop.f32.mrb[0].mxu0
        %v5357 = vadd.f32 %v5204, %v5356
        %v5358 = vpop.f32.mrb[0].mxu0
        %v5359 = vadd.f32 %v5206, %v5358
        %v5360 = vpop.f32.mrb[0].mxu0
        %v5361 = vadd.f32 %v5208, %v5360
        %v5362 = vpop.f32.mrb[0].mxu0
        %v5363 = vadd.f32 %v5210, %v5362
        %5364 = vmatprep.mubr.bf16.mxu0 %v2287
        %5365 = vmatmul.mubr.bf16.gmra.mrb[0].mxu0 %v2285
        %v5366 = vpop.f32.mrb[0].mxu0
        %v5367 = vadd.f32 %v5214, %v5366
        %v5368 = vpop.f32.mrb[0].mxu0
        %v5369 = vadd.f32 %v5216, %v5368
        %v5370 = vpop.f32.mrb[0].mxu0
        %v5371 = vadd.f32 %v5218, %v5370
        %v5372 = vpop.f32.mrb[0].mxu0
        %v5373 = vadd.f32 %v5220, %v5372
        %5374 = vmatprep.mubr.bf16.mxu0 %v2291
        %5375 = vmatmul.mubr.bf16.gmra.mrb[0].mxu0 %v2289
        %v5376 = vpop.f32.mrb[0].mxu0
        %v5377 = vadd.f32 %v5224, %v5376
        %v5378 = vpop.f32.mrb[0].mxu0
        %v5379 = vadd.f32 %v5226, %v5378
        %v5380 = vpop.f32.mrb[0].mxu0
        %v5381 = vadd.f32 %v5228, %v5380
        %v5382 = vpop.f32.mrb[0].mxu0
        %v5383 = vadd.f32 %v5230, %v5382
        %5384 = vmatprep.mubr.bf16.mxu0 %v2295
        %5385 = vmatmul.mubr.bf16.gmra.mrb[0].mxu0 %v2293
        %v5386 = vpop.f32.mrb[0].mxu0
        %v5387 = vadd.f32 %v5234, %v5386
        %v5388 = vpop.f32.mrb[0].mxu0
        %v5389 = vadd.f32 %v5236, %v5388
        %v5390 = vpop.f32.mrb[0].mxu0
        %v5391 = vadd.f32 %v5238, %v5390
        %v5392 = vpop.f32.mrb[0].mxu0
        %v5393 = vadd.f32 %v5240, %v5392
        %5394 = vmatprep.mubr.bf16.mxu0 %v2299
        %5395 = vmatmul.mubr.bf16.gmra.mrb[0].mxu0 %v2297
        %v5396 = vpop.f32.mrb[0].mxu0
        %v5397 = vadd.f32 %v5244, %v5396
        %v5398 = vpop.f32.mrb[0].mxu0
        %v5399 = vadd.f32 %v5246, %v5398
        %v5400 = vpop.f32.mrb[0].mxu0
        %v5401 = vadd.f32 %v5248, %v5400
        %v5402 = vpop.f32.mrb[0].mxu0
        %v5403 = vadd.f32 %v5250, %v5402
        %5404 = vmatprep.mubr.bf16.mxu0 %v2303
        %5405 = vmatmul.mubr.bf16.gmra.mrb[0].mxu0 %v2301
        %v5406 = vpop.f32.mrb[0].mxu0
        %v5407 = vadd.f32 %v5254, %v5406
        %v5408 = vpop.f32.mrb[0].mxu0
        %v5409 = vadd.f32 %v5256, %v5408
        %v5410 = vpop.f32.mrb[0].mxu0
        %v5411 = vadd.f32 %v5258, %v5410
        %v5412 = vpop.f32.mrb[0].mxu0
        %v5413 = vadd.f32 %v5260, %v5412
        %5414 = vmatprep.mubr.bf16.mxu0 %v2307
        %5415 = vmatmul.mubr.bf16.gmra.mrb[0].mxu0 %v2305
        %v5416 = vpop.f32.mrb[0].mxu0
        %v5417 = vadd.f32 %v5264, %v5416
        %v5418 = vpop.f32.mrb[0].mxu0
        %v5419 = vadd.f32 %v5266, %v5418
        %v5420 = vpop.f32.mrb[0].mxu0
        %v5421 = vadd.f32 %v5268, %v5420
        %v5422 = vpop.f32.mrb[0].mxu0
        %v5423 = vadd.f32 %v5270, %v5422
        %5424 = vmatprep.mubr.bf16.mxu0 %v2311
        %5425 = vmatmul.mubr.bf16.gmra.mrb[0].mxu0 %v2309
        %v5426 = vpop.f32.mrb[0].mxu0
        %v5427 = vadd.f32 %v5274, %v5426
        %v5428 = vpop.f32.mrb[0].mxu0
        %v5429 = vadd.f32 %v5276, %v5428
        %v5430 = vpop.f32.mrb[0].mxu0
        %v5431 = vadd.f32 %v5278, %v5430
        %v5432 = vpop.f32.mrb[0].mxu0
        %v5433 = vadd.f32 %v5280, %v5432
        %5434 = vmatprep.mubr.bf16.mxu0 %v2315
        %5435 = vmatmul.mubr.bf16.gmra.mrb[0].mxu0 %v2313
        %v5436 = vpop.f32.mrb[0].mxu0
        %v5437 = vadd.f32 %v5284, %v5436
        %v5438 = vpop.f32.mrb[0].mxu0
        %v5439 = vadd.f32 %v5286, %v5438
        %v5440 = vpop.f32.mrb[0].mxu0
        %v5441 = vadd.f32 %v5288, %v5440
        %v5442 = vpop.f32.mrb[0].mxu0
        %v5443 = vadd.f32 %v5290, %v5442
        %5444 = vdwg.mxu0
        %v5445 = vld [vmem:[#allocation15] ss:$2 sm:$0x3]
        %v5447 = vlaneseq
        %v5448 = vshrl.u32 %v5447, 7
        %v5449 = vsub.s32 0, %v5448
        %v5450 = vrot.slane %v5445, %v5449
        %v5451 = vlaneseq
        %v5452 = vshrl.u32 %v5451, 7
        %v5453 = vsub.s32 1, %v5452
        %v5454 = vrot.slane %v5445, %v5453
        %v5457 = vmul.f32 %v5327, %v5450
        %v5458 = vmul.f32 %v5329, %v5454
        %v5459 = vmul.f32 %v5331, %v5450
        %v5460 = vmul.f32 %v5333, %v5454
        %v5461 = vmul.f32 %v5337, %v5450
        %v5462 = vmul.f32 %v5339, %v5454
        %v5463 = vmul.f32 %v5341, %v5450
        %v5464 = vmul.f32 %v5343, %v5454
        %v5465 = vmul.f32 %v5347, %v5450
        %v5466 = vmul.f32 %v5349, %v5454
        %v5467 = vmul.f32 %v5351, %v5450
        %v5468 = vmul.f32 %v5353, %v5454
        %v5469 = vmul.f32 %v5357, %v5450
        %v5470 = vmul.f32 %v5359, %v5454
        %v5471 = vmul.f32 %v5361, %v5450
        %v5472 = vmul.f32 %v5363, %v5454
        %v5473 = vmul.f32 %v5367, %v5450
        %v5474 = vmul.f32 %v5369, %v5454
        %v5475 = vmul.f32 %v5371, %v5450
        %v5476 = vmul.f32 %v5373, %v5454
        %v5477 = vmul.f32 %v5377, %v5450
        %v5478 = vmul.f32 %v5379, %v5454
        %v5479 = vmul.f32 %v5381, %v5450
        %v5480 = vmul.f32 %v5383, %v5454
        %v5481 = vmul.f32 %v5387, %v5450
        %v5482 = vmul.f32 %v5389, %v5454
        %v5483 = vmul.f32 %v5391, %v5450
        %v5484 = vmul.f32 %v5393, %v5454
        %v5485 = vmul.f32 %v5397, %v5450
        %v5486 = vmul.f32 %v5399, %v5454
        %v5487 = vmul.f32 %v5401, %v5450
        %v5488 = vmul.f32 %v5403, %v5454
        %v5489 = vmul.f32 %v5407, %v5450
        %v5490 = vmul.f32 %v5409, %v5454
        %v5491 = vmul.f32 %v5411, %v5450
        %v5492 = vmul.f32 %v5413, %v5454
        %v5493 = vmul.f32 %v5417, %v5450
        %v5494 = vmul.f32 %v5419, %v5454
        %v5495 = vmul.f32 %v5421, %v5450
        %v5496 = vmul.f32 %v5423, %v5454
        %v5497 = vmul.f32 %v5427, %v5450
        %v5498 = vmul.f32 %v5429, %v5454
        %v5499 = vmul.f32 %v5431, %v5450
        %v5500 = vmul.f32 %v5433, %v5454
        %v5501 = vmul.f32 %v5437, %v5450
        %v5502 = vmul.f32 %v5439, %v5454
        %v5503 = vmul.f32 %v5441, %v5450
        %v5504 = vmul.f32 %v5443, %v5454
        %s5505 = scalar_lea.vmem [#allocation15], 1
        %v5506 = vld [vmem:[%s5505] ss:$2 sm:$0x3]
        %v5508 = vlaneseq
        %v5509 = vshrl.u32 %v5508, 7
        %v5510 = vsub.s32 0, %v5509
        %v5511 = vrot.slane %v5506, %v5510
        %v5512 = vlaneseq
        %v5513 = vshrl.u32 %v5512, 7
        %v5514 = vsub.s32 1, %v5513
        %v5515 = vrot.slane %v5506, %v5514
        %v5518 = vadd.f32 %v5457, %v5511
        %v5519 = vadd.f32 %v5458, %v5515
        %v5520 = vadd.f32 %v5459, %v5511
        %v5521 = vadd.f32 %v5460, %v5515
        %v5522 = vadd.f32 %v5461, %v5511
        %v5523 = vadd.f32 %v5462, %v5515
        %v5524 = vadd.f32 %v5463, %v5511
        %v5525 = vadd.f32 %v5464, %v5515
        %v5526 = vadd.f32 %v5465, %v5511
        %v5527 = vadd.f32 %v5466, %v5515
        %v5528 = vadd.f32 %v5467, %v5511
        %v5529 = vadd.f32 %v5468, %v5515
        %v5530 = vadd.f32 %v5469, %v5511
        %v5531 = vadd.f32 %v5470, %v5515
        %v5532 = vadd.f32 %v5471, %v5511
        %v5533 = vadd.f32 %v5472, %v5515
        %v5534 = vadd.f32 %v5473, %v5511
        %v5535 = vadd.f32 %v5474, %v5515
        %v5536 = vadd.f32 %v5475, %v5511
        %v5537 = vadd.f32 %v5476, %v5515
        %v5538 = vadd.f32 %v5477, %v5511
        %v5539 = vadd.f32 %v5478, %v5515
        %v5540 = vadd.f32 %v5479, %v5511
        %v5541 = vadd.f32 %v5480, %v5515
        %v5542 = vadd.f32 %v5481, %v5511
        %v5543 = vadd.f32 %v5482, %v5515
        %v5544 = vadd.f32 %v5483, %v5511
        %v5545 = vadd.f32 %v5484, %v5515
        %v5546 = vadd.f32 %v5485, %v5511
        %v5547 = vadd.f32 %v5486, %v5515
        %v5548 = vadd.f32 %v5487, %v5511
        %v5549 = vadd.f32 %v5488, %v5515
        %v5550 = vadd.f32 %v5489, %v5511
        %v5551 = vadd.f32 %v5490, %v5515
        %v5552 = vadd.f32 %v5491, %v5511
        %v5553 = vadd.f32 %v5492, %v5515
        %v5554 = vadd.f32 %v5493, %v5511
        %v5555 = vadd.f32 %v5494, %v5515
        %v5556 = vadd.f32 %v5495, %v5511
        %v5557 = vadd.f32 %v5496, %v5515
        %v5558 = vadd.f32 %v5497, %v5511
        %v5559 = vadd.f32 %v5498, %v5515
        %v5560 = vadd.f32 %v5499, %v5511
        %v5561 = vadd.f32 %v5500, %v5515
        %v5562 = vadd.f32 %v5501, %v5511
        %v5563 = vadd.f32 %v5502, %v5515
        %v5564 = vadd.f32 %v5503, %v5511
        %v5565 = vadd.f32 %v5504, %v5515
        %vm5566 = vcmp.ge.f32.partialorder %v5518, 0.0
        %vm5567 = vcmp.ge.f32.partialorder %v5519, 0.0
        %vm5568 = vcmp.ge.f32.partialorder %v5520, 0.0
        %vm5569 = vcmp.ge.f32.partialorder %v5521, 0.0
        %vm5570 = vcmp.ge.f32.partialorder %v5522, 0.0
        %vm5571 = vcmp.ge.f32.partialorder %v5523, 0.0
        %vm5572 = vcmp.ge.f32.partialorder %v5524, 0.0
        %vm5573 = vcmp.ge.f32.partialorder %v5525, 0.0
        %vm5574 = vcmp.ge.f32.partialorder %v5526, 0.0
        %vm5575 = vcmp.ge.f32.partialorder %v5527, 0.0
        %vm5576 = vcmp.ge.f32.partialorder %v5528, 0.0
        %vm5577 = vcmp.ge.f32.partialorder %v5529, 0.0
        %vm5578 = vcmp.ge.f32.partialorder %v5530, 0.0
        %vm5579 = vcmp.ge.f32.partialorder %v5531, 0.0
        %vm5580 = vcmp.ge.f32.partialorder %v5532, 0.0
        %vm5581 = vcmp.ge.f32.partialorder %v5533, 0.0
        %vm5582 = vcmp.ge.f32.partialorder %v5534, 0.0
        %vm5583 = vcmp.ge.f32.partialorder %v5535, 0.0
        %vm5584 = vcmp.ge.f32.partialorder %v5536, 0.0
        %vm5585 = vcmp.ge.f32.partialorder %v5537, 0.0
        %vm5586 = vcmp.ge.f32.partialorder %v5538, 0.0
        %vm5587 = vcmp.ge.f32.partialorder %v5539, 0.0
        %vm5588 = vcmp.ge.f32.partialorder %v5540, 0.0
        %vm5589 = vcmp.ge.f32.partialorder %v5541, 0.0
        %vm5590 = vcmp.ge.f32.partialorder %v5542, 0.0
        %vm5591 = vcmp.ge.f32.partialorder %v5543, 0.0
        %vm5592 = vcmp.ge.f32.partialorder %v5544, 0.0
        %vm5593 = vcmp.ge.f32.partialorder %v5545, 0.0
        %vm5594 = vcmp.ge.f32.partialorder %v5546, 0.0
        %vm5595 = vcmp.ge.f32.partialorder %v5547, 0.0
        %vm5596 = vcmp.ge.f32.partialorder %v5548, 0.0
        %vm5597 = vcmp.ge.f32.partialorder %v5549, 0.0
        %vm5598 = vcmp.ge.f32.partialorder %v5550, 0.0
        %vm5599 = vcmp.ge.f32.partialorder %v5551, 0.0
        %vm5600 = vcmp.ge.f32.partialorder %v5552, 0.0
        %vm5601 = vcmp.ge.f32.partialorder %v5553, 0.0
        %vm5602 = vcmp.ge.f32.partialorder %v5554, 0.0
        %vm5603 = vcmp.ge.f32.partialorder %v5555, 0.0
        %vm5604 = vcmp.ge.f32.partialorder %v5556, 0.0
        %vm5605 = vcmp.ge.f32.partialorder %v5557, 0.0
        %vm5606 = vcmp.ge.f32.partialorder %v5558, 0.0
        %vm5607 = vcmp.ge.f32.partialorder %v5559, 0.0
        %vm5608 = vcmp.ge.f32.partialorder %v5560, 0.0
        %vm5609 = vcmp.ge.f32.partialorder %v5561, 0.0
        %vm5610 = vcmp.ge.f32.partialorder %v5562, 0.0
        %vm5611 = vcmp.ge.f32.partialorder %v5563, 0.0
        %vm5612 = vcmp.ge.f32.partialorder %v5564, 0.0
        %vm5613 = vcmp.ge.f32.partialorder %v5565, 0.0
        %v5614 = vmul.f32 %v5518, 0.0001
        %v5615 = vmul.f32 %v5519, 0.0001
        %v5616 = vmul.f32 %v5520, 0.0001
        %v5617 = vmul.f32 %v5521, 0.0001
        %v5618 = vmul.f32 %v5522, 0.0001
        %v5619 = vmul.f32 %v5523, 0.0001
        %v5620 = vmul.f32 %v5524, 0.0001
        %v5621 = vmul.f32 %v5525, 0.0001
        %v5622 = vmul.f32 %v5526, 0.0001
        %v5623 = vmul.f32 %v5527, 0.0001
        %v5624 = vmul.f32 %v5528, 0.0001
        %v5625 = vmul.f32 %v5529, 0.0001
        %v5626 = vmul.f32 %v5530, 0.0001
        %v5627 = vmul.f32 %v5531, 0.0001
        %v5628 = vmul.f32 %v5532, 0.0001
        %v5629 = vmul.f32 %v5533, 0.0001
        %v5630 = vmul.f32 %v5534, 0.0001
        %v5631 = vmul.f32 %v5535, 0.0001
        %v5632 = vmul.f32 %v5536, 0.0001
        %v5633 = vmul.f32 %v5537, 0.0001
        %v5634 = vmul.f32 %v5538, 0.0001
        %v5635 = vmul.f32 %v5539, 0.0001
        %v5636 = vmul.f32 %v5540, 0.0001
        %v5637 = vmul.f32 %v5541, 0.0001
        %v5638 = vmul.f32 %v5542, 0.0001
        %v5639 = vmul.f32 %v5543, 0.0001
        %v5640 = vmul.f32 %v5544, 0.0001
        %v5641 = vmul.f32 %v5545, 0.0001
        %v5642 = vmul.f32 %v5546, 0.0001
        %v5643 = vmul.f32 %v5547, 0.0001
        %v5644 = vmul.f32 %v5548, 0.0001
        %v5645 = vmul.f32 %v5549, 0.0001
        %v5646 = vmul.f32 %v5550, 0.0001
        %v5647 = vmul.f32 %v5551, 0.0001
        %v5648 = vmul.f32 %v5552, 0.0001
        %v5649 = vmul.f32 %v5553, 0.0001
        %v5650 = vmul.f32 %v5554, 0.0001
        %v5651 = vmul.f32 %v5555, 0.0001
        %v5652 = vmul.f32 %v5556, 0.0001
        %v5653 = vmul.f32 %v5557, 0.0001
        %v5654 = vmul.f32 %v5558, 0.0001
        %v5655 = vmul.f32 %v5559, 0.0001
        %v5656 = vmul.f32 %v5560, 0.0001
        %v5657 = vmul.f32 %v5561, 0.0001
        %v5658 = vmul.f32 %v5562, 0.0001
        %v5659 = vmul.f32 %v5563, 0.0001
        %v5660 = vmul.f32 %v5564, 0.0001
        %v5661 = vmul.f32 %v5565, 0.0001
        %v5662 = vsel %vm5566, %v5518, %v5614
        %v5663 = vsel %vm5567, %v5519, %v5615
        %v5664 = vsel %vm5568, %v5520, %v5616
        %v5665 = vsel %vm5569, %v5521, %v5617
        %v5666 = vsel %vm5570, %v5522, %v5618
        %v5667 = vsel %vm5571, %v5523, %v5619
        %v5668 = vsel %vm5572, %v5524, %v5620
        %v5669 = vsel %vm5573, %v5525, %v5621
        %v5670 = vsel %vm5574, %v5526, %v5622
        %v5671 = vsel %vm5575, %v5527, %v5623
        %v5672 = vsel %vm5576, %v5528, %v5624
        %v5673 = vsel %vm5577, %v5529, %v5625
        %v5674 = vsel %vm5578, %v5530, %v5626
        %v5675 = vsel %vm5579, %v5531, %v5627
        %v5676 = vsel %vm5580, %v5532, %v5628
        %v5677 = vsel %vm5581, %v5533, %v5629
        %v5678 = vsel %vm5582, %v5534, %v5630
        %v5679 = vsel %vm5583, %v5535, %v5631
        %v5680 = vsel %vm5584, %v5536, %v5632
        %v5681 = vsel %vm5585, %v5537, %v5633
        %v5682 = vsel %vm5586, %v5538, %v5634
        %v5683 = vsel %vm5587, %v5539, %v5635
        %v5684 = vsel %vm5588, %v5540, %v5636
        %v5685 = vsel %vm5589, %v5541, %v5637
        %v5686 = vsel %vm5590, %v5542, %v5638
        %v5687 = vsel %vm5591, %v5543, %v5639
        %v5688 = vsel %vm5592, %v5544, %v5640
        %v5689 = vsel %vm5593, %v5545, %v5641
        %v5690 = vsel %vm5594, %v5546, %v5642
        %v5691 = vsel %vm5595, %v5547, %v5643
        %v5692 = vsel %vm5596, %v5548, %v5644
        %v5693 = vsel %vm5597, %v5549, %v5645
        %v5694 = vsel %vm5598, %v5550, %v5646
        %v5695 = vsel %vm5599, %v5551, %v5647
        %v5696 = vsel %vm5600, %v5552, %v5648
        %v5697 = vsel %vm5601, %v5553, %v5649
        %v5698 = vsel %vm5602, %v5554, %v5650
        %v5699 = vsel %vm5603, %v5555, %v5651
        %v5700 = vsel %vm5604, %v5556, %v5652
        %v5701 = vsel %vm5605, %v5557, %v5653
        %v5702 = vsel %vm5606, %v5558, %v5654
        %v5703 = vsel %vm5607, %v5559, %v5655
        %v5704 = vsel %vm5608, %v5560, %v5656
        %v5705 = vsel %vm5609, %v5561, %v5657
        %v5706 = vsel %vm5610, %v5562, %v5658
        %v5707 = vsel %vm5611, %v5563, %v5659
        %v5708 = vsel %vm5612, %v5564, %v5660
        %v5709 = vsel %vm5613, %v5565, %v5661
        %v5710 = vpack.c.bf16 %v5664, %v5662
        %v5711 = vpack.c.bf16 %v5665, %v5663
        %v5712 = vpack.c.bf16 %v5668, %v5666
        %v5713 = vpack.c.bf16 %v5669, %v5667
        %v5714 = vpack.c.bf16 %v5672, %v5670
        %v5715 = vpack.c.bf16 %v5673, %v5671
        %v5716 = vpack.c.bf16 %v5676, %v5674
        %v5717 = vpack.c.bf16 %v5677, %v5675
        %v5718 = vpack.c.bf16 %v5680, %v5678
        %v5719 = vpack.c.bf16 %v5681, %v5679
        %v5720 = vpack.c.bf16 %v5684, %v5682
        %v5721 = vpack.c.bf16 %v5685, %v5683
        %v5722 = vpack.c.bf16 %v5688, %v5686
        %v5723 = vpack.c.bf16 %v5689, %v5687
        %v5724 = vpack.c.bf16 %v5692, %v5690
        %v5725 = vpack.c.bf16 %v5693, %v5691
        %v5726 = vpack.c.bf16 %v5696, %v5694
        %v5727 = vpack.c.bf16 %v5697, %v5695
        %v5728 = vpack.c.bf16 %v5700, %v5698
        %v5729 = vpack.c.bf16 %v5701, %v5699
        %v5730 = vpack.c.bf16 %v5704, %v5702
        %v5731 = vpack.c.bf16 %v5705, %v5703
        %v5732 = vpack.c.bf16 %v5708, %v5706
        %v5733 = vpack.c.bf16 %v5709, %v5707
        %v5758 = vunpack.c.l.b16 %v5710
        %v5759 = vunpack.c.l.b16 %v5711
        %v5760 = vunpack.c.h.b16 %v5710
        %v5761 = vunpack.c.h.b16 %v5711
        %v5762 = vunpack.c.l.b16 %v5712
        %v5763 = vunpack.c.l.b16 %v5713
        %v5764 = vunpack.c.h.b16 %v5712
        %v5765 = vunpack.c.h.b16 %v5713
        %v5766 = vunpack.c.l.b16 %v5714
        %v5767 = vunpack.c.l.b16 %v5715
        %v5768 = vunpack.c.h.b16 %v5714
        %v5769 = vunpack.c.h.b16 %v5715
        %v5770 = vunpack.c.l.b16 %v5716
        %v5771 = vunpack.c.l.b16 %v5717
        %v5772 = vunpack.c.h.b16 %v5716
        %v5773 = vunpack.c.h.b16 %v5717
        %v5774 = vunpack.c.l.b16 %v5718
        %v5775 = vunpack.c.l.b16 %v5719
        %v5776 = vunpack.c.h.b16 %v5718
        %v5777 = vunpack.c.h.b16 %v5719
        %v5778 = vunpack.c.l.b16 %v5720
        %v5779 = vunpack.c.l.b16 %v5721
        %v5780 = vunpack.c.h.b16 %v5720
        %v5781 = vunpack.c.h.b16 %v5721
        %v5782 = vunpack.c.l.b16 %v5722
        %v5783 = vunpack.c.l.b16 %v5723
        %v5784 = vunpack.c.h.b16 %v5722
        %v5785 = vunpack.c.h.b16 %v5723
        %v5786 = vunpack.c.l.b16 %v5724
        %v5787 = vunpack.c.l.b16 %v5725
        %v5788 = vunpack.c.h.b16 %v5724
        %v5789 = vunpack.c.h.b16 %v5725
        %v5790 = vunpack.c.l.b16 %v5726
        %v5791 = vunpack.c.l.b16 %v5727
        %v5792 = vunpack.c.h.b16 %v5726
        %v5793 = vunpack.c.h.b16 %v5727
        %v5794 = vunpack.c.l.b16 %v5728
        %v5795 = vunpack.c.l.b16 %v5729
        %v5796 = vunpack.c.h.b16 %v5728
        %v5797 = vunpack.c.h.b16 %v5729
        %v5798 = vunpack.c.l.b16 %v5730
        %v5799 = vunpack.c.l.b16 %v5731
        %v5800 = vunpack.c.h.b16 %v5730
        %v5801 = vunpack.c.h.b16 %v5731
        %v5802 = vunpack.c.l.b16 %v5732
        %v5803 = vunpack.c.l.b16 %v5733
        %v5804 = vunpack.c.h.b16 %v5732
        %v5805 = vunpack.c.h.b16 %v5733
        %v5806 = vpack.c.b16 %v5759, %v5758
        %v5807 = vpack.c.b16 %v5761, %v5760
        %v5808 = vpack.c.b16 %v5763, %v5762
        %v5809 = vpack.c.b16 %v5765, %v5764
        %v5810 = vpack.c.b16 %v5767, %v5766
        %v5811 = vpack.c.b16 %v5769, %v5768
        %v5812 = vpack.c.b16 %v5771, %v5770
        %v5813 = vpack.c.b16 %v5773, %v5772
        %v5814 = vpack.c.b16 %v5775, %v5774
        %v5815 = vpack.c.b16 %v5777, %v5776
        %v5816 = vpack.c.b16 %v5779, %v5778
        %v5817 = vpack.c.b16 %v5781, %v5780
        %v5818 = vpack.c.b16 %v5783, %v5782
        %v5819 = vpack.c.b16 %v5785, %v5784
        %v5820 = vpack.c.b16 %v5787, %v5786
        %v5821 = vpack.c.b16 %v5789, %v5788
        %v5822 = vpack.c.b16 %v5791, %v5790
        %v5823 = vpack.c.b16 %v5793, %v5792
        %v5824 = vpack.c.b16 %v5795, %v5794
        %v5825 = vpack.c.b16 %v5797, %v5796
        %v5826 = vpack.c.b16 %v5799, %v5798
        %v5827 = vpack.c.b16 %v5801, %v5800
        %v5828 = vpack.c.b16 %v5803, %v5802
        %v5829 = vpack.c.b16 %v5805, %v5804
        %5854 = vst [vmem:[#allocation3] sm:$0xff] %v5806
        %5855 = vst [vmem:[#allocation3 + $0x8] sm:$0xff] %v5807
        %5856 = vst [vmem:[#allocation3 + $0x10] sm:$0xff] %v5808
        %5857 = vst [vmem:[#allocation3 + $0x18] sm:$0xff] %v5809
        %5858 = vst [vmem:[#allocation3 + $0x20] sm:$0xff] %v5810
        %5859 = vst [vmem:[#allocation3 + $0x28] sm:$0xff] %v5811
        %5860 = vst [vmem:[#allocation3 + $0x30] sm:$0xff] %v5812
        %5861 = vst [vmem:[#allocation3 + $0x38] sm:$0xff] %v5813
        %5862 = vst [vmem:[#allocation3 + $0x40] sm:$0xff] %v5814
        %5863 = vst [vmem:[#allocation3 + $0x48] sm:$0xff] %v5815
        %5864 = vst [vmem:[#allocation3 + $0x50] sm:$0xff] %v5816
        %5865 = vst [vmem:[#allocation3 + $0x58] sm:$0xff] %v5817
        %5866 = vst [vmem:[#allocation3 + $0x60] sm:$0xff] %v5818
        %5867 = vst [vmem:[#allocation3 + $0x68] sm:$0xff] %v5819
        %5868 = vst [vmem:[#allocation3 + $0x70] sm:$0xff] %v5820
        %5869 = vst [vmem:[#allocation3 + $0x78] sm:$0xff] %v5821
        %5870 = vst [vmem:[#allocation3 + $0x80] sm:$0xff] %v5822
        %5871 = vst [vmem:[#allocation3 + $0x88] sm:$0xff] %v5823
        %5872 = vst [vmem:[#allocation3 + $0x90] sm:$0xff] %v5824
        %5873 = vst [vmem:[#allocation3 + $0x98] sm:$0xff] %v5825
        %5874 = vst [vmem:[#allocation3 + $0xa0] sm:$0xff] %v5826
        %5875 = vst [vmem:[#allocation3 + $0xa8] sm:$0xff] %v5827
        %5876 = vst [vmem:[#allocation3 + $0xb0] sm:$0xff] %v5828
        %5877 = vst [vmem:[#allocation3 + $0xb8] sm:$0xff] %v5829
        %5878 = vst [vmem:[#allocation3 + $0xc0] sm:$0xff] 0
        %v5879 = vld [vmem:[#allocation3] sm:$0xff]
        %v5880 = vld [vmem:[#allocation3 + $0x8] sm:$0xff]
        %v5881 = vld [vmem:[#allocation3 + $0x10] sm:$0xff]
        %v5882 = vld [vmem:[#allocation3 + $0x18] sm:$0xff]
        %v5883 = vld [vmem:[#allocation3 + $0x20] sm:$0xff]
        %v5884 = vld [vmem:[#allocation3 + $0x28] sm:$0xff]
        %v5885 = vld [vmem:[#allocation3 + $0x30] sm:$0xff]
        %v5886 = vld [vmem:[#allocation3 + $0x38] sm:$0xff]
        %v5887 = vld [vmem:[#allocation3 + $0x40] sm:$0xff]
        %v5888 = vld [vmem:[#allocation3 + $0x48] sm:$0xff]
        %v5889 = vld [vmem:[#allocation3 + $0x50] sm:$0xff]
        %v5890 = vld [vmem:[#allocation3 + $0x58] sm:$0xff]
        %v5891 = vld [vmem:[#allocation3 + $0x60] sm:$0xff]
        %v5892 = vld [vmem:[#allocation3 + $0x68] sm:$0xff]
        %v5893 = vld [vmem:[#allocation3 + $0x70] sm:$0xff]
        %v5894 = vld [vmem:[#allocation3 + $0x78] sm:$0xff]
        %v5895 = vld [vmem:[#allocation3 + $0x80] sm:$0xff]
        %v5896 = vld [vmem:[#allocation3 + $0x88] sm:$0xff]
        %v5897 = vld [vmem:[#allocation3 + $0x90] sm:$0xff]
        %v5898 = vld [vmem:[#allocation3 + $0x98] sm:$0xff]
        %v5899 = vld [vmem:[#allocation3 + $0xa0] sm:$0x11]
        %v5900 = vld [vmem:[#allocation3] sm:$0xee]
        %v5901 = vld [vmem:[#allocation3 + $0xa0] sm:$0xff]
        %v5902 = vld [vmem:[#allocation3 + $0xa8] sm:$0xff]
        %v5903 = vld [vmem:[#allocation3 + $0xb0] sm:$0x11]
        %v5904 = vld [vmem:[#allocation3 + $0x10] sm:$0xee]
        %v5905 = vld [vmem:[#allocation3 + $0xb0] sm:$0xff]
        %v5906 = vld [vmem:[#allocation3 + $0xb8] sm:$0xff]
        %v5907 = vld [vmem:[#allocation3 + $0x20] sm:$0xff]
        %v5908 = vld [vmem:[#allocation3 + $0x28] sm:$0xff]
        %v5909 = vld [vmem:[#allocation3 + $0x30] sm:$0xff]
        %v5910 = vld [vmem:[#allocation3 + $0x38] sm:$0xff]
        %v5911 = vld [vmem:[#allocation3 + $0x40] sm:$0xff]
        %v5912 = vld [vmem:[#allocation3 + $0x48] sm:$0xff]
        %v5913 = vld [vmem:[#allocation3 + $0x50] sm:$0xff]
        %v5914 = vld [vmem:[#allocation3 + $0x58] sm:$0xff]
        %v5915 = vld [vmem:[#allocation3 + $0x60] sm:$0xff]
        %v5916 = vld [vmem:[#allocation3 + $0x68] sm:$0xff]
        %v5917 = vld [vmem:[#allocation3 + $0x70] sm:$0xff]
        %v5918 = vld [vmem:[#allocation3 + $0x78] sm:$0xff]
        %v5919 = vld [vmem:[#allocation3 + $0x80] sm:$0xff]
        %v5920 = vld [vmem:[#allocation3 + $0x88] sm:$0xff]
        %v5921 = vld [vmem:[#allocation3 + $0x90] sm:$0xff]
        %v5922 = vld [vmem:[#allocation3 + $0x98] sm:$0xff]
        %v5923 = vld [vmem:[#allocation3 + $0xa0] sm:$0xff]
        %v5924 = vld [vmem:[#allocation3 + $0xa8] sm:$0xff]
        %v5925 = vld [vmem:[#allocation3 + $0xb0] sm:$0xff]
        %v5926 = vld [vmem:[#allocation3 + $0xb8] sm:$0xff]
        %v5927 = vld [vmem:[#allocation3 + $0xc0] sm:$0x11]
        %v5928 = vld [vmem:[#allocation3 + $0x20] sm:$0xee]
        %v5949 = vunpack.c.l.b16 %v5879
        %v5950 = vunpack.c.h.b16 %v5879
        %v5951 = vunpack.c.l.b16 %v5880
        %v5952 = vunpack.c.h.b16 %v5880
        %v5953 = vunpack.c.l.b16 %v5881
        %v5954 = vunpack.c.h.b16 %v5881
        %v5955 = vunpack.c.l.b16 %v5882
        %v5956 = vunpack.c.h.b16 %v5882
        %v5957 = vunpack.c.l.b16 %v5883
        %v5958 = vunpack.c.h.b16 %v5883
        %v5959 = vunpack.c.l.b16 %v5884
        %v5960 = vunpack.c.h.b16 %v5884
        %v5961 = vunpack.c.l.b16 %v5885
        %v5962 = vunpack.c.h.b16 %v5885
        %v5963 = vunpack.c.l.b16 %v5886
        %v5964 = vunpack.c.h.b16 %v5886
        %v5965 = vunpack.c.l.b16 %v5887
        %v5966 = vunpack.c.h.b16 %v5887
        %v5967 = vunpack.c.l.b16 %v5888
        %v5968 = vunpack.c.h.b16 %v5888
        %v5969 = vunpack.c.l.b16 %v5889
        %v5970 = vunpack.c.h.b16 %v5889
        %v5971 = vunpack.c.l.b16 %v5890
        %v5972 = vunpack.c.h.b16 %v5890
        %v5973 = vunpack.c.l.b16 %v5891
        %v5974 = vunpack.c.h.b16 %v5891
        %v5975 = vunpack.c.l.b16 %v5892
        %v5976 = vunpack.c.h.b16 %v5892
        %v5977 = vunpack.c.l.b16 %v5893
        %v5978 = vunpack.c.h.b16 %v5893
        %v5979 = vunpack.c.l.b16 %v5894
        %v5980 = vunpack.c.h.b16 %v5894
        %v5981 = vunpack.c.l.b16 %v5895
        %v5982 = vunpack.c.h.b16 %v5895
        %v5983 = vunpack.c.l.b16 %v5896
        %v5984 = vunpack.c.h.b16 %v5896
        %v5985 = vunpack.c.l.b16 %v5897
        %v5986 = vunpack.c.h.b16 %v5897
        %v5987 = vunpack.c.l.b16 %v5898
        %v5988 = vunpack.c.h.b16 %v5898
        %v5989 = vpack.c.b16 %v5951, %v5949
        %v5990 = vpack.c.b16 %v5952, %v5950
        %v5991 = vpack.c.b16 %v5955, %v5953
        %v5992 = vpack.c.b16 %v5956, %v5954
        %v5993 = vpack.c.b16 %v5959, %v5957
        %v5994 = vpack.c.b16 %v5960, %v5958
        %v5995 = vpack.c.b16 %v5963, %v5961
        %v5996 = vpack.c.b16 %v5964, %v5962
        %v5997 = vpack.c.b16 %v5967, %v5965
        %v5998 = vpack.c.b16 %v5968, %v5966
        %v5999 = vpack.c.b16 %v5971, %v5969
        %v6000 = vpack.c.b16 %v5972, %v5970
        %v6001 = vpack.c.b16 %v5975, %v5973
        %v6002 = vpack.c.b16 %v5976, %v5974
        %v6003 = vpack.c.b16 %v5979, %v5977
        %v6004 = vpack.c.b16 %v5980, %v5978
        %v6005 = vpack.c.b16 %v5983, %v5981
        %v6006 = vpack.c.b16 %v5984, %v5982
        %v6007 = vpack.c.b16 %v5987, %v5985
        %v6008 = vpack.c.b16 %v5988, %v5986
        %v6030 = vunpack.c.l.b16 %v5899
        %v6031 = vunpack.c.h.b16 %v5899
        %v6032 = vpack.c.b16 %v6030, %v6030
        %v6033 = vpack.c.b16 %v6031, %v6031
        %v6035 = vshrl.u32 %v5989, 16
        %v6037 = vshll.u32 %v5989, 16
        %v6039 = vrot.slane %v6037, 1
        %v6040 = vor.u32 %v6035, %v6039
        %v6042 = vshll.u32 %v5991, 16
        %v6044 = vrot.slane %v6042, 1
        %v6045 = vsel %vm1553, %v6040, %v6044
        %v6047 = vshrl.u32 %v5990, 16
        %v6049 = vshll.u32 %v5990, 16
        %v6051 = vrot.slane %v6049, 1
        %v6052 = vor.u32 %v6047, %v6051
        %v6054 = vshll.u32 %v5992, 16
        %v6056 = vrot.slane %v6054, 1
        %v6057 = vsel %vm1553, %v6052, %v6056
        %v6058 = vshrl.u32 %v5991, 16
        %v6060 = vor.u32 %v6058, %v6044
        %v6062 = vshll.u32 %v5993, 16
        %v6064 = vrot.slane %v6062, 1
        %v6065 = vsel %vm1553, %v6060, %v6064
        %v6066 = vshrl.u32 %v5992, 16
        %v6068 = vor.u32 %v6066, %v6056
        %v6070 = vshll.u32 %v5994, 16
        %v6072 = vrot.slane %v6070, 1
        %v6073 = vsel %vm1553, %v6068, %v6072
        %v6074 = vshrl.u32 %v5993, 16
        %v6076 = vor.u32 %v6074, %v6064
        %v6078 = vshll.u32 %v5995, 16
        %v6080 = vrot.slane %v6078, 1
        %v6081 = vsel %vm1553, %v6076, %v6080
        %v6082 = vshrl.u32 %v5994, 16
        %v6084 = vor.u32 %v6082, %v6072
        %v6086 = vshll.u32 %v5996, 16
        %v6088 = vrot.slane %v6086, 1
        %v6089 = vsel %vm1553, %v6084, %v6088
        %v6090 = vshrl.u32 %v5995, 16
        %v6092 = vor.u32 %v6090, %v6080
        %v6094 = vshll.u32 %v5997, 16
        %v6096 = vrot.slane %v6094, 1
        %v6097 = vsel %vm1553, %v6092, %v6096
        %v6098 = vshrl.u32 %v5996, 16
        %v6100 = vor.u32 %v6098, %v6088
        %v6102 = vshll.u32 %v5998, 16
        %v6104 = vrot.slane %v6102, 1
        %v6105 = vsel %vm1553, %v6100, %v6104
        %v6106 = vshrl.u32 %v5997, 16
        %v6108 = vor.u32 %v6106, %v6096
        %v6110 = vshll.u32 %v5999, 16
        %v6112 = vrot.slane %v6110, 1
        %v6113 = vsel %vm1553, %v6108, %v6112
        %v6114 = vshrl.u32 %v5998, 16
        %v6116 = vor.u32 %v6114, %v6104
        %v6118 = vshll.u32 %v6000, 16
        %v6120 = vrot.slane %v6118, 1
        %v6121 = vsel %vm1553, %v6116, %v6120
        %v6122 = vshrl.u32 %v5999, 16
        %v6124 = vor.u32 %v6122, %v6112
        %v6126 = vshll.u32 %v6001, 16
        %v6128 = vrot.slane %v6126, 1
        %v6129 = vsel %vm1553, %v6124, %v6128
        %v6130 = vshrl.u32 %v6000, 16
        %v6132 = vor.u32 %v6130, %v6120
        %v6134 = vshll.u32 %v6002, 16
        %v6136 = vrot.slane %v6134, 1
        %v6137 = vsel %vm1553, %v6132, %v6136
        %v6138 = vshrl.u32 %v6001, 16
        %v6140 = vor.u32 %v6138, %v6128
        %v6142 = vshll.u32 %v6003, 16
        %v6144 = vrot.slane %v6142, 1
        %v6145 = vsel %vm1553, %v6140, %v6144
        %v6146 = vshrl.u32 %v6002, 16
        %v6148 = vor.u32 %v6146, %v6136
        %v6150 = vshll.u32 %v6004, 16
        %v6152 = vrot.slane %v6150, 1
        %v6153 = vsel %vm1553, %v6148, %v6152
        %v6154 = vshrl.u32 %v6003, 16
        %v6156 = vor.u32 %v6154, %v6144
        %v6158 = vshll.u32 %v6005, 16
        %v6160 = vrot.slane %v6158, 1
        %v6161 = vsel %vm1553, %v6156, %v6160
        %v6162 = vshrl.u32 %v6004, 16
        %v6164 = vor.u32 %v6162, %v6152
        %v6166 = vshll.u32 %v6006, 16
        %v6168 = vrot.slane %v6166, 1
        %v6169 = vsel %vm1553, %v6164, %v6168
        %v6170 = vshrl.u32 %v6005, 16
        %v6172 = vor.u32 %v6170, %v6160
        %v6174 = vshll.u32 %v6007, 16
        %v6176 = vrot.slane %v6174, 1
        %v6177 = vsel %vm1553, %v6172, %v6176
        %v6178 = vshrl.u32 %v6006, 16
        %v6180 = vor.u32 %v6178, %v6168
        %v6182 = vshll.u32 %v6008, 16
        %v6184 = vrot.slane %v6182, 1
        %v6185 = vsel %vm1553, %v6180, %v6184
        %v6186 = vshrl.u32 %v6007, 16
        %v6188 = vor.u32 %v6186, %v6176
        %v6190 = vshll.u32 %v6032, 16
        %v6192 = vrot.slane %v6190, 1
        %v6193 = vsel %vm1553, %v6188, %v6192
        %v6194 = vshrl.u32 %v6008, 16
        %v6196 = vor.u32 %v6194, %v6184
        %v6198 = vshll.u32 %v6033, 16
        %v6200 = vrot.slane %v6198, 1
        %v6201 = vsel %vm1553, %v6196, %v6200
        %v6223 = vunpack.c.l.b16 %v5900
        %v6224 = vunpack.c.h.b16 %v5900
        %v6225 = vpack.c.b16 %v5951, %v6223
        %v6226 = vpack.c.b16 %v5952, %v6224
        %v6227 = vrot.slane %v6225, 1
        %v6228 = vrot.slane %v5991, 1
        %v6229 = vsel %vm1783, %v6227, %v6228
        %v6230 = vrot.slane %v6226, 1
        %v6231 = vrot.slane %v5992, 1
        %v6232 = vsel %vm1783, %v6230, %v6231
        %v6233 = vrot.slane %v5993, 1
        %v6234 = vsel %vm1783, %v6228, %v6233
        %v6235 = vrot.slane %v5994, 1
        %v6236 = vsel %vm1783, %v6231, %v6235
        %v6237 = vrot.slane %v5995, 1
        %v6238 = vsel %vm1783, %v6233, %v6237
        %v6239 = vrot.slane %v5996, 1
        %v6240 = vsel %vm1783, %v6235, %v6239
        %v6241 = vrot.slane %v5997, 1
        %v6242 = vsel %vm1783, %v6237, %v6241
        %v6243 = vrot.slane %v5998, 1
        %v6244 = vsel %vm1783, %v6239, %v6243
        %v6245 = vrot.slane %v5999, 1
        %v6246 = vsel %vm1783, %v6241, %v6245
        %v6247 = vrot.slane %v6000, 1
        %v6248 = vsel %vm1783, %v6243, %v6247
        %v6249 = vrot.slane %v6001, 1
        %v6250 = vsel %vm1783, %v6245, %v6249
        %v6251 = vrot.slane %v6002, 1
        %v6252 = vsel %vm1783, %v6247, %v6251
        %v6253 = vrot.slane %v6003, 1
        %v6254 = vsel %vm1783, %v6249, %v6253
        %v6255 = vrot.slane %v6004, 1
        %v6256 = vsel %vm1783, %v6251, %v6255
        %v6257 = vrot.slane %v6005, 1
        %v6258 = vsel %vm1783, %v6253, %v6257
        %v6259 = vrot.slane %v6006, 1
        %v6260 = vsel %vm1783, %v6255, %v6259
        %v6261 = vrot.slane %v6007, 1
        %v6262 = vsel %vm1783, %v6257, %v6261
        %v6263 = vrot.slane %v6008, 1
        %v6264 = vsel %vm1783, %v6259, %v6263
        %v6265 = vrot.slane %v6032, 1
        %v6266 = vsel %vm1783, %v6261, %v6265
        %v6267 = vrot.slane %v6033, 1
        %v6268 = vsel %vm1783, %v6263, %v6267
        %v6291 = vunpack.c.l.b16 %v5901
        %v6292 = vunpack.c.h.b16 %v5901
        %v6293 = vunpack.c.l.b16 %v5902
        %v6294 = vunpack.c.h.b16 %v5902
        %v6295 = vpack.c.b16 %v6293, %v6291
        %v6296 = vpack.c.b16 %v6294, %v6292
        %v6300 = vunpack.c.l.b16 %v5903
        %v6301 = vunpack.c.h.b16 %v5903
        %v6302 = vpack.c.b16 %v6300, %v6300
        %v6303 = vpack.c.b16 %v6301, %v6301
        %v6305 = vshll.u32 %v6295, 16
        %v6307 = vrot.slane %v6305, 1
        %v6308 = vsel %vm1553, %v6188, %v6307
        %v6310 = vshll.u32 %v6296, 16
        %v6312 = vrot.slane %v6310, 1
        %v6313 = vsel %vm1553, %v6196, %v6312
        %v6314 = vshrl.u32 %v6295, 16
        %v6316 = vor.u32 %v6314, %v6307
        %v6318 = vshll.u32 %v6302, 16
        %v6320 = vrot.slane %v6318, 1
        %v6321 = vsel %vm1553, %v6316, %v6320
        %v6322 = vshrl.u32 %v6296, 16
        %v6324 = vor.u32 %v6322, %v6312
        %v6326 = vshll.u32 %v6303, 16
        %v6328 = vrot.slane %v6326, 1
        %v6329 = vsel %vm1553, %v6324, %v6328
        %v6335 = vunpack.c.l.b16 %v5904
        %v6336 = vunpack.c.h.b16 %v5904
        %v6337 = vpack.c.b16 %v5955, %v6335
        %v6338 = vpack.c.b16 %v5956, %v6336
        %v6339 = vrot.slane %v6337, 1
        %v6340 = vsel %vm1783, %v6339, %v6233
        %v6341 = vrot.slane %v6338, 1
        %v6342 = vsel %vm1783, %v6341, %v6235
        %v6343 = vrot.slane %v6295, 1
        %v6344 = vsel %vm1783, %v6261, %v6343
        %v6345 = vrot.slane %v6296, 1
        %v6346 = vsel %vm1783, %v6263, %v6345
        %v6347 = vrot.slane %v6302, 1
        %v6348 = vsel %vm1783, %v6343, %v6347
        %v6349 = vrot.slane %v6303, 1
        %v6350 = vsel %vm1783, %v6345, %v6349
        %v6359 = vunpack.c.l.b16 %v5905
        %v6360 = vunpack.c.h.b16 %v5905
        %v6361 = vunpack.c.l.b16 %v5906
        %v6362 = vunpack.c.h.b16 %v5906
        %v6363 = vpack.c.b16 %v6361, %v6359
        %v6364 = vpack.c.b16 %v6362, %v6360
        %v6388 = vunpack.c.l.b16 %v5907
        %v6389 = vunpack.c.h.b16 %v5907
        %v6390 = vunpack.c.l.b16 %v5908
        %v6391 = vunpack.c.h.b16 %v5908
        %v6392 = vunpack.c.l.b16 %v5909
        %v6393 = vunpack.c.h.b16 %v5909
        %v6394 = vunpack.c.l.b16 %v5910
        %v6395 = vunpack.c.h.b16 %v5910
        %v6396 = vunpack.c.l.b16 %v5911
        %v6397 = vunpack.c.h.b16 %v5911
        %v6398 = vunpack.c.l.b16 %v5912
        %v6399 = vunpack.c.h.b16 %v5912
        %v6400 = vunpack.c.l.b16 %v5913
        %v6401 = vunpack.c.h.b16 %v5913
        %v6402 = vunpack.c.l.b16 %v5914
        %v6403 = vunpack.c.h.b16 %v5914
        %v6404 = vunpack.c.l.b16 %v5915
        %v6405 = vunpack.c.h.b16 %v5915
        %v6406 = vunpack.c.l.b16 %v5916
        %v6407 = vunpack.c.h.b16 %v5916
        %v6408 = vunpack.c.l.b16 %v5917
        %v6409 = vunpack.c.h.b16 %v5917
        %v6410 = vunpack.c.l.b16 %v5918
        %v6411 = vunpack.c.h.b16 %v5918
        %v6412 = vunpack.c.l.b16 %v5919
        %v6413 = vunpack.c.h.b16 %v5919
        %v6414 = vunpack.c.l.b16 %v5920
        %v6415 = vunpack.c.h.b16 %v5920
        %v6416 = vunpack.c.l.b16 %v5921
        %v6417 = vunpack.c.h.b16 %v5921
        %v6418 = vunpack.c.l.b16 %v5922
        %v6419 = vunpack.c.h.b16 %v5922
        %v6420 = vunpack.c.l.b16 %v5923
        %v6421 = vunpack.c.h.b16 %v5923
        %v6422 = vunpack.c.l.b16 %v5924
        %v6423 = vunpack.c.h.b16 %v5924
        %v6424 = vunpack.c.l.b16 %v5925
        %v6425 = vunpack.c.h.b16 %v5925
        %v6426 = vunpack.c.l.b16 %v5926
        %v6427 = vunpack.c.h.b16 %v5926
        %v6428 = vunpack.c.l.b16 %v5927
        %v6429 = vunpack.c.h.b16 %v5927
        %v6430 = vpack.c.b16 %v6390, %v6388
        %v6431 = vpack.c.b16 %v6391, %v6389
        %v6432 = vpack.c.b16 %v6394, %v6392
        %v6433 = vpack.c.b16 %v6395, %v6393
        %v6434 = vpack.c.b16 %v6398, %v6396
        %v6435 = vpack.c.b16 %v6399, %v6397
        %v6436 = vpack.c.b16 %v6402, %v6400
        %v6437 = vpack.c.b16 %v6403, %v6401
        %v6438 = vpack.c.b16 %v6406, %v6404
        %v6439 = vpack.c.b16 %v6407, %v6405
        %v6440 = vpack.c.b16 %v6410, %v6408
        %v6441 = vpack.c.b16 %v6411, %v6409
        %v6442 = vpack.c.b16 %v6414, %v6412
        %v6443 = vpack.c.b16 %v6415, %v6413
        %v6444 = vpack.c.b16 %v6418, %v6416
        %v6445 = vpack.c.b16 %v6419, %v6417
        %v6446 = vpack.c.b16 %v6422, %v6420
        %v6447 = vpack.c.b16 %v6423, %v6421
        %v6448 = vpack.c.b16 %v6426, %v6424
        %v6449 = vpack.c.b16 %v6427, %v6425
        %v6450 = vpack.c.b16 %v6428, %v6428
        %v6451 = vpack.c.b16 %v6429, %v6429
        %v6453 = vshrl.u32 %v6430, 16
        %v6455 = vshll.u32 %v6430, 16
        %v6457 = vrot.slane %v6455, 1
        %v6458 = vor.u32 %v6453, %v6457
        %v6460 = vshll.u32 %v6432, 16
        %v6462 = vrot.slane %v6460, 1
        %v6463 = vsel %vm1553, %v6458, %v6462
        %v6465 = vshrl.u32 %v6431, 16
        %v6467 = vshll.u32 %v6431, 16
        %v6469 = vrot.slane %v6467, 1
        %v6470 = vor.u32 %v6465, %v6469
        %v6472 = vshll.u32 %v6433, 16
        %v6474 = vrot.slane %v6472, 1
        %v6475 = vsel %vm1553, %v6470, %v6474
        %v6476 = vshrl.u32 %v6432, 16
        %v6478 = vor.u32 %v6476, %v6462
        %v6480 = vshll.u32 %v6434, 16
        %v6482 = vrot.slane %v6480, 1
        %v6483 = vsel %vm1553, %v6478, %v6482
        %v6484 = vshrl.u32 %v6433, 16
        %v6486 = vor.u32 %v6484, %v6474
        %v6488 = vshll.u32 %v6435, 16
        %v6490 = vrot.slane %v6488, 1
        %v6491 = vsel %vm1553, %v6486, %v6490
        %v6492 = vshrl.u32 %v6434, 16
        %v6494 = vor.u32 %v6492, %v6482
        %v6496 = vshll.u32 %v6436, 16
        %v6498 = vrot.slane %v6496, 1
        %v6499 = vsel %vm1553, %v6494, %v6498
        %v6500 = vshrl.u32 %v6435, 16
        %v6502 = vor.u32 %v6500, %v6490
        %v6504 = vshll.u32 %v6437, 16
        %v6506 = vrot.slane %v6504, 1
        %v6507 = vsel %vm1553, %v6502, %v6506
        %v6508 = vshrl.u32 %v6436, 16
        %v6510 = vor.u32 %v6508, %v6498
        %v6512 = vshll.u32 %v6438, 16
        %v6514 = vrot.slane %v6512, 1
        %v6515 = vsel %vm1553, %v6510, %v6514
        %v6516 = vshrl.u32 %v6437, 16
        %v6518 = vor.u32 %v6516, %v6506
        %v6520 = vshll.u32 %v6439, 16
        %v6522 = vrot.slane %v6520, 1
        %v6523 = vsel %vm1553, %v6518, %v6522
        %v6524 = vshrl.u32 %v6438, 16
        %v6526 = vor.u32 %v6524, %v6514
        %v6528 = vshll.u32 %v6440, 16
        %v6530 = vrot.slane %v6528, 1
        %v6531 = vsel %vm1553, %v6526, %v6530
        %v6532 = vshrl.u32 %v6439, 16
        %v6534 = vor.u32 %v6532, %v6522
        %v6536 = vshll.u32 %v6441, 16
        %v6538 = vrot.slane %v6536, 1
        %v6539 = vsel %vm1553, %v6534, %v6538
        %v6540 = vshrl.u32 %v6440, 16
        %v6542 = vor.u32 %v6540, %v6530
        %v6544 = vshll.u32 %v6442, 16
        %v6546 = vrot.slane %v6544, 1
        %v6547 = vsel %vm1553, %v6542, %v6546
        %v6548 = vshrl.u32 %v6441, 16
        %v6550 = vor.u32 %v6548, %v6538
        %v6552 = vshll.u32 %v6443, 16
        %v6554 = vrot.slane %v6552, 1
        %v6555 = vsel %vm1553, %v6550, %v6554
        %v6556 = vshrl.u32 %v6442, 16
        %v6558 = vor.u32 %v6556, %v6546
        %v6560 = vshll.u32 %v6444, 16
        %v6562 = vrot.slane %v6560, 1
        %v6563 = vsel %vm1553, %v6558, %v6562
        %v6564 = vshrl.u32 %v6443, 16
        %v6566 = vor.u32 %v6564, %v6554
        %v6568 = vshll.u32 %v6445, 16
        %v6570 = vrot.slane %v6568, 1
        %v6571 = vsel %vm1553, %v6566, %v6570
        %v6572 = vshrl.u32 %v6444, 16
        %v6574 = vor.u32 %v6572, %v6562
        %v6576 = vshll.u32 %v6446, 16
        %v6578 = vrot.slane %v6576, 1
        %v6579 = vsel %vm1553, %v6574, %v6578
        %v6580 = vshrl.u32 %v6445, 16
        %v6582 = vor.u32 %v6580, %v6570
        %v6584 = vshll.u32 %v6447, 16
        %v6586 = vrot.slane %v6584, 1
        %v6587 = vsel %vm1553, %v6582, %v6586
        %v6588 = vshrl.u32 %v6446, 16
        %v6590 = vor.u32 %v6588, %v6578
        %v6592 = vshll.u32 %v6448, 16
        %v6594 = vrot.slane %v6592, 1
        %v6595 = vsel %vm1553, %v6590, %v6594
        %v6596 = vshrl.u32 %v6447, 16
        %v6598 = vor.u32 %v6596, %v6586
        %v6600 = vshll.u32 %v6449, 16
        %v6602 = vrot.slane %v6600, 1
        %v6603 = vsel %vm1553, %v6598, %v6602
        %v6604 = vshrl.u32 %v6448, 16
        %v6606 = vor.u32 %v6604, %v6594
        %v6608 = vshll.u32 %v6450, 16
        %v6610 = vrot.slane %v6608, 1
        %v6611 = vsel %vm1553, %v6606, %v6610
        %v6612 = vshrl.u32 %v6449, 16
        %v6614 = vor.u32 %v6612, %v6602
        %v6616 = vshll.u32 %v6451, 16
        %v6618 = vrot.slane %v6616, 1
        %v6619 = vsel %vm1553, %v6614, %v6618
        %v6641 = vunpack.c.l.b16 %v5928
        %v6642 = vunpack.c.h.b16 %v5928
        %v6643 = vpack.c.b16 %v6390, %v6641
        %v6644 = vpack.c.b16 %v6391, %v6642
        %v6645 = vrot.slane %v6643, 1
        %v6646 = vrot.slane %v6432, 1
        %v6647 = vsel %vm1783, %v6645, %v6646
        %v6648 = vrot.slane %v6644, 1
        %v6649 = vrot.slane %v6433, 1
        %v6650 = vsel %vm1783, %v6648, %v6649
        %v6651 = vrot.slane %v6434, 1
        %v6652 = vsel %vm1783, %v6646, %v6651
        %v6653 = vrot.slane %v6435, 1
        %v6654 = vsel %vm1783, %v6649, %v6653
        %v6655 = vrot.slane %v6436, 1
        %v6656 = vsel %vm1783, %v6651, %v6655
        %v6657 = vrot.slane %v6437, 1
        %v6658 = vsel %vm1783, %v6653, %v6657
        %v6659 = vrot.slane %v6438, 1
        %v6660 = vsel %vm1783, %v6655, %v6659
        %v6661 = vrot.slane %v6439, 1
        %v6662 = vsel %vm1783, %v6657, %v6661
        %v6663 = vrot.slane %v6440, 1
        %v6664 = vsel %vm1783, %v6659, %v6663
        %v6665 = vrot.slane %v6441, 1
        %v6666 = vsel %vm1783, %v6661, %v6665
        %v6667 = vrot.slane %v6442, 1
        %v6668 = vsel %vm1783, %v6663, %v6667
        %v6669 = vrot.slane %v6443, 1
        %v6670 = vsel %vm1783, %v6665, %v6669
        %v6671 = vrot.slane %v6444, 1
        %v6672 = vsel %vm1783, %v6667, %v6671
        %v6673 = vrot.slane %v6445, 1
        %v6674 = vsel %vm1783, %v6669, %v6673
        %v6675 = vrot.slane %v6446, 1
        %v6676 = vsel %vm1783, %v6671, %v6675
        %v6677 = vrot.slane %v6447, 1
        %v6678 = vsel %vm1783, %v6673, %v6677
        %v6679 = vrot.slane %v6448, 1
        %v6680 = vsel %vm1783, %v6675, %v6679
        %v6681 = vrot.slane %v6449, 1
        %v6682 = vsel %vm1783, %v6677, %v6681
        %v6683 = vrot.slane %v6450, 1
        %v6684 = vsel %vm1783, %v6679, %v6683
        %v6685 = vrot.slane %v6451, 1
        %v6686 = vsel %vm1783, %v6681, %v6685
        %v6707 = vld [vmem:[#allocation10] sm:$0xff]
        %v6708 = vld [vmem:[#allocation10 + $0x8] sm:$0xff]
        %v6709 = vld [vmem:[#allocation10 + $0x10] sm:$0xff]
        %v6710 = vld [vmem:[#allocation10 + $0x18] sm:$0xff]
        %v6711 = vld [vmem:[#allocation10 + $0x20] sm:$0xff]
        %v6712 = vld [vmem:[#allocation10 + $0x28] sm:$0xff]
        %v6713 = vld [vmem:[#allocation10 + $0x30] sm:$0xff]
        %v6714 = vld [vmem:[#allocation10 + $0x38] sm:$0xff]
        %v6715 = vld [vmem:[#allocation10 + $0x40] sm:$0xff]
        %v6716 = vld [vmem:[#allocation10 + $0x48] sm:$0xff]
        %v6717 = vld [vmem:[#allocation10 + $0x50] sm:$0xff]
        %v6718 = vld [vmem:[#allocation10 + $0x58] sm:$0xff]
        %v6719 = vld [vmem:[#allocation10 + $0x60] sm:$0xff]
        %v6720 = vld [vmem:[#allocation10 + $0x68] sm:$0xff]
        %v6721 = vld [vmem:[#allocation10 + $0x70] sm:$0xff]
        %v6722 = vld [vmem:[#allocation10 + $0x78] sm:$0xff]
        %v6723 = vld [vmem:[#allocation10 + $0x80] sm:$0xff]
        %v6724 = vld [vmem:[#allocation10 + $0x88] sm:$0xff]
        %v6725 = vld [vmem:[#allocation10 + $0x90] sm:$0xff]
        %v6726 = vld [vmem:[#allocation10 + $0x98] sm:$0xff]
        %v6727 = vld [vmem:[#allocation10 + $0xa0] sm:$0xff]
        %v6728 = vld [vmem:[#allocation10 + $0xa8] sm:$0xff]
        %v6729 = vld [vmem:[#allocation10 + $0xb0] sm:$0xff]
        %v6730 = vld [vmem:[#allocation10 + $0xb8] sm:$0xff]
        %v6731 = vld [vmem:[#allocation10 + $0xc0] sm:$0xff]
        %v6732 = vld [vmem:[#allocation10 + $0xc8] sm:$0xff]
        %v6733 = vld [vmem:[#allocation10 + $0xd0] sm:$0xff]
        %v6734 = vld [vmem:[#allocation10 + $0xd8] sm:$0xff]
        %v6735 = vld [vmem:[#allocation10 + $0xe0] sm:$0xff]
        %v6736 = vld [vmem:[#allocation10 + $0xe8] sm:$0xff]
        %v6737 = vld [vmem:[#allocation10 + $0xf0] sm:$0xff]
        %v6738 = vld [vmem:[#allocation10 + $0xf8] sm:$0xff]
        %v6739 = vld [vmem:[#allocation10 + $0x100] sm:$0xff]
        %v6740 = vld [vmem:[#allocation10 + $0x108] sm:$0xff]
        %v6741 = vld [vmem:[#allocation10 + $0x110] sm:$0xff]
        %v6742 = vld [vmem:[#allocation10 + $0x118] sm:$0xff]
        %v6743 = vld [vmem:[#allocation10 + $0x120] sm:$0xff]
        %v6744 = vld [vmem:[#allocation10 + $0x128] sm:$0xff]
        %v6745 = vld [vmem:[#allocation10 + $0x130] sm:$0xff]
        %v6746 = vld [vmem:[#allocation10 + $0x138] sm:$0xff]
        %v6747 = vld [vmem:[#allocation10 + $0x140] sm:$0xff]
        %v6748 = vld [vmem:[#allocation10 + $0x148] sm:$0xff]
        %v6749 = vld [vmem:[#allocation10 + $0x150] sm:$0xff]
        %v6750 = vld [vmem:[#allocation10 + $0x158] sm:$0xff]
        %v6751 = vld [vmem:[#allocation10 + $0x160] sm:$0xff]
        %v6752 = vld [vmem:[#allocation10 + $0x168] sm:$0xff]
        %v6753 = vld [vmem:[#allocation10 + $0x170] sm:$0xff]
        %v6754 = vld [vmem:[#allocation10 + $0x178] sm:$0xff]
        %v6755 = vld [vmem:[#allocation10 + $0x180] sm:$0xff]
        %v6756 = vld [vmem:[#allocation10 + $0x188] sm:$0xff]
        %v6757 = vld [vmem:[#allocation10 + $0x190] sm:$0xff]
        %v6758 = vld [vmem:[#allocation10 + $0x198] sm:$0xff]
        %v6759 = vld [vmem:[#allocation10 + $0x1a0] sm:$0xff]
        %v6760 = vld [vmem:[#allocation10 + $0x1a8] sm:$0xff]
        %v6761 = vld [vmem:[#allocation10 + $0x1b0] sm:$0xff]
        %v6762 = vld [vmem:[#allocation10 + $0x1b8] sm:$0xff]
        %v6763 = vld [vmem:[#allocation10 + $0x1c0] sm:$0xff]
        %v6764 = vld [vmem:[#allocation10 + $0x1c8] sm:$0xff]
        %v6765 = vld [vmem:[#allocation10 + $0x1d0] sm:$0xff]
        %v6766 = vld [vmem:[#allocation10 + $0x1d8] sm:$0xff]
        %v6767 = vld [vmem:[#allocation10 + $0x1e0] sm:$0xff]
        %v6768 = vld [vmem:[#allocation10 + $0x1e8] sm:$0xff]
        %v6769 = vld [vmem:[#allocation10 + $0x1f0] sm:$0xff]
        %v6770 = vld [vmem:[#allocation10 + $0x1f8] sm:$0xff]
        %v6771 = vld [vmem:[#allocation10 + $0x200] sm:$0xff]
        %v6772 = vld [vmem:[#allocation10 + $0x208] sm:$0xff]
        %v6773 = vld [vmem:[#allocation10 + $0x210] sm:$0xff]
        %v6774 = vld [vmem:[#allocation10 + $0x218] sm:$0xff]
        %v6775 = vld [vmem:[#allocation10 + $0x220] sm:$0xff]
        %v6776 = vld [vmem:[#allocation10 + $0x228] sm:$0xff]
        %v6777 = vld [vmem:[#allocation10 + $0x230] sm:$0xff]
        %v6778 = vld [vmem:[#allocation10 + $0x238] sm:$0xff]
        %v6779 = vld [vmem:[#allocation10 + $0x240] sm:$0xff]
        %v6780 = vld [vmem:[#allocation10 + $0x248] sm:$0xff]
        %v6781 = vld [vmem:[#allocation10 + $0x250] sm:$0xff]
        %v6782 = vld [vmem:[#allocation10 + $0x258] sm:$0xff]
        %v6783 = vld [vmem:[#allocation10 + $0x260] sm:$0xff]
        %v6784 = vld [vmem:[#allocation10 + $0x268] sm:$0xff]
        %v6785 = vld [vmem:[#allocation10 + $0x270] sm:$0xff]
        %v6786 = vld [vmem:[#allocation10 + $0x278] sm:$0xff]
        %v6787 = vld [vmem:[#allocation10 + $0x280] sm:$0xff]
        %v6788 = vld [vmem:[#allocation10 + $0x288] sm:$0xff]
        %v6789 = vld [vmem:[#allocation10 + $0x290] sm:$0xff]
        %v6790 = vld [vmem:[#allocation10 + $0x298] sm:$0xff]
        %v6791 = vld [vmem:[#allocation10 + $0x2a0] sm:$0xff]
        %v6792 = vld [vmem:[#allocation10 + $0x2a8] sm:$0xff]
        %v6793 = vld [vmem:[#allocation10 + $0x2b0] sm:$0xff]
        %v6794 = vld [vmem:[#allocation10 + $0x2b8] sm:$0xff]
        %v6795 = vld [vmem:[#allocation10 + $0x2c0] sm:$0xff]
        %v6796 = vld [vmem:[#allocation10 + $0x2c8] sm:$0xff]
        %v6797 = vld [vmem:[#allocation10 + $0x2d0] sm:$0xff]
        %v6798 = vld [vmem:[#allocation10 + $0x2d8] sm:$0xff]
        %v6799 = vld [vmem:[#allocation10 + $0x2e0] sm:$0xff]
        %v6800 = vld [vmem:[#allocation10 + $0x2e8] sm:$0xff]
        %v6801 = vld [vmem:[#allocation10 + $0x2f0] sm:$0xff]
        %v6802 = vld [vmem:[#allocation10 + $0x2f8] sm:$0xff]
        %v6803 = vld [vmem:[#allocation10 + $0x300] sm:$0xff]
        %v6804 = vld [vmem:[#allocation10 + $0x308] sm:$0xff]
        %v6805 = vld [vmem:[#allocation10 + $0x310] sm:$0xff]
        %v6806 = vld [vmem:[#allocation10 + $0x318] sm:$0xff]
        %v6807 = vld [vmem:[#allocation10 + $0x320] sm:$0xff]
        %v6808 = vld [vmem:[#allocation10 + $0x328] sm:$0xff]
        %v6809 = vld [vmem:[#allocation10 + $0x330] sm:$0xff]
        %v6810 = vld [vmem:[#allocation10 + $0x338] sm:$0xff]
        %v6811 = vld [vmem:[#allocation10 + $0x340] sm:$0xff]
        %v6812 = vld [vmem:[#allocation10 + $0x348] sm:$0xff]
        %v6813 = vld [vmem:[#allocation10 + $0x350] sm:$0xff]
        %v6814 = vld [vmem:[#allocation10 + $0x358] sm:$0xff]
        %v6815 = vld [vmem:[#allocation10 + $0x360] sm:$0xff]
        %v6816 = vld [vmem:[#allocation10 + $0x368] sm:$0xff]
        %v6817 = vld [vmem:[#allocation10 + $0x370] sm:$0xff]
        %v6818 = vld [vmem:[#allocation10 + $0x378] sm:$0xff]
        %v6819 = vld [vmem:[#allocation10 + $0x380] sm:$0xff]
        %v6820 = vld [vmem:[#allocation10 + $0x388] sm:$0xff]
        %v6821 = vld [vmem:[#allocation10 + $0x390] sm:$0xff]
        %v6822 = vld [vmem:[#allocation10 + $0x398] sm:$0xff]
        %v6823 = vld [vmem:[#allocation10 + $0x3a0] sm:$0xff]
        %v6824 = vld [vmem:[#allocation10 + $0x3a8] sm:$0xff]
        %v6825 = vld [vmem:[#allocation10 + $0x3b0] sm:$0xff]
        %v6826 = vld [vmem:[#allocation10 + $0x3b8] sm:$0xff]
        %v6827 = vld [vmem:[#allocation10 + $0x3c0] sm:$0xff]
        %v6828 = vld [vmem:[#allocation10 + $0x3c8] sm:$0xff]
        %v6829 = vld [vmem:[#allocation10 + $0x3d0] sm:$0xff]
        %v6830 = vld [vmem:[#allocation10 + $0x3d8] sm:$0xff]
        %v6831 = vld [vmem:[#allocation10 + $0x3e0] sm:$0xff]
        %v6832 = vld [vmem:[#allocation10 + $0x3e8] sm:$0xff]
        %v6833 = vld [vmem:[#allocation10 + $0x3f0] sm:$0xff]
        %v6834 = vld [vmem:[#allocation10 + $0x3f8] sm:$0xff]
        %v6835 = vld [vmem:[#allocation10 + $0x400] sm:$0xff]
        %v6836 = vld [vmem:[#allocation10 + $0x408] sm:$0xff]
        %v6837 = vld [vmem:[#allocation10 + $0x410] sm:$0xff]
        %v6838 = vld [vmem:[#allocation10 + $0x418] sm:$0xff]
        %v6839 = vld [vmem:[#allocation10 + $0x420] sm:$0xff]
        %v6840 = vld [vmem:[#allocation10 + $0x428] sm:$0xff]
        %v6841 = vld [vmem:[#allocation10 + $0x430] sm:$0xff]
        %v6842 = vld [vmem:[#allocation10 + $0x438] sm:$0xff]
        %v6843 = vld [vmem:[#allocation10 + $0x440] sm:$0xff]
        %v6844 = vld [vmem:[#allocation10 + $0x448] sm:$0xff]
        %v6845 = vld [vmem:[#allocation10 + $0x450] sm:$0xff]
        %v6846 = vld [vmem:[#allocation10 + $0x458] sm:$0xff]
        %v6847 = vld [vmem:[#allocation10 + $0x460] sm:$0xff]
        %v6848 = vld [vmem:[#allocation10 + $0x468] sm:$0xff]
        %v6849 = vld [vmem:[#allocation10 + $0x470] sm:$0xff]
        %v6850 = vld [vmem:[#allocation10 + $0x478] sm:$0xff]
        %v6851 = vld [vmem:[#allocation10 + $0x480] sm:$0xff]
        %v6852 = vld [vmem:[#allocation10 + $0x488] sm:$0xff]
        %v6853 = vld [vmem:[#allocation10 + $0x490] sm:$0xff]
        %v6854 = vld [vmem:[#allocation10 + $0x498] sm:$0xff]
        %v6855 = vld [vmem:[#allocation10 + $0x4a0] sm:$0xff]
        %v6856 = vld [vmem:[#allocation10 + $0x4a8] sm:$0xff]
        %v6857 = vld [vmem:[#allocation10 + $0x4b0] sm:$0xff]
        %v6858 = vld [vmem:[#allocation10 + $0x4b8] sm:$0xff]
        %v6859 = vld [vmem:[#allocation10 + $0x4c0] sm:$0xff]
        %v6860 = vld [vmem:[#allocation10 + $0x4c8] sm:$0xff]
        %v6861 = vld [vmem:[#allocation10 + $0x4d0] sm:$0xff]
        %v6862 = vld [vmem:[#allocation10 + $0x4d8] sm:$0xff]
        %v6863 = vld [vmem:[#allocation10 + $0x4e0] sm:$0xff]
        %v6864 = vld [vmem:[#allocation10 + $0x4e8] sm:$0xff]
        %v6865 = vld [vmem:[#allocation10 + $0x4f0] sm:$0xff]
        %v6866 = vld [vmem:[#allocation10 + $0x4f8] sm:$0xff]
        %v6867 = vld [vmem:[#allocation10 + $0x500] sm:$0xff]
        %v6868 = vld [vmem:[#allocation10 + $0x508] sm:$0xff]
        %v6869 = vld [vmem:[#allocation10 + $0x510] sm:$0xff]
        %v6870 = vld [vmem:[#allocation10 + $0x518] sm:$0xff]
        %v6871 = vld [vmem:[#allocation10 + $0x520] sm:$0xff]
        %v6872 = vld [vmem:[#allocation10 + $0x528] sm:$0xff]
        %v6873 = vld [vmem:[#allocation10 + $0x530] sm:$0xff]
        %v6874 = vld [vmem:[#allocation10 + $0x538] sm:$0xff]
        %v6875 = vld [vmem:[#allocation10 + $0x540] sm:$0xff]
        %v6876 = vld [vmem:[#allocation10 + $0x548] sm:$0xff]
        %v6877 = vld [vmem:[#allocation10 + $0x550] sm:$0xff]
        %v6878 = vld [vmem:[#allocation10 + $0x558] sm:$0xff]
        %v6879 = vld [vmem:[#allocation10 + $0x560] sm:$0xff]
        %v6880 = vld [vmem:[#allocation10 + $0x568] sm:$0xff]
        %v6881 = vld [vmem:[#allocation10 + $0x570] sm:$0xff]
        %v6882 = vld [vmem:[#allocation10 + $0x578] sm:$0xff]
        %v6883 = vld [vmem:[#allocation10 + $0x580] sm:$0xff]
        %v6884 = vld [vmem:[#allocation10 + $0x588] sm:$0xff]
        %v6885 = vld [vmem:[#allocation10 + $0x590] sm:$0xff]
        %v6886 = vld [vmem:[#allocation10 + $0x598] sm:$0xff]
        %v6887 = vld [vmem:[#allocation10 + $0x5a0] sm:$0xff]
        %v6888 = vld [vmem:[#allocation10 + $0x5a8] sm:$0xff]
        %v6889 = vld [vmem:[#allocation10 + $0x5b0] sm:$0xff]
        %v6890 = vld [vmem:[#allocation10 + $0x5b8] sm:$0xff]
        %v6891 = vld [vmem:[#allocation10 + $0x5c0] sm:$0xff]
        %v6892 = vld [vmem:[#allocation10 + $0x5c8] sm:$0xff]
        %v6893 = vld [vmem:[#allocation10 + $0x5d0] sm:$0xff]
        %v6894 = vld [vmem:[#allocation10 + $0x5d8] sm:$0xff]
        %v6895 = vld [vmem:[#allocation10 + $0x5e0] sm:$0xff]
        %v6896 = vld [vmem:[#allocation10 + $0x5e8] sm:$0xff]
        %v6897 = vld [vmem:[#allocation10 + $0x5f0] sm:$0xff]
        %v6898 = vld [vmem:[#allocation10 + $0x5f8] sm:$0xff]
        %v6899 = vld [vmem:[#allocation10 + $0x600] sm:$0xff]
        %v6900 = vld [vmem:[#allocation10 + $0x608] sm:$0xff]
        %v6901 = vld [vmem:[#allocation10 + $0x610] sm:$0xff]
        %v6902 = vld [vmem:[#allocation10 + $0x618] sm:$0xff]
        %v6903 = vld [vmem:[#allocation10 + $0x620] sm:$0xff]
        %v6904 = vld [vmem:[#allocation10 + $0x628] sm:$0xff]
        %v6905 = vld [vmem:[#allocation10 + $0x630] sm:$0xff]
        %v6906 = vld [vmem:[#allocation10 + $0x638] sm:$0xff]
        %v6907 = vld [vmem:[#allocation10 + $0x640] sm:$0xff]
        %v6908 = vld [vmem:[#allocation10 + $0x648] sm:$0xff]
        %v6909 = vld [vmem:[#allocation10 + $0x650] sm:$0xff]
        %v6910 = vld [vmem:[#allocation10 + $0x658] sm:$0xff]
        %v6911 = vld [vmem:[#allocation10 + $0x660] sm:$0xff]
        %v6912 = vld [vmem:[#allocation10 + $0x668] sm:$0xff]
        %v6913 = vld [vmem:[#allocation10 + $0x670] sm:$0xff]
        %v6914 = vld [vmem:[#allocation10 + $0x678] sm:$0xff]
        %v6915 = vld [vmem:[#allocation10 + $0x680] sm:$0xff]
        %v6916 = vld [vmem:[#allocation10 + $0x688] sm:$0xff]
        %v6917 = vld [vmem:[#allocation10 + $0x690] sm:$0xff]
        %v6918 = vld [vmem:[#allocation10 + $0x698] sm:$0xff]
        %v6919 = vld [vmem:[#allocation10 + $0x6a0] sm:$0xff]
        %v6920 = vld [vmem:[#allocation10 + $0x6a8] sm:$0xff]
        %v6921 = vld [vmem:[#allocation10 + $0x6b0] sm:$0xff]
        %v6922 = vld [vmem:[#allocation10 + $0x6b8] sm:$0xff]
        %v6923 = vld [vmem:[#allocation10 + $0x6c0] sm:$0xff]
        %v6924 = vld [vmem:[#allocation10 + $0x6c8] sm:$0xff]
        %v6925 = vld [vmem:[#allocation10 + $0x6d0] sm:$0xff]
        %v6926 = vld [vmem:[#allocation10 + $0x6d8] sm:$0xff]
        %v6927 = vld [vmem:[#allocation10 + $0x6e0] sm:$0xff]
        %v6928 = vld [vmem:[#allocation10 + $0x6e8] sm:$0xff]
        %v6929 = vld [vmem:[#allocation10 + $0x6f0] sm:$0xff]
        %v6930 = vld [vmem:[#allocation10 + $0x6f8] sm:$0xff]
        %v6931 = vld [vmem:[#allocation10 + $0x700] sm:$0xff]
        %v6932 = vld [vmem:[#allocation10 + $0x708] sm:$0xff]
        %v6933 = vld [vmem:[#allocation10 + $0x710] sm:$0xff]
        %v6934 = vld [vmem:[#allocation10 + $0x718] sm:$0xff]
        %v6935 = vld [vmem:[#allocation10 + $0x720] sm:$0xff]
        %v6936 = vld [vmem:[#allocation10 + $0x728] sm:$0xff]
        %v6937 = vld [vmem:[#allocation10 + $0x730] sm:$0xff]
        %v6938 = vld [vmem:[#allocation10 + $0x738] sm:$0xff]
        %v6939 = vld [vmem:[#allocation10 + $0x740] sm:$0xff]
        %v6940 = vld [vmem:[#allocation10 + $0x748] sm:$0xff]
        %v6941 = vld [vmem:[#allocation10 + $0x750] sm:$0xff]
        %v6942 = vld [vmem:[#allocation10 + $0x758] sm:$0xff]
        %v6943 = vld [vmem:[#allocation10 + $0x760] sm:$0xff]
        %v6944 = vld [vmem:[#allocation10 + $0x768] sm:$0xff]
        %v6945 = vld [vmem:[#allocation10 + $0x770] sm:$0xff]
        %v6946 = vld [vmem:[#allocation10 + $0x778] sm:$0xff]
        %v6947 = vld [vmem:[#allocation10 + $0x780] sm:$0xff]
        %v6948 = vld [vmem:[#allocation10 + $0x788] sm:$0xff]
        %v6949 = vld [vmem:[#allocation10 + $0x790] sm:$0xff]
        %v6950 = vld [vmem:[#allocation10 + $0x798] sm:$0xff]
        %v6951 = vld [vmem:[#allocation10 + $0x7a0] sm:$0xff]
        %v6952 = vld [vmem:[#allocation10 + $0x7a8] sm:$0xff]
        %v6953 = vld [vmem:[#allocation10 + $0x7b0] sm:$0xff]
        %v6954 = vld [vmem:[#allocation10 + $0x7b8] sm:$0xff]
        %v6955 = vld [vmem:[#allocation10 + $0x7c0] sm:$0xff]
        %v6956 = vld [vmem:[#allocation10 + $0x7c8] sm:$0xff]
        %v6957 = vld [vmem:[#allocation10 + $0x7d0] sm:$0xff]
        %v6958 = vld [vmem:[#allocation10 + $0x7d8] sm:$0xff]
        %v6959 = vld [vmem:[#allocation10 + $0x7e0] sm:$0xff]
        %v6960 = vld [vmem:[#allocation10 + $0x7e8] sm:$0xff]
        %v6961 = vld [vmem:[#allocation10 + $0x7f0] sm:$0xff]
        %v6962 = vld [vmem:[#allocation10 + $0x7f8] sm:$0xff]
        %v6963 = vld [vmem:[#allocation10 + $0x800] sm:$0xff]
        %v6964 = vld [vmem:[#allocation10 + $0x808] sm:$0xff]
        %v6965 = vld [vmem:[#allocation10 + $0x810] sm:$0xff]
        %v6966 = vld [vmem:[#allocation10 + $0x818] sm:$0xff]
        %v6967 = vld [vmem:[#allocation10 + $0x820] sm:$0xff]
        %v6968 = vld [vmem:[#allocation10 + $0x828] sm:$0xff]
        %v6969 = vld [vmem:[#allocation10 + $0x830] sm:$0xff]
        %v6970 = vld [vmem:[#allocation10 + $0x838] sm:$0xff]
        %v6971 = vld [vmem:[#allocation10 + $0x840] sm:$0xff]
        %v6972 = vld [vmem:[#allocation10 + $0x848] sm:$0xff]
        %v6973 = vld [vmem:[#allocation10 + $0x850] sm:$0xff]
        %v6974 = vld [vmem:[#allocation10 + $0x858] sm:$0xff]
        %v6975 = vld [vmem:[#allocation10 + $0x860] sm:$0xff]
        %v6976 = vld [vmem:[#allocation10 + $0x868] sm:$0xff]
        %v6977 = vld [vmem:[#allocation10 + $0x870] sm:$0xff]
        %v6978 = vld [vmem:[#allocation10 + $0x878] sm:$0xff]
        %v6979 = vld [vmem:[#allocation10 + $0x880] sm:$0xff]
        %v6980 = vld [vmem:[#allocation10 + $0x888] sm:$0xff]
        %v6981 = vld [vmem:[#allocation10 + $0x890] sm:$0xff]
        %v6982 = vld [vmem:[#allocation10 + $0x898] sm:$0xff]
        %v6983 = vld [vmem:[#allocation10 + $0x8a0] sm:$0xff]
        %v6984 = vld [vmem:[#allocation10 + $0x8a8] sm:$0xff]
        %v6985 = vld [vmem:[#allocation10 + $0x8b0] sm:$0xff]
        %v6986 = vld [vmem:[#allocation10 + $0x8b8] sm:$0xff]
        %v6987 = vld [vmem:[#allocation10 + $0x8c0] sm:$0xff]
        %v6988 = vld [vmem:[#allocation10 + $0x8c8] sm:$0xff]
        %v6989 = vld [vmem:[#allocation10 + $0x8d0] sm:$0xff]
        %v6990 = vld [vmem:[#allocation10 + $0x8d8] sm:$0xff]
        %v6991 = vld [vmem:[#allocation10 + $0x8e0] sm:$0xff]
        %v6992 = vld [vmem:[#allocation10 + $0x8e8] sm:$0xff]
        %v6993 = vld [vmem:[#allocation10 + $0x8f0] sm:$0xff]
        %v6994 = vld [vmem:[#allocation10 + $0x8f8] sm:$0xff]
        %v7283 = vunpack.c.l.b16 %v6707
        %v7284 = vunpack.c.h.b16 %v6707
        %v7285 = vunpack.c.l.b16 %v6708
        %v7286 = vunpack.c.h.b16 %v6708
        %v7287 = vunpack.c.l.b16 %v6709
        %v7288 = vunpack.c.h.b16 %v6709
        %v7289 = vunpack.c.l.b16 %v6710
        %v7290 = vunpack.c.h.b16 %v6710
        %v7291 = vunpack.c.l.b16 %v6711
        %v7292 = vunpack.c.h.b16 %v6711
        %v7293 = vunpack.c.l.b16 %v6712
        %v7294 = vunpack.c.h.b16 %v6712
        %v7295 = vunpack.c.l.b16 %v6713
        %v7296 = vunpack.c.h.b16 %v6713
        %v7297 = vunpack.c.l.b16 %v6714
        %v7298 = vunpack.c.h.b16 %v6714
        %v7299 = vunpack.c.l.b16 %v6715
        %v7300 = vunpack.c.h.b16 %v6715
        %v7301 = vunpack.c.l.b16 %v6716
        %v7302 = vunpack.c.h.b16 %v6716
        %v7303 = vunpack.c.l.b16 %v6717
        %v7304 = vunpack.c.h.b16 %v6717
        %v7305 = vunpack.c.l.b16 %v6718
        %v7306 = vunpack.c.h.b16 %v6718
        %v7307 = vunpack.c.l.b16 %v6719
        %v7308 = vunpack.c.h.b16 %v6719
        %v7309 = vunpack.c.l.b16 %v6720
        %v7310 = vunpack.c.h.b16 %v6720
        %v7311 = vunpack.c.l.b16 %v6721
        %v7312 = vunpack.c.h.b16 %v6721
        %v7313 = vunpack.c.l.b16 %v6722
        %v7314 = vunpack.c.h.b16 %v6722
        %v7315 = vunpack.c.l.b16 %v6723
        %v7316 = vunpack.c.h.b16 %v6723
        %v7317 = vunpack.c.l.b16 %v6724
        %v7318 = vunpack.c.h.b16 %v6724
        %v7319 = vunpack.c.l.b16 %v6725
        %v7320 = vunpack.c.h.b16 %v6725
        %v7321 = vunpack.c.l.b16 %v6726
        %v7322 = vunpack.c.h.b16 %v6726
        %v7323 = vunpack.c.l.b16 %v6727
        %v7324 = vunpack.c.h.b16 %v6727
        %v7325 = vunpack.c.l.b16 %v6728
        %v7326 = vunpack.c.h.b16 %v6728
        %v7327 = vunpack.c.l.b16 %v6729
        %v7328 = vunpack.c.h.b16 %v6729
        %v7329 = vunpack.c.l.b16 %v6730
        %v7330 = vunpack.c.h.b16 %v6730
        %v7331 = vunpack.c.l.b16 %v6731
        %v7332 = vunpack.c.h.b16 %v6731
        %v7333 = vunpack.c.l.b16 %v6732
        %v7334 = vunpack.c.h.b16 %v6732
        %v7335 = vunpack.c.l.b16 %v6733
        %v7336 = vunpack.c.h.b16 %v6733
        %v7337 = vunpack.c.l.b16 %v6734
        %v7338 = vunpack.c.h.b16 %v6734
        %v7339 = vunpack.c.l.b16 %v6735
        %v7340 = vunpack.c.h.b16 %v6735
        %v7341 = vunpack.c.l.b16 %v6736
        %v7342 = vunpack.c.h.b16 %v6736
        %v7343 = vunpack.c.l.b16 %v6737
        %v7344 = vunpack.c.h.b16 %v6737
        %v7345 = vunpack.c.l.b16 %v6738
        %v7346 = vunpack.c.h.b16 %v6738
        %v7347 = vunpack.c.l.b16 %v6739
        %v7348 = vunpack.c.h.b16 %v6739
        %v7349 = vunpack.c.l.b16 %v6740
        %v7350 = vunpack.c.h.b16 %v6740
        %v7351 = vunpack.c.l.b16 %v6741
        %v7352 = vunpack.c.h.b16 %v6741
        %v7353 = vunpack.c.l.b16 %v6742
        %v7354 = vunpack.c.h.b16 %v6742
        %v7355 = vunpack.c.l.b16 %v6743
        %v7356 = vunpack.c.h.b16 %v6743
        %v7357 = vunpack.c.l.b16 %v6744
        %v7358 = vunpack.c.h.b16 %v6744
        %v7359 = vunpack.c.l.b16 %v6745
        %v7360 = vunpack.c.h.b16 %v6745
        %v7361 = vunpack.c.l.b16 %v6746
        %v7362 = vunpack.c.h.b16 %v6746
        %v7363 = vunpack.c.l.b16 %v6747
        %v7364 = vunpack.c.h.b16 %v6747
        %v7365 = vunpack.c.l.b16 %v6748
        %v7366 = vunpack.c.h.b16 %v6748
        %v7367 = vunpack.c.l.b16 %v6749
        %v7368 = vunpack.c.h.b16 %v6749
        %v7369 = vunpack.c.l.b16 %v6750
        %v7370 = vunpack.c.h.b16 %v6750
        %v7371 = vunpack.c.l.b16 %v6751
        %v7372 = vunpack.c.h.b16 %v6751
        %v7373 = vunpack.c.l.b16 %v6752
        %v7374 = vunpack.c.h.b16 %v6752
        %v7375 = vunpack.c.l.b16 %v6753
        %v7376 = vunpack.c.h.b16 %v6753
        %v7377 = vunpack.c.l.b16 %v6754
        %v7378 = vunpack.c.h.b16 %v6754
        %v7379 = vunpack.c.l.b16 %v6755
        %v7380 = vunpack.c.h.b16 %v6755
        %v7381 = vunpack.c.l.b16 %v6756
        %v7382 = vunpack.c.h.b16 %v6756
        %v7383 = vunpack.c.l.b16 %v6757
        %v7384 = vunpack.c.h.b16 %v6757
        %v7385 = vunpack.c.l.b16 %v6758
        %v7386 = vunpack.c.h.b16 %v6758
        %v7387 = vunpack.c.l.b16 %v6759
        %v7388 = vunpack.c.h.b16 %v6759
        %v7389 = vunpack.c.l.b16 %v6760
        %v7390 = vunpack.c.h.b16 %v6760
        %v7391 = vunpack.c.l.b16 %v6761
        %v7392 = vunpack.c.h.b16 %v6761
        %v7393 = vunpack.c.l.b16 %v6762
        %v7394 = vunpack.c.h.b16 %v6762
        %v7395 = vunpack.c.l.b16 %v6763
        %v7396 = vunpack.c.h.b16 %v6763
        %v7397 = vunpack.c.l.b16 %v6764
        %v7398 = vunpack.c.h.b16 %v6764
        %v7399 = vunpack.c.l.b16 %v6765
        %v7400 = vunpack.c.h.b16 %v6765
        %v7401 = vunpack.c.l.b16 %v6766
        %v7402 = vunpack.c.h.b16 %v6766
        %v7403 = vunpack.c.l.b16 %v6767
        %v7404 = vunpack.c.h.b16 %v6767
        %v7405 = vunpack.c.l.b16 %v6768
        %v7406 = vunpack.c.h.b16 %v6768
        %v7407 = vunpack.c.l.b16 %v6769
        %v7408 = vunpack.c.h.b16 %v6769
        %v7409 = vunpack.c.l.b16 %v6770
        %v7410 = vunpack.c.h.b16 %v6770
        %v7411 = vunpack.c.l.b16 %v6771
        %v7412 = vunpack.c.h.b16 %v6771
        %v7413 = vunpack.c.l.b16 %v6772
        %v7414 = vunpack.c.h.b16 %v6772
        %v7415 = vunpack.c.l.b16 %v6773
        %v7416 = vunpack.c.h.b16 %v6773
        %v7417 = vunpack.c.l.b16 %v6774
        %v7418 = vunpack.c.h.b16 %v6774
        %v7419 = vunpack.c.l.b16 %v6775
        %v7420 = vunpack.c.h.b16 %v6775
        %v7421 = vunpack.c.l.b16 %v6776
        %v7422 = vunpack.c.h.b16 %v6776
        %v7423 = vunpack.c.l.b16 %v6777
        %v7424 = vunpack.c.h.b16 %v6777
        %v7425 = vunpack.c.l.b16 %v6778
        %v7426 = vunpack.c.h.b16 %v6778
        %v7427 = vunpack.c.l.b16 %v6779
        %v7428 = vunpack.c.h.b16 %v6779
        %v7429 = vunpack.c.l.b16 %v6780
        %v7430 = vunpack.c.h.b16 %v6780
        %v7431 = vunpack.c.l.b16 %v6781
        %v7432 = vunpack.c.h.b16 %v6781
        %v7433 = vunpack.c.l.b16 %v6782
        %v7434 = vunpack.c.h.b16 %v6782
        %v7435 = vunpack.c.l.b16 %v6783
        %v7436 = vunpack.c.h.b16 %v6783
        %v7437 = vunpack.c.l.b16 %v6784
        %v7438 = vunpack.c.h.b16 %v6784
        %v7439 = vunpack.c.l.b16 %v6785
        %v7440 = vunpack.c.h.b16 %v6785
        %v7441 = vunpack.c.l.b16 %v6786
        %v7442 = vunpack.c.h.b16 %v6786
        %v7443 = vunpack.c.l.b16 %v6787
        %v7444 = vunpack.c.h.b16 %v6787
        %v7445 = vunpack.c.l.b16 %v6788
        %v7446 = vunpack.c.h.b16 %v6788
        %v7447 = vunpack.c.l.b16 %v6789
        %v7448 = vunpack.c.h.b16 %v6789
        %v7449 = vunpack.c.l.b16 %v6790
        %v7450 = vunpack.c.h.b16 %v6790
        %v7451 = vunpack.c.l.b16 %v6791
        %v7452 = vunpack.c.h.b16 %v6791
        %v7453 = vunpack.c.l.b16 %v6792
        %v7454 = vunpack.c.h.b16 %v6792
        %v7455 = vunpack.c.l.b16 %v6793
        %v7456 = vunpack.c.h.b16 %v6793
        %v7457 = vunpack.c.l.b16 %v6794
        %v7458 = vunpack.c.h.b16 %v6794
        %v7459 = vunpack.c.l.b16 %v6795
        %v7460 = vunpack.c.h.b16 %v6795
        %v7461 = vunpack.c.l.b16 %v6796
        %v7462 = vunpack.c.h.b16 %v6796
        %v7463 = vunpack.c.l.b16 %v6797
        %v7464 = vunpack.c.h.b16 %v6797
        %v7465 = vunpack.c.l.b16 %v6798
        %v7466 = vunpack.c.h.b16 %v6798
        %v7467 = vunpack.c.l.b16 %v6799
        %v7468 = vunpack.c.h.b16 %v6799
        %v7469 = vunpack.c.l.b16 %v6800
        %v7470 = vunpack.c.h.b16 %v6800
        %v7471 = vunpack.c.l.b16 %v6801
        %v7472 = vunpack.c.h.b16 %v6801
        %v7473 = vunpack.c.l.b16 %v6802
        %v7474 = vunpack.c.h.b16 %v6802
        %v7475 = vunpack.c.l.b16 %v6803
        %v7476 = vunpack.c.h.b16 %v6803
        %v7477 = vunpack.c.l.b16 %v6804
        %v7478 = vunpack.c.h.b16 %v6804
        %v7479 = vunpack.c.l.b16 %v6805
        %v7480 = vunpack.c.h.b16 %v6805
        %v7481 = vunpack.c.l.b16 %v6806
        %v7482 = vunpack.c.h.b16 %v6806
        %v7483 = vunpack.c.l.b16 %v6807
        %v7484 = vunpack.c.h.b16 %v6807
        %v7485 = vunpack.c.l.b16 %v6808
        %v7486 = vunpack.c.h.b16 %v6808
        %v7487 = vunpack.c.l.b16 %v6809
        %v7488 = vunpack.c.h.b16 %v6809
        %v7489 = vunpack.c.l.b16 %v6810
        %v7490 = vunpack.c.h.b16 %v6810
        %v7491 = vunpack.c.l.b16 %v6811
        %v7492 = vunpack.c.h.b16 %v6811
        %v7493 = vunpack.c.l.b16 %v6812
        %v7494 = vunpack.c.h.b16 %v6812
        %v7495 = vunpack.c.l.b16 %v6813
        %v7496 = vunpack.c.h.b16 %v6813
        %v7497 = vunpack.c.l.b16 %v6814
        %v7498 = vunpack.c.h.b16 %v6814
        %v7499 = vunpack.c.l.b16 %v6815
        %v7500 = vunpack.c.h.b16 %v6815
        %v7501 = vunpack.c.l.b16 %v6816
        %v7502 = vunpack.c.h.b16 %v6816
        %v7503 = vunpack.c.l.b16 %v6817
        %v7504 = vunpack.c.h.b16 %v6817
        %v7505 = vunpack.c.l.b16 %v6818
        %v7506 = vunpack.c.h.b16 %v6818
        %v7507 = vunpack.c.l.b16 %v6819
        %v7508 = vunpack.c.h.b16 %v6819
        %v7509 = vunpack.c.l.b16 %v6820
        %v7510 = vunpack.c.h.b16 %v6820
        %v7511 = vunpack.c.l.b16 %v6821
        %v7512 = vunpack.c.h.b16 %v6821
        %v7513 = vunpack.c.l.b16 %v6822
        %v7514 = vunpack.c.h.b16 %v6822
        %v7515 = vunpack.c.l.b16 %v6823
        %v7516 = vunpack.c.h.b16 %v6823
        %v7517 = vunpack.c.l.b16 %v6824
        %v7518 = vunpack.c.h.b16 %v6824
        %v7519 = vunpack.c.l.b16 %v6825
        %v7520 = vunpack.c.h.b16 %v6825
        %v7521 = vunpack.c.l.b16 %v6826
        %v7522 = vunpack.c.h.b16 %v6826
        %v7523 = vunpack.c.l.b16 %v6827
        %v7524 = vunpack.c.h.b16 %v6827
        %v7525 = vunpack.c.l.b16 %v6828
        %v7526 = vunpack.c.h.b16 %v6828
        %v7527 = vunpack.c.l.b16 %v6829
        %v7528 = vunpack.c.h.b16 %v6829
        %v7529 = vunpack.c.l.b16 %v6830
        %v7530 = vunpack.c.h.b16 %v6830
        %v7531 = vunpack.c.l.b16 %v6831
        %v7532 = vunpack.c.h.b16 %v6831
        %v7533 = vunpack.c.l.b16 %v6832
        %v7534 = vunpack.c.h.b16 %v6832
        %v7535 = vunpack.c.l.b16 %v6833
        %v7536 = vunpack.c.h.b16 %v6833
        %v7537 = vunpack.c.l.b16 %v6834
        %v7538 = vunpack.c.h.b16 %v6834
        %v7539 = vunpack.c.l.b16 %v6835
        %v7540 = vunpack.c.h.b16 %v6835
        %v7541 = vunpack.c.l.b16 %v6836
        %v7542 = vunpack.c.h.b16 %v6836
        %v7543 = vunpack.c.l.b16 %v6837
        %v7544 = vunpack.c.h.b16 %v6837
        %v7545 = vunpack.c.l.b16 %v6838
        %v7546 = vunpack.c.h.b16 %v6838
        %v7547 = vunpack.c.l.b16 %v6839
        %v7548 = vunpack.c.h.b16 %v6839
        %v7549 = vunpack.c.l.b16 %v6840
        %v7550 = vunpack.c.h.b16 %v6840
        %v7551 = vunpack.c.l.b16 %v6841
        %v7552 = vunpack.c.h.b16 %v6841
        %v7553 = vunpack.c.l.b16 %v6842
        %v7554 = vunpack.c.h.b16 %v6842
        %v7555 = vunpack.c.l.b16 %v6843
        %v7556 = vunpack.c.h.b16 %v6843
        %v7557 = vunpack.c.l.b16 %v6844
        %v7558 = vunpack.c.h.b16 %v6844
        %v7559 = vunpack.c.l.b16 %v6845
        %v7560 = vunpack.c.h.b16 %v6845
        %v7561 = vunpack.c.l.b16 %v6846
        %v7562 = vunpack.c.h.b16 %v6846
        %v7563 = vunpack.c.l.b16 %v6847
        %v7564 = vunpack.c.h.b16 %v6847
        %v7565 = vunpack.c.l.b16 %v6848
        %v7566 = vunpack.c.h.b16 %v6848
        %v7567 = vunpack.c.l.b16 %v6849
        %v7568 = vunpack.c.h.b16 %v6849
        %v7569 = vunpack.c.l.b16 %v6850
        %v7570 = vunpack.c.h.b16 %v6850
        %v7571 = vunpack.c.l.b16 %v6851
        %v7572 = vunpack.c.h.b16 %v6851
        %v7573 = vunpack.c.l.b16 %v6852
        %v7574 = vunpack.c.h.b16 %v6852
        %v7575 = vunpack.c.l.b16 %v6853
        %v7576 = vunpack.c.h.b16 %v6853
        %v7577 = vunpack.c.l.b16 %v6854
        %v7578 = vunpack.c.h.b16 %v6854
        %v7579 = vunpack.c.l.b16 %v6855
        %v7580 = vunpack.c.h.b16 %v6855
        %v7581 = vunpack.c.l.b16 %v6856
        %v7582 = vunpack.c.h.b16 %v6856
        %v7583 = vunpack.c.l.b16 %v6857
        %v7584 = vunpack.c.h.b16 %v6857
        %v7585 = vunpack.c.l.b16 %v6858
        %v7586 = vunpack.c.h.b16 %v6858
        %v7587 = vunpack.c.l.b16 %v6859
        %v7588 = vunpack.c.h.b16 %v6859
        %v7589 = vunpack.c.l.b16 %v6860
        %v7590 = vunpack.c.h.b16 %v6860
        %v7591 = vunpack.c.l.b16 %v6861
        %v7592 = vunpack.c.h.b16 %v6861
        %v7593 = vunpack.c.l.b16 %v6862
        %v7594 = vunpack.c.h.b16 %v6862
        %v7595 = vunpack.c.l.b16 %v6863
        %v7596 = vunpack.c.h.b16 %v6863
        %v7597 = vunpack.c.l.b16 %v6864
        %v7598 = vunpack.c.h.b16 %v6864
        %v7599 = vunpack.c.l.b16 %v6865
        %v7600 = vunpack.c.h.b16 %v6865
        %v7601 = vunpack.c.l.b16 %v6866
        %v7602 = vunpack.c.h.b16 %v6866
        %v7603 = vunpack.c.l.b16 %v6867
        %v7604 = vunpack.c.h.b16 %v6867
        %v7605 = vunpack.c.l.b16 %v6868
        %v7606 = vunpack.c.h.b16 %v6868
        %v7607 = vunpack.c.l.b16 %v6869
        %v7608 = vunpack.c.h.b16 %v6869
        %v7609 = vunpack.c.l.b16 %v6870
        %v7610 = vunpack.c.h.b16 %v6870
        %v7611 = vunpack.c.l.b16 %v6871
        %v7612 = vunpack.c.h.b16 %v6871
        %v7613 = vunpack.c.l.b16 %v6872
        %v7614 = vunpack.c.h.b16 %v6872
        %v7615 = vunpack.c.l.b16 %v6873
        %v7616 = vunpack.c.h.b16 %v6873
        %v7617 = vunpack.c.l.b16 %v6874
        %v7618 = vunpack.c.h.b16 %v6874
        %v7619 = vunpack.c.l.b16 %v6875
        %v7620 = vunpack.c.h.b16 %v6875
        %v7621 = vunpack.c.l.b16 %v6876
        %v7622 = vunpack.c.h.b16 %v6876
        %v7623 = vunpack.c.l.b16 %v6877
        %v7624 = vunpack.c.h.b16 %v6877
        %v7625 = vunpack.c.l.b16 %v6878
        %v7626 = vunpack.c.h.b16 %v6878
        %v7627 = vunpack.c.l.b16 %v6879
        %v7628 = vunpack.c.h.b16 %v6879
        %v7629 = vunpack.c.l.b16 %v6880
        %v7630 = vunpack.c.h.b16 %v6880
        %v7631 = vunpack.c.l.b16 %v6881
        %v7632 = vunpack.c.h.b16 %v6881
        %v7633 = vunpack.c.l.b16 %v6882
        %v7634 = vunpack.c.h.b16 %v6882
        %v7635 = vunpack.c.l.b16 %v6883
        %v7636 = vunpack.c.h.b16 %v6883
        %v7637 = vunpack.c.l.b16 %v6884
        %v7638 = vunpack.c.h.b16 %v6884
        %v7639 = vunpack.c.l.b16 %v6885
        %v7640 = vunpack.c.h.b16 %v6885
        %v7641 = vunpack.c.l.b16 %v6886
        %v7642 = vunpack.c.h.b16 %v6886
        %v7643 = vunpack.c.l.b16 %v6887
        %v7644 = vunpack.c.h.b16 %v6887
        %v7645 = vunpack.c.l.b16 %v6888
        %v7646 = vunpack.c.h.b16 %v6888
        %v7647 = vunpack.c.l.b16 %v6889
        %v7648 = vunpack.c.h.b16 %v6889
        %v7649 = vunpack.c.l.b16 %v6890
        %v7650 = vunpack.c.h.b16 %v6890
        %v7651 = vunpack.c.l.b16 %v6891
        %v7652 = vunpack.c.h.b16 %v6891
        %v7653 = vunpack.c.l.b16 %v6892
        %v7654 = vunpack.c.h.b16 %v6892
        %v7655 = vunpack.c.l.b16 %v6893
        %v7656 = vunpack.c.h.b16 %v6893
        %v7657 = vunpack.c.l.b16 %v6894
        %v7658 = vunpack.c.h.b16 %v6894
        %v7659 = vunpack.c.l.b16 %v6895
        %v7660 = vunpack.c.h.b16 %v6895
        %v7661 = vunpack.c.l.b16 %v6896
        %v7662 = vunpack.c.h.b16 %v6896
        %v7663 = vunpack.c.l.b16 %v6897
        %v7664 = vunpack.c.h.b16 %v6897
        %v7665 = vunpack.c.l.b16 %v6898
        %v7666 = vunpack.c.h.b16 %v6898
        %v7667 = vunpack.c.l.b16 %v6899
        %v7668 = vunpack.c.h.b16 %v6899
        %v7669 = vunpack.c.l.b16 %v6900
        %v7670 = vunpack.c.h.b16 %v6900
        %v7671 = vunpack.c.l.b16 %v6901
        %v7672 = vunpack.c.h.b16 %v6901
        %v7673 = vunpack.c.l.b16 %v6902
        %v7674 = vunpack.c.h.b16 %v6902
        %v7675 = vunpack.c.l.b16 %v6903
        %v7676 = vunpack.c.h.b16 %v6903
        %v7677 = vunpack.c.l.b16 %v6904
        %v7678 = vunpack.c.h.b16 %v6904
        %v7679 = vunpack.c.l.b16 %v6905
        %v7680 = vunpack.c.h.b16 %v6905
        %v7681 = vunpack.c.l.b16 %v6906
        %v7682 = vunpack.c.h.b16 %v6906
        %v7683 = vunpack.c.l.b16 %v6907
        %v7684 = vunpack.c.h.b16 %v6907
        %v7685 = vunpack.c.l.b16 %v6908
        %v7686 = vunpack.c.h.b16 %v6908
        %v7687 = vunpack.c.l.b16 %v6909
        %v7688 = vunpack.c.h.b16 %v6909
        %v7689 = vunpack.c.l.b16 %v6910
        %v7690 = vunpack.c.h.b16 %v6910
        %v7691 = vunpack.c.l.b16 %v6911
        %v7692 = vunpack.c.h.b16 %v6911
        %v7693 = vunpack.c.l.b16 %v6912
        %v7694 = vunpack.c.h.b16 %v6912
        %v7695 = vunpack.c.l.b16 %v6913
        %v7696 = vunpack.c.h.b16 %v6913
        %v7697 = vunpack.c.l.b16 %v6914
        %v7698 = vunpack.c.h.b16 %v6914
        %v7699 = vunpack.c.l.b16 %v6915
        %v7700 = vunpack.c.h.b16 %v6915
        %v7701 = vunpack.c.l.b16 %v6916
        %v7702 = vunpack.c.h.b16 %v6916
        %v7703 = vunpack.c.l.b16 %v6917
        %v7704 = vunpack.c.h.b16 %v6917
        %v7705 = vunpack.c.l.b16 %v6918
        %v7706 = vunpack.c.h.b16 %v6918
        %v7707 = vunpack.c.l.b16 %v6919
        %v7708 = vunpack.c.h.b16 %v6919
        %v7709 = vunpack.c.l.b16 %v6920
        %v7710 = vunpack.c.h.b16 %v6920
        %v7711 = vunpack.c.l.b16 %v6921
        %v7712 = vunpack.c.h.b16 %v6921
        %v7713 = vunpack.c.l.b16 %v6922
        %v7714 = vunpack.c.h.b16 %v6922
        %v7715 = vunpack.c.l.b16 %v6923
        %v7716 = vunpack.c.h.b16 %v6923
        %v7717 = vunpack.c.l.b16 %v6924
        %v7718 = vunpack.c.h.b16 %v6924
        %v7719 = vunpack.c.l.b16 %v6925
        %v7720 = vunpack.c.h.b16 %v6925
        %v7721 = vunpack.c.l.b16 %v6926
        %v7722 = vunpack.c.h.b16 %v6926
        %v7723 = vunpack.c.l.b16 %v6927
        %v7724 = vunpack.c.h.b16 %v6927
        %v7725 = vunpack.c.l.b16 %v6928
        %v7726 = vunpack.c.h.b16 %v6928
        %v7727 = vunpack.c.l.b16 %v6929
        %v7728 = vunpack.c.h.b16 %v6929
        %v7729 = vunpack.c.l.b16 %v6930
        %v7730 = vunpack.c.h.b16 %v6930
        %v7731 = vunpack.c.l.b16 %v6931
        %v7732 = vunpack.c.h.b16 %v6931
        %v7733 = vunpack.c.l.b16 %v6932
        %v7734 = vunpack.c.h.b16 %v6932
        %v7735 = vunpack.c.l.b16 %v6933
        %v7736 = vunpack.c.h.b16 %v6933
        %v7737 = vunpack.c.l.b16 %v6934
        %v7738 = vunpack.c.h.b16 %v6934
        %v7739 = vunpack.c.l.b16 %v6935
        %v7740 = vunpack.c.h.b16 %v6935
        %v7741 = vunpack.c.l.b16 %v6936
        %v7742 = vunpack.c.h.b16 %v6936
        %v7743 = vunpack.c.l.b16 %v6937
        %v7744 = vunpack.c.h.b16 %v6937
        %v7745 = vunpack.c.l.b16 %v6938
        %v7746 = vunpack.c.h.b16 %v6938
        %v7747 = vunpack.c.l.b16 %v6939
        %v7748 = vunpack.c.h.b16 %v6939
        %v7749 = vunpack.c.l.b16 %v6940
        %v7750 = vunpack.c.h.b16 %v6940
        %v7751 = vunpack.c.l.b16 %v6941
        %v7752 = vunpack.c.h.b16 %v6941
        %v7753 = vunpack.c.l.b16 %v6942
        %v7754 = vunpack.c.h.b16 %v6942
        %v7755 = vunpack.c.l.b16 %v6943
        %v7756 = vunpack.c.h.b16 %v6943
        %v7757 = vunpack.c.l.b16 %v6944
        %v7758 = vunpack.c.h.b16 %v6944
        %v7759 = vunpack.c.l.b16 %v6945
        %v7760 = vunpack.c.h.b16 %v6945
        %v7761 = vunpack.c.l.b16 %v6946
        %v7762 = vunpack.c.h.b16 %v6946
        %v7763 = vunpack.c.l.b16 %v6947
        %v7764 = vunpack.c.h.b16 %v6947
        %v7765 = vunpack.c.l.b16 %v6948
        %v7766 = vunpack.c.h.b16 %v6948
        %v7767 = vunpack.c.l.b16 %v6949
        %v7768 = vunpack.c.h.b16 %v6949
        %v7769 = vunpack.c.l.b16 %v6950
        %v7770 = vunpack.c.h.b16 %v6950
        %v7771 = vunpack.c.l.b16 %v6951
        %v7772 = vunpack.c.h.b16 %v6951
        %v7773 = vunpack.c.l.b16 %v6952
        %v7774 = vunpack.c.h.b16 %v6952
        %v7775 = vunpack.c.l.b16 %v6953
        %v7776 = vunpack.c.h.b16 %v6953
        %v7777 = vunpack.c.l.b16 %v6954
        %v7778 = vunpack.c.h.b16 %v6954
        %v7779 = vunpack.c.l.b16 %v6955
        %v7780 = vunpack.c.h.b16 %v6955
        %v7781 = vunpack.c.l.b16 %v6956
        %v7782 = vunpack.c.h.b16 %v6956
        %v7783 = vunpack.c.l.b16 %v6957
        %v7784 = vunpack.c.h.b16 %v6957
        %v7785 = vunpack.c.l.b16 %v6958
        %v7786 = vunpack.c.h.b16 %v6958
        %v7787 = vunpack.c.l.b16 %v6959
        %v7788 = vunpack.c.h.b16 %v6959
        %v7789 = vunpack.c.l.b16 %v6960
        %v7790 = vunpack.c.h.b16 %v6960
        %v7791 = vunpack.c.l.b16 %v6961
        %v7792 = vunpack.c.h.b16 %v6961
        %v7793 = vunpack.c.l.b16 %v6962
        %v7794 = vunpack.c.h.b16 %v6962
        %v7795 = vunpack.c.l.b16 %v6963
        %v7796 = vunpack.c.h.b16 %v6963
        %v7797 = vunpack.c.l.b16 %v6964
        %v7798 = vunpack.c.h.b16 %v6964
        %v7799 = vunpack.c.l.b16 %v6965
        %v7800 = vunpack.c.h.b16 %v6965
        %v7801 = vunpack.c.l.b16 %v6966
        %v7802 = vunpack.c.h.b16 %v6966
        %v7803 = vunpack.c.l.b16 %v6967
        %v7804 = vunpack.c.h.b16 %v6967
        %v7805 = vunpack.c.l.b16 %v6968
        %v7806 = vunpack.c.h.b16 %v6968
        %v7807 = vunpack.c.l.b16 %v6969
        %v7808 = vunpack.c.h.b16 %v6969
        %v7809 = vunpack.c.l.b16 %v6970
        %v7810 = vunpack.c.h.b16 %v6970
        %v7811 = vunpack.c.l.b16 %v6971
        %v7812 = vunpack.c.h.b16 %v6971
        %v7813 = vunpack.c.l.b16 %v6972
        %v7814 = vunpack.c.h.b16 %v6972
        %v7815 = vunpack.c.l.b16 %v6973
        %v7816 = vunpack.c.h.b16 %v6973
        %v7817 = vunpack.c.l.b16 %v6974
        %v7818 = vunpack.c.h.b16 %v6974
        %v7819 = vunpack.c.l.b16 %v6975
        %v7820 = vunpack.c.h.b16 %v6975
        %v7821 = vunpack.c.l.b16 %v6976
        %v7822 = vunpack.c.h.b16 %v6976
        %v7823 = vunpack.c.l.b16 %v6977
        %v7824 = vunpack.c.h.b16 %v6977
        %v7825 = vunpack.c.l.b16 %v6978
        %v7826 = vunpack.c.h.b16 %v6978
        %v7827 = vunpack.c.l.b16 %v6979
        %v7828 = vunpack.c.h.b16 %v6979
        %v7829 = vunpack.c.l.b16 %v6980
        %v7830 = vunpack.c.h.b16 %v6980
        %v7831 = vunpack.c.l.b16 %v6981
        %v7832 = vunpack.c.h.b16 %v6981
        %v7833 = vunpack.c.l.b16 %v6982
        %v7834 = vunpack.c.h.b16 %v6982
        %v7835 = vunpack.c.l.b16 %v6983
        %v7836 = vunpack.c.h.b16 %v6983
        %v7837 = vunpack.c.l.b16 %v6984
        %v7838 = vunpack.c.h.b16 %v6984
        %v7839 = vunpack.c.l.b16 %v6985
        %v7840 = vunpack.c.h.b16 %v6985
        %v7841 = vunpack.c.l.b16 %v6986
        %v7842 = vunpack.c.h.b16 %v6986
        %v7843 = vunpack.c.l.b16 %v6987
        %v7844 = vunpack.c.h.b16 %v6987
        %v7845 = vunpack.c.l.b16 %v6988
        %v7846 = vunpack.c.h.b16 %v6988
        %v7847 = vunpack.c.l.b16 %v6989
        %v7848 = vunpack.c.h.b16 %v6989
        %v7849 = vunpack.c.l.b16 %v6990
        %v7850 = vunpack.c.h.b16 %v6990
        %v7851 = vunpack.c.l.b16 %v6991
        %v7852 = vunpack.c.h.b16 %v6991
        %v7853 = vunpack.c.l.b16 %v6992
        %v7854 = vunpack.c.h.b16 %v6992
        %v7855 = vunpack.c.l.b16 %v6993
        %v7856 = vunpack.c.h.b16 %v6993
        %v7857 = vunpack.c.l.b16 %v6994
        %v7858 = vunpack.c.h.b16 %v6994
        %v7859 = vpack.c.b16 %v7285, %v7283
        %v7860 = vpack.c.b16 %v7286, %v7284
        %v7861 = vpack.c.b16 %v7289, %v7287
        %v7862 = vpack.c.b16 %v7290, %v7288
        %v7863 = vpack.c.b16 %v7293, %v7291
        %v7864 = vpack.c.b16 %v7294, %v7292
        %v7865 = vpack.c.b16 %v7297, %v7295
        %v7866 = vpack.c.b16 %v7298, %v7296
        %v7867 = vpack.c.b16 %v7301, %v7299
        %v7868 = vpack.c.b16 %v7302, %v7300
        %v7869 = vpack.c.b16 %v7305, %v7303
        %v7870 = vpack.c.b16 %v7306, %v7304
        %v7871 = vpack.c.b16 %v7309, %v7307
        %v7872 = vpack.c.b16 %v7310, %v7308
        %v7873 = vpack.c.b16 %v7313, %v7311
        %v7874 = vpack.c.b16 %v7314, %v7312
        %v7875 = vpack.c.b16 %v7317, %v7315
        %v7876 = vpack.c.b16 %v7318, %v7316
        %v7877 = vpack.c.b16 %v7321, %v7319
        %v7878 = vpack.c.b16 %v7322, %v7320
        %v7879 = vpack.c.b16 %v7325, %v7323
        %v7880 = vpack.c.b16 %v7326, %v7324
        %v7881 = vpack.c.b16 %v7329, %v7327
        %v7882 = vpack.c.b16 %v7330, %v7328
        %v7883 = vpack.c.b16 %v7333, %v7331
        %v7884 = vpack.c.b16 %v7334, %v7332
        %v7885 = vpack.c.b16 %v7337, %v7335
        %v7886 = vpack.c.b16 %v7338, %v7336
        %v7887 = vpack.c.b16 %v7341, %v7339
        %v7888 = vpack.c.b16 %v7342, %v7340
        %v7889 = vpack.c.b16 %v7345, %v7343
        %v7890 = vpack.c.b16 %v7346, %v7344
        %v7891 = vpack.c.b16 %v7349, %v7347
        %v7892 = vpack.c.b16 %v7350, %v7348
        %v7893 = vpack.c.b16 %v7353, %v7351
        %v7894 = vpack.c.b16 %v7354, %v7352
        %v7895 = vpack.c.b16 %v7357, %v7355
        %v7896 = vpack.c.b16 %v7358, %v7356
        %v7897 = vpack.c.b16 %v7361, %v7359
        %v7898 = vpack.c.b16 %v7362, %v7360
        %v7899 = vpack.c.b16 %v7365, %v7363
        %v7900 = vpack.c.b16 %v7366, %v7364
        %v7901 = vpack.c.b16 %v7369, %v7367
        %v7902 = vpack.c.b16 %v7370, %v7368
        %v7903 = vpack.c.b16 %v7373, %v7371
        %v7904 = vpack.c.b16 %v7374, %v7372
        %v7905 = vpack.c.b16 %v7377, %v7375
        %v7906 = vpack.c.b16 %v7378, %v7376
        %v7907 = vpack.c.b16 %v7381, %v7379
        %v7908 = vpack.c.b16 %v7382, %v7380
        %v7909 = vpack.c.b16 %v7385, %v7383
        %v7910 = vpack.c.b16 %v7386, %v7384
        %v7911 = vpack.c.b16 %v7389, %v7387
        %v7912 = vpack.c.b16 %v7390, %v7388
        %v7913 = vpack.c.b16 %v7393, %v7391
        %v7914 = vpack.c.b16 %v7394, %v7392
        %v7915 = vpack.c.b16 %v7397, %v7395
        %v7916 = vpack.c.b16 %v7398, %v7396
        %v7917 = vpack.c.b16 %v7401, %v7399
        %v7918 = vpack.c.b16 %v7402, %v7400
        %v7919 = vpack.c.b16 %v7405, %v7403
        %v7920 = vpack.c.b16 %v7406, %v7404
        %v7921 = vpack.c.b16 %v7409, %v7407
        %v7922 = vpack.c.b16 %v7410, %v7408
        %v7923 = vpack.c.b16 %v7413, %v7411
        %v7924 = vpack.c.b16 %v7414, %v7412
        %v7925 = vpack.c.b16 %v7417, %v7415
        %v7926 = vpack.c.b16 %v7418, %v7416
        %v7927 = vpack.c.b16 %v7421, %v7419
        %v7928 = vpack.c.b16 %v7422, %v7420
        %v7929 = vpack.c.b16 %v7425, %v7423
        %v7930 = vpack.c.b16 %v7426, %v7424
        %v7931 = vpack.c.b16 %v7429, %v7427
        %v7932 = vpack.c.b16 %v7430, %v7428
        %v7933 = vpack.c.b16 %v7433, %v7431
        %v7934 = vpack.c.b16 %v7434, %v7432
        %v7935 = vpack.c.b16 %v7437, %v7435
        %v7936 = vpack.c.b16 %v7438, %v7436
        %v7937 = vpack.c.b16 %v7441, %v7439
        %v7938 = vpack.c.b16 %v7442, %v7440
        %v7939 = vpack.c.b16 %v7445, %v7443
        %v7940 = vpack.c.b16 %v7446, %v7444
        %v7941 = vpack.c.b16 %v7449, %v7447
        %v7942 = vpack.c.b16 %v7450, %v7448
        %v7943 = vpack.c.b16 %v7453, %v7451
        %v7944 = vpack.c.b16 %v7454, %v7452
        %v7945 = vpack.c.b16 %v7457, %v7455
        %v7946 = vpack.c.b16 %v7458, %v7456
        %v7947 = vpack.c.b16 %v7461, %v7459
        %v7948 = vpack.c.b16 %v7462, %v7460
        %v7949 = vpack.c.b16 %v7465, %v7463
        %v7950 = vpack.c.b16 %v7466, %v7464
        %v7951 = vpack.c.b16 %v7469, %v7467
        %v7952 = vpack.c.b16 %v7470, %v7468
        %v7953 = vpack.c.b16 %v7473, %v7471
        %v7954 = vpack.c.b16 %v7474, %v7472
        %v7955 = vpack.c.b16 %v7477, %v7475
        %v7956 = vpack.c.b16 %v7478, %v7476
        %v7957 = vpack.c.b16 %v7481, %v7479
        %v7958 = vpack.c.b16 %v7482, %v7480
        %v7959 = vpack.c.b16 %v7485, %v7483
        %v7960 = vpack.c.b16 %v7486, %v7484
        %v7961 = vpack.c.b16 %v7489, %v7487
        %v7962 = vpack.c.b16 %v7490, %v7488
        %v7963 = vpack.c.b16 %v7493, %v7491
        %v7964 = vpack.c.b16 %v7494, %v7492
        %v7965 = vpack.c.b16 %v7497, %v7495
        %v7966 = vpack.c.b16 %v7498, %v7496
        %v7967 = vpack.c.b16 %v7501, %v7499
        %v7968 = vpack.c.b16 %v7502, %v7500
        %v7969 = vpack.c.b16 %v7505, %v7503
        %v7970 = vpack.c.b16 %v7506, %v7504
        %v7971 = vpack.c.b16 %v7509, %v7507
        %v7972 = vpack.c.b16 %v7510, %v7508
        %v7973 = vpack.c.b16 %v7513, %v7511
        %v7974 = vpack.c.b16 %v7514, %v7512
        %v7975 = vpack.c.b16 %v7517, %v7515
        %v7976 = vpack.c.b16 %v7518, %v7516
        %v7977 = vpack.c.b16 %v7521, %v7519
        %v7978 = vpack.c.b16 %v7522, %v7520
        %v7979 = vpack.c.b16 %v7525, %v7523
        %v7980 = vpack.c.b16 %v7526, %v7524
        %v7981 = vpack.c.b16 %v7529, %v7527
        %v7982 = vpack.c.b16 %v7530, %v7528
        %v7983 = vpack.c.b16 %v7533, %v7531
        %v7984 = vpack.c.b16 %v7534, %v7532
        %v7985 = vpack.c.b16 %v7537, %v7535
        %v7986 = vpack.c.b16 %v7538, %v7536
        %v7987 = vpack.c.b16 %v7541, %v7539
        %v7988 = vpack.c.b16 %v7542, %v7540
        %v7989 = vpack.c.b16 %v7545, %v7543
        %v7990 = vpack.c.b16 %v7546, %v7544
        %v7991 = vpack.c.b16 %v7549, %v7547
        %v7992 = vpack.c.b16 %v7550, %v7548
        %v7993 = vpack.c.b16 %v7553, %v7551
        %v7994 = vpack.c.b16 %v7554, %v7552
        %v7995 = vpack.c.b16 %v7557, %v7555
        %v7996 = vpack.c.b16 %v7558, %v7556
        %v7997 = vpack.c.b16 %v7561, %v7559
        %v7998 = vpack.c.b16 %v7562, %v7560
        %v7999 = vpack.c.b16 %v7565, %v7563
        %v8000 = vpack.c.b16 %v7566, %v7564
        %v8001 = vpack.c.b16 %v7569, %v7567
        %v8002 = vpack.c.b16 %v7570, %v7568
        %v8003 = vpack.c.b16 %v7573, %v7571
        %v8004 = vpack.c.b16 %v7574, %v7572
        %v8005 = vpack.c.b16 %v7577, %v7575
        %v8006 = vpack.c.b16 %v7578, %v7576
        %v8007 = vpack.c.b16 %v7581, %v7579
        %v8008 = vpack.c.b16 %v7582, %v7580
        %v8009 = vpack.c.b16 %v7585, %v7583
        %v8010 = vpack.c.b16 %v7586, %v7584
        %v8011 = vpack.c.b16 %v7589, %v7587
        %v8012 = vpack.c.b16 %v7590, %v7588
        %v8013 = vpack.c.b16 %v7593, %v7591
        %v8014 = vpack.c.b16 %v7594, %v7592
        %v8015 = vpack.c.b16 %v7597, %v7595
        %v8016 = vpack.c.b16 %v7598, %v7596
        %v8017 = vpack.c.b16 %v7601, %v7599
        %v8018 = vpack.c.b16 %v7602, %v7600
        %v8019 = vpack.c.b16 %v7605, %v7603
        %v8020 = vpack.c.b16 %v7606, %v7604
        %v8021 = vpack.c.b16 %v7609, %v7607
        %v8022 = vpack.c.b16 %v7610, %v7608
        %v8023 = vpack.c.b16 %v7613, %v7611
        %v8024 = vpack.c.b16 %v7614, %v7612
        %v8025 = vpack.c.b16 %v7617, %v7615
        %v8026 = vpack.c.b16 %v7618, %v7616
        %v8027 = vpack.c.b16 %v7621, %v7619
        %v8028 = vpack.c.b16 %v7622, %v7620
        %v8029 = vpack.c.b16 %v7625, %v7623
        %v8030 = vpack.c.b16 %v7626, %v7624
        %v8031 = vpack.c.b16 %v7629, %v7627
        %v8032 = vpack.c.b16 %v7630, %v7628
        %v8033 = vpack.c.b16 %v7633, %v7631
        %v8034 = vpack.c.b16 %v7634, %v7632
        %v8035 = vpack.c.b16 %v7637, %v7635
        %v8036 = vpack.c.b16 %v7638, %v7636
        %v8037 = vpack.c.b16 %v7641, %v7639
        %v8038 = vpack.c.b16 %v7642, %v7640
        %v8039 = vpack.c.b16 %v7645, %v7643
        %v8040 = vpack.c.b16 %v7646, %v7644
        %v8041 = vpack.c.b16 %v7649, %v7647
        %v8042 = vpack.c.b16 %v7650, %v7648
        %v8043 = vpack.c.b16 %v7653, %v7651
        %v8044 = vpack.c.b16 %v7654, %v7652
        %v8045 = vpack.c.b16 %v7657, %v7655
        %v8046 = vpack.c.b16 %v7658, %v7656
        %v8047 = vpack.c.b16 %v7661, %v7659
        %v8048 = vpack.c.b16 %v7662, %v7660
        %v8049 = vpack.c.b16 %v7665, %v7663
        %v8050 = vpack.c.b16 %v7666, %v7664
        %v8051 = vpack.c.b16 %v7669, %v7667
        %v8052 = vpack.c.b16 %v7670, %v7668
        %v8053 = vpack.c.b16 %v7673, %v7671
        %v8054 = vpack.c.b16 %v7674, %v7672
        %v8055 = vpack.c.b16 %v7677, %v7675
        %v8056 = vpack.c.b16 %v7678, %v7676
        %v8057 = vpack.c.b16 %v7681, %v7679
        %v8058 = vpack.c.b16 %v7682, %v7680
        %v8059 = vpack.c.b16 %v7685, %v7683
        %v8060 = vpack.c.b16 %v7686, %v7684
        %v8061 = vpack.c.b16 %v7689, %v7687
        %v8062 = vpack.c.b16 %v7690, %v7688
        %v8063 = vpack.c.b16 %v7693, %v7691
        %v8064 = vpack.c.b16 %v7694, %v7692
        %v8065 = vpack.c.b16 %v7697, %v7695
        %v8066 = vpack.c.b16 %v7698, %v7696
        %v8067 = vpack.c.b16 %v7701, %v7699
        %v8068 = vpack.c.b16 %v7702, %v7700
        %v8069 = vpack.c.b16 %v7705, %v7703
        %v8070 = vpack.c.b16 %v7706, %v7704
        %v8071 = vpack.c.b16 %v7709, %v7707
        %v8072 = vpack.c.b16 %v7710, %v7708
        %v8073 = vpack.c.b16 %v7713, %v7711
        %v8074 = vpack.c.b16 %v7714, %v7712
        %v8075 = vpack.c.b16 %v7717, %v7715
        %v8076 = vpack.c.b16 %v7718, %v7716
        %v8077 = vpack.c.b16 %v7721, %v7719
        %v8078 = vpack.c.b16 %v7722, %v7720
        %v8079 = vpack.c.b16 %v7725, %v7723
        %v8080 = vpack.c.b16 %v7726, %v7724
        %v8081 = vpack.c.b16 %v7729, %v7727
        %v8082 = vpack.c.b16 %v7730, %v7728
        %v8083 = vpack.c.b16 %v7733, %v7731
        %v8084 = vpack.c.b16 %v7734, %v7732
        %v8085 = vpack.c.b16 %v7737, %v7735
        %v8086 = vpack.c.b16 %v7738, %v7736
        %v8087 = vpack.c.b16 %v7741, %v7739
        %v8088 = vpack.c.b16 %v7742, %v7740
        %v8089 = vpack.c.b16 %v7745, %v7743
        %v8090 = vpack.c.b16 %v7746, %v7744
        %v8091 = vpack.c.b16 %v7749, %v7747
        %v8092 = vpack.c.b16 %v7750, %v7748
        %v8093 = vpack.c.b16 %v7753, %v7751
        %v8094 = vpack.c.b16 %v7754, %v7752
        %v8095 = vpack.c.b16 %v7757, %v7755
        %v8096 = vpack.c.b16 %v7758, %v7756
        %v8097 = vpack.c.b16 %v7761, %v7759
        %v8098 = vpack.c.b16 %v7762, %v7760
        %v8099 = vpack.c.b16 %v7765, %v7763
        %v8100 = vpack.c.b16 %v7766, %v7764
        %v8101 = vpack.c.b16 %v7769, %v7767
        %v8102 = vpack.c.b16 %v7770, %v7768
        %v8103 = vpack.c.b16 %v7773, %v7771
        %v8104 = vpack.c.b16 %v7774, %v7772
        %v8105 = vpack.c.b16 %v7777, %v7775
        %v8106 = vpack.c.b16 %v7778, %v7776
        %v8107 = vpack.c.b16 %v7781, %v7779
        %v8108 = vpack.c.b16 %v7782, %v7780
        %v8109 = vpack.c.b16 %v7785, %v7783
        %v8110 = vpack.c.b16 %v7786, %v7784
        %v8111 = vpack.c.b16 %v7789, %v7787
        %v8112 = vpack.c.b16 %v7790, %v7788
        %v8113 = vpack.c.b16 %v7793, %v7791
        %v8114 = vpack.c.b16 %v7794, %v7792
        %v8115 = vpack.c.b16 %v7797, %v7795
        %v8116 = vpack.c.b16 %v7798, %v7796
        %v8117 = vpack.c.b16 %v7801, %v7799
        %v8118 = vpack.c.b16 %v7802, %v7800
        %v8119 = vpack.c.b16 %v7805, %v7803
        %v8120 = vpack.c.b16 %v7806, %v7804
        %v8121 = vpack.c.b16 %v7809, %v7807
        %v8122 = vpack.c.b16 %v7810, %v7808
        %v8123 = vpack.c.b16 %v7813, %v7811
        %v8124 = vpack.c.b16 %v7814, %v7812
        %v8125 = vpack.c.b16 %v7817, %v7815
        %v8126 = vpack.c.b16 %v7818, %v7816
        %v8127 = vpack.c.b16 %v7821, %v7819
        %v8128 = vpack.c.b16 %v7822, %v7820
        %v8129 = vpack.c.b16 %v7825, %v7823
        %v8130 = vpack.c.b16 %v7826, %v7824
        %v8131 = vpack.c.b16 %v7829, %v7827
        %v8132 = vpack.c.b16 %v7830, %v7828
        %v8133 = vpack.c.b16 %v7833, %v7831
        %v8134 = vpack.c.b16 %v7834, %v7832
        %v8135 = vpack.c.b16 %v7837, %v7835
        %v8136 = vpack.c.b16 %v7838, %v7836
        %v8137 = vpack.c.b16 %v7841, %v7839
        %v8138 = vpack.c.b16 %v7842, %v7840
        %v8139 = vpack.c.b16 %v7845, %v7843
        %v8140 = vpack.c.b16 %v7846, %v7844
        %v8141 = vpack.c.b16 %v7849, %v7847
        %v8142 = vpack.c.b16 %v7850, %v7848
        %v8143 = vpack.c.b16 %v7853, %v7851
        %v8144 = vpack.c.b16 %v7854, %v7852
        %v8145 = vpack.c.b16 %v7857, %v7855
        %v8146 = vpack.c.b16 %v7858, %v7856
        %8435 = vmatprep.subr.bf16.mxu0 %v7860
        %8436 = vmatpush1.bf16.msra.mxu0 %v7859
        %8437 = vmatprep.subr.bf16.mxu0 %v7862
        %8438 = vmatpush1.bf16.msra.mxu0 %v7861
        %8439 = vmatprep.subr.bf16.mxu0 %v7864
        %8440 = vmatpush1.bf16.msra.mxu0 %v7863
        %8441 = vmatprep.subr.bf16.mxu0 %v7866
        %8442 = vmatpush1.bf16.msra.mxu0 %v7865
        %8443 = vmatprep.subr.bf16.mxu0 %v7868
        %8444 = vmatpush1.bf16.msra.mxu0 %v7867
        %8445 = vmatprep.subr.bf16.mxu0 %v7870
        %8446 = vmatpush1.bf16.msra.mxu0 %v7869
        %8447 = vmatprep.subr.bf16.mxu0 %v7872
        %8448 = vmatpush1.bf16.msra.mxu0 %v7871
        %8449 = vmatprep.subr.bf16.mxu0 %v7874
        %8450 = vmatpush1.bf16.msra.mxu0 %v7873
        %8451 = vmatprep.subr.bf16.mxu0 %v7876
        %8452 = vmatpush1.bf16.msra.mxu0 %v7875
        %8453 = vmatprep.subr.bf16.mxu0 %v7878
        %8454 = vmatpush1.bf16.msra.mxu0 %v7877
        %8455 = vmatprep.subr.bf16.mxu0 %v7880
        %8456 = vmatpush1.bf16.msra.mxu0 %v7879
        %8457 = vmatprep.subr.bf16.mxu0 %v7882
        %8458 = vmatpush1.bf16.msra.mxu0 %v7881
        %8459 = vmatprep.subr.bf16.mxu0 %v7884
        %8460 = vmatpush1.bf16.msra.mxu0 %v7883
        %8461 = vmatprep.subr.bf16.mxu0 %v7886
        %8462 = vmatpush1.bf16.msra.mxu0 %v7885
        %8463 = vmatprep.subr.bf16.mxu0 %v7888
        %8464 = vmatpush1.bf16.msra.mxu0 %v7887
        %8465 = vmatprep.subr.bf16.mxu0 %v7890
        %8466 = vmatpush1.bf16.msra.mxu0 %v7889
        %8467 = vmatprep.mubr.bf16.mxu0 %v5990
        %8468 = vmatmul.mubr.bf16.gmra.mrb[0].mxu0 %v5989
        %v8469 = vpop.f32.mrb[0].mxu0
        %v8470 = vadd.f32 0.0, %v8469
        %v8471 = vpop.f32.mrb[0].mxu0
        %v8472 = vadd.f32 0.0, %v8471
        %v8473 = vpop.f32.mrb[0].mxu0
        %v8474 = vadd.f32 0.0, %v8473
        %v8475 = vpop.f32.mrb[0].mxu0
        %v8476 = vadd.f32 0.0, %v8475
        %8477 = vmatprep.mubr.bf16.mxu0 %v5992
        %8478 = vmatmul.mubr.bf16.gmra.mrb[0].mxu0 %v5991
        %v8479 = vpop.f32.mrb[0].mxu0
        %v8480 = vadd.f32 0.0, %v8479
        %v8481 = vpop.f32.mrb[0].mxu0
        %v8482 = vadd.f32 0.0, %v8481
        %v8483 = vpop.f32.mrb[0].mxu0
        %v8484 = vadd.f32 0.0, %v8483
        %v8485 = vpop.f32.mrb[0].mxu0
        %v8486 = vadd.f32 0.0, %v8485
        %8487 = vmatprep.mubr.bf16.mxu0 %v5994
        %8488 = vmatmul.mubr.bf16.gmra.mrb[0].mxu0 %v5993
        %v8489 = vpop.f32.mrb[0].mxu0
        %v8490 = vadd.f32 0.0, %v8489
        %v8491 = vpop.f32.mrb[0].mxu0
        %v8492 = vadd.f32 0.0, %v8491
        %v8493 = vpop.f32.mrb[0].mxu0
        %v8494 = vadd.f32 0.0, %v8493
        %v8495 = vpop.f32.mrb[0].mxu0
        %v8496 = vadd.f32 0.0, %v8495
        %8497 = vmatprep.mubr.bf16.mxu0 %v5996
        %8498 = vmatmul.mubr.bf16.gmra.mrb[0].mxu0 %v5995
        %v8499 = vpop.f32.mrb[0].mxu0
        %v8500 = vadd.f32 0.0, %v8499
        %v8501 = vpop.f32.mrb[0].mxu0
        %v8502 = vadd.f32 0.0, %v8501
        %v8503 = vpop.f32.mrb[0].mxu0
        %v8504 = vadd.f32 0.0, %v8503
        %v8505 = vpop.f32.mrb[0].mxu0
        %v8506 = vadd.f32 0.0, %v8505
        %8507 = vmatprep.mubr.bf16.mxu0 %v5998
        %8508 = vmatmul.mubr.bf16.gmra.mrb[0].mxu0 %v5997
        %v8509 = vpop.f32.mrb[0].mxu0
        %v8510 = vadd.f32 0.0, %v8509
        %v8511 = vpop.f32.mrb[0].mxu0
        %v8512 = vadd.f32 0.0, %v8511
        %v8513 = vpop.f32.mrb[0].mxu0
        %v8514 = vadd.f32 0.0, %v8513
        %v8515 = vpop.f32.mrb[0].mxu0
        %v8516 = vadd.f32 0.0, %v8515
        %8517 = vmatprep.mubr.bf16.mxu0 %v6000
        %8518 = vmatmul.mubr.bf16.gmra.mrb[0].mxu0 %v5999
        %v8519 = vpop.f32.mrb[0].mxu0
        %v8520 = vadd.f32 0.0, %v8519
        %v8521 = vpop.f32.mrb[0].mxu0
        %v8522 = vadd.f32 0.0, %v8521
        %v8523 = vpop.f32.mrb[0].mxu0
        %v8524 = vadd.f32 0.0, %v8523
        %v8525 = vpop.f32.mrb[0].mxu0
        %v8526 = vadd.f32 0.0, %v8525
        %8527 = vmatprep.mubr.bf16.mxu0 %v6002
        %8528 = vmatmul.mubr.bf16.gmra.mrb[0].mxu0 %v6001
        %v8529 = vpop.f32.mrb[0].mxu0
        %v8530 = vadd.f32 0.0, %v8529
        %v8531 = vpop.f32.mrb[0].mxu0
        %v8532 = vadd.f32 0.0, %v8531
        %v8533 = vpop.f32.mrb[0].mxu0
        %v8534 = vadd.f32 0.0, %v8533
        %v8535 = vpop.f32.mrb[0].mxu0
        %v8536 = vadd.f32 0.0, %v8535
        %8537 = vmatprep.mubr.bf16.mxu0 %v6004
        %8538 = vmatmul.mubr.bf16.gmra.mrb[0].mxu0 %v6003
        %v8539 = vpop.f32.mrb[0].mxu0
        %v8540 = vadd.f32 0.0, %v8539
        %v8541 = vpop.f32.mrb[0].mxu0
        %v8542 = vadd.f32 0.0, %v8541
        %v8543 = vpop.f32.mrb[0].mxu0
        %v8544 = vadd.f32 0.0, %v8543
        %v8545 = vpop.f32.mrb[0].mxu0
        %v8546 = vadd.f32 0.0, %v8545
        %8547 = vmatprep.mubr.bf16.mxu0 %v6006
        %8548 = vmatmul.mubr.bf16.gmra.mrb[0].mxu0 %v6005
        %v8549 = vpop.f32.mrb[0].mxu0
        %v8550 = vadd.f32 0.0, %v8549
        %v8551 = vpop.f32.mrb[0].mxu0
        %v8552 = vadd.f32 0.0, %v8551
        %v8553 = vpop.f32.mrb[0].mxu0
        %v8554 = vadd.f32 0.0, %v8553
        %v8555 = vpop.f32.mrb[0].mxu0
        %v8556 = vadd.f32 0.0, %v8555
        %8557 = vmatprep.mubr.bf16.mxu0 %v6008
        %8558 = vmatmul.mubr.bf16.gmra.mrb[0].mxu0 %v6007
        %v8559 = vpop.f32.mrb[0].mxu0
        %v8560 = vadd.f32 0.0, %v8559
        %v8561 = vpop.f32.mrb[0].mxu0
        %v8562 = vadd.f32 0.0, %v8561
        %v8563 = vpop.f32.mrb[0].mxu0
        %v8564 = vadd.f32 0.0, %v8563
        %v8565 = vpop.f32.mrb[0].mxu0
        %v8566 = vadd.f32 0.0, %v8565
        %8567 = vdwg.mxu0
        %8568 = vmatprep.subr.bf16.mxu0 %v7892
        %8569 = vmatpush1.bf16.msra.mxu0 %v7891
        %8570 = vmatprep.subr.bf16.mxu0 %v7894
        %8571 = vmatpush1.bf16.msra.mxu0 %v7893
        %8572 = vmatprep.subr.bf16.mxu0 %v7896
        %8573 = vmatpush1.bf16.msra.mxu0 %v7895
        %8574 = vmatprep.subr.bf16.mxu0 %v7898
        %8575 = vmatpush1.bf16.msra.mxu0 %v7897
        %8576 = vmatprep.subr.bf16.mxu0 %v7900
        %8577 = vmatpush1.bf16.msra.mxu0 %v7899
        %8578 = vmatprep.subr.bf16.mxu0 %v7902
        %8579 = vmatpush1.bf16.msra.mxu0 %v7901
        %8580 = vmatprep.subr.bf16.mxu0 %v7904
        %8581 = vmatpush1.bf16.msra.mxu0 %v7903
        %8582 = vmatprep.subr.bf16.mxu0 %v7906
        %8583 = vmatpush1.bf16.msra.mxu0 %v7905
        %8584 = vmatprep.subr.bf16.mxu0 %v7908
        %8585 = vmatpush1.bf16.msra.mxu0 %v7907
        %8586 = vmatprep.subr.bf16.mxu0 %v7910
        %8587 = vmatpush1.bf16.msra.mxu0 %v7909
        %8588 = vmatprep.subr.bf16.mxu0 %v7912
        %8589 = vmatpush1.bf16.msra.mxu0 %v7911
        %8590 = vmatprep.subr.bf16.mxu0 %v7914
        %8591 = vmatpush1.bf16.msra.mxu0 %v7913
        %8592 = vmatprep.subr.bf16.mxu0 %v7916
        %8593 = vmatpush1.bf16.msra.mxu0 %v7915
        %8594 = vmatprep.subr.bf16.mxu0 %v7918
        %8595 = vmatpush1.bf16.msra.mxu0 %v7917
        %8596 = vmatprep.subr.bf16.mxu0 %v7920
        %8597 = vmatpush1.bf16.msra.mxu0 %v7919
        %8598 = vmatprep.subr.bf16.mxu0 %v7922
        %8599 = vmatpush1.bf16.msra.mxu0 %v7921
        %8600 = vmatprep.mubr.bf16.mxu0 %v6057
        %8601 = vmatmul.mubr.bf16.gmra.mrb[0].mxu0 %v6045
        %v8602 = vpop.f32.mrb[0].mxu0
        %v8603 = vadd.f32 %v8470, %v8602
        %v8604 = vpop.f32.mrb[0].mxu0
        %v8605 = vadd.f32 %v8472, %v8604
        %v8606 = vpop.f32.mrb[0].mxu0
        %v8607 = vadd.f32 %v8474, %v8606
        %v8608 = vpop.f32.mrb[0].mxu0
        %v8609 = vadd.f32 %v8476, %v8608
        %8610 = vmatprep.mubr.bf16.mxu0 %v6073
        %8611 = vmatmul.mubr.bf16.gmra.mrb[0].mxu0 %v6065
        %v8612 = vpop.f32.mrb[0].mxu0
        %v8613 = vadd.f32 %v8480, %v8612
        %v8614 = vpop.f32.mrb[0].mxu0
        %v8615 = vadd.f32 %v8482, %v8614
        %v8616 = vpop.f32.mrb[0].mxu0
        %v8617 = vadd.f32 %v8484, %v8616
        %v8618 = vpop.f32.mrb[0].mxu0
        %v8619 = vadd.f32 %v8486, %v8618
        %8620 = vmatprep.mubr.bf16.mxu0 %v6089
        %8621 = vmatmul.mubr.bf16.gmra.mrb[0].mxu0 %v6081
        %v8622 = vpop.f32.mrb[0].mxu0
        %v8623 = vadd.f32 %v8490, %v8622
        %v8624 = vpop.f32.mrb[0].mxu0
        %v8625 = vadd.f32 %v8492, %v8624
        %v8626 = vpop.f32.mrb[0].mxu0
        %v8627 = vadd.f32 %v8494, %v8626
        %v8628 = vpop.f32.mrb[0].mxu0
        %v8629 = vadd.f32 %v8496, %v8628
        %8630 = vmatprep.mubr.bf16.mxu0 %v6105
        %8631 = vmatmul.mubr.bf16.gmra.mrb[0].mxu0 %v6097
        %v8632 = vpop.f32.mrb[0].mxu0
        %v8633 = vadd.f32 %v8500, %v8632
        %v8634 = vpop.f32.mrb[0].mxu0
        %v8635 = vadd.f32 %v8502, %v8634
        %v8636 = vpop.f32.mrb[0].mxu0
        %v8637 = vadd.f32 %v8504, %v8636
        %v8638 = vpop.f32.mrb[0].mxu0
        %v8639 = vadd.f32 %v8506, %v8638
        %8640 = vmatprep.mubr.bf16.mxu0 %v6121
        %8641 = vmatmul.mubr.bf16.gmra.mrb[0].mxu0 %v6113
        %v8642 = vpop.f32.mrb[0].mxu0
        %v8643 = vadd.f32 %v8510, %v8642
        %v8644 = vpop.f32.mrb[0].mxu0
        %v8645 = vadd.f32 %v8512, %v8644
        %v8646 = vpop.f32.mrb[0].mxu0
        %v8647 = vadd.f32 %v8514, %v8646
        %v8648 = vpop.f32.mrb[0].mxu0
        %v8649 = vadd.f32 %v8516, %v8648
        %8650 = vmatprep.mubr.bf16.mxu0 %v6137
        %8651 = vmatmul.mubr.bf16.gmra.mrb[0].mxu0 %v6129
        %v8652 = vpop.f32.mrb[0].mxu0
        %v8653 = vadd.f32 %v8520, %v8652
        %v8654 = vpop.f32.mrb[0].mxu0
        %v8655 = vadd.f32 %v8522, %v8654
        %v8656 = vpop.f32.mrb[0].mxu0
        %v8657 = vadd.f32 %v8524, %v8656
        %v8658 = vpop.f32.mrb[0].mxu0
        %v8659 = vadd.f32 %v8526, %v8658
        %8660 = vmatprep.mubr.bf16.mxu0 %v6153
        %8661 = vmatmul.mubr.bf16.gmra.mrb[0].mxu0 %v6145
        %v8662 = vpop.f32.mrb[0].mxu0
        %v8663 = vadd.f32 %v8530, %v8662
        %v8664 = vpop.f32.mrb[0].mxu0
        %v8665 = vadd.f32 %v8532, %v8664
        %v8666 = vpop.f32.mrb[0].mxu0
        %v8667 = vadd.f32 %v8534, %v8666
        %v8668 = vpop.f32.mrb[0].mxu0
        %v8669 = vadd.f32 %v8536, %v8668
        %8670 = vmatprep.mubr.bf16.mxu0 %v6169
        %8671 = vmatmul.mubr.bf16.gmra.mrb[0].mxu0 %v6161
        %v8672 = vpop.f32.mrb[0].mxu0
        %v8673 = vadd.f32 %v8540, %v8672
        %v8674 = vpop.f32.mrb[0].mxu0
        %v8675 = vadd.f32 %v8542, %v8674
        %v8676 = vpop.f32.mrb[0].mxu0
        %v8677 = vadd.f32 %v8544, %v8676
        %v8678 = vpop.f32.mrb[0].mxu0
        %v8679 = vadd.f32 %v8546, %v8678
        %8680 = vmatprep.mubr.bf16.mxu0 %v6185
        %8681 = vmatmul.mubr.bf16.gmra.mrb[0].mxu0 %v6177
        %v8682 = vpop.f32.mrb[0].mxu0
        %v8683 = vadd.f32 %v8550, %v8682
        %v8684 = vpop.f32.mrb[0].mxu0
        %v8685 = vadd.f32 %v8552, %v8684
        %v8686 = vpop.f32.mrb[0].mxu0
        %v8687 = vadd.f32 %v8554, %v8686
        %v8688 = vpop.f32.mrb[0].mxu0
        %v8689 = vadd.f32 %v8556, %v8688
        %8690 = vmatprep.mubr.bf16.mxu0 %v6201
        %8691 = vmatmul.mubr.bf16.gmra.mrb[0].mxu0 %v6193
        %v8692 = vpop.f32.mrb[0].mxu0
        %v8693 = vadd.f32 %v8560, %v8692
        %v8694 = vpop.f32.mrb[0].mxu0
        %v8695 = vadd.f32 %v8562, %v8694
        %v8696 = vpop.f32.mrb[0].mxu0
        %v8697 = vadd.f32 %v8564, %v8696
        %v8698 = vpop.f32.mrb[0].mxu0
        %v8699 = vadd.f32 %v8566, %v8698
        %8700 = vdwg.mxu0
        %8701 = vmatprep.subr.bf16.mxu0 %v7924
        %8702 = vmatpush1.bf16.msra.mxu0 %v7923
        %8703 = vmatprep.subr.bf16.mxu0 %v7926
        %8704 = vmatpush1.bf16.msra.mxu0 %v7925
        %8705 = vmatprep.subr.bf16.mxu0 %v7928
        %8706 = vmatpush1.bf16.msra.mxu0 %v7927
        %8707 = vmatprep.subr.bf16.mxu0 %v7930
        %8708 = vmatpush1.bf16.msra.mxu0 %v7929
        %8709 = vmatprep.subr.bf16.mxu0 %v7932
        %8710 = vmatpush1.bf16.msra.mxu0 %v7931
        %8711 = vmatprep.subr.bf16.mxu0 %v7934
        %8712 = vmatpush1.bf16.msra.mxu0 %v7933
        %8713 = vmatprep.subr.bf16.mxu0 %v7936
        %8714 = vmatpush1.bf16.msra.mxu0 %v7935
        %8715 = vmatprep.subr.bf16.mxu0 %v7938
        %8716 = vmatpush1.bf16.msra.mxu0 %v7937
        %8717 = vmatprep.subr.bf16.mxu0 %v7940
        %8718 = vmatpush1.bf16.msra.mxu0 %v7939
        %8719 = vmatprep.subr.bf16.mxu0 %v7942
        %8720 = vmatpush1.bf16.msra.mxu0 %v7941
        %8721 = vmatprep.subr.bf16.mxu0 %v7944
        %8722 = vmatpush1.bf16.msra.mxu0 %v7943
        %8723 = vmatprep.subr.bf16.mxu0 %v7946
        %8724 = vmatpush1.bf16.msra.mxu0 %v7945
        %8725 = vmatprep.subr.bf16.mxu0 %v7948
        %8726 = vmatpush1.bf16.msra.mxu0 %v7947
        %8727 = vmatprep.subr.bf16.mxu0 %v7950
        %8728 = vmatpush1.bf16.msra.mxu0 %v7949
        %8729 = vmatprep.subr.bf16.mxu0 %v7952
        %8730 = vmatpush1.bf16.msra.mxu0 %v7951
        %8731 = vmatprep.subr.bf16.mxu0 %v7954
        %8732 = vmatpush1.bf16.msra.mxu0 %v7953
        %8733 = vmatprep.mubr.bf16.mxu0 %v6232
        %8734 = vmatmul.mubr.bf16.gmra.mrb[0].mxu0 %v6229
        %v8735 = vpop.f32.mrb[0].mxu0
        %v8736 = vadd.f32 %v8603, %v8735
        %v8737 = vpop.f32.mrb[0].mxu0
        %v8738 = vadd.f32 %v8605, %v8737
        %v8739 = vpop.f32.mrb[0].mxu0
        %v8740 = vadd.f32 %v8607, %v8739
        %v8741 = vpop.f32.mrb[0].mxu0
        %v8742 = vadd.f32 %v8609, %v8741
        %8743 = vmatprep.mubr.bf16.mxu0 %v6236
        %8744 = vmatmul.mubr.bf16.gmra.mrb[0].mxu0 %v6234
        %v8745 = vpop.f32.mrb[0].mxu0
        %v8746 = vadd.f32 %v8613, %v8745
        %v8747 = vpop.f32.mrb[0].mxu0
        %v8748 = vadd.f32 %v8615, %v8747
        %v8749 = vpop.f32.mrb[0].mxu0
        %v8750 = vadd.f32 %v8617, %v8749
        %v8751 = vpop.f32.mrb[0].mxu0
        %v8752 = vadd.f32 %v8619, %v8751
        %8753 = vmatprep.mubr.bf16.mxu0 %v6240
        %8754 = vmatmul.mubr.bf16.gmra.mrb[0].mxu0 %v6238
        %v8755 = vpop.f32.mrb[0].mxu0
        %v8756 = vadd.f32 %v8623, %v8755
        %v8757 = vpop.f32.mrb[0].mxu0
        %v8758 = vadd.f32 %v8625, %v8757
        %v8759 = vpop.f32.mrb[0].mxu0
        %v8760 = vadd.f32 %v8627, %v8759
        %v8761 = vpop.f32.mrb[0].mxu0
        %v8762 = vadd.f32 %v8629, %v8761
        %8763 = vmatprep.mubr.bf16.mxu0 %v6244
        %8764 = vmatmul.mubr.bf16.gmra.mrb[0].mxu0 %v6242
        %v8765 = vpop.f32.mrb[0].mxu0
        %v8766 = vadd.f32 %v8633, %v8765
        %v8767 = vpop.f32.mrb[0].mxu0
        %v8768 = vadd.f32 %v8635, %v8767
        %v8769 = vpop.f32.mrb[0].mxu0
        %v8770 = vadd.f32 %v8637, %v8769
        %v8771 = vpop.f32.mrb[0].mxu0
        %v8772 = vadd.f32 %v8639, %v8771
        %8773 = vmatprep.mubr.bf16.mxu0 %v6248
        %8774 = vmatmul.mubr.bf16.gmra.mrb[0].mxu0 %v6246
        %v8775 = vpop.f32.mrb[0].mxu0
        %v8776 = vadd.f32 %v8643, %v8775
        %v8777 = vpop.f32.mrb[0].mxu0
        %v8778 = vadd.f32 %v8645, %v8777
        %v8779 = vpop.f32.mrb[0].mxu0
        %v8780 = vadd.f32 %v8647, %v8779
        %v8781 = vpop.f32.mrb[0].mxu0
        %v8782 = vadd.f32 %v8649, %v8781
        %8783 = vmatprep.mubr.bf16.mxu0 %v6252
        %8784 = vmatmul.mubr.bf16.gmra.mrb[0].mxu0 %v6250
        %v8785 = vpop.f32.mrb[0].mxu0
        %v8786 = vadd.f32 %v8653, %v8785
        %v8787 = vpop.f32.mrb[0].mxu0
        %v8788 = vadd.f32 %v8655, %v8787
        %v8789 = vpop.f32.mrb[0].mxu0
        %v8790 = vadd.f32 %v8657, %v8789
        %v8791 = vpop.f32.mrb[0].mxu0
        %v8792 = vadd.f32 %v8659, %v8791
        %8793 = vmatprep.mubr.bf16.mxu0 %v6256
        %8794 = vmatmul.mubr.bf16.gmra.mrb[0].mxu0 %v6254
        %v8795 = vpop.f32.mrb[0].mxu0
        %v8796 = vadd.f32 %v8663, %v8795
        %v8797 = vpop.f32.mrb[0].mxu0
        %v8798 = vadd.f32 %v8665, %v8797
        %v8799 = vpop.f32.mrb[0].mxu0
        %v8800 = vadd.f32 %v8667, %v8799
        %v8801 = vpop.f32.mrb[0].mxu0
        %v8802 = vadd.f32 %v8669, %v8801
        %8803 = vmatprep.mubr.bf16.mxu0 %v6260
        %8804 = vmatmul.mubr.bf16.gmra.mrb[0].mxu0 %v6258
        %v8805 = vpop.f32.mrb[0].mxu0
        %v8806 = vadd.f32 %v8673, %v8805
        %v8807 = vpop.f32.mrb[0].mxu0
        %v8808 = vadd.f32 %v8675, %v8807
        %v8809 = vpop.f32.mrb[0].mxu0
        %v8810 = vadd.f32 %v8677, %v8809
        %v8811 = vpop.f32.mrb[0].mxu0
        %v8812 = vadd.f32 %v8679, %v8811
        %8813 = vmatprep.mubr.bf16.mxu0 %v6264
        %8814 = vmatmul.mubr.bf16.gmra.mrb[0].mxu0 %v6262
        %v8815 = vpop.f32.mrb[0].mxu0
        %v8816 = vadd.f32 %v8683, %v8815
        %v8817 = vpop.f32.mrb[0].mxu0
        %v8818 = vadd.f32 %v8685, %v8817
        %v8819 = vpop.f32.mrb[0].mxu0
        %v8820 = vadd.f32 %v8687, %v8819
        %v8821 = vpop.f32.mrb[0].mxu0
        %v8822 = vadd.f32 %v8689, %v8821
        %8823 = vmatprep.mubr.bf16.mxu0 %v6268
        %8824 = vmatmul.mubr.bf16.gmra.mrb[0].mxu0 %v6266
        %v8825 = vpop.f32.mrb[0].mxu0
        %v8826 = vadd.f32 %v8693, %v8825
        %v8827 = vpop.f32.mrb[0].mxu0
        %v8828 = vadd.f32 %v8695, %v8827
        %v8829 = vpop.f32.mrb[0].mxu0
        %v8830 = vadd.f32 %v8697, %v8829
        %v8831 = vpop.f32.mrb[0].mxu0
        %v8832 = vadd.f32 %v8699, %v8831
        %8833 = vdwg.mxu0
        %8834 = vmatprep.subr.bf16.mxu0 %v7956
        %8835 = vmatpush1.bf16.msra.mxu0 %v7955
        %8836 = vmatprep.subr.bf16.mxu0 %v7958
        %8837 = vmatpush1.bf16.msra.mxu0 %v7957
        %8838 = vmatprep.subr.bf16.mxu0 %v7960
        %8839 = vmatpush1.bf16.msra.mxu0 %v7959
        %8840 = vmatprep.subr.bf16.mxu0 %v7962
        %8841 = vmatpush1.bf16.msra.mxu0 %v7961
        %8842 = vmatprep.subr.bf16.mxu0 %v7964
        %8843 = vmatpush1.bf16.msra.mxu0 %v7963
        %8844 = vmatprep.subr.bf16.mxu0 %v7966
        %8845 = vmatpush1.bf16.msra.mxu0 %v7965
        %8846 = vmatprep.subr.bf16.mxu0 %v7968
        %8847 = vmatpush1.bf16.msra.mxu0 %v7967
        %8848 = vmatprep.subr.bf16.mxu0 %v7970
        %8849 = vmatpush1.bf16.msra.mxu0 %v7969
        %8850 = vmatprep.subr.bf16.mxu0 %v7972
        %8851 = vmatpush1.bf16.msra.mxu0 %v7971
        %8852 = vmatprep.subr.bf16.mxu0 %v7974
        %8853 = vmatpush1.bf16.msra.mxu0 %v7973
        %8854 = vmatprep.subr.bf16.mxu0 %v7976
        %8855 = vmatpush1.bf16.msra.mxu0 %v7975
        %8856 = vmatprep.subr.bf16.mxu0 %v7978
        %8857 = vmatpush1.bf16.msra.mxu0 %v7977
        %8858 = vmatprep.subr.bf16.mxu0 %v7980
        %8859 = vmatpush1.bf16.msra.mxu0 %v7979
        %8860 = vmatprep.subr.bf16.mxu0 %v7982
        %8861 = vmatpush1.bf16.msra.mxu0 %v7981
        %8862 = vmatprep.subr.bf16.mxu0 %v7984
        %8863 = vmatpush1.bf16.msra.mxu0 %v7983
        %8864 = vmatprep.subr.bf16.mxu0 %v7986
        %8865 = vmatpush1.bf16.msra.mxu0 %v7985
        %8866 = vmatprep.mubr.bf16.mxu0 %v5992
        %8867 = vmatmul.mubr.bf16.gmra.mrb[0].mxu0 %v5991
        %v8868 = vpop.f32.mrb[0].mxu0
        %v8869 = vadd.f32 %v8736, %v8868
        %v8870 = vpop.f32.mrb[0].mxu0
        %v8871 = vadd.f32 %v8738, %v8870
        %v8872 = vpop.f32.mrb[0].mxu0
        %v8873 = vadd.f32 %v8740, %v8872
        %v8874 = vpop.f32.mrb[0].mxu0
        %v8875 = vadd.f32 %v8742, %v8874
        %8876 = vmatprep.mubr.bf16.mxu0 %v5994
        %8877 = vmatmul.mubr.bf16.gmra.mrb[0].mxu0 %v5993
        %v8878 = vpop.f32.mrb[0].mxu0
        %v8879 = vadd.f32 %v8746, %v8878
        %v8880 = vpop.f32.mrb[0].mxu0
        %v8881 = vadd.f32 %v8748, %v8880
        %v8882 = vpop.f32.mrb[0].mxu0
        %v8883 = vadd.f32 %v8750, %v8882
        %v8884 = vpop.f32.mrb[0].mxu0
        %v8885 = vadd.f32 %v8752, %v8884
        %8886 = vmatprep.mubr.bf16.mxu0 %v5996
        %8887 = vmatmul.mubr.bf16.gmra.mrb[0].mxu0 %v5995
        %v8888 = vpop.f32.mrb[0].mxu0
        %v8889 = vadd.f32 %v8756, %v8888
        %v8890 = vpop.f32.mrb[0].mxu0
        %v8891 = vadd.f32 %v8758, %v8890
        %v8892 = vpop.f32.mrb[0].mxu0
        %v8893 = vadd.f32 %v8760, %v8892
        %v8894 = vpop.f32.mrb[0].mxu0
        %v8895 = vadd.f32 %v8762, %v8894
        %8896 = vmatprep.mubr.bf16.mxu0 %v5998
        %8897 = vmatmul.mubr.bf16.gmra.mrb[0].mxu0 %v5997
        %v8898 = vpop.f32.mrb[0].mxu0
        %v8899 = vadd.f32 %v8766, %v8898
        %v8900 = vpop.f32.mrb[0].mxu0
        %v8901 = vadd.f32 %v8768, %v8900
        %v8902 = vpop.f32.mrb[0].mxu0
        %v8903 = vadd.f32 %v8770, %v8902
        %v8904 = vpop.f32.mrb[0].mxu0
        %v8905 = vadd.f32 %v8772, %v8904
        %8906 = vmatprep.mubr.bf16.mxu0 %v6000
        %8907 = vmatmul.mubr.bf16.gmra.mrb[0].mxu0 %v5999
        %v8908 = vpop.f32.mrb[0].mxu0
        %v8909 = vadd.f32 %v8776, %v8908
        %v8910 = vpop.f32.mrb[0].mxu0
        %v8911 = vadd.f32 %v8778, %v8910
        %v8912 = vpop.f32.mrb[0].mxu0
        %v8913 = vadd.f32 %v8780, %v8912
        %v8914 = vpop.f32.mrb[0].mxu0
        %v8915 = vadd.f32 %v8782, %v8914
        %8916 = vmatprep.mubr.bf16.mxu0 %v6002
        %8917 = vmatmul.mubr.bf16.gmra.mrb[0].mxu0 %v6001
        %v8918 = vpop.f32.mrb[0].mxu0
        %v8919 = vadd.f32 %v8786, %v8918
        %v8920 = vpop.f32.mrb[0].mxu0
        %v8921 = vadd.f32 %v8788, %v8920
        %v8922 = vpop.f32.mrb[0].mxu0
        %v8923 = vadd.f32 %v8790, %v8922
        %v8924 = vpop.f32.mrb[0].mxu0
        %v8925 = vadd.f32 %v8792, %v8924
        %8926 = vmatprep.mubr.bf16.mxu0 %v6004
        %8927 = vmatmul.mubr.bf16.gmra.mrb[0].mxu0 %v6003
        %v8928 = vpop.f32.mrb[0].mxu0
        %v8929 = vadd.f32 %v8796, %v8928
        %v8930 = vpop.f32.mrb[0].mxu0
        %v8931 = vadd.f32 %v8798, %v8930
        %v8932 = vpop.f32.mrb[0].mxu0
        %v8933 = vadd.f32 %v8800, %v8932
        %v8934 = vpop.f32.mrb[0].mxu0
        %v8935 = vadd.f32 %v8802, %v8934
        %8936 = vmatprep.mubr.bf16.mxu0 %v6006
        %8937 = vmatmul.mubr.bf16.gmra.mrb[0].mxu0 %v6005
        %v8938 = vpop.f32.mrb[0].mxu0
        %v8939 = vadd.f32 %v8806, %v8938
        %v8940 = vpop.f32.mrb[0].mxu0
        %v8941 = vadd.f32 %v8808, %v8940
        %v8942 = vpop.f32.mrb[0].mxu0
        %v8943 = vadd.f32 %v8810, %v8942
        %v8944 = vpop.f32.mrb[0].mxu0
        %v8945 = vadd.f32 %v8812, %v8944
        %8946 = vmatprep.mubr.bf16.mxu0 %v6008
        %8947 = vmatmul.mubr.bf16.gmra.mrb[0].mxu0 %v6007
        %v8948 = vpop.f32.mrb[0].mxu0
        %v8949 = vadd.f32 %v8816, %v8948
        %v8950 = vpop.f32.mrb[0].mxu0
        %v8951 = vadd.f32 %v8818, %v8950
        %v8952 = vpop.f32.mrb[0].mxu0
        %v8953 = vadd.f32 %v8820, %v8952
        %v8954 = vpop.f32.mrb[0].mxu0
        %v8955 = vadd.f32 %v8822, %v8954
        %8956 = vmatprep.mubr.bf16.mxu0 %v6296
        %8957 = vmatmul.mubr.bf16.gmra.mrb[0].mxu0 %v6295
        %v8958 = vpop.f32.mrb[0].mxu0
        %v8959 = vadd.f32 %v8826, %v8958
        %v8960 = vpop.f32.mrb[0].mxu0
        %v8961 = vadd.f32 %v8828, %v8960
        %v8962 = vpop.f32.mrb[0].mxu0
        %v8963 = vadd.f32 %v8830, %v8962
        %v8964 = vpop.f32.mrb[0].mxu0
        %v8965 = vadd.f32 %v8832, %v8964
        %8966 = vdwg.mxu0
        %8967 = vmatprep.subr.bf16.mxu0 %v7988
        %8968 = vmatpush1.bf16.msra.mxu0 %v7987
        %8969 = vmatprep.subr.bf16.mxu0 %v7990
        %8970 = vmatpush1.bf16.msra.mxu0 %v7989
        %8971 = vmatprep.subr.bf16.mxu0 %v7992
        %8972 = vmatpush1.bf16.msra.mxu0 %v7991
        %8973 = vmatprep.subr.bf16.mxu0 %v7994
        %8974 = vmatpush1.bf16.msra.mxu0 %v7993
        %8975 = vmatprep.subr.bf16.mxu0 %v7996
        %8976 = vmatpush1.bf16.msra.mxu0 %v7995
        %8977 = vmatprep.subr.bf16.mxu0 %v7998
        %8978 = vmatpush1.bf16.msra.mxu0 %v7997
        %8979 = vmatprep.subr.bf16.mxu0 %v8000
        %8980 = vmatpush1.bf16.msra.mxu0 %v7999
        %8981 = vmatprep.subr.bf16.mxu0 %v8002
        %8982 = vmatpush1.bf16.msra.mxu0 %v8001
        %8983 = vmatprep.subr.bf16.mxu0 %v8004
        %8984 = vmatpush1.bf16.msra.mxu0 %v8003
        %8985 = vmatprep.subr.bf16.mxu0 %v8006
        %8986 = vmatpush1.bf16.msra.mxu0 %v8005
        %8987 = vmatprep.subr.bf16.mxu0 %v8008
        %8988 = vmatpush1.bf16.msra.mxu0 %v8007
        %8989 = vmatprep.subr.bf16.mxu0 %v8010
        %8990 = vmatpush1.bf16.msra.mxu0 %v8009
        %8991 = vmatprep.subr.bf16.mxu0 %v8012
        %8992 = vmatpush1.bf16.msra.mxu0 %v8011
        %8993 = vmatprep.subr.bf16.mxu0 %v8014
        %8994 = vmatpush1.bf16.msra.mxu0 %v8013
        %8995 = vmatprep.subr.bf16.mxu0 %v8016
        %8996 = vmatpush1.bf16.msra.mxu0 %v8015
        %8997 = vmatprep.subr.bf16.mxu0 %v8018
        %8998 = vmatpush1.bf16.msra.mxu0 %v8017
        %8999 = vmatprep.mubr.bf16.mxu0 %v6073
        %9000 = vmatmul.mubr.bf16.gmra.mrb[0].mxu0 %v6065
        %v9001 = vpop.f32.mrb[0].mxu0
        %v9002 = vadd.f32 %v8869, %v9001
        %v9003 = vpop.f32.mrb[0].mxu0
        %v9004 = vadd.f32 %v8871, %v9003
        %v9005 = vpop.f32.mrb[0].mxu0
        %v9006 = vadd.f32 %v8873, %v9005
        %v9007 = vpop.f32.mrb[0].mxu0
        %v9008 = vadd.f32 %v8875, %v9007
        %9009 = vmatprep.mubr.bf16.mxu0 %v6089
        %9010 = vmatmul.mubr.bf16.gmra.mrb[0].mxu0 %v6081
        %v9011 = vpop.f32.mrb[0].mxu0
        %v9012 = vadd.f32 %v8879, %v9011
        %v9013 = vpop.f32.mrb[0].mxu0
        %v9014 = vadd.f32 %v8881, %v9013
        %v9015 = vpop.f32.mrb[0].mxu0
        %v9016 = vadd.f32 %v8883, %v9015
        %v9017 = vpop.f32.mrb[0].mxu0
        %v9018 = vadd.f32 %v8885, %v9017
        %9019 = vmatprep.mubr.bf16.mxu0 %v6105
        %9020 = vmatmul.mubr.bf16.gmra.mrb[0].mxu0 %v6097
        %v9021 = vpop.f32.mrb[0].mxu0
        %v9022 = vadd.f32 %v8889, %v9021
        %v9023 = vpop.f32.mrb[0].mxu0
        %v9024 = vadd.f32 %v8891, %v9023
        %v9025 = vpop.f32.mrb[0].mxu0
        %v9026 = vadd.f32 %v8893, %v9025
        %v9027 = vpop.f32.mrb[0].mxu0
        %v9028 = vadd.f32 %v8895, %v9027
        %9029 = vmatprep.mubr.bf16.mxu0 %v6121
        %9030 = vmatmul.mubr.bf16.gmra.mrb[0].mxu0 %v6113
        %v9031 = vpop.f32.mrb[0].mxu0
        %v9032 = vadd.f32 %v8899, %v9031
        %v9033 = vpop.f32.mrb[0].mxu0
        %v9034 = vadd.f32 %v8901, %v9033
        %v9035 = vpop.f32.mrb[0].mxu0
        %v9036 = vadd.f32 %v8903, %v9035
        %v9037 = vpop.f32.mrb[0].mxu0
        %v9038 = vadd.f32 %v8905, %v9037
        %9039 = vmatprep.mubr.bf16.mxu0 %v6137
        %9040 = vmatmul.mubr.bf16.gmra.mrb[0].mxu0 %v6129
        %v9041 = vpop.f32.mrb[0].mxu0
        %v9042 = vadd.f32 %v8909, %v9041
        %v9043 = vpop.f32.mrb[0].mxu0
        %v9044 = vadd.f32 %v8911, %v9043
        %v9045 = vpop.f32.mrb[0].mxu0
        %v9046 = vadd.f32 %v8913, %v9045
        %v9047 = vpop.f32.mrb[0].mxu0
        %v9048 = vadd.f32 %v8915, %v9047
        %9049 = vmatprep.mubr.bf16.mxu0 %v6153
        %9050 = vmatmul.mubr.bf16.gmra.mrb[0].mxu0 %v6145
        %v9051 = vpop.f32.mrb[0].mxu0
        %v9052 = vadd.f32 %v8919, %v9051
        %v9053 = vpop.f32.mrb[0].mxu0
        %v9054 = vadd.f32 %v8921, %v9053
        %v9055 = vpop.f32.mrb[0].mxu0
        %v9056 = vadd.f32 %v8923, %v9055
        %v9057 = vpop.f32.mrb[0].mxu0
        %v9058 = vadd.f32 %v8925, %v9057
        %9059 = vmatprep.mubr.bf16.mxu0 %v6169
        %9060 = vmatmul.mubr.bf16.gmra.mrb[0].mxu0 %v6161
        %v9061 = vpop.f32.mrb[0].mxu0
        %v9062 = vadd.f32 %v8929, %v9061
        %v9063 = vpop.f32.mrb[0].mxu0
        %v9064 = vadd.f32 %v8931, %v9063
        %v9065 = vpop.f32.mrb[0].mxu0
        %v9066 = vadd.f32 %v8933, %v9065
        %v9067 = vpop.f32.mrb[0].mxu0
        %v9068 = vadd.f32 %v8935, %v9067
        %9069 = vmatprep.mubr.bf16.mxu0 %v6185
        %9070 = vmatmul.mubr.bf16.gmra.mrb[0].mxu0 %v6177
        %v9071 = vpop.f32.mrb[0].mxu0
        %v9072 = vadd.f32 %v8939, %v9071
        %v9073 = vpop.f32.mrb[0].mxu0
        %v9074 = vadd.f32 %v8941, %v9073
        %v9075 = vpop.f32.mrb[0].mxu0
        %v9076 = vadd.f32 %v8943, %v9075
        %v9077 = vpop.f32.mrb[0].mxu0
        %v9078 = vadd.f32 %v8945, %v9077
        %9079 = vmatprep.mubr.bf16.mxu0 %v6313
        %9080 = vmatmul.mubr.bf16.gmra.mrb[0].mxu0 %v6308
        %v9081 = vpop.f32.mrb[0].mxu0
        %v9082 = vadd.f32 %v8949, %v9081
        %v9083 = vpop.f32.mrb[0].mxu0
        %v9084 = vadd.f32 %v8951, %v9083
        %v9085 = vpop.f32.mrb[0].mxu0
        %v9086 = vadd.f32 %v8953, %v9085
        %v9087 = vpop.f32.mrb[0].mxu0
        %v9088 = vadd.f32 %v8955, %v9087
        %9089 = vmatprep.mubr.bf16.mxu0 %v6329
        %9090 = vmatmul.mubr.bf16.gmra.mrb[0].mxu0 %v6321
        %v9091 = vpop.f32.mrb[0].mxu0
        %v9092 = vadd.f32 %v8959, %v9091
        %v9093 = vpop.f32.mrb[0].mxu0
        %v9094 = vadd.f32 %v8961, %v9093
        %v9095 = vpop.f32.mrb[0].mxu0
        %v9096 = vadd.f32 %v8963, %v9095
        %v9097 = vpop.f32.mrb[0].mxu0
        %v9098 = vadd.f32 %v8965, %v9097
        %9099 = vdwg.mxu0
        %9100 = vmatprep.subr.bf16.mxu0 %v8020
        %9101 = vmatpush1.bf16.msra.mxu0 %v8019
        %9102 = vmatprep.subr.bf16.mxu0 %v8022
        %9103 = vmatpush1.bf16.msra.mxu0 %v8021
        %9104 = vmatprep.subr.bf16.mxu0 %v8024
        %9105 = vmatpush1.bf16.msra.mxu0 %v8023
        %9106 = vmatprep.subr.bf16.mxu0 %v8026
        %9107 = vmatpush1.bf16.msra.mxu0 %v8025
        %9108 = vmatprep.subr.bf16.mxu0 %v8028
        %9109 = vmatpush1.bf16.msra.mxu0 %v8027
        %9110 = vmatprep.subr.bf16.mxu0 %v8030
        %9111 = vmatpush1.bf16.msra.mxu0 %v8029
        %9112 = vmatprep.subr.bf16.mxu0 %v8032
        %9113 = vmatpush1.bf16.msra.mxu0 %v8031
        %9114 = vmatprep.subr.bf16.mxu0 %v8034
        %9115 = vmatpush1.bf16.msra.mxu0 %v8033
        %9116 = vmatprep.subr.bf16.mxu0 %v8036
        %9117 = vmatpush1.bf16.msra.mxu0 %v8035
        %9118 = vmatprep.subr.bf16.mxu0 %v8038
        %9119 = vmatpush1.bf16.msra.mxu0 %v8037
        %9120 = vmatprep.subr.bf16.mxu0 %v8040
        %9121 = vmatpush1.bf16.msra.mxu0 %v8039
        %9122 = vmatprep.subr.bf16.mxu0 %v8042
        %9123 = vmatpush1.bf16.msra.mxu0 %v8041
        %9124 = vmatprep.subr.bf16.mxu0 %v8044
        %9125 = vmatpush1.bf16.msra.mxu0 %v8043
        %9126 = vmatprep.subr.bf16.mxu0 %v8046
        %9127 = vmatpush1.bf16.msra.mxu0 %v8045
        %9128 = vmatprep.subr.bf16.mxu0 %v8048
        %9129 = vmatpush1.bf16.msra.mxu0 %v8047
        %9130 = vmatprep.subr.bf16.mxu0 %v8050
        %9131 = vmatpush1.bf16.msra.mxu0 %v8049
        %9132 = vmatprep.mubr.bf16.mxu0 %v6342
        %9133 = vmatmul.mubr.bf16.gmra.mrb[0].mxu0 %v6340
        %v9134 = vpop.f32.mrb[0].mxu0
        %v9135 = vadd.f32 %v9002, %v9134
        %v9136 = vpop.f32.mrb[0].mxu0
        %v9137 = vadd.f32 %v9004, %v9136
        %v9138 = vpop.f32.mrb[0].mxu0
        %v9139 = vadd.f32 %v9006, %v9138
        %v9140 = vpop.f32.mrb[0].mxu0
        %v9141 = vadd.f32 %v9008, %v9140
        %9142 = vmatprep.mubr.bf16.mxu0 %v6240
        %9143 = vmatmul.mubr.bf16.gmra.mrb[0].mxu0 %v6238
        %v9144 = vpop.f32.mrb[0].mxu0
        %v9145 = vadd.f32 %v9012, %v9144
        %v9146 = vpop.f32.mrb[0].mxu0
        %v9147 = vadd.f32 %v9014, %v9146
        %v9148 = vpop.f32.mrb[0].mxu0
        %v9149 = vadd.f32 %v9016, %v9148
        %v9150 = vpop.f32.mrb[0].mxu0
        %v9151 = vadd.f32 %v9018, %v9150
        %9152 = vmatprep.mubr.bf16.mxu0 %v6244
        %9153 = vmatmul.mubr.bf16.gmra.mrb[0].mxu0 %v6242
        %v9154 = vpop.f32.mrb[0].mxu0
        %v9155 = vadd.f32 %v9022, %v9154
        %v9156 = vpop.f32.mrb[0].mxu0
        %v9157 = vadd.f32 %v9024, %v9156
        %v9158 = vpop.f32.mrb[0].mxu0
        %v9159 = vadd.f32 %v9026, %v9158
        %v9160 = vpop.f32.mrb[0].mxu0
        %v9161 = vadd.f32 %v9028, %v9160
        %9162 = vmatprep.mubr.bf16.mxu0 %v6248
        %9163 = vmatmul.mubr.bf16.gmra.mrb[0].mxu0 %v6246
        %v9164 = vpop.f32.mrb[0].mxu0
        %v9165 = vadd.f32 %v9032, %v9164
        %v9166 = vpop.f32.mrb[0].mxu0
        %v9167 = vadd.f32 %v9034, %v9166
        %v9168 = vpop.f32.mrb[0].mxu0
        %v9169 = vadd.f32 %v9036, %v9168
        %v9170 = vpop.f32.mrb[0].mxu0
        %v9171 = vadd.f32 %v9038, %v9170
        %9172 = vmatprep.mubr.bf16.mxu0 %v6252
        %9173 = vmatmul.mubr.bf16.gmra.mrb[0].mxu0 %v6250
        %v9174 = vpop.f32.mrb[0].mxu0
        %v9175 = vadd.f32 %v9042, %v9174
        %v9176 = vpop.f32.mrb[0].mxu0
        %v9177 = vadd.f32 %v9044, %v9176
        %v9178 = vpop.f32.mrb[0].mxu0
        %v9179 = vadd.f32 %v9046, %v9178
        %v9180 = vpop.f32.mrb[0].mxu0
        %v9181 = vadd.f32 %v9048, %v9180
        %9182 = vmatprep.mubr.bf16.mxu0 %v6256
        %9183 = vmatmul.mubr.bf16.gmra.mrb[0].mxu0 %v6254
        %v9184 = vpop.f32.mrb[0].mxu0
        %v9185 = vadd.f32 %v9052, %v9184
        %v9186 = vpop.f32.mrb[0].mxu0
        %v9187 = vadd.f32 %v9054, %v9186
        %v9188 = vpop.f32.mrb[0].mxu0
        %v9189 = vadd.f32 %v9056, %v9188
        %v9190 = vpop.f32.mrb[0].mxu0
        %v9191 = vadd.f32 %v9058, %v9190
        %9192 = vmatprep.mubr.bf16.mxu0 %v6260
        %9193 = vmatmul.mubr.bf16.gmra.mrb[0].mxu0 %v6258
        %v9194 = vpop.f32.mrb[0].mxu0
        %v9195 = vadd.f32 %v9062, %v9194
        %v9196 = vpop.f32.mrb[0].mxu0
        %v9197 = vadd.f32 %v9064, %v9196
        %v9198 = vpop.f32.mrb[0].mxu0
        %v9199 = vadd.f32 %v9066, %v9198
        %v9200 = vpop.f32.mrb[0].mxu0
        %v9201 = vadd.f32 %v9068, %v9200
        %9202 = vmatprep.mubr.bf16.mxu0 %v6264
        %9203 = vmatmul.mubr.bf16.gmra.mrb[0].mxu0 %v6262
        %v9204 = vpop.f32.mrb[0].mxu0
        %v9205 = vadd.f32 %v9072, %v9204
        %v9206 = vpop.f32.mrb[0].mxu0
        %v9207 = vadd.f32 %v9074, %v9206
        %v9208 = vpop.f32.mrb[0].mxu0
        %v9209 = vadd.f32 %v9076, %v9208
        %v9210 = vpop.f32.mrb[0].mxu0
        %v9211 = vadd.f32 %v9078, %v9210
        %9212 = vmatprep.mubr.bf16.mxu0 %v6346
        %9213 = vmatmul.mubr.bf16.gmra.mrb[0].mxu0 %v6344
        %v9214 = vpop.f32.mrb[0].mxu0
        %v9215 = vadd.f32 %v9082, %v9214
        %v9216 = vpop.f32.mrb[0].mxu0
        %v9217 = vadd.f32 %v9084, %v9216
        %v9218 = vpop.f32.mrb[0].mxu0
        %v9219 = vadd.f32 %v9086, %v9218
        %v9220 = vpop.f32.mrb[0].mxu0
        %v9221 = vadd.f32 %v9088, %v9220
        %9222 = vmatprep.mubr.bf16.mxu0 %v6350
        %9223 = vmatmul.mubr.bf16.gmra.mrb[0].mxu0 %v6348
        %v9224 = vpop.f32.mrb[0].mxu0
        %v9225 = vadd.f32 %v9092, %v9224
        %v9226 = vpop.f32.mrb[0].mxu0
        %v9227 = vadd.f32 %v9094, %v9226
        %v9228 = vpop.f32.mrb[0].mxu0
        %v9229 = vadd.f32 %v9096, %v9228
        %v9230 = vpop.f32.mrb[0].mxu0
        %v9231 = vadd.f32 %v9098, %v9230
        %9232 = vdwg.mxu0
        %9233 = vmatprep.subr.bf16.mxu0 %v8052
        %9234 = vmatpush1.bf16.msra.mxu0 %v8051
        %9235 = vmatprep.subr.bf16.mxu0 %v8054
        %9236 = vmatpush1.bf16.msra.mxu0 %v8053
        %9237 = vmatprep.subr.bf16.mxu0 %v8056
        %9238 = vmatpush1.bf16.msra.mxu0 %v8055
        %9239 = vmatprep.subr.bf16.mxu0 %v8058
        %9240 = vmatpush1.bf16.msra.mxu0 %v8057
        %9241 = vmatprep.subr.bf16.mxu0 %v8060
        %9242 = vmatpush1.bf16.msra.mxu0 %v8059
        %9243 = vmatprep.subr.bf16.mxu0 %v8062
        %9244 = vmatpush1.bf16.msra.mxu0 %v8061
        %9245 = vmatprep.subr.bf16.mxu0 %v8064
        %9246 = vmatpush1.bf16.msra.mxu0 %v8063
        %9247 = vmatprep.subr.bf16.mxu0 %v8066
        %9248 = vmatpush1.bf16.msra.mxu0 %v8065
        %9249 = vmatprep.subr.bf16.mxu0 %v8068
        %9250 = vmatpush1.bf16.msra.mxu0 %v8067
        %9251 = vmatprep.subr.bf16.mxu0 %v8070
        %9252 = vmatpush1.bf16.msra.mxu0 %v8069
        %9253 = vmatprep.subr.bf16.mxu0 %v8072
        %9254 = vmatpush1.bf16.msra.mxu0 %v8071
        %9255 = vmatprep.subr.bf16.mxu0 %v8074
        %9256 = vmatpush1.bf16.msra.mxu0 %v8073
        %9257 = vmatprep.subr.bf16.mxu0 %v8076
        %9258 = vmatpush1.bf16.msra.mxu0 %v8075
        %9259 = vmatprep.subr.bf16.mxu0 %v8078
        %9260 = vmatpush1.bf16.msra.mxu0 %v8077
        %9261 = vmatprep.subr.bf16.mxu0 %v8080
        %9262 = vmatpush1.bf16.msra.mxu0 %v8079
        %9263 = vmatprep.subr.bf16.mxu0 %v8082
        %9264 = vmatpush1.bf16.msra.mxu0 %v8081
        %9265 = vmatprep.mubr.bf16.mxu0 %v5994
        %9266 = vmatmul.mubr.bf16.gmra.mrb[0].mxu0 %v5993
        %v9267 = vpop.f32.mrb[0].mxu0
        %v9268 = vadd.f32 %v9135, %v9267
        %v9269 = vpop.f32.mrb[0].mxu0
        %v9270 = vadd.f32 %v9137, %v9269
        %v9271 = vpop.f32.mrb[0].mxu0
        %v9272 = vadd.f32 %v9139, %v9271
        %v9273 = vpop.f32.mrb[0].mxu0
        %v9274 = vadd.f32 %v9141, %v9273
        %9275 = vmatprep.mubr.bf16.mxu0 %v5996
        %9276 = vmatmul.mubr.bf16.gmra.mrb[0].mxu0 %v5995
        %v9277 = vpop.f32.mrb[0].mxu0
        %v9278 = vadd.f32 %v9145, %v9277
        %v9279 = vpop.f32.mrb[0].mxu0
        %v9280 = vadd.f32 %v9147, %v9279
        %v9281 = vpop.f32.mrb[0].mxu0
        %v9282 = vadd.f32 %v9149, %v9281
        %v9283 = vpop.f32.mrb[0].mxu0
        %v9284 = vadd.f32 %v9151, %v9283
        %9285 = vmatprep.mubr.bf16.mxu0 %v5998
        %9286 = vmatmul.mubr.bf16.gmra.mrb[0].mxu0 %v5997
        %v9287 = vpop.f32.mrb[0].mxu0
        %v9288 = vadd.f32 %v9155, %v9287
        %v9289 = vpop.f32.mrb[0].mxu0
        %v9290 = vadd.f32 %v9157, %v9289
        %v9291 = vpop.f32.mrb[0].mxu0
        %v9292 = vadd.f32 %v9159, %v9291
        %v9293 = vpop.f32.mrb[0].mxu0
        %v9294 = vadd.f32 %v9161, %v9293
        %9295 = vmatprep.mubr.bf16.mxu0 %v6000
        %9296 = vmatmul.mubr.bf16.gmra.mrb[0].mxu0 %v5999
        %v9297 = vpop.f32.mrb[0].mxu0
        %v9298 = vadd.f32 %v9165, %v9297
        %v9299 = vpop.f32.mrb[0].mxu0
        %v9300 = vadd.f32 %v9167, %v9299
        %v9301 = vpop.f32.mrb[0].mxu0
        %v9302 = vadd.f32 %v9169, %v9301
        %v9303 = vpop.f32.mrb[0].mxu0
        %v9304 = vadd.f32 %v9171, %v9303
        %9305 = vmatprep.mubr.bf16.mxu0 %v6002
        %9306 = vmatmul.mubr.bf16.gmra.mrb[0].mxu0 %v6001
        %v9307 = vpop.f32.mrb[0].mxu0
        %v9308 = vadd.f32 %v9175, %v9307
        %v9309 = vpop.f32.mrb[0].mxu0
        %v9310 = vadd.f32 %v9177, %v9309
        %v9311 = vpop.f32.mrb[0].mxu0
        %v9312 = vadd.f32 %v9179, %v9311
        %v9313 = vpop.f32.mrb[0].mxu0
        %v9314 = vadd.f32 %v9181, %v9313
        %9315 = vmatprep.mubr.bf16.mxu0 %v6004
        %9316 = vmatmul.mubr.bf16.gmra.mrb[0].mxu0 %v6003
        %v9317 = vpop.f32.mrb[0].mxu0
        %v9318 = vadd.f32 %v9185, %v9317
        %v9319 = vpop.f32.mrb[0].mxu0
        %v9320 = vadd.f32 %v9187, %v9319
        %v9321 = vpop.f32.mrb[0].mxu0
        %v9322 = vadd.f32 %v9189, %v9321
        %v9323 = vpop.f32.mrb[0].mxu0
        %v9324 = vadd.f32 %v9191, %v9323
        %9325 = vmatprep.mubr.bf16.mxu0 %v6006
        %9326 = vmatmul.mubr.bf16.gmra.mrb[0].mxu0 %v6005
        %v9327 = vpop.f32.mrb[0].mxu0
        %v9328 = vadd.f32 %v9195, %v9327
        %v9329 = vpop.f32.mrb[0].mxu0
        %v9330 = vadd.f32 %v9197, %v9329
        %v9331 = vpop.f32.mrb[0].mxu0
        %v9332 = vadd.f32 %v9199, %v9331
        %v9333 = vpop.f32.mrb[0].mxu0
        %v9334 = vadd.f32 %v9201, %v9333
        %9335 = vmatprep.mubr.bf16.mxu0 %v6008
        %9336 = vmatmul.mubr.bf16.gmra.mrb[0].mxu0 %v6007
        %v9337 = vpop.f32.mrb[0].mxu0
        %v9338 = vadd.f32 %v9205, %v9337
        %v9339 = vpop.f32.mrb[0].mxu0
        %v9340 = vadd.f32 %v9207, %v9339
        %v9341 = vpop.f32.mrb[0].mxu0
        %v9342 = vadd.f32 %v9209, %v9341
        %v9343 = vpop.f32.mrb[0].mxu0
        %v9344 = vadd.f32 %v9211, %v9343
        %9345 = vmatprep.mubr.bf16.mxu0 %v6296
        %9346 = vmatmul.mubr.bf16.gmra.mrb[0].mxu0 %v6295
        %v9347 = vpop.f32.mrb[0].mxu0
        %v9348 = vadd.f32 %v9215, %v9347
        %v9349 = vpop.f32.mrb[0].mxu0
        %v9350 = vadd.f32 %v9217, %v9349
        %v9351 = vpop.f32.mrb[0].mxu0
        %v9352 = vadd.f32 %v9219, %v9351
        %v9353 = vpop.f32.mrb[0].mxu0
        %v9354 = vadd.f32 %v9221, %v9353
        %9355 = vmatprep.mubr.bf16.mxu0 %v6364
        %9356 = vmatmul.mubr.bf16.gmra.mrb[0].mxu0 %v6363
        %v9357 = vpop.f32.mrb[0].mxu0
        %v9358 = vadd.f32 %v9225, %v9357
        %v9359 = vpop.f32.mrb[0].mxu0
        %v9360 = vadd.f32 %v9227, %v9359
        %v9361 = vpop.f32.mrb[0].mxu0
        %v9362 = vadd.f32 %v9229, %v9361
        %v9363 = vpop.f32.mrb[0].mxu0
        %v9364 = vadd.f32 %v9231, %v9363
        %9365 = vdwg.mxu0
        %9366 = vmatprep.subr.bf16.mxu0 %v8084
        %9367 = vmatpush1.bf16.msra.mxu0 %v8083
        %9368 = vmatprep.subr.bf16.mxu0 %v8086
        %9369 = vmatpush1.bf16.msra.mxu0 %v8085
        %9370 = vmatprep.subr.bf16.mxu0 %v8088
        %9371 = vmatpush1.bf16.msra.mxu0 %v8087
        %9372 = vmatprep.subr.bf16.mxu0 %v8090
        %9373 = vmatpush1.bf16.msra.mxu0 %v8089
        %9374 = vmatprep.subr.bf16.mxu0 %v8092
        %9375 = vmatpush1.bf16.msra.mxu0 %v8091
        %9376 = vmatprep.subr.bf16.mxu0 %v8094
        %9377 = vmatpush1.bf16.msra.mxu0 %v8093
        %9378 = vmatprep.subr.bf16.mxu0 %v8096
        %9379 = vmatpush1.bf16.msra.mxu0 %v8095
        %9380 = vmatprep.subr.bf16.mxu0 %v8098
        %9381 = vmatpush1.bf16.msra.mxu0 %v8097
        %9382 = vmatprep.subr.bf16.mxu0 %v8100
        %9383 = vmatpush1.bf16.msra.mxu0 %v8099
        %9384 = vmatprep.subr.bf16.mxu0 %v8102
        %9385 = vmatpush1.bf16.msra.mxu0 %v8101
        %9386 = vmatprep.subr.bf16.mxu0 %v8104
        %9387 = vmatpush1.bf16.msra.mxu0 %v8103
        %9388 = vmatprep.subr.bf16.mxu0 %v8106
        %9389 = vmatpush1.bf16.msra.mxu0 %v8105
        %9390 = vmatprep.subr.bf16.mxu0 %v8108
        %9391 = vmatpush1.bf16.msra.mxu0 %v8107
        %9392 = vmatprep.subr.bf16.mxu0 %v8110
        %9393 = vmatpush1.bf16.msra.mxu0 %v8109
        %9394 = vmatprep.subr.bf16.mxu0 %v8112
        %9395 = vmatpush1.bf16.msra.mxu0 %v8111
        %9396 = vmatprep.subr.bf16.mxu0 %v8114
        %9397 = vmatpush1.bf16.msra.mxu0 %v8113
        %9398 = vmatprep.mubr.bf16.mxu0 %v6475
        %9399 = vmatmul.mubr.bf16.gmra.mrb[0].mxu0 %v6463
        %v9400 = vpop.f32.mrb[0].mxu0
        %v9401 = vadd.f32 %v9268, %v9400
        %v9402 = vpop.f32.mrb[0].mxu0
        %v9403 = vadd.f32 %v9270, %v9402
        %v9404 = vpop.f32.mrb[0].mxu0
        %v9405 = vadd.f32 %v9272, %v9404
        %v9406 = vpop.f32.mrb[0].mxu0
        %v9407 = vadd.f32 %v9274, %v9406
        %9408 = vmatprep.mubr.bf16.mxu0 %v6491
        %9409 = vmatmul.mubr.bf16.gmra.mrb[0].mxu0 %v6483
        %v9410 = vpop.f32.mrb[0].mxu0
        %v9411 = vadd.f32 %v9278, %v9410
        %v9412 = vpop.f32.mrb[0].mxu0
        %v9413 = vadd.f32 %v9280, %v9412
        %v9414 = vpop.f32.mrb[0].mxu0
        %v9415 = vadd.f32 %v9282, %v9414
        %v9416 = vpop.f32.mrb[0].mxu0
        %v9417 = vadd.f32 %v9284, %v9416
        %9418 = vmatprep.mubr.bf16.mxu0 %v6507
        %9419 = vmatmul.mubr.bf16.gmra.mrb[0].mxu0 %v6499
        %v9420 = vpop.f32.mrb[0].mxu0
        %v9421 = vadd.f32 %v9288, %v9420
        %v9422 = vpop.f32.mrb[0].mxu0
        %v9423 = vadd.f32 %v9290, %v9422
        %v9424 = vpop.f32.mrb[0].mxu0
        %v9425 = vadd.f32 %v9292, %v9424
        %v9426 = vpop.f32.mrb[0].mxu0
        %v9427 = vadd.f32 %v9294, %v9426
        %9428 = vmatprep.mubr.bf16.mxu0 %v6523
        %9429 = vmatmul.mubr.bf16.gmra.mrb[0].mxu0 %v6515
        %v9430 = vpop.f32.mrb[0].mxu0
        %v9431 = vadd.f32 %v9298, %v9430
        %v9432 = vpop.f32.mrb[0].mxu0
        %v9433 = vadd.f32 %v9300, %v9432
        %v9434 = vpop.f32.mrb[0].mxu0
        %v9435 = vadd.f32 %v9302, %v9434
        %v9436 = vpop.f32.mrb[0].mxu0
        %v9437 = vadd.f32 %v9304, %v9436
        %9438 = vmatprep.mubr.bf16.mxu0 %v6539
        %9439 = vmatmul.mubr.bf16.gmra.mrb[0].mxu0 %v6531
        %v9440 = vpop.f32.mrb[0].mxu0
        %v9441 = vadd.f32 %v9308, %v9440
        %v9442 = vpop.f32.mrb[0].mxu0
        %v9443 = vadd.f32 %v9310, %v9442
        %v9444 = vpop.f32.mrb[0].mxu0
        %v9445 = vadd.f32 %v9312, %v9444
        %v9446 = vpop.f32.mrb[0].mxu0
        %v9447 = vadd.f32 %v9314, %v9446
        %9448 = vmatprep.mubr.bf16.mxu0 %v6555
        %9449 = vmatmul.mubr.bf16.gmra.mrb[0].mxu0 %v6547
        %v9450 = vpop.f32.mrb[0].mxu0
        %v9451 = vadd.f32 %v9318, %v9450
        %v9452 = vpop.f32.mrb[0].mxu0
        %v9453 = vadd.f32 %v9320, %v9452
        %v9454 = vpop.f32.mrb[0].mxu0
        %v9455 = vadd.f32 %v9322, %v9454
        %v9456 = vpop.f32.mrb[0].mxu0
        %v9457 = vadd.f32 %v9324, %v9456
        %9458 = vmatprep.mubr.bf16.mxu0 %v6571
        %9459 = vmatmul.mubr.bf16.gmra.mrb[0].mxu0 %v6563
        %v9460 = vpop.f32.mrb[0].mxu0
        %v9461 = vadd.f32 %v9328, %v9460
        %v9462 = vpop.f32.mrb[0].mxu0
        %v9463 = vadd.f32 %v9330, %v9462
        %v9464 = vpop.f32.mrb[0].mxu0
        %v9465 = vadd.f32 %v9332, %v9464
        %v9466 = vpop.f32.mrb[0].mxu0
        %v9467 = vadd.f32 %v9334, %v9466
        %9468 = vmatprep.mubr.bf16.mxu0 %v6587
        %9469 = vmatmul.mubr.bf16.gmra.mrb[0].mxu0 %v6579
        %v9470 = vpop.f32.mrb[0].mxu0
        %v9471 = vadd.f32 %v9338, %v9470
        %v9472 = vpop.f32.mrb[0].mxu0
        %v9473 = vadd.f32 %v9340, %v9472
        %v9474 = vpop.f32.mrb[0].mxu0
        %v9475 = vadd.f32 %v9342, %v9474
        %v9476 = vpop.f32.mrb[0].mxu0
        %v9477 = vadd.f32 %v9344, %v9476
        %9478 = vmatprep.mubr.bf16.mxu0 %v6603
        %9479 = vmatmul.mubr.bf16.gmra.mrb[0].mxu0 %v6595
        %v9480 = vpop.f32.mrb[0].mxu0
        %v9481 = vadd.f32 %v9348, %v9480
        %v9482 = vpop.f32.mrb[0].mxu0
        %v9483 = vadd.f32 %v9350, %v9482
        %v9484 = vpop.f32.mrb[0].mxu0
        %v9485 = vadd.f32 %v9352, %v9484
        %v9486 = vpop.f32.mrb[0].mxu0
        %v9487 = vadd.f32 %v9354, %v9486
        %9488 = vmatprep.mubr.bf16.mxu0 %v6619
        %9489 = vmatmul.mubr.bf16.gmra.mrb[0].mxu0 %v6611
        %v9490 = vpop.f32.mrb[0].mxu0
        %v9491 = vadd.f32 %v9358, %v9490
        %v9492 = vpop.f32.mrb[0].mxu0
        %v9493 = vadd.f32 %v9360, %v9492
        %v9494 = vpop.f32.mrb[0].mxu0
        %v9495 = vadd.f32 %v9362, %v9494
        %v9496 = vpop.f32.mrb[0].mxu0
        %v9497 = vadd.f32 %v9364, %v9496
        %9498 = vdwg.mxu0
        %9499 = vmatprep.subr.bf16.mxu0 %v8116
        %9500 = vmatpush1.bf16.msra.mxu0 %v8115
        %9501 = vmatprep.subr.bf16.mxu0 %v8118
        %9502 = vmatpush1.bf16.msra.mxu0 %v8117
        %9503 = vmatprep.subr.bf16.mxu0 %v8120
        %9504 = vmatpush1.bf16.msra.mxu0 %v8119
        %9505 = vmatprep.subr.bf16.mxu0 %v8122
        %9506 = vmatpush1.bf16.msra.mxu0 %v8121
        %9507 = vmatprep.subr.bf16.mxu0 %v8124
        %9508 = vmatpush1.bf16.msra.mxu0 %v8123
        %9509 = vmatprep.subr.bf16.mxu0 %v8126
        %9510 = vmatpush1.bf16.msra.mxu0 %v8125
        %9511 = vmatprep.subr.bf16.mxu0 %v8128
        %9512 = vmatpush1.bf16.msra.mxu0 %v8127
        %9513 = vmatprep.subr.bf16.mxu0 %v8130
        %9514 = vmatpush1.bf16.msra.mxu0 %v8129
        %9515 = vmatprep.subr.bf16.mxu0 %v8132
        %9516 = vmatpush1.bf16.msra.mxu0 %v8131
        %9517 = vmatprep.subr.bf16.mxu0 %v8134
        %9518 = vmatpush1.bf16.msra.mxu0 %v8133
        %9519 = vmatprep.subr.bf16.mxu0 %v8136
        %9520 = vmatpush1.bf16.msra.mxu0 %v8135
        %9521 = vmatprep.subr.bf16.mxu0 %v8138
        %9522 = vmatpush1.bf16.msra.mxu0 %v8137
        %9523 = vmatprep.subr.bf16.mxu0 %v8140
        %9524 = vmatpush1.bf16.msra.mxu0 %v8139
        %9525 = vmatprep.subr.bf16.mxu0 %v8142
        %9526 = vmatpush1.bf16.msra.mxu0 %v8141
        %9527 = vmatprep.subr.bf16.mxu0 %v8144
        %9528 = vmatpush1.bf16.msra.mxu0 %v8143
        %9529 = vmatprep.subr.bf16.mxu0 %v8146
        %9530 = vmatpush1.bf16.msra.mxu0 %v8145
        %9531 = vmatprep.mubr.bf16.mxu0 %v6650
        %9532 = vmatmul.mubr.bf16.gmra.mrb[0].mxu0 %v6647
        %v9533 = vpop.f32.mrb[0].mxu0
        %v9534 = vadd.f32 %v9401, %v9533
        %v9535 = vpop.f32.mrb[0].mxu0
        %v9536 = vadd.f32 %v9403, %v9535
        %v9537 = vpop.f32.mrb[0].mxu0
        %v9538 = vadd.f32 %v9405, %v9537
        %v9539 = vpop.f32.mrb[0].mxu0
        %v9540 = vadd.f32 %v9407, %v9539
        %9541 = vmatprep.mubr.bf16.mxu0 %v6654
        %9542 = vmatmul.mubr.bf16.gmra.mrb[0].mxu0 %v6652
        %v9543 = vpop.f32.mrb[0].mxu0
        %v9544 = vadd.f32 %v9411, %v9543
        %v9545 = vpop.f32.mrb[0].mxu0
        %v9546 = vadd.f32 %v9413, %v9545
        %v9547 = vpop.f32.mrb[0].mxu0
        %v9548 = vadd.f32 %v9415, %v9547
        %v9549 = vpop.f32.mrb[0].mxu0
        %v9550 = vadd.f32 %v9417, %v9549
        %9551 = vmatprep.mubr.bf16.mxu0 %v6658
        %9552 = vmatmul.mubr.bf16.gmra.mrb[0].mxu0 %v6656
        %v9553 = vpop.f32.mrb[0].mxu0
        %v9554 = vadd.f32 %v9421, %v9553
        %v9555 = vpop.f32.mrb[0].mxu0
        %v9556 = vadd.f32 %v9423, %v9555
        %v9557 = vpop.f32.mrb[0].mxu0
        %v9558 = vadd.f32 %v9425, %v9557
        %v9559 = vpop.f32.mrb[0].mxu0
        %v9560 = vadd.f32 %v9427, %v9559
        %9561 = vmatprep.mubr.bf16.mxu0 %v6662
        %9562 = vmatmul.mubr.bf16.gmra.mrb[0].mxu0 %v6660
        %v9563 = vpop.f32.mrb[0].mxu0
        %v9564 = vadd.f32 %v9431, %v9563
        %v9565 = vpop.f32.mrb[0].mxu0
        %v9566 = vadd.f32 %v9433, %v9565
        %v9567 = vpop.f32.mrb[0].mxu0
        %v9568 = vadd.f32 %v9435, %v9567
        %v9569 = vpop.f32.mrb[0].mxu0
        %v9570 = vadd.f32 %v9437, %v9569
        %9571 = vmatprep.mubr.bf16.mxu0 %v6666
        %9572 = vmatmul.mubr.bf16.gmra.mrb[0].mxu0 %v6664
        %v9573 = vpop.f32.mrb[0].mxu0
        %v9574 = vadd.f32 %v9441, %v9573
        %v9575 = vpop.f32.mrb[0].mxu0
        %v9576 = vadd.f32 %v9443, %v9575
        %v9577 = vpop.f32.mrb[0].mxu0
        %v9578 = vadd.f32 %v9445, %v9577
        %v9579 = vpop.f32.mrb[0].mxu0
        %v9580 = vadd.f32 %v9447, %v9579
        %9581 = vmatprep.mubr.bf16.mxu0 %v6670
        %9582 = vmatmul.mubr.bf16.gmra.mrb[0].mxu0 %v6668
        %v9583 = vpop.f32.mrb[0].mxu0
        %v9584 = vadd.f32 %v9451, %v9583
        %v9585 = vpop.f32.mrb[0].mxu0
        %v9586 = vadd.f32 %v9453, %v9585
        %v9587 = vpop.f32.mrb[0].mxu0
        %v9588 = vadd.f32 %v9455, %v9587
        %v9589 = vpop.f32.mrb[0].mxu0
        %v9590 = vadd.f32 %v9457, %v9589
        %9591 = vmatprep.mubr.bf16.mxu0 %v6674
        %9592 = vmatmul.mubr.bf16.gmra.mrb[0].mxu0 %v6672
        %v9593 = vpop.f32.mrb[0].mxu0
        %v9594 = vadd.f32 %v9461, %v9593
        %v9595 = vpop.f32.mrb[0].mxu0
        %v9596 = vadd.f32 %v9463, %v9595
        %v9597 = vpop.f32.mrb[0].mxu0
        %v9598 = vadd.f32 %v9465, %v9597
        %v9599 = vpop.f32.mrb[0].mxu0
        %v9600 = vadd.f32 %v9467, %v9599
        %9601 = vmatprep.mubr.bf16.mxu0 %v6678
        %9602 = vmatmul.mubr.bf16.gmra.mrb[0].mxu0 %v6676
        %v9603 = vpop.f32.mrb[0].mxu0
        %v9604 = vadd.f32 %v9471, %v9603
        %v9605 = vpop.f32.mrb[0].mxu0
        %v9606 = vadd.f32 %v9473, %v9605
        %v9607 = vpop.f32.mrb[0].mxu0
        %v9608 = vadd.f32 %v9475, %v9607
        %v9609 = vpop.f32.mrb[0].mxu0
        %v9610 = vadd.f32 %v9477, %v9609
        %9611 = vmatprep.mubr.bf16.mxu0 %v6682
        %9612 = vmatmul.mubr.bf16.gmra.mrb[0].mxu0 %v6680
        %v9613 = vpop.f32.mrb[0].mxu0
        %v9614 = vadd.f32 %v9481, %v9613
        %v9615 = vpop.f32.mrb[0].mxu0
        %v9616 = vadd.f32 %v9483, %v9615
        %v9617 = vpop.f32.mrb[0].mxu0
        %v9618 = vadd.f32 %v9485, %v9617
        %v9619 = vpop.f32.mrb[0].mxu0
        %v9620 = vadd.f32 %v9487, %v9619
        %9621 = vmatprep.mubr.bf16.mxu0 %v6686
        %9622 = vmatmul.mubr.bf16.gmra.mrb[0].mxu0 %v6684
        %v9623 = vpop.f32.mrb[0].mxu0
        %v9624 = vadd.f32 %v9491, %v9623
        %v9625 = vpop.f32.mrb[0].mxu0
        %v9626 = vadd.f32 %v9493, %v9625
        %v9627 = vpop.f32.mrb[0].mxu0
        %v9628 = vadd.f32 %v9495, %v9627
        %v9629 = vpop.f32.mrb[0].mxu0
        %v9630 = vadd.f32 %v9497, %v9629
        %9631 = vdwg.mxu0
        %v9632 = vld [vmem:[#allocation16] ss:$2 sm:$0x3]
        %v9634 = vlaneseq
        %v9635 = vshrl.u32 %v9634, 7
        %v9636 = vsub.s32 0, %v9635
        %v9637 = vrot.slane %v9632, %v9636
        %v9638 = vlaneseq
        %v9639 = vshrl.u32 %v9638, 7
        %v9640 = vsub.s32 1, %v9639
        %v9641 = vrot.slane %v9632, %v9640
        %v9644 = vmul.f32 %v9534, %v9637
        %v9645 = vmul.f32 %v9536, %v9641
        %v9646 = vmul.f32 %v9538, %v9637
        %v9647 = vmul.f32 %v9540, %v9641
        %v9648 = vmul.f32 %v9544, %v9637
        %v9649 = vmul.f32 %v9546, %v9641
        %v9650 = vmul.f32 %v9548, %v9637
        %v9651 = vmul.f32 %v9550, %v9641
        %v9652 = vmul.f32 %v9554, %v9637
        %v9653 = vmul.f32 %v9556, %v9641
        %v9654 = vmul.f32 %v9558, %v9637
        %v9655 = vmul.f32 %v9560, %v9641
        %v9656 = vmul.f32 %v9564, %v9637
        %v9657 = vmul.f32 %v9566, %v9641
        %v9658 = vmul.f32 %v9568, %v9637
        %v9659 = vmul.f32 %v9570, %v9641
        %v9660 = vmul.f32 %v9574, %v9637
        %v9661 = vmul.f32 %v9576, %v9641
        %v9662 = vmul.f32 %v9578, %v9637
        %v9663 = vmul.f32 %v9580, %v9641
        %v9664 = vmul.f32 %v9584, %v9637
        %v9665 = vmul.f32 %v9586, %v9641
        %v9666 = vmul.f32 %v9588, %v9637
        %v9667 = vmul.f32 %v9590, %v9641
        %v9668 = vmul.f32 %v9594, %v9637
        %v9669 = vmul.f32 %v9596, %v9641
        %v9670 = vmul.f32 %v9598, %v9637
        %v9671 = vmul.f32 %v9600, %v9641
        %v9672 = vmul.f32 %v9604, %v9637
        %v9673 = vmul.f32 %v9606, %v9641
        %v9674 = vmul.f32 %v9608, %v9637
        %v9675 = vmul.f32 %v9610, %v9641
        %v9676 = vmul.f32 %v9614, %v9637
        %v9677 = vmul.f32 %v9616, %v9641
        %v9678 = vmul.f32 %v9618, %v9637
        %v9679 = vmul.f32 %v9620, %v9641
        %v9680 = vmul.f32 %v9624, %v9637
        %v9681 = vmul.f32 %v9626, %v9641
        %v9682 = vmul.f32 %v9628, %v9637
        %v9683 = vmul.f32 %v9630, %v9641
        %s9684 = scalar_lea.vmem [#allocation16], 1
        %v9685 = vld [vmem:[%s9684] ss:$2 sm:$0x3]
        %v9687 = vlaneseq
        %v9688 = vshrl.u32 %v9687, 7
        %v9689 = vsub.s32 0, %v9688
        %v9690 = vrot.slane %v9685, %v9689
        %v9691 = vlaneseq
        %v9692 = vshrl.u32 %v9691, 7
        %v9693 = vsub.s32 1, %v9692
        %v9694 = vrot.slane %v9685, %v9693
        %v9697 = vadd.f32 %v9644, %v9690
        %v9698 = vadd.f32 %v9645, %v9694
        %v9699 = vadd.f32 %v9646, %v9690
        %v9700 = vadd.f32 %v9647, %v9694
        %v9701 = vadd.f32 %v9648, %v9690
        %v9702 = vadd.f32 %v9649, %v9694
        %v9703 = vadd.f32 %v9650, %v9690
        %v9704 = vadd.f32 %v9651, %v9694
        %v9705 = vadd.f32 %v9652, %v9690
        %v9706 = vadd.f32 %v9653, %v9694
        %v9707 = vadd.f32 %v9654, %v9690
        %v9708 = vadd.f32 %v9655, %v9694
        %v9709 = vadd.f32 %v9656, %v9690
        %v9710 = vadd.f32 %v9657, %v9694
        %v9711 = vadd.f32 %v9658, %v9690
        %v9712 = vadd.f32 %v9659, %v9694
        %v9713 = vadd.f32 %v9660, %v9690
        %v9714 = vadd.f32 %v9661, %v9694
        %v9715 = vadd.f32 %v9662, %v9690
        %v9716 = vadd.f32 %v9663, %v9694
        %v9717 = vadd.f32 %v9664, %v9690
        %v9718 = vadd.f32 %v9665, %v9694
        %v9719 = vadd.f32 %v9666, %v9690
        %v9720 = vadd.f32 %v9667, %v9694
        %v9721 = vadd.f32 %v9668, %v9690
        %v9722 = vadd.f32 %v9669, %v9694
        %v9723 = vadd.f32 %v9670, %v9690
        %v9724 = vadd.f32 %v9671, %v9694
        %v9725 = vadd.f32 %v9672, %v9690
        %v9726 = vadd.f32 %v9673, %v9694
        %v9727 = vadd.f32 %v9674, %v9690
        %v9728 = vadd.f32 %v9675, %v9694
        %v9729 = vadd.f32 %v9676, %v9690
        %v9730 = vadd.f32 %v9677, %v9694
        %v9731 = vadd.f32 %v9678, %v9690
        %v9732 = vadd.f32 %v9679, %v9694
        %v9733 = vadd.f32 %v9680, %v9690
        %v9734 = vadd.f32 %v9681, %v9694
        %v9735 = vadd.f32 %v9682, %v9690
        %v9736 = vadd.f32 %v9683, %v9694
        %vm9737 = vcmp.ge.f32.partialorder %v9697, 0.0
        %vm9738 = vcmp.ge.f32.partialorder %v9698, 0.0
        %vm9739 = vcmp.ge.f32.partialorder %v9699, 0.0
        %vm9740 = vcmp.ge.f32.partialorder %v9700, 0.0
        %vm9741 = vcmp.ge.f32.partialorder %v9701, 0.0
        %vm9742 = vcmp.ge.f32.partialorder %v9702, 0.0
        %vm9743 = vcmp.ge.f32.partialorder %v9703, 0.0
        %vm9744 = vcmp.ge.f32.partialorder %v9704, 0.0
        %vm9745 = vcmp.ge.f32.partialorder %v9705, 0.0
        %vm9746 = vcmp.ge.f32.partialorder %v9706, 0.0
        %vm9747 = vcmp.ge.f32.partialorder %v9707, 0.0
        %vm9748 = vcmp.ge.f32.partialorder %v9708, 0.0
        %vm9749 = vcmp.ge.f32.partialorder %v9709, 0.0
        %vm9750 = vcmp.ge.f32.partialorder %v9710, 0.0
        %vm9751 = vcmp.ge.f32.partialorder %v9711, 0.0
        %vm9752 = vcmp.ge.f32.partialorder %v9712, 0.0
        %vm9753 = vcmp.ge.f32.partialorder %v9713, 0.0
        %vm9754 = vcmp.ge.f32.partialorder %v9714, 0.0
        %vm9755 = vcmp.ge.f32.partialorder %v9715, 0.0
        %vm9756 = vcmp.ge.f32.partialorder %v9716, 0.0
        %vm9757 = vcmp.ge.f32.partialorder %v9717, 0.0
        %vm9758 = vcmp.ge.f32.partialorder %v9718, 0.0
        %vm9759 = vcmp.ge.f32.partialorder %v9719, 0.0
        %vm9760 = vcmp.ge.f32.partialorder %v9720, 0.0
        %vm9761 = vcmp.ge.f32.partialorder %v9721, 0.0
        %vm9762 = vcmp.ge.f32.partialorder %v9722, 0.0
        %vm9763 = vcmp.ge.f32.partialorder %v9723, 0.0
        %vm9764 = vcmp.ge.f32.partialorder %v9724, 0.0
        %vm9765 = vcmp.ge.f32.partialorder %v9725, 0.0
        %vm9766 = vcmp.ge.f32.partialorder %v9726, 0.0
        %vm9767 = vcmp.ge.f32.partialorder %v9727, 0.0
        %vm9768 = vcmp.ge.f32.partialorder %v9728, 0.0
        %vm9769 = vcmp.ge.f32.partialorder %v9729, 0.0
        %vm9770 = vcmp.ge.f32.partialorder %v9730, 0.0
        %vm9771 = vcmp.ge.f32.partialorder %v9731, 0.0
        %vm9772 = vcmp.ge.f32.partialorder %v9732, 0.0
        %vm9773 = vcmp.ge.f32.partialorder %v9733, 0.0
        %vm9774 = vcmp.ge.f32.partialorder %v9734, 0.0
        %vm9775 = vcmp.ge.f32.partialorder %v9735, 0.0
        %vm9776 = vcmp.ge.f32.partialorder %v9736, 0.0
        %v9777 = vmul.f32 %v9697, 0.0001
        %v9778 = vmul.f32 %v9698, 0.0001
        %v9779 = vmul.f32 %v9699, 0.0001
        %v9780 = vmul.f32 %v9700, 0.0001
        %v9781 = vmul.f32 %v9701, 0.0001
        %v9782 = vmul.f32 %v9702, 0.0001
        %v9783 = vmul.f32 %v9703, 0.0001
        %v9784 = vmul.f32 %v9704, 0.0001
        %v9785 = vmul.f32 %v9705, 0.0001
        %v9786 = vmul.f32 %v9706, 0.0001
        %v9787 = vmul.f32 %v9707, 0.0001
        %v9788 = vmul.f32 %v9708, 0.0001
        %v9789 = vmul.f32 %v9709, 0.0001
        %v9790 = vmul.f32 %v9710, 0.0001
        %v9791 = vmul.f32 %v9711, 0.0001
        %v9792 = vmul.f32 %v9712, 0.0001
        %v9793 = vmul.f32 %v9713, 0.0001
        %v9794 = vmul.f32 %v9714, 0.0001
        %v9795 = vmul.f32 %v9715, 0.0001
        %v9796 = vmul.f32 %v9716, 0.0001
        %v9797 = vmul.f32 %v9717, 0.0001
        %v9798 = vmul.f32 %v9718, 0.0001
        %v9799 = vmul.f32 %v9719, 0.0001
        %v9800 = vmul.f32 %v9720, 0.0001
        %v9801 = vmul.f32 %v9721, 0.0001
        %v9802 = vmul.f32 %v9722, 0.0001
        %v9803 = vmul.f32 %v9723, 0.0001
        %v9804 = vmul.f32 %v9724, 0.0001
        %v9805 = vmul.f32 %v9725, 0.0001
        %v9806 = vmul.f32 %v9726, 0.0001
        %v9807 = vmul.f32 %v9727, 0.0001
        %v9808 = vmul.f32 %v9728, 0.0001
        %v9809 = vmul.f32 %v9729, 0.0001
        %v9810 = vmul.f32 %v9730, 0.0001
        %v9811 = vmul.f32 %v9731, 0.0001
        %v9812 = vmul.f32 %v9732, 0.0001
        %v9813 = vmul.f32 %v9733, 0.0001
        %v9814 = vmul.f32 %v9734, 0.0001
        %v9815 = vmul.f32 %v9735, 0.0001
        %v9816 = vmul.f32 %v9736, 0.0001
        %v9817 = vsel %vm9737, %v9697, %v9777
        %v9818 = vsel %vm9738, %v9698, %v9778
        %v9819 = vsel %vm9739, %v9699, %v9779
        %v9820 = vsel %vm9740, %v9700, %v9780
        %v9821 = vsel %vm9741, %v9701, %v9781
        %v9822 = vsel %vm9742, %v9702, %v9782
        %v9823 = vsel %vm9743, %v9703, %v9783
        %v9824 = vsel %vm9744, %v9704, %v9784
        %v9825 = vsel %vm9745, %v9705, %v9785
        %v9826 = vsel %vm9746, %v9706, %v9786
        %v9827 = vsel %vm9747, %v9707, %v9787
        %v9828 = vsel %vm9748, %v9708, %v9788
        %v9829 = vsel %vm9749, %v9709, %v9789
        %v9830 = vsel %vm9750, %v9710, %v9790
        %v9831 = vsel %vm9751, %v9711, %v9791
        %v9832 = vsel %vm9752, %v9712, %v9792
        %v9833 = vsel %vm9753, %v9713, %v9793
        %v9834 = vsel %vm9754, %v9714, %v9794
        %v9835 = vsel %vm9755, %v9715, %v9795
        %v9836 = vsel %vm9756, %v9716, %v9796
        %v9837 = vsel %vm9757, %v9717, %v9797
        %v9838 = vsel %vm9758, %v9718, %v9798
        %v9839 = vsel %vm9759, %v9719, %v9799
        %v9840 = vsel %vm9760, %v9720, %v9800
        %v9841 = vsel %vm9761, %v9721, %v9801
        %v9842 = vsel %vm9762, %v9722, %v9802
        %v9843 = vsel %vm9763, %v9723, %v9803
        %v9844 = vsel %vm9764, %v9724, %v9804
        %v9845 = vsel %vm9765, %v9725, %v9805
        %v9846 = vsel %vm9766, %v9726, %v9806
        %v9847 = vsel %vm9767, %v9727, %v9807
        %v9848 = vsel %vm9768, %v9728, %v9808
        %v9849 = vsel %vm9769, %v9729, %v9809
        %v9850 = vsel %vm9770, %v9730, %v9810
        %v9851 = vsel %vm9771, %v9731, %v9811
        %v9852 = vsel %vm9772, %v9732, %v9812
        %v9853 = vsel %vm9773, %v9733, %v9813
        %v9854 = vsel %vm9774, %v9734, %v9814
        %v9855 = vsel %vm9775, %v9735, %v9815
        %v9856 = vsel %vm9776, %v9736, %v9816
        %v9857 = vld [vmem:[#allocation12] sm:$0xf]
        %v9858 = vpack.c.bf16 %v9819, %v9817
        %v9859 = vpack.c.bf16 %v9820, %v9818
        %v9860 = vpack.c.bf16 %v9823, %v9821
        %v9861 = vpack.c.bf16 %v9824, %v9822
        %v9862 = vpack.c.bf16 %v9827, %v9825
        %v9863 = vpack.c.bf16 %v9828, %v9826
        %v9864 = vpack.c.bf16 %v9831, %v9829
        %v9865 = vpack.c.bf16 %v9832, %v9830
        %v9866 = vpack.c.bf16 %v9835, %v9833
        %v9867 = vpack.c.bf16 %v9836, %v9834
        %v9868 = vpack.c.bf16 %v9839, %v9837
        %v9869 = vpack.c.bf16 %v9840, %v9838
        %v9870 = vpack.c.bf16 %v9843, %v9841
        %v9871 = vpack.c.bf16 %v9844, %v9842
        %v9872 = vpack.c.bf16 %v9847, %v9845
        %v9873 = vpack.c.bf16 %v9848, %v9846
        %v9874 = vpack.c.bf16 %v9851, %v9849
        %v9875 = vpack.c.bf16 %v9852, %v9850
        %v9876 = vpack.c.bf16 %v9855, %v9853
        %v9877 = vpack.c.bf16 %v9856, %v9854
        %v9880 = vunpack.c.l.s4 1983009808
        %v9881 = vunpack.c.0.s8 %v9880
        %v9882 = vlaneseq
        %v9883 = vshrl.u32 %v9882, 7
        %v9884 = vsub.s32 %v9881, %v9883
        %v9885 = vrot.slane %v9857, %v9884
        %v9886 = vcombine.high %v9885, %v9885
        %9889 = vmatprep.subr.bf16.mxu0 %v9859
        %9890 = vmatpush1.bf16.xpose.msra.mxu0 %v9858
        %9891 = vmatprep.subr.bf16.mxu0 %v9861
        %9892 = vmatpush1.bf16.xpose.msra.mxu0 %v9860
        %9893 = vmatprep.subr.bf16.mxu0 %v9863
        %9894 = vmatpush1.bf16.xpose.msra.mxu0 %v9862
        %9895 = vmatprep.subr.bf16.mxu0 %v9865
        %9896 = vmatpush1.bf16.xpose.msra.mxu0 %v9864
        %9897 = vmatprep.subr.bf16.mxu0 %v9867
        %9898 = vmatpush1.bf16.xpose.msra.mxu0 %v9866
        %9899 = vmatprep.subr.bf16.mxu0 %v9869
        %9900 = vmatpush1.bf16.xpose.msra.mxu0 %v9868
        %9901 = vmatprep.subr.bf16.mxu0 %v9871
        %9902 = vmatpush1.bf16.xpose.msra.mxu0 %v9870
        %9903 = vmatprep.subr.bf16.mxu0 %v9873
        %9904 = vmatpush1.bf16.xpose.msra.mxu0 %v9872
        %9905 = vmatprep.subr.bf16.mxu0 %v9875
        %9906 = vmatpush1.bf16.xpose.msra.mxu0 %v9874
        %9907 = vmatprep.subr.bf16.mxu0 %v9877
        %9908 = vmatpush1.bf16.xpose.msra.mxu0 %v9876
        %9909 = vmatprep.subr.bf16.mxu0 0
        %9910 = vmatpush1.bf16.xpose.msra.mxu0 0
        %9911 = vmatprep.subr.bf16.mxu0 0
        %9912 = vmatpush1.bf16.xpose.msra.mxu0 0
        %9913 = vmatprep.subr.bf16.mxu0 0
        %9914 = vmatpush1.bf16.xpose.msra.mxu0 0
        %9915 = vmatprep.subr.bf16.mxu0 0
        %9916 = vmatpush1.bf16.xpose.msra.mxu0 0
        %9917 = vmatprep.subr.bf16.mxu0 0
        %9918 = vmatpush1.bf16.xpose.msra.mxu0 0
        %9919 = vmatprep.subr.bf16.mxu0 0
        %9920 = vmatpush1.bf16.xpose.msra.mxu0 0
        %9921 = vmatprep.mubr.bf16.mxu0 %v9886
        %9922 = vmatmul.mubr.bf16.gmra.mrb[0].mxu0 %v9885
        %v9923 = vpop.f32.mrb[0].mxu0
        %v9924 = vadd.f32 0.0, %v9923
        %v9925 = vpop.f32.mrb[0].mxu0
        %v9926 = vadd.f32 0.0, %v9925
        %v9927 = vpop.f32.mrb[0].mxu0
        %v9928 = vpop.f32.mrb[0].mxu0
        %9929 = vdwg.mxu0
        %v9930 = vld [vmem:[%s8] sm:$0xf]
        %9932 = vset.pattern.permute.xlu0 0
        %9933 = vperm.xlu0 %9932, %v9930
        %v9934 = vpop.permute.xlu0 %9933
        %v9936 = vmul.f32 %v9924, %v9934
        %v9937 = vmul.f32 %v9926, %v9934
        %9938 = vset.pattern.permute.xlu0 1
        %9939 = vperm.xlu0 %9938, %v9930
        %v9940 = vpop.permute.xlu0 %9939
        %v9942 = vadd.f32 %v9936, %v9940
        %v9943 = vadd.f32 %v9937, %v9940
        %vm9944 = vcmp.ge.f32.partialorder %v9942, 0.0
        %vm9945 = vcmp.ge.f32.partialorder %v9943, 0.0
        %v9946 = vmul.f32 %v9942, 0.0001
        %v9947 = vmul.f32 %v9943, 0.0001
        %v9948 = vsel %vm9944, %v9942, %v9946
        %v9949 = vsel %vm9945, %v9943, %v9947
        %v9950 = vld [vmem:[#allocation18] sm:$0xff]
        %v9951 = vld [vmem:[#allocation18 + $0x8] sm:$0xff]
        %v9952 = vld [vmem:[#allocation18 + $0x10] sm:$0xff]
        %v9953 = vld [vmem:[#allocation18 + $0x18] sm:$0xff]
        %v9954 = vld [vmem:[#allocation18 + $0x20] sm:$0xff]
        %v9955 = vld [vmem:[#allocation18 + $0x28] sm:$0xff]
        %v9956 = vld [vmem:[#allocation18 + $0x30] sm:$0xff]
        %v9957 = vld [vmem:[#allocation18 + $0x38] sm:$0xff]
        %v9958 = vld [vmem:[#allocation18 + $0x40] sm:$0xff]
        %v9959 = vld [vmem:[#allocation18 + $0x48] sm:$0xff]
        %v9960 = vld [vmem:[#allocation18 + $0x50] sm:$0xff]
        %v9961 = vld [vmem:[#allocation18 + $0x58] sm:$0xff]
        %v9962 = vld [vmem:[#allocation18 + $0x60] sm:$0xff]
        %v9963 = vld [vmem:[#allocation18 + $0x68] sm:$0xff]
        %v9964 = vld [vmem:[#allocation18 + $0x70] sm:$0xff]
        %v9965 = vld [vmem:[#allocation18 + $0x78] sm:$0xff]
        %v9966 = vld [vmem:[#allocation18 + $0x80] sm:$0xff]
        %v9967 = vld [vmem:[#allocation18 + $0x88] sm:$0xff]
        %v9968 = vld [vmem:[#allocation18 + $0x90] sm:$0xff]
        %v9969 = vld [vmem:[#allocation18 + $0x98] sm:$0xff]
        %v9970 = vld [vmem:[#allocation18 + $0xa0] sm:$0xff]
        %v9971 = vld [vmem:[#allocation18 + $0xa8] sm:$0xff]
        %v9972 = vld [vmem:[#allocation18 + $0xb0] sm:$0xff]
        %v9973 = vld [vmem:[#allocation18 + $0xb8] sm:$0xff]
        %v9974 = vld [vmem:[#allocation18 + $0xc0] sm:$0xff]
        %v9975 = vld [vmem:[#allocation18 + $0xc8] sm:$0xff]
        %v9976 = vld [vmem:[#allocation18 + $0xd0] sm:$0xff]
        %v9977 = vld [vmem:[#allocation18 + $0xd8] sm:$0xff]
        %v9978 = vld [vmem:[#allocation18 + $0xe0] sm:$0xff]
        %v9979 = vld [vmem:[#allocation18 + $0xe8] sm:$0xff]
        %v9980 = vld [vmem:[#allocation18 + $0xf0] sm:$0xff]
        %v9981 = vld [vmem:[#allocation18 + $0xf8] sm:$0xff]
        %v9982 = vld [vmem:[#allocation18 + $0x100] sm:$0xff]
        %v9983 = vld [vmem:[#allocation18 + $0x108] sm:$0xff]
        %v9984 = vld [vmem:[#allocation18 + $0x110] sm:$0xff]
        %v9985 = vld [vmem:[#allocation18 + $0x118] sm:$0xff]
        %v9986 = vld [vmem:[#allocation18 + $0x120] sm:$0xff]
        %v9987 = vld [vmem:[#allocation18 + $0x128] sm:$0xff]
        %v9988 = vld [vmem:[#allocation18 + $0x130] sm:$0xff]
        %v9989 = vld [vmem:[#allocation18 + $0x138] sm:$0xff]
        %vm9990 = vcmask 261120
        %v9992 = vsel %vm9990, %v9949, 0
        %9994 = vmatprep.subr.mxu0 %v9951
        %9995 = vmatpush1.msra.mxu0 %v9950
        %9996 = vmatprep.subr.mxu0 %v9953
        %9997 = vmatpush1.msra.mxu0 %v9952
        %9998 = vmatprep.subr.mxu0 %v9955
        %9999 = vmatpush1.msra.mxu0 %v9954
        %10000 = vmatprep.subr.mxu0 %v9957
        %10001 = vmatpush1.msra.mxu0 %v9956
        %10002 = vmatprep.subr.mxu0 %v9959
        %10003 = vmatpush1.msra.mxu0 %v9958
        %10004 = vmatprep.subr.mxu0 %v9961
        %10005 = vmatpush1.msra.mxu0 %v9960
        %10006 = vmatprep.subr.mxu0 %v9963
        %10007 = vmatpush1.msra.mxu0 %v9962
        %10008 = vmatprep.subr.mxu0 %v9965
        %10009 = vmatpush1.msra.mxu0 %v9964
        %10010 = vmatprep.subr.mxu0 %v9967
        %10011 = vmatpush1.msra.mxu0 %v9966
        %10012 = vmatprep.subr.mxu0 %v9969
        %10013 = vmatpush1.msra.mxu0 %v9968
        %10014 = vmatprep.subr.mxu0 %v9971
        %10015 = vmatpush1.msra.mxu0 %v9970
        %10016 = vmatprep.subr.mxu0 %v9973
        %10017 = vmatpush1.msra.mxu0 %v9972
        %10018 = vmatprep.subr.mxu0 %v9975
        %10019 = vmatpush1.msra.mxu0 %v9974
        %10020 = vmatprep.subr.mxu0 %v9977
        %10021 = vmatpush1.msra.mxu0 %v9976
        %10022 = vmatprep.subr.mxu0 %v9979
        %10023 = vmatpush1.msra.mxu0 %v9978
        %10024 = vmatprep.subr.mxu0 %v9981
        %10025 = vmatpush1.msra.mxu0 %v9980
        %10026 = vmatprep.subr.mxu0 %v9983
        %10027 = vmatpush1.msra.mxu0 %v9982
        %10028 = vmatprep.subr.mxu0 %v9985
        %10029 = vmatpush1.msra.mxu0 %v9984
        %10030 = vmatprep.subr.mxu0 %v9987
        %10031 = vmatpush1.msra.mxu0 %v9986
        %10032 = vmatprep.subr.mxu0 %v9989
        %10033 = vmatpush1.msra.mxu0 %v9988
        %10034 = vmatprep.subr.mxu0 0.0
        %10035 = vmatpush1.msra.mxu0 0.0
        %10036 = vmatprep.subr.mxu0 0.0
        %10037 = vmatpush1.msra.mxu0 0.0
        %10038 = vmatprep.subr.mxu0 0.0
        %10039 = vmatpush1.msra.mxu0 0.0
        %10040 = vmatprep.subr.mxu0 0.0
        %10041 = vmatpush1.msra.mxu0 0.0
        %10042 = vmatprep.subr.mxu0 0.0
        %10043 = vmatpush1.msra.mxu0 0.0
        %10044 = vmatprep.subr.mxu0 0.0
        %10045 = vmatpush1.msra.mxu0 0.0
        %10046 = vmatprep.subr.mxu0 0.0
        %10047 = vmatpush1.msra.mxu0 0.0
        %10048 = vmatprep.subr.mxu0 0.0
        %10049 = vmatpush1.msra.mxu0 0.0
        %10050 = vmatprep.subr.mxu0 0.0
        %10051 = vmatpush1.msra.mxu0 0.0
        %10052 = vmatprep.subr.mxu0 0.0
        %10053 = vmatpush1.msra.mxu0 0.0
        %10054 = vmatprep.subr.mxu0 0.0
        %10055 = vmatpush1.msra.mxu0 0.0
        %10056 = vmatprep.subr.mxu0 0.0
        %10057 = vmatpush1.msra.mxu0 0.0
        %10058 = vmatprep.mubr.f32.mxu0 %v9992
        %10059 = vmatmul.mubr.f32.gmra.mrb[0].mxu0 %v9948
        %v10060 = vpop.f32.mrb[0].mxu0
        %v10061 = vadd.f32 0.0, %v10060
        %v10062 = vpop.f32.mrb[0].mxu0
        %v10063 = vadd.f32 0.0, %v10062
        %10064 = vdwg.mxu0
        %v10067 = vcombine.low %v10061, %v10063
        %10069 = vst [vmem:[%s485] sm:$0xff] %v10067
        %s10070 = sand.u32 %s254, 1
        %s10071 = scalar_lea.sflag [#allocation6], %s10070
        %s10072 = sand.u32 %s254, 1
        %s10073 = smul.addr %s10072, 8
        %s10074 = scalar_lea.vmem [#allocation19], %s10073
        // Predicated region
        $region97: #{tpu_custom_call.1} parent=59 // pred_check
          %p10075 = pneg %p264
        $region98: #{tpu_custom_call.1} parent=59 // pred_check_branch
          %10077 = sbr.rel (%p10075) target = $region100
        $region99: #{tpu_custom_call.1} parent=59 // pred_region
          %s10079 = ssub.s32 128, 128
          %10080 = vsyncadd %s10071, %s10079
          %s10081 = smul.addr %s31, 2
          %s10082 = smul.addr %s10081, 64
          %s10083 = scalar_lea.hbm %s10, %s10082
          %s10085 = sshll.u32 %s10074, 4
          %s10086 = int_to_ptr.vmem [resolvable:$true] %s10085
          %10088 = dma.vmem_to_hbm [thread:$0]  %s10086, 128, %s10083, %s10071
        $region100: #{tpu_custom_call.1} parent=59 // pred_fallthru
          _
      $region60: #{tpu_custom_call.1} parent=5 // pred_fallthru
        _
      %p10089 = scmp.le.s32.totalorder 2, %s26
      // Predicated region
      $region101: #{tpu_custom_call.1} parent=5 // pred_check
        %p10090 = pneg %p10089
      $region102: #{tpu_custom_call.1} parent=5 // pred_check_branch
        %10092 = sbr.rel (%p10090) target = $region104
      $region103: #{tpu_custom_call.1} parent=5 // pred_region
        %s10093 = ssub.s32 %s26, 2
        // Predicated region
        $region105: #{tpu_custom_call.1} parent=103 // pred_check
          %p10094 = pneg %p270
        $region106: #{tpu_custom_call.1} parent=103 // pred_check_branch
          %10096 = sbr.rel (%p10094) target = $region108
        $region107: #{tpu_custom_call.1} parent=103 // pred_region
          %s10097 = sand.u32 %s255, 1
          %s10098 = scalar_lea.sflag [#allocation6], %s10097
          %s10099 = sand.u32 %s255, 1
          %s10100 = smul.addr %s10099, 8
          %s10101 = scalar_lea.vmem [#allocation19], %s10100
          %10102 = dma.done %s10098, 128
        $region108: #{tpu_custom_call.1} parent=103 // pred_fallthru
          _
      $region104: #{tpu_custom_call.1} parent=5 // pred_fallthru
        _
    $region6: #{tpu_custom_call.1} parent=1 // loop_footer
      %s30 = sadd.s32 1, %s26
    $region7: #{tpu_custom_call.1} parent=1 // loop_footer_branch
      %25 = sbr.rel target = $region3
    $region8: #{tpu_custom_call.1} parent=1 // loop_exit
      _
    %10103 = vsyncpa [#allocation5], 1
    %s10104 = scalar_lea.sflag [#allocation5], 1
    %10105 = vsyncpa %s10104, 1
    %10106 = vsyncpa [#allocation8], 1
    %10107 = vsyncpa [#allocation11], 1
    %10108 = vsyncpa [#allocation14], 1
    %10109 = vsyncpa [#allocation17], 1
    %10110 = vsyncpa [#allocation6], 1
    %s10111 = scalar_lea.sflag [#allocation6], 1
    %10112 = vsyncpa %s10111, 1

</llo_original>
